<compile_context>
chip_gen: v6e
topology: v6e:2x2x1
jax: 0.10.0
libtpu: 0.0.40
codegen_flags: <defaults>
</compile_context>

<pallas_src>
import functools

import jax
import jax.numpy as jnp
from jax import lax
from jax.experimental import pallas as pl
from jax.experimental.pallas import tpu as pltpu

_ATTN_ORDER = ("global_res", "time", "space", "time_cor", "space_cor")
_NUM_ATTN = len(_ATTN_ORDER)
# Input slice feeding the x (keys/values/residual) and y (queries) argument of
# each Attention call in STA.forward; slices are [0]=time, [1]=mid, [2]=space.
_X_SLICE = (1, 0, 2, 0, 2)
_Y_SLICE = (1, 0, 2, 2, 0)

_CORE_PARALLEL = getattr(pltpu, "CORE_PARALLEL", pltpu.PARALLEL)


def _recip(d):
    # EUP approximate reciprocal + one Newton step -> ~f32 exact, no VALU divide.
    r = pl.reciprocal(d, approx=True)
    return r * (2.0 - d * r)


def _sigmoid(v):
    # tanh form keeps the whole gating combine on the EUP (no f32 divide).
    return 0.5 * (1.0 + jnp.tanh(0.5 * v))


# --------------------------------------------------------------------------
# Fused STA kernel: one batch element per grid step; everything stays in
# VMEM / vregs between the five attentions and the gating combine.
#   x_ref   : (1, 3, C, N) f32   [time, mid, space]
#   w_ref   : (15C, C)    bf16   [mid slab 2C | time slab 4C | space slab 4C | Wt x5]
#   b_ref   : (15C, 1)    f32    matching biases (zero rows for the folded M rows)
#   o_ref   : (1, C, N)   f32
#   proj_ref: (10C, N)    bf16   scratch: slab projections (M@x and Wv@x rows)
#   xr_ref  : (C, N)      f32    scratch: x_v @ attention accumulator
#   cs_ref  : (1, N)      f32    scratch: attention.sum(over queries) accumulator
# --------------------------------------------------------------------------
def sta_kernel(x_ref, w_ref, b_ref, o_ref, proj_ref, xr_ref, cs_ref, *, tq):
    C = x_ref.shape[2]
    N = x_ref.shape[3]
    n_chunks = N // tq
    bf16 = jnp.bfloat16

    # Row layout of the projection scratch (all offsets are multiples of C, so
    # they stay aligned to both the f32 (8,128) and bf16 (16,128) tilings).
    MX_OFF = (0, 2 * C, 6 * C, 3 * C, 7 * C)          # M_i @ x_slice rows
    XV_OFF = (C, 4 * C, 8 * C, 5 * C, 9 * C)          # Wv_i @ x_slice (+bv) rows
    WT_OFF = tuple(10 * C + i * C for i in range(_NUM_ATTN))

    # ---- batched 1x1-conv projections: ONE MXU matmul per input slice ----
    def project(lo, hi, slice_idx):
        w = w_ref[lo:hi, :]                                      # (R, C) bf16
        xs = x_ref[0, slice_idx].astype(bf16)                    # (C, N) bf16
        acc = jnp.dot(w, xs, preferred_element_type=jnp.float32)  # (R, N) f32
        proj_ref[lo:hi, :] = (acc + b_ref[lo:hi, :]).astype(bf16)

    project(0, 2 * C, 1)         # mid  : [M_g ; Wv_g]
    project(2 * C, 6 * C, 0)     # time : [M_t ; M_tc ; Wv_t ; Wv_tc]
    project(6 * C, 10 * C, 2)    # space: [M_s ; M_sc ; Wv_s ; Wv_sc]

    def attention(i):
        xs, ys = _X_SLICE[i], _Y_SLICE[i]
        x_f32 = x_ref[0, xs]                                     # (C, N) f32
        mx = proj_ref[MX_OFF[i]:MX_OFF[i] + C, :]                # (C, N) bf16

        xr_ref[...] = jnp.zeros_like(xr_ref)
        cs_ref[...] = jnp.zeros_like(cs_ref)

        # Query-chunked attention: keys stay whole (full softmax rows); the
        # (tq, N) energy tile is the only O(N^2 / n_chunks) temporary.  The
        # chunk loop is a static Python loop (small trip count, static slice
        # starts, full LLO scheduler visibility).
        for c in range(n_chunks):
            q0 = c * tq
            y_chunk = x_ref[0, ys, :, q0:q0 + tq].astype(bf16)   # (C, tq)
            # energy = y_chunk^T @ (M @ x): contract channel dim 0 of both
            # operands; Mosaic chooses the layout (no explicit transpose).
            energy = lax.dot_general(
                y_chunk, mx, (((0,), (0,)), ((), ())),
                preferred_element_type=jnp.float32)              # (tq, N)
            p = jnp.exp(energy - jnp.max(energy, axis=-1, keepdims=True))
            attn = p * _recip(jnp.sum(p, axis=-1, keepdims=True))  # row softmax
            xv_chunk = proj_ref[XV_OFF[i]:XV_OFF[i] + C, q0:q0 + tq]  # (C, tq) bf16
            xr_ref[...] += jnp.dot(xv_chunk, attn.astype(bf16),
                                   preferred_element_type=jnp.float32)
            cs_ref[...] += jnp.sum(attn, axis=0, keepdims=True)

        # Extra normalization over queries (torch: attention.sum(dim=1)).
        x_r = xr_ref[...] * _recip(1e-7 + cs_ref[...])
        # x_r = relu(trans_conv(x - x_r)); out = x + x_r
        wt = w_ref[WT_OFF[i]:WT_OFF[i] + C, :]                   # (C, C) bf16
        t = jnp.dot(wt, (x_f32 - x_r).astype(bf16),
                    preferred_element_type=jnp.float32) + b_ref[WT_OFF[i]:WT_OFF[i] + C, :]
        return x_f32 + jnp.maximum(t, 0.0)

    gf = attention(0)      # global_res(mid, mid)
    ta = attention(1)      # time(time, time)
    sa = attention(2)      # space(space, space)
    tc = attention(3)      # time_cor(time, space)
    sc = attention(4)      # space_cor(space, time)

    # sigmoid / tanh gating combine (elementwise, EUP transcendentals).
    sig_g = _sigmoid(gf)
    t_upd = jnp.tanh(ta * _sigmoid(tc))
    s_upd = jnp.tanh(sa * _sigmoid(sc))
    gr = _sigmoid((t_upd + s_upd) * sig_g)
    o_ref[0] = x_ref[0, 1] + gr * jnp.tanh(gf)


# --------------------------------------------------------------------------
# Wrapper: fold q/k weights, stack per-slice projection slabs, launch kernel.
# --------------------------------------------------------------------------
def _fold_qk(p):
    # Shared q/k conv weight: energy = (Wqk y)^T (Wqk x) = y^T (Wqk^T Wqk) x.
    return jnp.dot(p["wqk"].T, p["wqk"])


def _pack_params(params):
    g, t, s, tc, sc = (params[k] for k in _ATTN_ORDER)
    C = g["wqk"].shape[0]
    w_all = jnp.concatenate([
        _fold_qk(g), g["wv"],                             # mid slab   (2C rows)
        _fold_qk(t), _fold_qk(tc), t["wv"], tc["wv"],     # time slab  (4C rows)
        _fold_qk(s), _fold_qk(sc), s["wv"], sc["wv"],     # space slab (4C rows)
        g["wt"], t["wt"], s["wt"], tc["wt"], sc["wt"],    # trans convs (5C rows)
    ], axis=0)
    z = jnp.zeros((C, 1), jnp.float32)
    b_all = jnp.concatenate([
        z, g["bv"],
        z, z, t["bv"], tc["bv"],
        z, z, s["bv"], sc["bv"],
        g["bt"], t["bt"], s["bt"], tc["bt"], sc["bt"],
    ], axis=0)
    # bf16 weights = MXU-native operands; biases stay f32 (added post-matmul).
    return w_all.astype(jnp.bfloat16), b_all.astype(jnp.float32)


def _pick_query_chunk(n):
    # Largest query chunk that bounds the (tq, N) energy tile; small N is one chunk.
    if n <= 512:
        return n
    for c in (512, 256, 128):
        if n % c == 0:
            return c
    return n  # TODO(synk): pad ragged N to a multiple of 128 before the kernel.


def _vmem_limit_bytes():
    # ~75% of physical VMEM: ~48 MiB on v7x (64 MiB parts), 96 MiB on v5e/v6e.
    try:
        cap = pltpu.get_tpu_info().vmem_capacity_bytes
    except Exception:
        cap = 128 * 1024 * 1024
    return int(min(96 * 1024 * 1024, max(32 * 1024 * 1024, cap * 3 // 4)))


@functools.partial(jax.jit, static_argnames=("tq", "vmem_limit", "core_parallel"))
def _sta_jit(x, params, *, tq, vmem_limit, core_parallel):
    B, S, C, N = x.shape
    w_all, b_all = _pack_params(params)
    sem = (_CORE_PARALLEL if core_parallel else pltpu.PARALLEL,)
    return pl.pallas_call(
        functools.partial(sta_kernel, tq=tq),
        out_shape=jax.ShapeDtypeStruct((B, C, N), jnp.float32),
        grid=(B,),
        in_specs=[
            # Only the 3 slices STA.forward reads, even if S > 3.
            pl.BlockSpec((1, 3, C, N), lambda b: (b, 0, 0, 0)),
            pl.BlockSpec((15 * C, C), lambda b: (0, 0)),   # resident weight slab
            pl.BlockSpec((15 * C, 1), lambda b: (0, 0)),   # resident bias slab
        ],
        out_specs=pl.BlockSpec((1, C, N), lambda b: (b, 0, 0)),
        scratch_shapes=[
            pltpu.VMEM((10 * C, N), jnp.bfloat16),   # slab projections
            pltpu.VMEM((C, N), jnp.float32),         # x_r accumulator
            pltpu.VMEM((1, N), jnp.float32),         # column-sum accumulator
        ],
        compiler_params=pltpu.CompilerParams(
            dimension_semantics=sem,
            vmem_limit_bytes=vmem_limit,
        ),
    )(x, w_all, b_all)


def sta_forward(x, params):
    """x: (B, S>=3, C, N) in the PyTorch layout. Returns (B, C, N) = STA.forward(x)."""
    assert x.shape[1] >= 3, "STA needs the [time, mid, space] slices"
    tq = _pick_query_chunk(x.shape[-1])
    try:
        out = _sta_jit(x, params, tq=tq, vmem_limit=_vmem_limit_bytes(),
                       core_parallel=True)
        return jax.block_until_ready(out)
    except Exception:
        # Target rejected CORE_PARALLEL (or the generous VMEM limit): fall back
        # to the known-good single-core configuration.
        out = _sta_jit(x, params, tq=tq, vmem_limit=48 * 1024 * 1024,
                       core_parallel=False)
        return jax.block_until_ready(out)


# --------------------------------------------------------------------------
# Deterministic parameter init (mirrors Conv1d shapes; q/k weight is shared,
# q_conv/k_conv have no bias, v_conv/trans_conv do).
# --------------------------------------------------------------------------
def init_attention_params(key, C):
    k1, k2, k3, k4, k5 = jax.random.split(key, 5)
    bound = 1.0 / jnp.sqrt(C)
    return {
        "wqk": jax.random.uniform(k1, (C, C), jnp.float32, -bound, bound),
        "wv": jax.random.uniform(k2, (C, C), jnp.float32, -bound, bound),
        "bv": jax.random.uniform(k3, (C, 1), jnp.float32, -bound, bound),
        "wt": jax.random.uniform(k4, (C, C), jnp.float32, -bound, bound),
        "bt": jax.random.uniform(k5, (C, 1), jnp.float32, -bound, bound),
    }


def init_sta_params(key, C):
    keys = jax.random.split(key, _NUM_ATTN)
    return {name: init_attention_params(k, C) for name, k in zip(_ATTN_ORDER, keys)}


# --------------------------------------------------------------------------
# Pure-JAX f32 reference (exact torch semantics) for verification.
# --------------------------------------------------------------------------
def ref_attention(x, y, p):
    xq = jnp.einsum("oc,bcn->bon", p["wqk"], y).transpose(0, 2, 1)      # (B, N, C)
    xk = jnp.einsum("oc,bcn->bon", p["wqk"], x)                         # (B, C, N)
    xv = jnp.einsum("oc,bcn->bon", p["wv"], x) + p["bv"].reshape(1, -1, 1)
    energy = jnp.einsum("bnc,bcm->bnm", xq, xk)
    attn = jax.nn.softmax(energy, axis=-1)
    attn = attn / (1e-07 + attn.sum(axis=1, keepdims=True))
    x_r = jnp.einsum("bcn,bnm->bcm", xv, attn)
    t = jnp.einsum("oc,bcn->bon", p["wt"], x - x_r) + p["bt"].reshape(1, -1, 1)
    return x + jnp.maximum(t, 0.0)


def ref_sta(x, params):
    time_x, mid_x, space_x = x[:, 0], x[:, 1], x[:, 2]
    gf = ref_attention(mid_x, mid_x, params["global_res"])
    ta = ref_attention(time_x, time_x, params["time"])
    sa = ref_attention(space_x, space_x, params["space"])
    tc = ref_attention(time_x, space_x, params["time_cor"])
    sc = ref_attention(space_x, time_x, params["space_cor"])
    t_upd = jnp.tanh(ta * jax.nn.sigmoid(tc))
    s_upd = jnp.tanh(sa * jax.nn.sigmoid(sc))
    sig_g = jax.nn.sigmoid(gf)
    gr = jax.nn.sigmoid(t_upd * sig_g + s_upd * sig_g)
    return mid_x + gr * jnp.tanh(gf)


if __name__ == "__main__":
    # STA(64) inside PointNetEncoder: C = 64 channels, N points (lane-dense), S = 3 slices.
    B, S, C, N = 2, 3, 64, 128
    key = jax.random.PRNGKey(0)
    kx, kp = jax.random.split(key)
    x = jax.random.normal(kx, (B, S, C, N), jnp.float32)
    params = init_sta_params(kp, C)

    out = sta_forward(x, params)
    assert out.shape == (B, C, N)

    ref = ref_sta(x, params)
    max_err = float(jnp.max(jnp.abs(out - ref)))
    mean_err = float(jnp.mean(jnp.abs(out - ref)))
    # The kernel feeds the MXU bf16 operands (f32 accumulation) while the
    # reference runs entirely in f32, so the element-wise tolerance is set for
    # bf16 matmul chains; the mean-error check guards overall fidelity.  The
    # softmax / column-normalization reciprocals are Newton-refined (~exact).
    assert jnp.allclose(out, ref, atol=5e-2, rtol=5e-2), (max_err, mean_err)
    assert mean_err < 1e-2, mean_err
    print("KERNEL_OK")
</pallas_src>

<mosaic_0001>
module attributes {stable_mosaic.version = 11 : i64} {
  func.func @sta_kernel(%arg0: i32, %arg1: memref<1x3x64x128xf32, #tpu.memory_space<vmem>>, %arg2: memref<960x64xbf16, #tpu.memory_space<vmem>>, %arg3: memref<960x1xf32, #tpu.memory_space<vmem>>, %arg4: memref<1x64x128xf32, #tpu.memory_space<vmem>>, %arg5: memref<640x128xbf16, #tpu.memory_space<vmem>>, %arg6: memref<64x128xf32, #tpu.memory_space<vmem>>, %arg7: memref<1x128xf32, #tpu.memory_space<vmem>>) attributes {dimension_semantics = [#tpu.dimension_semantics<core_parallel>], iteration_bounds = array<i64: 2>, scalar_prefetch = 0 : i64, scratch_operands = 3 : i64, tpu.core_type = #tpu.core_type<tc>, window_params = [{transform_indices = @transform_0, window_bounds = array<i64: 1, 3, 64, 128>}, {pipeline_mode = #tpu.pipeline_mode<synchronous>, transform_indices = @transform_1, window_bounds = array<i64: 960, 64>}, {pipeline_mode = #tpu.pipeline_mode<synchronous>, transform_indices = @transform_2, window_bounds = array<i64: 960, 1>}, {transform_indices = @transform_3, window_bounds = array<i64: 1, 64, 128>}]} {
    %c0 = arith.constant 0 : index
    %c0_0 = arith.constant 0 : index
    %0 = vector.load %arg2[%c0, %c0_0] : memref<960x64xbf16, #tpu.memory_space<vmem>>, vector<128x64xbf16>
    %c0_1 = arith.constant 0 : index
    %c1 = arith.constant 1 : index
    %c0_2 = arith.constant 0 : index
    %c0_3 = arith.constant 0 : index
    %1 = vector.load %arg1[%c0_1, %c1, %c0_2, %c0_3] : memref<1x3x64x128xf32, #tpu.memory_space<vmem>>, vector<1x1x64x128xf32>
    %2 = vector.shape_cast %1 : vector<1x1x64x128xf32> to vector<64x128xf32>
    %3 = arith.truncf %2 : vector<64x128xf32> to vector<64x128xbf16>
    %cst = arith.constant dense<0.000000e+00> : vector<128x128xf32>
    %4 = tpu.matmul %0, %3, %cst {dimension_numbers = #tpu.dot_dimension_numbers<[1], [0], [0], [1], [0, 0, 1, 1], [], []>} : vector<128x64xbf16>, vector<64x128xbf16>, vector<128x128xf32> -> vector<128x128xf32>
    %c0_4 = arith.constant 0 : index
    %c0_5 = arith.constant 0 : index
    %5 = vector.load %arg3[%c0_4, %c0_5] : memref<960x1xf32, #tpu.memory_space<vmem>>, vector<128x1xf32>
    %6 = vector.broadcast %5 : vector<128x1xf32> to vector<128x128xf32>
    %7 = arith.addf %4, %6 : vector<128x128xf32>
    %8 = arith.truncf %7 : vector<128x128xf32> to vector<128x128xbf16>
    %c0_6 = arith.constant 0 : index
    %c0_7 = arith.constant 0 : index
    %9 = vector.load %arg5[%c0_6, %c0_7] : memref<640x128xbf16, #tpu.memory_space<vmem>>, vector<128x128xbf16>
    tpu.vector_store %arg5[%c0_6, %c0_7], %8 {strides = array<i32>} : memref<640x128xbf16, #tpu.memory_space<vmem>>, vector<128x128xbf16>,
    %c128 = arith.constant 128 : index
    %c0_8 = arith.constant 0 : index
    %10 = vector.load %arg2[%c128, %c0_8] : memref<960x64xbf16, #tpu.memory_space<vmem>>, vector<256x64xbf16>
    %c0_9 = arith.constant 0 : index
    %c0_10 = arith.constant 0 : index
    %c0_11 = arith.constant 0 : index
    %c0_12 = arith.constant 0 : index
    %11 = vector.load %arg1[%c0_9, %c0_10, %c0_11, %c0_12] : memref<1x3x64x128xf32, #tpu.memory_space<vmem>>, vector<1x1x64x128xf32>
    %12 = vector.shape_cast %11 : vector<1x1x64x128xf32> to vector<64x128xf32>
    %13 = arith.truncf %12 : vector<64x128xf32> to vector<64x128xbf16>
    %cst_13 = arith.constant dense<0.000000e+00> : vector<256x128xf32>
    %14 = tpu.matmul %10, %13, %cst_13 {dimension_numbers = #tpu.dot_dimension_numbers<[1], [0], [0], [1], [0, 0, 1, 1], [], []>} : vector<256x64xbf16>, vector<64x128xbf16>, vector<256x128xf32> -> vector<256x128xf32>
    %c128_14 = arith.constant 128 : index
    %c0_15 = arith.constant 0 : index
    %15 = vector.load %arg3[%c128_14, %c0_15] : memref<960x1xf32, #tpu.memory_space<vmem>>, vector<256x1xf32>
    %16 = vector.broadcast %15 : vector<256x1xf32> to vector<256x128xf32>
    %17 = arith.addf %14, %16 : vector<256x128xf32>
    %18 = arith.truncf %17 : vector<256x128xf32> to vector<256x128xbf16>
    %c128_16 = arith.constant 128 : index
    %c0_17 = arith.constant 0 : index
    %19 = vector.load %arg5[%c128_16, %c0_17] : memref<640x128xbf16, #tpu.memory_space<vmem>>, vector<256x128xbf16>
    tpu.vector_store %arg5[%c128_16, %c0_17], %18 {strides = array<i32>} : memref<640x128xbf16, #tpu.memory_space<vmem>>, vector<256x128xbf16>,
    %c384 = arith.constant 384 : index
    %c0_18 = arith.constant 0 : index
    %20 = vector.load %arg2[%c384, %c0_18] : memref<960x64xbf16, #tpu.memory_space<vmem>>, vector<256x64xbf16>
    %c0_19 = arith.constant 0 : index
    %c2 = arith.constant 2 : index
    %c0_20 = arith.constant 0 : index
    %c0_21 = arith.constant 0 : index
    %21 = vector.load %arg1[%c0_19, %c2, %c0_20, %c0_21] : memref<1x3x64x128xf32, #tpu.memory_space<vmem>>, vector<1x1x64x128xf32>
    %22 = vector.shape_cast %21 : vector<1x1x64x128xf32> to vector<64x128xf32>
    %23 = arith.truncf %22 : vector<64x128xf32> to vector<64x128xbf16>
    %cst_22 = arith.constant dense<0.000000e+00> : vector<256x128xf32>
    %24 = tpu.matmul %20, %23, %cst_22 {dimension_numbers = #tpu.dot_dimension_numbers<[1], [0], [0], [1], [0, 0, 1, 1], [], []>} : vector<256x64xbf16>, vector<64x128xbf16>, vector<256x128xf32> -> vector<256x128xf32>
    %c384_23 = arith.constant 384 : index
    %c0_24 = arith.constant 0 : index
    %25 = vector.load %arg3[%c384_23, %c0_24] : memref<960x1xf32, #tpu.memory_space<vmem>>, vector<256x1xf32>
    %26 = vector.broadcast %25 : vector<256x1xf32> to vector<256x128xf32>
    %27 = arith.addf %24, %26 : vector<256x128xf32>
    %28 = arith.truncf %27 : vector<256x128xf32> to vector<256x128xbf16>
    %c384_25 = arith.constant 384 : index
    %c0_26 = arith.constant 0 : index
    %29 = vector.load %arg5[%c384_25, %c0_26] : memref<640x128xbf16, #tpu.memory_space<vmem>>, vector<256x128xbf16>
    tpu.vector_store %arg5[%c384_25, %c0_26], %28 {strides = array<i32>} : memref<640x128xbf16, #tpu.memory_space<vmem>>, vector<256x128xbf16>,
    %c0_27 = arith.constant 0 : index
    %c1_28 = arith.constant 1 : index
    %c0_29 = arith.constant 0 : index
    %c0_30 = arith.constant 0 : index
    %30 = vector.load %arg1[%c0_27, %c1_28, %c0_29, %c0_30] : memref<1x3x64x128xf32, #tpu.memory_space<vmem>>, vector<1x1x64x128xf32>
    %31 = vector.shape_cast %30 : vector<1x1x64x128xf32> to vector<64x128xf32>
    %c0_31 = arith.constant 0 : index
    %c0_32 = arith.constant 0 : index
    %32 = vector.load %arg5[%c0_31, %c0_32] : memref<640x128xbf16, #tpu.memory_space<vmem>>, vector<64x128xbf16>
    %cst_33 = arith.constant 0.000000e+00 : f32
    %33 = vector.broadcast %cst_33 : f32 to vector<64x128xf32>
    %c0_34 = arith.constant 0 : index
    %c0_35 = arith.constant 0 : index
    %34 = vector.load %arg6[%c0_34, %c0_35] : memref<64x128xf32, #tpu.memory_space<vmem>>, vector<64x128xf32>
    tpu.vector_store %arg6[%c0_34, %c0_35], %33 {strides = array<i32>} : memref<64x128xf32, #tpu.memory_space<vmem>>, vector<64x128xf32>,
    %cst_36 = arith.constant 0.000000e+00 : f32
    %35 = vector.broadcast %cst_36 : f32 to vector<1x128xf32>
    %c0_37 = arith.constant 0 : index
    %c0_38 = arith.constant 0 : index
    %36 = vector.load %arg7[%c0_37, %c0_38] : memref<1x128xf32, #tpu.memory_space<vmem>>, vector<1x128xf32>
    tpu.vector_store %arg7[%c0_37, %c0_38], %35 {strides = array<i32>} : memref<1x128xf32, #tpu.memory_space<vmem>>, vector<1x128xf32>,
    %c0_39 = arith.constant 0 : index
    %c1_40 = arith.constant 1 : index
    %c0_41 = arith.constant 0 : index
    %c0_42 = arith.constant 0 : index
    %37 = vector.load %arg1[%c0_39, %c1_40, %c0_41, %c0_42] : memref<1x3x64x128xf32, #tpu.memory_space<vmem>>, vector<1x1x64x128xf32>
    %38 = vector.shape_cast %37 : vector<1x1x64x128xf32> to vector<64x128xf32>
    %39 = arith.truncf %38 : vector<64x128xf32> to vector<64x128xbf16>
    %cst_43 = arith.constant dense<0.000000e+00> : vector<128x128xf32>
    %40 = tpu.matmul %39, %32, %cst_43 {dimension_numbers = #tpu.dot_dimension_numbers<[0], [0], [1], [1], [0, 1, 1, 1], [], []>} : vector<64x128xbf16>, vector<64x128xbf16>, vector<128x128xf32> -> vector<128x128xf32>
    %cst_44 = arith.constant dense<0xFF800000> : vector<128xf32>
    %41 = vector.multi_reduction <maximumf>, %40, %cst_44 [1] : vector<128x128xf32> to vector<128xf32>
    %42 = vector.shape_cast %41 : vector<128xf32> to vector<128x1xf32>
    %43 = vector.broadcast %42 : vector<128x1xf32> to vector<128x128xf32>
    %44 = arith.subf %40, %43 : vector<128x128xf32>
    %45 = math.exp %44 : vector<128x128xf32>
    %cst_45 = arith.constant dense<0.000000e+00> : vector<128xf32>
    %46 = vector.multi_reduction <add>, %45, %cst_45 [1] : vector<128x128xf32> to vector<128xf32>
    %47 = vector.shape_cast %46 : vector<128xf32> to vector<128x1xf32>
    %48 = tpu.reciprocal %47 {approx = true} : vector<128x1xf32> -> vector<128x1xf32>
    %49 = arith.mulf %47, %48 : vector<128x1xf32>
    %cst_46 = arith.constant 2.000000e+00 : f32
    %50 = vector.broadcast %cst_46 : f32 to vector<128x1xf32>
    %51 = arith.subf %50, %49 : vector<128x1xf32>
    %52 = arith.mulf %48, %51 : vector<128x1xf32>
    %53 = vector.broadcast %52 : vector<128x1xf32> to vector<128x128xf32>
    %54 = arith.mulf %45, %53 : vector<128x128xf32>
    %c64 = arith.constant 64 : index
    %c0_47 = arith.constant 0 : index
    %55 = vector.load %arg5[%c64, %c0_47] : memref<640x128xbf16, #tpu.memory_space<vmem>>, vector<64x128xbf16>
    %c0_48 = arith.constant 0 : index
    %c0_49 = arith.constant 0 : index
    %56 = vector.load %arg6[%c0_48, %c0_49] : memref<64x128xf32, #tpu.memory_space<vmem>>, vector<64x128xf32>
    %57 = arith.truncf %54 : vector<128x128xf32> to vector<128x128xbf16>
    %cst_50 = arith.constant dense<0.000000e+00> : vector<64x128xf32>
    %58 = tpu.matmul %55, %57, %cst_50 {dimension_numbers = #tpu.dot_dimension_numbers<[1], [0], [0], [1], [0, 0, 1, 1], [], []>} : vector<64x128xbf16>, vector<128x128xbf16>, vector<64x128xf32> -> vector<64x128xf32>
    %59 = arith.addf %56, %58 : vector<64x128xf32>
    %c0_51 = arith.constant 0 : index
    %c0_52 = arith.constant 0 : index
    %60 = vector.load %arg6[%c0_51, %c0_52] : memref<64x128xf32, #tpu.memory_space<vmem>>, vector<64x128xf32>
    tpu.vector_store %arg6[%c0_51, %c0_52], %59 {strides = array<i32>} : memref<64x128xf32, #tpu.memory_space<vmem>>, vector<64x128xf32>,
    %c0_53 = arith.constant 0 : index
    %c0_54 = arith.constant 0 : index
    %61 = vector.load %arg7[%c0_53, %c0_54] : memref<1x128xf32, #tpu.memory_space<vmem>>, vector<1x128xf32>
    %cst_55 = arith.constant dense<0.000000e+00> : vector<128xf32>
    %62 = vector.multi_reduction <add>, %54, %cst_55 [0] : vector<128x128xf32> to vector<128xf32>
    %63 = vector.shape_cast %62 : vector<128xf32> to vector<1x128xf32>
    %64 = arith.addf %61, %63 : vector<1x128xf32>
    %c0_56 = arith.constant 0 : index
    %c0_57 = arith.constant 0 : index
    %65 = vector.load %arg7[%c0_56, %c0_57] : memref<1x128xf32, #tpu.memory_space<vmem>>, vector<1x128xf32>
    tpu.vector_store %arg7[%c0_56, %c0_57], %64 {strides = array<i32>} : memref<1x128xf32, #tpu.memory_space<vmem>>, vector<1x128xf32>,
    %c0_58 = arith.constant 0 : index
    %c0_59 = arith.constant 0 : index
    %66 = vector.load %arg6[%c0_58, %c0_59] : memref<64x128xf32, #tpu.memory_space<vmem>>, vector<64x128xf32>
    %c0_60 = arith.constant 0 : index
    %c0_61 = arith.constant 0 : index
    %67 = vector.load %arg7[%c0_60, %c0_61] : memref<1x128xf32, #tpu.memory_space<vmem>>, vector<1x128xf32>
    %cst_62 = arith.constant 1.000000e-07 : f32
    %68 = vector.broadcast %cst_62 : f32 to vector<1x128xf32>
    %69 = arith.addf %68, %67 : vector<1x128xf32>
    %70 = tpu.reciprocal %69 {approx = true} : vector<1x128xf32> -> vector<1x128xf32>
    %71 = arith.mulf %69, %70 : vector<1x128xf32>
    %cst_63 = arith.constant 2.000000e+00 : f32
    %72 = vector.broadcast %cst_63 : f32 to vector<1x128xf32>
    %73 = arith.subf %72, %71 : vector<1x128xf32>
    %74 = arith.mulf %70, %73 : vector<1x128xf32>
    %75 = vector.broadcast %74 : vector<1x128xf32> to vector<64x128xf32>
    %76 = arith.mulf %66, %75 : vector<64x128xf32>
    %c640 = arith.constant 640 : index
    %c0_64 = arith.constant 0 : index
    %77 = vector.load %arg2[%c640, %c0_64] : memref<960x64xbf16, #tpu.memory_space<vmem>>, vector<64x64xbf16>
    %78 = arith.subf %31, %76 : vector<64x128xf32>
    %79 = arith.truncf %78 : vector<64x128xf32> to vector<64x128xbf16>
    %cst_65 = arith.constant dense<0.000000e+00> : vector<64x128xf32>
    %80 = tpu.matmul %77, %79, %cst_65 {dimension_numbers = #tpu.dot_dimension_numbers<[1], [0], [0], [1], [0, 0, 1, 1], [], []>} : vector<64x64xbf16>, vector<64x128xbf16>, vector<64x128xf32> -> vector<64x128xf32>
    %c640_66 = arith.constant 640 : index
    %c0_67 = arith.constant 0 : index
    %81 = vector.load %arg3[%c640_66, %c0_67] : memref<960x1xf32, #tpu.memory_space<vmem>>, vector<64x1xf32>
    %82 = vector.broadcast %81 : vector<64x1xf32> to vector<64x128xf32>
    %83 = arith.addf %80, %82 : vector<64x128xf32>
    %cst_68 = arith.constant 0.000000e+00 : f32
    %84 = vector.broadcast %cst_68 : f32 to vector<64x128xf32>
    %85 = arith.maximumf %83, %84 : vector<64x128xf32>
    %86 = arith.addf %31, %85 : vector<64x128xf32>
    %c0_69 = arith.constant 0 : index
    %c0_70 = arith.constant 0 : index
    %c0_71 = arith.constant 0 : index
    %c0_72 = arith.constant 0 : index
    %87 = vector.load %arg1[%c0_69, %c0_70, %c0_71, %c0_72] : memref<1x3x64x128xf32, #tpu.memory_space<vmem>>, vector<1x1x64x128xf32>
    %88 = vector.shape_cast %87 : vector<1x1x64x128xf32> to vector<64x128xf32>
    %c128_73 = arith.constant 128 : index
    %c0_74 = arith.constant 0 : index
    %89 = vector.load %arg5[%c128_73, %c0_74] : memref<640x128xbf16, #tpu.memory_space<vmem>>, vector<64x128xbf16>
    %cst_75 = arith.constant 0.000000e+00 : f32
    %90 = vector.broadcast %cst_75 : f32 to vector<64x128xf32>
    %c0_76 = arith.constant 0 : index
    %c0_77 = arith.constant 0 : index
    %91 = vector.load %arg6[%c0_76, %c0_77] : memref<64x128xf32, #tpu.memory_space<vmem>>, vector<64x128xf32>
    tpu.vector_store %arg6[%c0_76, %c0_77], %90 {strides = array<i32>} : memref<64x128xf32, #tpu.memory_space<vmem>>, vector<64x128xf32>,
    %cst_78 = arith.constant 0.000000e+00 : f32
    %92 = vector.broadcast %cst_78 : f32 to vector<1x128xf32>
    %c0_79 = arith.constant 0 : index
    %c0_80 = arith.constant 0 : index
    %93 = vector.load %arg7[%c0_79, %c0_80] : memref<1x128xf32, #tpu.memory_space<vmem>>, vector<1x128xf32>
    tpu.vector_store %arg7[%c0_79, %c0_80], %92 {strides = array<i32>} : memref<1x128xf32, #tpu.memory_space<vmem>>, vector<1x128xf32>,
    %c0_81 = arith.constant 0 : index
    %c0_82 = arith.constant 0 : index
    %c0_83 = arith.constant 0 : index
    %c0_84 = arith.constant 0 : index
    %94 = vector.load %arg1[%c0_81, %c0_82, %c0_83, %c0_84] : memref<1x3x64x128xf32, #tpu.memory_space<vmem>>, vector<1x1x64x128xf32>
    %95 = vector.shape_cast %94 : vector<1x1x64x128xf32> to vector<64x128xf32>
    %96 = arith.truncf %95 : vector<64x128xf32> to vector<64x128xbf16>
    %cst_85 = arith.constant dense<0.000000e+00> : vector<128x128xf32>
    %97 = tpu.matmul %96, %89, %cst_85 {dimension_numbers = #tpu.dot_dimension_numbers<[0], [0], [1], [1], [0, 1, 1, 1], [], []>} : vector<64x128xbf16>, vector<64x128xbf16>, vector<128x128xf32> -> vector<128x128xf32>
    %cst_86 = arith.constant dense<0xFF800000> : vector<128xf32>
    %98 = vector.multi_reduction <maximumf>, %97, %cst_86 [1] : vector<128x128xf32> to vector<128xf32>
    %99 = vector.shape_cast %98 : vector<128xf32> to vector<128x1xf32>
    %100 = vector.broadcast %99 : vector<128x1xf32> to vector<128x128xf32>
    %101 = arith.subf %97, %100 : vector<128x128xf32>
    %102 = math.exp %101 : vector<128x128xf32>
    %cst_87 = arith.constant dense<0.000000e+00> : vector<128xf32>
    %103 = vector.multi_reduction <add>, %102, %cst_87 [1] : vector<128x128xf32> to vector<128xf32>
    %104 = vector.shape_cast %103 : vector<128xf32> to vector<128x1xf32>
    %105 = tpu.reciprocal %104 {approx = true} : vector<128x1xf32> -> vector<128x1xf32>
    %106 = arith.mulf %104, %105 : vector<128x1xf32>
    %cst_88 = arith.constant 2.000000e+00 : f32
    %107 = vector.broadcast %cst_88 : f32 to vector<128x1xf32>
    %108 = arith.subf %107, %106 : vector<128x1xf32>
    %109 = arith.mulf %105, %108 : vector<128x1xf32>
    %110 = vector.broadcast %109 : vector<128x1xf32> to vector<128x128xf32>
    %111 = arith.mulf %102, %110 : vector<128x128xf32>
    %c256 = arith.constant 256 : index
    %c0_89 = arith.constant 0 : index
    %112 = vector.load %arg5[%c256, %c0_89] : memref<640x128xbf16, #tpu.memory_space<vmem>>, vector<64x128xbf16>
    %c0_90 = arith.constant 0 : index
    %c0_91 = arith.constant 0 : index
    %113 = vector.load %arg6[%c0_90, %c0_91] : memref<64x128xf32, #tpu.memory_space<vmem>>, vector<64x128xf32>
    %114 = arith.truncf %111 : vector<128x128xf32> to vector<128x128xbf16>
    %cst_92 = arith.constant dense<0.000000e+00> : vector<64x128xf32>
    %115 = tpu.matmul %112, %114, %cst_92 {dimension_numbers = #tpu.dot_dimension_numbers<[1], [0], [0], [1], [0, 0, 1, 1], [], []>} : vector<64x128xbf16>, vector<128x128xbf16>, vector<64x128xf32> -> vector<64x128xf32>
    %116 = arith.addf %113, %115 : vector<64x128xf32>
    %c0_93 = arith.constant 0 : index
    %c0_94 = arith.constant 0 : index
    %117 = vector.load %arg6[%c0_93, %c0_94] : memref<64x128xf32, #tpu.memory_space<vmem>>, vector<64x128xf32>
    tpu.vector_store %arg6[%c0_93, %c0_94], %116 {strides = array<i32>} : memref<64x128xf32, #tpu.memory_space<vmem>>, vector<64x128xf32>,
    %c0_95 = arith.constant 0 : index
    %c0_96 = arith.constant 0 : index
    %118 = vector.load %arg7[%c0_95, %c0_96] : memref<1x128xf32, #tpu.memory_space<vmem>>, vector<1x128xf32>
    %cst_97 = arith.constant dense<0.000000e+00> : vector<128xf32>
    %119 = vector.multi_reduction <add>, %111, %cst_97 [0] : vector<128x128xf32> to vector<128xf32>
    %120 = vector.shape_cast %119 : vector<128xf32> to vector<1x128xf32>
    %121 = arith.addf %118, %120 : vector<1x128xf32>
    %c0_98 = arith.constant 0 : index
    %c0_99 = arith.constant 0 : index
    %122 = vector.load %arg7[%c0_98, %c0_99] : memref<1x128xf32, #tpu.memory_space<vmem>>, vector<1x128xf32>
    tpu.vector_store %arg7[%c0_98, %c0_99], %121 {strides = array<i32>} : memref<1x128xf32, #tpu.memory_space<vmem>>, vector<1x128xf32>,
    %c0_100 = arith.constant 0 : index
    %c0_101 = arith.constant 0 : index
    %123 = vector.load %arg6[%c0_100, %c0_101] : memref<64x128xf32, #tpu.memory_space<vmem>>, vector<64x128xf32>
    %c0_102 = arith.constant 0 : index
    %c0_103 = arith.constant 0 : index
    %124 = vector.load %arg7[%c0_102, %c0_103] : memref<1x128xf32, #tpu.memory_space<vmem>>, vector<1x128xf32>
    %cst_104 = arith.constant 1.000000e-07 : f32
    %125 = vector.broadcast %cst_104 : f32 to vector<1x128xf32>
    %126 = arith.addf %125, %124 : vector<1x128xf32>
    %127 = tpu.reciprocal %126 {approx = true} : vector<1x128xf32> -> vector<1x128xf32>
    %128 = arith.mulf %126, %127 : vector<1x128xf32>
    %cst_105 = arith.constant 2.000000e+00 : f32
    %129 = vector.broadcast %cst_105 : f32 to vector<1x128xf32>
    %130 = arith.subf %129, %128 : vector<1x128xf32>
    %131 = arith.mulf %127, %130 : vector<1x128xf32>
    %132 = vector.broadcast %131 : vector<1x128xf32> to vector<64x128xf32>
    %133 = arith.mulf %123, %132 : vector<64x128xf32>
    %c704 = arith.constant 704 : index
    %c0_106 = arith.constant 0 : index
    %134 = vector.load %arg2[%c704, %c0_106] : memref<960x64xbf16, #tpu.memory_space<vmem>>, vector<64x64xbf16>
    %135 = arith.subf %88, %133 : vector<64x128xf32>
    %136 = arith.truncf %135 : vector<64x128xf32> to vector<64x128xbf16>
    %cst_107 = arith.constant dense<0.000000e+00> : vector<64x128xf32>
    %137 = tpu.matmul %134, %136, %cst_107 {dimension_numbers = #tpu.dot_dimension_numbers<[1], [0], [0], [1], [0, 0, 1, 1], [], []>} : vector<64x64xbf16>, vector<64x128xbf16>, vector<64x128xf32> -> vector<64x128xf32>
    %c704_108 = arith.constant 704 : index
    %c0_109 = arith.constant 0 : index
    %138 = vector.load %arg3[%c704_108, %c0_109] : memref<960x1xf32, #tpu.memory_space<vmem>>, vector<64x1xf32>
    %139 = vector.broadcast %138 : vector<64x1xf32> to vector<64x128xf32>
    %140 = arith.addf %137, %139 : vector<64x128xf32>
    %cst_110 = arith.constant 0.000000e+00 : f32
    %141 = vector.broadcast %cst_110 : f32 to vector<64x128xf32>
    %142 = arith.maximumf %140, %141 : vector<64x128xf32>
    %143 = arith.addf %88, %142 : vector<64x128xf32>
    %c0_111 = arith.constant 0 : index
    %c2_112 = arith.constant 2 : index
    %c0_113 = arith.constant 0 : index
    %c0_114 = arith.constant 0 : index
    %144 = vector.load %arg1[%c0_111, %c2_112, %c0_113, %c0_114] : memref<1x3x64x128xf32, #tpu.memory_space<vmem>>, vector<1x1x64x128xf32>
    %145 = vector.shape_cast %144 : vector<1x1x64x128xf32> to vector<64x128xf32>
    %c384_115 = arith.constant 384 : index
    %c0_116 = arith.constant 0 : index
    %146 = vector.load %arg5[%c384_115, %c0_116] : memref<640x128xbf16, #tpu.memory_space<vmem>>, vector<64x128xbf16>
    %cst_117 = arith.constant 0.000000e+00 : f32
    %147 = vector.broadcast %cst_117 : f32 to vector<64x128xf32>
    %c0_118 = arith.constant 0 : index
    %c0_119 = arith.constant 0 : index
    %148 = vector.load %arg6[%c0_118, %c0_119] : memref<64x128xf32, #tpu.memory_space<vmem>>, vector<64x128xf32>
    tpu.vector_store %arg6[%c0_118, %c0_119], %147 {strides = array<i32>} : memref<64x128xf32, #tpu.memory_space<vmem>>, vector<64x128xf32>,
    %cst_120 = arith.constant 0.000000e+00 : f32
    %149 = vector.broadcast %cst_120 : f32 to vector<1x128xf32>
    %c0_121 = arith.constant 0 : index
    %c0_122 = arith.constant 0 : index
    %150 = vector.load %arg7[%c0_121, %c0_122] : memref<1x128xf32, #tpu.memory_space<vmem>>, vector<1x128xf32>
    tpu.vector_store %arg7[%c0_121, %c0_122], %149 {strides = array<i32>} : memref<1x128xf32, #tpu.memory_space<vmem>>, vector<1x128xf32>,
    %c0_123 = arith.constant 0 : index
    %c2_124 = arith.constant 2 : index
    %c0_125 = arith.constant 0 : index
    %c0_126 = arith.constant 0 : index
    %151 = vector.load %arg1[%c0_123, %c2_124, %c0_125, %c0_126] : memref<1x3x64x128xf32, #tpu.memory_space<vmem>>, vector<1x1x64x128xf32>
    %152 = vector.shape_cast %151 : vector<1x1x64x128xf32> to vector<64x128xf32>
    %153 = arith.truncf %152 : vector<64x128xf32> to vector<64x128xbf16>
    %cst_127 = arith.constant dense<0.000000e+00> : vector<128x128xf32>
    %154 = tpu.matmul %153, %146, %cst_127 {dimension_numbers = #tpu.dot_dimension_numbers<[0], [0], [1], [1], [0, 1, 1, 1], [], []>} : vector<64x128xbf16>, vector<64x128xbf16>, vector<128x128xf32> -> vector<128x128xf32>
    %cst_128 = arith.constant dense<0xFF800000> : vector<128xf32>
    %155 = vector.multi_reduction <maximumf>, %154, %cst_128 [1] : vector<128x128xf32> to vector<128xf32>
    %156 = vector.shape_cast %155 : vector<128xf32> to vector<128x1xf32>
    %157 = vector.broadcast %156 : vector<128x1xf32> to vector<128x128xf32>
    %158 = arith.subf %154, %157 : vector<128x128xf32>
    %159 = math.exp %158 : vector<128x128xf32>
    %cst_129 = arith.constant dense<0.000000e+00> : vector<128xf32>
    %160 = vector.multi_reduction <add>, %159, %cst_129 [1] : vector<128x128xf32> to vector<128xf32>
    %161 = vector.shape_cast %160 : vector<128xf32> to vector<128x1xf32>
    %162 = tpu.reciprocal %161 {approx = true} : vector<128x1xf32> -> vector<128x1xf32>
    %163 = arith.mulf %161, %162 : vector<128x1xf32>
    %cst_130 = arith.constant 2.000000e+00 : f32
    %164 = vector.broadcast %cst_130 : f32 to vector<128x1xf32>
    %165 = arith.subf %164, %163 : vector<128x1xf32>
    %166 = arith.mulf %162, %165 : vector<128x1xf32>
    %167 = vector.broadcast %166 : vector<128x1xf32> to vector<128x128xf32>
    %168 = arith.mulf %159, %167 : vector<128x128xf32>
    %c512 = arith.constant 512 : index
    %c0_131 = arith.constant 0 : index
    %169 = vector.load %arg5[%c512, %c0_131] : memref<640x128xbf16, #tpu.memory_space<vmem>>, vector<64x128xbf16>
    %c0_132 = arith.constant 0 : index
    %c0_133 = arith.constant 0 : index
    %170 = vector.load %arg6[%c0_132, %c0_133] : memref<64x128xf32, #tpu.memory_space<vmem>>, vector<64x128xf32>
    %171 = arith.truncf %168 : vector<128x128xf32> to vector<128x128xbf16>
    %cst_134 = arith.constant dense<0.000000e+00> : vector<64x128xf32>
    %172 = tpu.matmul %169, %171, %cst_134 {dimension_numbers = #tpu.dot_dimension_numbers<[1], [0], [0], [1], [0, 0, 1, 1], [], []>} : vector<64x128xbf16>, vector<128x128xbf16>, vector<64x128xf32> -> vector<64x128xf32>
    %173 = arith.addf %170, %172 : vector<64x128xf32>
    %c0_135 = arith.constant 0 : index
    %c0_136 = arith.constant 0 : index
    %174 = vector.load %arg6[%c0_135, %c0_136] : memref<64x128xf32, #tpu.memory_space<vmem>>, vector<64x128xf32>
    tpu.vector_store %arg6[%c0_135, %c0_136], %173 {strides = array<i32>} : memref<64x128xf32, #tpu.memory_space<vmem>>, vector<64x128xf32>,
    %c0_137 = arith.constant 0 : index
    %c0_138 = arith.constant 0 : index
    %175 = vector.load %arg7[%c0_137, %c0_138] : memref<1x128xf32, #tpu.memory_space<vmem>>, vector<1x128xf32>
    %cst_139 = arith.constant dense<0.000000e+00> : vector<128xf32>
    %176 = vector.multi_reduction <add>, %168, %cst_139 [0] : vector<128x128xf32> to vector<128xf32>
    %177 = vector.shape_cast %176 : vector<128xf32> to vector<1x128xf32>
    %178 = arith.addf %175, %177 : vector<1x128xf32>
    %c0_140 = arith.constant 0 : index
    %c0_141 = arith.constant 0 : index
    %179 = vector.load %arg7[%c0_140, %c0_141] : memref<1x128xf32, #tpu.memory_space<vmem>>, vector<1x128xf32>
    tpu.vector_store %arg7[%c0_140, %c0_141], %178 {strides = array<i32>} : memref<1x128xf32, #tpu.memory_space<vmem>>, vector<1x128xf32>,
    %c0_142 = arith.constant 0 : index
    %c0_143 = arith.constant 0 : index
    %180 = vector.load %arg6[%c0_142, %c0_143] : memref<64x128xf32, #tpu.memory_space<vmem>>, vector<64x128xf32>
    %c0_144 = arith.constant 0 : index
    %c0_145 = arith.constant 0 : index
    %181 = vector.load %arg7[%c0_144, %c0_145] : memref<1x128xf32, #tpu.memory_space<vmem>>, vector<1x128xf32>
    %cst_146 = arith.constant 1.000000e-07 : f32
    %182 = vector.broadcast %cst_146 : f32 to vector<1x128xf32>
    %183 = arith.addf %182, %181 : vector<1x128xf32>
    %184 = tpu.reciprocal %183 {approx = true} : vector<1x128xf32> -> vector<1x128xf32>
    %185 = arith.mulf %183, %184 : vector<1x128xf32>
    %cst_147 = arith.constant 2.000000e+00 : f32
    %186 = vector.broadcast %cst_147 : f32 to vector<1x128xf32>
    %187 = arith.subf %186, %185 : vector<1x128xf32>
    %188 = arith.mulf %184, %187 : vector<1x128xf32>
    %189 = vector.broadcast %188 : vector<1x128xf32> to vector<64x128xf32>
    %190 = arith.mulf %180, %189 : vector<64x128xf32>
    %c768 = arith.constant 768 : index
    %c0_148 = arith.constant 0 : index
    %191 = vector.load %arg2[%c768, %c0_148] : memref<960x64xbf16, #tpu.memory_space<vmem>>, vector<64x64xbf16>
    %192 = arith.subf %145, %190 : vector<64x128xf32>
    %193 = arith.truncf %192 : vector<64x128xf32> to vector<64x128xbf16>
    %cst_149 = arith.constant dense<0.000000e+00> : vector<64x128xf32>
    %194 = tpu.matmul %191, %193, %cst_149 {dimension_numbers = #tpu.dot_dimension_numbers<[1], [0], [0], [1], [0, 0, 1, 1], [], []>} : vector<64x64xbf16>, vector<64x128xbf16>, vector<64x128xf32> -> vector<64x128xf32>
    %c768_150 = arith.constant 768 : index
    %c0_151 = arith.constant 0 : index
    %195 = vector.load %arg3[%c768_150, %c0_151] : memref<960x1xf32, #tpu.memory_space<vmem>>, vector<64x1xf32>
    %196 = vector.broadcast %195 : vector<64x1xf32> to vector<64x128xf32>
    %197 = arith.addf %194, %196 : vector<64x128xf32>
    %cst_152 = arith.constant 0.000000e+00 : f32
    %198 = vector.broadcast %cst_152 : f32 to vector<64x128xf32>
    %199 = arith.maximumf %197, %198 : vector<64x128xf32>
    %200 = arith.addf %145, %199 : vector<64x128xf32>
    %c0_153 = arith.constant 0 : index
    %c0_154 = arith.constant 0 : index
    %c0_155 = arith.constant 0 : index
    %c0_156 = arith.constant 0 : index
    %201 = vector.load %arg1[%c0_153, %c0_154, %c0_155, %c0_156] : memref<1x3x64x128xf32, #tpu.memory_space<vmem>>, vector<1x1x64x128xf32>
    %202 = vector.shape_cast %201 : vector<1x1x64x128xf32> to vector<64x128xf32>
    %c192 = arith.constant 192 : index
    %c0_157 = arith.constant 0 : index
    %203 = vector.load %arg5[%c192, %c0_157] : memref<640x128xbf16, #tpu.memory_space<vmem>>, vector<64x128xbf16>
    %cst_158 = arith.constant 0.000000e+00 : f32
    %204 = vector.broadcast %cst_158 : f32 to vector<64x128xf32>
    %c0_159 = arith.constant 0 : index
    %c0_160 = arith.constant 0 : index
    %205 = vector.load %arg6[%c0_159, %c0_160] : memref<64x128xf32, #tpu.memory_space<vmem>>, vector<64x128xf32>
    tpu.vector_store %arg6[%c0_159, %c0_160], %204 {strides = array<i32>} : memref<64x128xf32, #tpu.memory_space<vmem>>, vector<64x128xf32>,
    %cst_161 = arith.constant 0.000000e+00 : f32
    %206 = vector.broadcast %cst_161 : f32 to vector<1x128xf32>
    %c0_162 = arith.constant 0 : index
    %c0_163 = arith.constant 0 : index
    %207 = vector.load %arg7[%c0_162, %c0_163] : memref<1x128xf32, #tpu.memory_space<vmem>>, vector<1x128xf32>
    tpu.vector_store %arg7[%c0_162, %c0_163], %206 {strides = array<i32>} : memref<1x128xf32, #tpu.memory_space<vmem>>, vector<1x128xf32>,
    %c0_164 = arith.constant 0 : index
    %c2_165 = arith.constant 2 : index
    %c0_166 = arith.constant 0 : index
    %c0_167 = arith.constant 0 : index
    %208 = vector.load %arg1[%c0_164, %c2_165, %c0_166, %c0_167] : memref<1x3x64x128xf32, #tpu.memory_space<vmem>>, vector<1x1x64x128xf32>
    %209 = vector.shape_cast %208 : vector<1x1x64x128xf32> to vector<64x128xf32>
    %210 = arith.truncf %209 : vector<64x128xf32> to vector<64x128xbf16>
    %cst_168 = arith.constant dense<0.000000e+00> : vector<128x128xf32>
    %211 = tpu.matmul %210, %203, %cst_168 {dimension_numbers = #tpu.dot_dimension_numbers<[0], [0], [1], [1], [0, 1, 1, 1], [], []>} : vector<64x128xbf16>, vector<64x128xbf16>, vector<128x128xf32> -> vector<128x128xf32>
    %cst_169 = arith.constant dense<0xFF800000> : vector<128xf32>
    %212 = vector.multi_reduction <maximumf>, %211, %cst_169 [1] : vector<128x128xf32> to vector<128xf32>
    %213 = vector.shape_cast %212 : vector<128xf32> to vector<128x1xf32>
    %214 = vector.broadcast %213 : vector<128x1xf32> to vector<128x128xf32>
    %215 = arith.subf %211, %214 : vector<128x128xf32>
    %216 = math.exp %215 : vector<128x128xf32>
    %cst_170 = arith.constant dense<0.000000e+00> : vector<128xf32>
    %217 = vector.multi_reduction <add>, %216, %cst_170 [1] : vector<128x128xf32> to vector<128xf32>
    %218 = vector.shape_cast %217 : vector<128xf32> to vector<128x1xf32>
    %219 = tpu.reciprocal %218 {approx = true} : vector<128x1xf32> -> vector<128x1xf32>
    %220 = arith.mulf %218, %219 : vector<128x1xf32>
    %cst_171 = arith.constant 2.000000e+00 : f32
    %221 = vector.broadcast %cst_171 : f32 to vector<128x1xf32>
    %222 = arith.subf %221, %220 : vector<128x1xf32>
    %223 = arith.mulf %219, %222 : vector<128x1xf32>
    %224 = vector.broadcast %223 : vector<128x1xf32> to vector<128x128xf32>
    %225 = arith.mulf %216, %224 : vector<128x128xf32>
    %c320 = arith.constant 320 : index
    %c0_172 = arith.constant 0 : index
    %226 = vector.load %arg5[%c320, %c0_172] : memref<640x128xbf16, #tpu.memory_space<vmem>>, vector<64x128xbf16>
    %c0_173 = arith.constant 0 : index
    %c0_174 = arith.constant 0 : index
    %227 = vector.load %arg6[%c0_173, %c0_174] : memref<64x128xf32, #tpu.memory_space<vmem>>, vector<64x128xf32>
    %228 = arith.truncf %225 : vector<128x128xf32> to vector<128x128xbf16>
    %cst_175 = arith.constant dense<0.000000e+00> : vector<64x128xf32>
    %229 = tpu.matmul %226, %228, %cst_175 {dimension_numbers = #tpu.dot_dimension_numbers<[1], [0], [0], [1], [0, 0, 1, 1], [], []>} : vector<64x128xbf16>, vector<128x128xbf16>, vector<64x128xf32> -> vector<64x128xf32>
    %230 = arith.addf %227, %229 : vector<64x128xf32>
    %c0_176 = arith.constant 0 : index
    %c0_177 = arith.constant 0 : index
    %231 = vector.load %arg6[%c0_176, %c0_177] : memref<64x128xf32, #tpu.memory_space<vmem>>, vector<64x128xf32>
    tpu.vector_store %arg6[%c0_176, %c0_177], %230 {strides = array<i32>} : memref<64x128xf32, #tpu.memory_space<vmem>>, vector<64x128xf32>,
    %c0_178 = arith.constant 0 : index
    %c0_179 = arith.constant 0 : index
    %232 = vector.load %arg7[%c0_178, %c0_179] : memref<1x128xf32, #tpu.memory_space<vmem>>, vector<1x128xf32>
    %cst_180 = arith.constant dense<0.000000e+00> : vector<128xf32>
    %233 = vector.multi_reduction <add>, %225, %cst_180 [0] : vector<128x128xf32> to vector<128xf32>
    %234 = vector.shape_cast %233 : vector<128xf32> to vector<1x128xf32>
    %235 = arith.addf %232, %234 : vector<1x128xf32>
    %c0_181 = arith.constant 0 : index
    %c0_182 = arith.constant 0 : index
    %236 = vector.load %arg7[%c0_181, %c0_182] : memref<1x128xf32, #tpu.memory_space<vmem>>, vector<1x128xf32>
    tpu.vector_store %arg7[%c0_181, %c0_182], %235 {strides = array<i32>} : memref<1x128xf32, #tpu.memory_space<vmem>>, vector<1x128xf32>,
    %c0_183 = arith.constant 0 : index
    %c0_184 = arith.constant 0 : index
    %237 = vector.load %arg6[%c0_183, %c0_184] : memref<64x128xf32, #tpu.memory_space<vmem>>, vector<64x128xf32>
    %c0_185 = arith.constant 0 : index
    %c0_186 = arith.constant 0 : index
    %238 = vector.load %arg7[%c0_185, %c0_186] : memref<1x128xf32, #tpu.memory_space<vmem>>, vector<1x128xf32>
    %cst_187 = arith.constant 1.000000e-07 : f32
    %239 = vector.broadcast %cst_187 : f32 to vector<1x128xf32>
    %240 = arith.addf %239, %238 : vector<1x128xf32>
    %241 = tpu.reciprocal %240 {approx = true} : vector<1x128xf32> -> vector<1x128xf32>
    %242 = arith.mulf %240, %241 : vector<1x128xf32>
    %cst_188 = arith.constant 2.000000e+00 : f32
    %243 = vector.broadcast %cst_188 : f32 to vector<1x128xf32>
    %244 = arith.subf %243, %242 : vector<1x128xf32>
    %245 = arith.mulf %241, %244 : vector<1x128xf32>
    %246 = vector.broadcast %245 : vector<1x128xf32> to vector<64x128xf32>
    %247 = arith.mulf %237, %246 : vector<64x128xf32>
    %c832 = arith.constant 832 : index
    %c0_189 = arith.constant 0 : index
    %248 = vector.load %arg2[%c832, %c0_189] : memref<960x64xbf16, #tpu.memory_space<vmem>>, vector<64x64xbf16>
    %249 = arith.subf %202, %247 : vector<64x128xf32>
    %250 = arith.truncf %249 : vector<64x128xf32> to vector<64x128xbf16>
    %cst_190 = arith.constant dense<0.000000e+00> : vector<64x128xf32>
    %251 = tpu.matmul %248, %250, %cst_190 {dimension_numbers = #tpu.dot_dimension_numbers<[1], [0], [0], [1], [0, 0, 1, 1], [], []>} : vector<64x64xbf16>, vector<64x128xbf16>, vector<64x128xf32> -> vector<64x128xf32>
    %c832_191 = arith.constant 832 : index
    %c0_192 = arith.constant 0 : index
    %252 = vector.load %arg3[%c832_191, %c0_192] : memref<960x1xf32, #tpu.memory_space<vmem>>, vector<64x1xf32>
    %253 = vector.broadcast %252 : vector<64x1xf32> to vector<64x128xf32>
    %254 = arith.addf %251, %253 : vector<64x128xf32>
    %cst_193 = arith.constant 0.000000e+00 : f32
    %255 = vector.broadcast %cst_193 : f32 to vector<64x128xf32>
    %256 = arith.maximumf %254, %255 : vector<64x128xf32>
    %257 = arith.addf %202, %256 : vector<64x128xf32>
    %c0_194 = arith.constant 0 : index
    %c2_195 = arith.constant 2 : index
    %c0_196 = arith.constant 0 : index
    %c0_197 = arith.constant 0 : index
    %258 = vector.load %arg1[%c0_194, %c2_195, %c0_196, %c0_197] : memref<1x3x64x128xf32, #tpu.memory_space<vmem>>, vector<1x1x64x128xf32>
    %259 = vector.shape_cast %258 : vector<1x1x64x128xf32> to vector<64x128xf32>
    %c448 = arith.constant 448 : index
    %c0_198 = arith.constant 0 : index
    %260 = vector.load %arg5[%c448, %c0_198] : memref<640x128xbf16, #tpu.memory_space<vmem>>, vector<64x128xbf16>
    %cst_199 = arith.constant 0.000000e+00 : f32
    %261 = vector.broadcast %cst_199 : f32 to vector<64x128xf32>
    %c0_200 = arith.constant 0 : index
    %c0_201 = arith.constant 0 : index
    %262 = vector.load %arg6[%c0_200, %c0_201] : memref<64x128xf32, #tpu.memory_space<vmem>>, vector<64x128xf32>
    tpu.vector_store %arg6[%c0_200, %c0_201], %261 {strides = array<i32>} : memref<64x128xf32, #tpu.memory_space<vmem>>, vector<64x128xf32>,
    %cst_202 = arith.constant 0.000000e+00 : f32
    %263 = vector.broadcast %cst_202 : f32 to vector<1x128xf32>
    %c0_203 = arith.constant 0 : index
    %c0_204 = arith.constant 0 : index
    %264 = vector.load %arg7[%c0_203, %c0_204] : memref<1x128xf32, #tpu.memory_space<vmem>>, vector<1x128xf32>
    tpu.vector_store %arg7[%c0_203, %c0_204], %263 {strides = array<i32>} : memref<1x128xf32, #tpu.memory_space<vmem>>, vector<1x128xf32>,
    %c0_205 = arith.constant 0 : index
    %c0_206 = arith.constant 0 : index
    %c0_207 = arith.constant 0 : index
    %c0_208 = arith.constant 0 : index
    %265 = vector.load %arg1[%c0_205, %c0_206, %c0_207, %c0_208] : memref<1x3x64x128xf32, #tpu.memory_space<vmem>>, vector<1x1x64x128xf32>
    %266 = vector.shape_cast %265 : vector<1x1x64x128xf32> to vector<64x128xf32>
    %267 = arith.truncf %266 : vector<64x128xf32> to vector<64x128xbf16>
    %cst_209 = arith.constant dense<0.000000e+00> : vector<128x128xf32>
    %268 = tpu.matmul %267, %260, %cst_209 {dimension_numbers = #tpu.dot_dimension_numbers<[0], [0], [1], [1], [0, 1, 1, 1], [], []>} : vector<64x128xbf16>, vector<64x128xbf16>, vector<128x128xf32> -> vector<128x128xf32>
    %cst_210 = arith.constant dense<0xFF800000> : vector<128xf32>
    %269 = vector.multi_reduction <maximumf>, %268, %cst_210 [1] : vector<128x128xf32> to vector<128xf32>
    %270 = vector.shape_cast %269 : vector<128xf32> to vector<128x1xf32>
    %271 = vector.broadcast %270 : vector<128x1xf32> to vector<128x128xf32>
    %272 = arith.subf %268, %271 : vector<128x128xf32>
    %273 = math.exp %272 : vector<128x128xf32>
    %cst_211 = arith.constant dense<0.000000e+00> : vector<128xf32>
    %274 = vector.multi_reduction <add>, %273, %cst_211 [1] : vector<128x128xf32> to vector<128xf32>
    %275 = vector.shape_cast %274 : vector<128xf32> to vector<128x1xf32>
    %276 = tpu.reciprocal %275 {approx = true} : vector<128x1xf32> -> vector<128x1xf32>
    %277 = arith.mulf %275, %276 : vector<128x1xf32>
    %cst_212 = arith.constant 2.000000e+00 : f32
    %278 = vector.broadcast %cst_212 : f32 to vector<128x1xf32>
    %279 = arith.subf %278, %277 : vector<128x1xf32>
    %280 = arith.mulf %276, %279 : vector<128x1xf32>
    %281 = vector.broadcast %280 : vector<128x1xf32> to vector<128x128xf32>
    %282 = arith.mulf %273, %281 : vector<128x128xf32>
    %c576 = arith.constant 576 : index
    %c0_213 = arith.constant 0 : index
    %283 = vector.load %arg5[%c576, %c0_213] : memref<640x128xbf16, #tpu.memory_space<vmem>>, vector<64x128xbf16>
    %c0_214 = arith.constant 0 : index
    %c0_215 = arith.constant 0 : index
    %284 = vector.load %arg6[%c0_214, %c0_215] : memref<64x128xf32, #tpu.memory_space<vmem>>, vector<64x128xf32>
    %285 = arith.truncf %282 : vector<128x128xf32> to vector<128x128xbf16>
    %cst_216 = arith.constant dense<0.000000e+00> : vector<64x128xf32>
    %286 = tpu.matmul %283, %285, %cst_216 {dimension_numbers = #tpu.dot_dimension_numbers<[1], [0], [0], [1], [0, 0, 1, 1], [], []>} : vector<64x128xbf16>, vector<128x128xbf16>, vector<64x128xf32> -> vector<64x128xf32>
    %287 = arith.addf %284, %286 : vector<64x128xf32>
    %c0_217 = arith.constant 0 : index
    %c0_218 = arith.constant 0 : index
    %288 = vector.load %arg6[%c0_217, %c0_218] : memref<64x128xf32, #tpu.memory_space<vmem>>, vector<64x128xf32>
    tpu.vector_store %arg6[%c0_217, %c0_218], %287 {strides = array<i32>} : memref<64x128xf32, #tpu.memory_space<vmem>>, vector<64x128xf32>,
    %c0_219 = arith.constant 0 : index
    %c0_220 = arith.constant 0 : index
    %289 = vector.load %arg7[%c0_219, %c0_220] : memref<1x128xf32, #tpu.memory_space<vmem>>, vector<1x128xf32>
    %cst_221 = arith.constant dense<0.000000e+00> : vector<128xf32>
    %290 = vector.multi_reduction <add>, %282, %cst_221 [0] : vector<128x128xf32> to vector<128xf32>
    %291 = vector.shape_cast %290 : vector<128xf32> to vector<1x128xf32>
    %292 = arith.addf %289, %291 : vector<1x128xf32>
    %c0_222 = arith.constant 0 : index
    %c0_223 = arith.constant 0 : index
    %293 = vector.load %arg7[%c0_222, %c0_223] : memref<1x128xf32, #tpu.memory_space<vmem>>, vector<1x128xf32>
    tpu.vector_store %arg7[%c0_222, %c0_223], %292 {strides = array<i32>} : memref<1x128xf32, #tpu.memory_space<vmem>>, vector<1x128xf32>,
    %c0_224 = arith.constant 0 : index
    %c0_225 = arith.constant 0 : index
    %294 = vector.load %arg6[%c0_224, %c0_225] : memref<64x128xf32, #tpu.memory_space<vmem>>, vector<64x128xf32>
    %c0_226 = arith.constant 0 : index
    %c0_227 = arith.constant 0 : index
    %295 = vector.load %arg7[%c0_226, %c0_227] : memref<1x128xf32, #tpu.memory_space<vmem>>, vector<1x128xf32>
    %cst_228 = arith.constant 1.000000e-07 : f32
    %296 = vector.broadcast %cst_228 : f32 to vector<1x128xf32>
    %297 = arith.addf %296, %295 : vector<1x128xf32>
    %298 = tpu.reciprocal %297 {approx = true} : vector<1x128xf32> -> vector<1x128xf32>
    %299 = arith.mulf %297, %298 : vector<1x128xf32>
    %cst_229 = arith.constant 2.000000e+00 : f32
    %300 = vector.broadcast %cst_229 : f32 to vector<1x128xf32>
    %301 = arith.subf %300, %299 : vector<1x128xf32>
    %302 = arith.mulf %298, %301 : vector<1x128xf32>
    %303 = vector.broadcast %302 : vector<1x128xf32> to vector<64x128xf32>
    %304 = arith.mulf %294, %303 : vector<64x128xf32>
    %c896 = arith.constant 896 : index
    %c0_230 = arith.constant 0 : index
    %305 = vector.load %arg2[%c896, %c0_230] : memref<960x64xbf16, #tpu.memory_space<vmem>>, vector<64x64xbf16>
    %306 = arith.subf %259, %304 : vector<64x128xf32>
    %307 = arith.truncf %306 : vector<64x128xf32> to vector<64x128xbf16>
    %cst_231 = arith.constant dense<0.000000e+00> : vector<64x128xf32>
    %308 = tpu.matmul %305, %307, %cst_231 {dimension_numbers = #tpu.dot_dimension_numbers<[1], [0], [0], [1], [0, 0, 1, 1], [], []>} : vector<64x64xbf16>, vector<64x128xbf16>, vector<64x128xf32> -> vector<64x128xf32>
    %c896_232 = arith.constant 896 : index
    %c0_233 = arith.constant 0 : index
    %309 = vector.load %arg3[%c896_232, %c0_233] : memref<960x1xf32, #tpu.memory_space<vmem>>, vector<64x1xf32>
    %310 = vector.broadcast %309 : vector<64x1xf32> to vector<64x128xf32>
    %311 = arith.addf %308, %310 : vector<64x128xf32>
    %cst_234 = arith.constant 0.000000e+00 : f32
    %312 = vector.broadcast %cst_234 : f32 to vector<64x128xf32>
    %313 = arith.maximumf %311, %312 : vector<64x128xf32>
    %314 = arith.addf %259, %313 : vector<64x128xf32>
    %cst_235 = arith.constant 5.000000e-01 : f32
    %315 = vector.broadcast %cst_235 : f32 to vector<64x128xf32>
    %316 = arith.mulf %315, %86 : vector<64x128xf32>
    %317 = math.tanh %316 : vector<64x128xf32>
    %cst_236 = arith.constant 1.000000e+00 : f32
    %318 = vector.broadcast %cst_236 : f32 to vector<64x128xf32>
    %319 = arith.addf %318, %317 : vector<64x128xf32>
    %cst_237 = arith.constant 5.000000e-01 : f32
    %320 = vector.broadcast %cst_237 : f32 to vector<64x128xf32>
    %321 = arith.mulf %320, %319 : vector<64x128xf32>
    %cst_238 = arith.constant 5.000000e-01 : f32
    %322 = vector.broadcast %cst_238 : f32 to vector<64x128xf32>
    %323 = arith.mulf %322, %257 : vector<64x128xf32>
    %324 = math.tanh %323 : vector<64x128xf32>
    %cst_239 = arith.constant 1.000000e+00 : f32
    %325 = vector.broadcast %cst_239 : f32 to vector<64x128xf32>
    %326 = arith.addf %325, %324 : vector<64x128xf32>
    %cst_240 = arith.constant 5.000000e-01 : f32
    %327 = vector.broadcast %cst_240 : f32 to vector<64x128xf32>
    %328 = arith.mulf %327, %326 : vector<64x128xf32>
    %329 = arith.mulf %143, %328 : vector<64x128xf32>
    %330 = math.tanh %329 : vector<64x128xf32>
    %cst_241 = arith.constant 5.000000e-01 : f32
    %331 = vector.broadcast %cst_241 : f32 to vector<64x128xf32>
    %332 = arith.mulf %331, %314 : vector<64x128xf32>
    %333 = math.tanh %332 : vector<64x128xf32>
    %cst_242 = arith.constant 1.000000e+00 : f32
    %334 = vector.broadcast %cst_242 : f32 to vector<64x128xf32>
    %335 = arith.addf %334, %333 : vector<64x128xf32>
    %cst_243 = arith.constant 5.000000e-01 : f32
    %336 = vector.broadcast %cst_243 : f32 to vector<64x128xf32>
    %337 = arith.mulf %336, %335 : vector<64x128xf32>
    %338 = arith.mulf %200, %337 : vector<64x128xf32>
    %339 = math.tanh %338 : vector<64x128xf32>
    %340 = arith.addf %330, %339 : vector<64x128xf32>
    %341 = arith.mulf %340, %321 : vector<64x128xf32>
    %cst_244 = arith.constant 5.000000e-01 : f32
    %342 = vector.broadcast %cst_244 : f32 to vector<64x128xf32>
    %343 = arith.mulf %342, %341 : vector<64x128xf32>
    %344 = math.tanh %343 : vector<64x128xf32>
    %cst_245 = arith.constant 1.000000e+00 : f32
    %345 = vector.broadcast %cst_245 : f32 to vector<64x128xf32>
    %346 = arith.addf %345, %344 : vector<64x128xf32>
    %cst_246 = arith.constant 5.000000e-01 : f32
    %347 = vector.broadcast %cst_246 : f32 to vector<64x128xf32>
    %348 = arith.mulf %347, %346 : vector<64x128xf32>
    %c0_247 = arith.constant 0 : index
    %c1_248 = arith.constant 1 : index
    %c0_249 = arith.constant 0 : index
    %c0_250 = arith.constant 0 : index
    %349 = vector.load %arg1[%c0_247, %c1_248, %c0_249, %c0_250] : memref<1x3x64x128xf32, #tpu.memory_space<vmem>>, vector<1x1x64x128xf32>
    %350 = vector.shape_cast %349 : vector<1x1x64x128xf32> to vector<64x128xf32>
    %351 = math.tanh %86 : vector<64x128xf32>
    %352 = arith.mulf %348, %351 : vector<64x128xf32>
    %353 = arith.addf %350, %352 : vector<64x128xf32>
    %c0_251 = arith.constant 0 : index
    %c0_252 = arith.constant 0 : index
    %c0_253 = arith.constant 0 : index
    %354 = vector.load %arg4[%c0_251, %c0_252, %c0_253] : memref<1x64x128xf32, #tpu.memory_space<vmem>>, vector<1x64x128xf32>
    %355 = vector.shape_cast %354 : vector<1x64x128xf32> to vector<64x128xf32>
    %356 = vector.shape_cast %353 : vector<64x128xf32> to vector<1x64x128xf32>
    tpu.vector_store %arg4[%c0_251, %c0_252, %c0_253], %356 {strides = array<i32>} : memref<1x64x128xf32, #tpu.memory_space<vmem>>, vector<1x64x128xf32>,
    return
  }
  func.func @transform_0(%arg0: i32) -> (i32, i32, i32, i32) {
    %c0_i32 = arith.constant 0 : i32
    %c0_i32_0 = arith.constant 0 : i32
    %c0_i32_1 = arith.constant 0 : i32
    %c0_i32_2 = arith.constant 0 : i32
    return %arg0, %c0_i32, %c0_i32_0, %c0_i32_1 : i32, i32, i32, i32
  }
  func.func @transform_1(%arg0: i32) -> (i32, i32) {
    %c0_i32 = arith.constant 0 : i32
    %c0_i32_0 = arith.constant 0 : i32
    %c0_i32_1 = arith.constant 0 : i32
    return %c0_i32, %c0_i32_0 : i32, i32
  }
  func.func @transform_2(%arg0: i32) -> (i32, i32) {
    %c0_i32 = arith.constant 0 : i32
    %c0_i32_0 = arith.constant 0 : i32
    %c0_i32_1 = arith.constant 0 : i32
    return %c0_i32, %c0_i32_0 : i32, i32
  }
  func.func @transform_3(%arg0: i32) -> (i32, i32, i32) {
    %c0_i32 = arith.constant 0 : i32
    %c0_i32_0 = arith.constant 0 : i32
    %c0_i32_1 = arith.constant 0 : i32
    return %arg0, %c0_i32, %c0_i32_0 : i32, i32, i32
  }
}

module attributes {stable_mosaic.version = 11 : i64} {
  func.func @sta_kernel(%arg0: i32, %arg1: memref<1x3x64x128xf32, #tpu.memory_space<vmem>>, %arg2: memref<960x64xbf16, #tpu.memory_space<vmem>>, %arg3: memref<960x1xf32, #tpu.memory_space<vmem>>, %arg4: memref<1x64x128xf32, #tpu.memory_space<vmem>>, %arg5: memref<640x128xbf16, #tpu.memory_space<vmem>>, %arg6: memref<64x128xf32, #tpu.memory_space<vmem>>, %arg7: memref<1x128xf32, #tpu.memory_space<vmem>>) attributes {dimension_semantics = [#tpu.dimension_semantics<parallel>], iteration_bounds = array<i64: 2>, scalar_prefetch = 0 : i64, scratch_operands = 3 : i64, tpu.core_type = #tpu.core_type<tc>, window_params = [{transform_indices = @transform_0, window_bounds = array<i64: 1, 3, 64, 128>}, {pipeline_mode = #tpu.pipeline_mode<synchronous>, transform_indices = @transform_1, window_bounds = array<i64: 960, 64>}, {pipeline_mode = #tpu.pipeline_mode<synchronous>, transform_indices = @transform_2, window_bounds = array<i64: 960, 1>}, {transform_indices = @transform_3, window_bounds = array<i64: 1, 64, 128>}]} {
    %c0 = arith.constant 0 : index
    %c0_0 = arith.constant 0 : index
    %0 = vector.load %arg2[%c0, %c0_0] : memref<960x64xbf16, #tpu.memory_space<vmem>>, vector<128x64xbf16>
    %c0_1 = arith.constant 0 : index
    %c1 = arith.constant 1 : index
    %c0_2 = arith.constant 0 : index
    %c0_3 = arith.constant 0 : index
    %1 = vector.load %arg1[%c0_1, %c1, %c0_2, %c0_3] : memref<1x3x64x128xf32, #tpu.memory_space<vmem>>, vector<1x1x64x128xf32>
    %2 = vector.shape_cast %1 : vector<1x1x64x128xf32> to vector<64x128xf32>
    %3 = arith.truncf %2 : vector<64x128xf32> to vector<64x128xbf16>
    %cst = arith.constant dense<0.000000e+00> : vector<128x128xf32>
    %4 = tpu.matmul %0, %3, %cst {dimension_numbers = #tpu.dot_dimension_numbers<[1], [0], [0], [1], [0, 0, 1, 1], [], []>} : vector<128x64xbf16>, vector<64x128xbf16>, vector<128x128xf32> -> vector<128x128xf32>
    %c0_4 = arith.constant 0 : index
    %c0_5 = arith.constant 0 : index
    %5 = vector.load %arg3[%c0_4, %c0_5] : memref<960x1xf32, #tpu.memory_space<vmem>>, vector<128x1xf32>
    %6 = vector.broadcast %5 : vector<128x1xf32> to vector<128x128xf32>
    %7 = arith.addf %4, %6 : vector<128x128xf32>
    %8 = arith.truncf %7 : vector<128x128xf32> to vector<128x128xbf16>
    %c0_6 = arith.constant 0 : index
    %c0_7 = arith.constant 0 : index
    %9 = vector.load %arg5[%c0_6, %c0_7] : memref<640x128xbf16, #tpu.memory_space<vmem>>, vector<128x128xbf16>
    tpu.vector_store %arg5[%c0_6, %c0_7], %8 {strides = array<i32>} : memref<640x128xbf16, #tpu.memory_space<vmem>>, vector<128x128xbf16>,
    %c128 = arith.constant 128 : index
    %c0_8 = arith.constant 0 : index
    %10 = vector.load %arg2[%c128, %c0_8] : memref<960x64xbf16, #tpu.memory_space<vmem>>, vector<256x64xbf16>
    %c0_9 = arith.constant 0 : index
    %c0_10 = arith.constant 0 : index
    %c0_11 = arith.constant 0 : index
    %c0_12 = arith.constant 0 : index
    %11 = vector.load %arg1[%c0_9, %c0_10, %c0_11, %c0_12] : memref<1x3x64x128xf32, #tpu.memory_space<vmem>>, vector<1x1x64x128xf32>
    %12 = vector.shape_cast %11 : vector<1x1x64x128xf32> to vector<64x128xf32>
    %13 = arith.truncf %12 : vector<64x128xf32> to vector<64x128xbf16>
    %cst_13 = arith.constant dense<0.000000e+00> : vector<256x128xf32>
    %14 = tpu.matmul %10, %13, %cst_13 {dimension_numbers = #tpu.dot_dimension_numbers<[1], [0], [0], [1], [0, 0, 1, 1], [], []>} : vector<256x64xbf16>, vector<64x128xbf16>, vector<256x128xf32> -> vector<256x128xf32>
    %c128_14 = arith.constant 128 : index
    %c0_15 = arith.constant 0 : index
    %15 = vector.load %arg3[%c128_14, %c0_15] : memref<960x1xf32, #tpu.memory_space<vmem>>, vector<256x1xf32>
    %16 = vector.broadcast %15 : vector<256x1xf32> to vector<256x128xf32>
    %17 = arith.addf %14, %16 : vector<256x128xf32>
    %18 = arith.truncf %17 : vector<256x128xf32> to vector<256x128xbf16>
    %c128_16 = arith.constant 128 : index
    %c0_17 = arith.constant 0 : index
    %19 = vector.load %arg5[%c128_16, %c0_17] : memref<640x128xbf16, #tpu.memory_space<vmem>>, vector<256x128xbf16>
    tpu.vector_store %arg5[%c128_16, %c0_17], %18 {strides = array<i32>} : memref<640x128xbf16, #tpu.memory_space<vmem>>, vector<256x128xbf16>,
    %c384 = arith.constant 384 : index
    %c0_18 = arith.constant 0 : index
    %20 = vector.load %arg2[%c384, %c0_18] : memref<960x64xbf16, #tpu.memory_space<vmem>>, vector<256x64xbf16>
    %c0_19 = arith.constant 0 : index
    %c2 = arith.constant 2 : index
    %c0_20 = arith.constant 0 : index
    %c0_21 = arith.constant 0 : index
    %21 = vector.load %arg1[%c0_19, %c2, %c0_20, %c0_21] : memref<1x3x64x128xf32, #tpu.memory_space<vmem>>, vector<1x1x64x128xf32>
    %22 = vector.shape_cast %21 : vector<1x1x64x128xf32> to vector<64x128xf32>
    %23 = arith.truncf %22 : vector<64x128xf32> to vector<64x128xbf16>
    %cst_22 = arith.constant dense<0.000000e+00> : vector<256x128xf32>
    %24 = tpu.matmul %20, %23, %cst_22 {dimension_numbers = #tpu.dot_dimension_numbers<[1], [0], [0], [1], [0, 0, 1, 1], [], []>} : vector<256x64xbf16>, vector<64x128xbf16>, vector<256x128xf32> -> vector<256x128xf32>
    %c384_23 = arith.constant 384 : index
    %c0_24 = arith.constant 0 : index
    %25 = vector.load %arg3[%c384_23, %c0_24] : memref<960x1xf32, #tpu.memory_space<vmem>>, vector<256x1xf32>
    %26 = vector.broadcast %25 : vector<256x1xf32> to vector<256x128xf32>
    %27 = arith.addf %24, %26 : vector<256x128xf32>
    %28 = arith.truncf %27 : vector<256x128xf32> to vector<256x128xbf16>
    %c384_25 = arith.constant 384 : index
    %c0_26 = arith.constant 0 : index
    %29 = vector.load %arg5[%c384_25, %c0_26] : memref<640x128xbf16, #tpu.memory_space<vmem>>, vector<256x128xbf16>
    tpu.vector_store %arg5[%c384_25, %c0_26], %28 {strides = array<i32>} : memref<640x128xbf16, #tpu.memory_space<vmem>>, vector<256x128xbf16>,
    %c0_27 = arith.constant 0 : index
    %c1_28 = arith.constant 1 : index
    %c0_29 = arith.constant 0 : index
    %c0_30 = arith.constant 0 : index
    %30 = vector.load %arg1[%c0_27, %c1_28, %c0_29, %c0_30] : memref<1x3x64x128xf32, #tpu.memory_space<vmem>>, vector<1x1x64x128xf32>
    %31 = vector.shape_cast %30 : vector<1x1x64x128xf32> to vector<64x128xf32>
    %c0_31 = arith.constant 0 : index
    %c0_32 = arith.constant 0 : index
    %32 = vector.load %arg5[%c0_31, %c0_32] : memref<640x128xbf16, #tpu.memory_space<vmem>>, vector<64x128xbf16>
    %cst_33 = arith.constant 0.000000e+00 : f32
    %33 = vector.broadcast %cst_33 : f32 to vector<64x128xf32>
    %c0_34 = arith.constant 0 : index
    %c0_35 = arith.constant 0 : index
    %34 = vector.load %arg6[%c0_34, %c0_35] : memref<64x128xf32, #tpu.memory_space<vmem>>, vector<64x128xf32>
    tpu.vector_store %arg6[%c0_34, %c0_35], %33 {strides = array<i32>} : memref<64x128xf32, #tpu.memory_space<vmem>>, vector<64x128xf32>,
    %cst_36 = arith.constant 0.000000e+00 : f32
    %35 = vector.broadcast %cst_36 : f32 to vector<1x128xf32>
    %c0_37 = arith.constant 0 : index
    %c0_38 = arith.constant 0 : index
    %36 = vector.load %arg7[%c0_37, %c0_38] : memref<1x128xf32, #tpu.memory_space<vmem>>, vector<1x128xf32>
    tpu.vector_store %arg7[%c0_37, %c0_38], %35 {strides = array<i32>} : memref<1x128xf32, #tpu.memory_space<vmem>>, vector<1x128xf32>,
    %c0_39 = arith.constant 0 : index
    %c1_40 = arith.constant 1 : index
    %c0_41 = arith.constant 0 : index
    %c0_42 = arith.constant 0 : index
    %37 = vector.load %arg1[%c0_39, %c1_40, %c0_41, %c0_42] : memref<1x3x64x128xf32, #tpu.memory_space<vmem>>, vector<1x1x64x128xf32>
    %38 = vector.shape_cast %37 : vector<1x1x64x128xf32> to vector<64x128xf32>
    %39 = arith.truncf %38 : vector<64x128xf32> to vector<64x128xbf16>
    %cst_43 = arith.constant dense<0.000000e+00> : vector<128x128xf32>
    %40 = tpu.matmul %39, %32, %cst_43 {dimension_numbers = #tpu.dot_dimension_numbers<[0], [0], [1], [1], [0, 1, 1, 1], [], []>} : vector<64x128xbf16>, vector<64x128xbf16>, vector<128x128xf32> -> vector<128x128xf32>
    %cst_44 = arith.constant dense<0xFF800000> : vector<128xf32>
    %41 = vector.multi_reduction <maximumf>, %40, %cst_44 [1] : vector<128x128xf32> to vector<128xf32>
    %42 = vector.shape_cast %41 : vector<128xf32> to vector<128x1xf32>
    %43 = vector.broadcast %42 : vector<128x1xf32> to vector<128x128xf32>
    %44 = arith.subf %40, %43 : vector<128x128xf32>
    %45 = math.exp %44 : vector<128x128xf32>
    %cst_45 = arith.constant dense<0.000000e+00> : vector<128xf32>
    %46 = vector.multi_reduction <add>, %45, %cst_45 [1] : vector<128x128xf32> to vector<128xf32>
    %47 = vector.shape_cast %46 : vector<128xf32> to vector<128x1xf32>
    %48 = tpu.reciprocal %47 {approx = true} : vector<128x1xf32> -> vector<128x1xf32>
    %49 = arith.mulf %47, %48 : vector<128x1xf32>
    %cst_46 = arith.constant 2.000000e+00 : f32
    %50 = vector.broadcast %cst_46 : f32 to vector<128x1xf32>
    %51 = arith.subf %50, %49 : vector<128x1xf32>
    %52 = arith.mulf %48, %51 : vector<128x1xf32>
    %53 = vector.broadcast %52 : vector<128x1xf32> to vector<128x128xf32>
    %54 = arith.mulf %45, %53 : vector<128x128xf32>
    %c64 = arith.constant 64 : index
    %c0_47 = arith.constant 0 : index
    %55 = vector.load %arg5[%c64, %c0_47] : memref<640x128xbf16, #tpu.memory_space<vmem>>, vector<64x128xbf16>
    %c0_48 = arith.constant 0 : index
    %c0_49 = arith.constant 0 : index
    %56 = vector.load %arg6[%c0_48, %c0_49] : memref<64x128xf32, #tpu.memory_space<vmem>>, vector<64x128xf32>
    %57 = arith.truncf %54 : vector<128x128xf32> to vector<128x128xbf16>
    %cst_50 = arith.constant dense<0.000000e+00> : vector<64x128xf32>
    %58 = tpu.matmul %55, %57, %cst_50 {dimension_numbers = #tpu.dot_dimension_numbers<[1], [0], [0], [1], [0, 0, 1, 1], [], []>} : vector<64x128xbf16>, vector<128x128xbf16>, vector<64x128xf32> -> vector<64x128xf32>
    %59 = arith.addf %56, %58 : vector<64x128xf32>
    %c0_51 = arith.constant 0 : index
    %c0_52 = arith.constant 0 : index
    %60 = vector.load %arg6[%c0_51, %c0_52] : memref<64x128xf32, #tpu.memory_space<vmem>>, vector<64x128xf32>
    tpu.vector_store %arg6[%c0_51, %c0_52], %59 {strides = array<i32>} : memref<64x128xf32, #tpu.memory_space<vmem>>, vector<64x128xf32>,
    %c0_53 = arith.constant 0 : index
    %c0_54 = arith.constant 0 : index
    %61 = vector.load %arg7[%c0_53, %c0_54] : memref<1x128xf32, #tpu.memory_space<vmem>>, vector<1x128xf32>
    %cst_55 = arith.constant dense<0.000000e+00> : vector<128xf32>
    %62 = vector.multi_reduction <add>, %54, %cst_55 [0] : vector<128x128xf32> to vector<128xf32>
    %63 = vector.shape_cast %62 : vector<128xf32> to vector<1x128xf32>
    %64 = arith.addf %61, %63 : vector<1x128xf32>
    %c0_56 = arith.constant 0 : index
    %c0_57 = arith.constant 0 : index
    %65 = vector.load %arg7[%c0_56, %c0_57] : memref<1x128xf32, #tpu.memory_space<vmem>>, vector<1x128xf32>
    tpu.vector_store %arg7[%c0_56, %c0_57], %64 {strides = array<i32>} : memref<1x128xf32, #tpu.memory_space<vmem>>, vector<1x128xf32>,
    %c0_58 = arith.constant 0 : index
    %c0_59 = arith.constant 0 : index
    %66 = vector.load %arg6[%c0_58, %c0_59] : memref<64x128xf32, #tpu.memory_space<vmem>>, vector<64x128xf32>
    %c0_60 = arith.constant 0 : index
    %c0_61 = arith.constant 0 : index
    %67 = vector.load %arg7[%c0_60, %c0_61] : memref<1x128xf32, #tpu.memory_space<vmem>>, vector<1x128xf32>
    %cst_62 = arith.constant 1.000000e-07 : f32
    %68 = vector.broadcast %cst_62 : f32 to vector<1x128xf32>
    %69 = arith.addf %68, %67 : vector<1x128xf32>
    %70 = tpu.reciprocal %69 {approx = true} : vector<1x128xf32> -> vector<1x128xf32>
    %71 = arith.mulf %69, %70 : vector<1x128xf32>
    %cst_63 = arith.constant 2.000000e+00 : f32
    %72 = vector.broadcast %cst_63 : f32 to vector<1x128xf32>
    %73 = arith.subf %72, %71 : vector<1x128xf32>
    %74 = arith.mulf %70, %73 : vector<1x128xf32>
    %75 = vector.broadcast %74 : vector<1x128xf32> to vector<64x128xf32>
    %76 = arith.mulf %66, %75 : vector<64x128xf32>
    %c640 = arith.constant 640 : index
    %c0_64 = arith.constant 0 : index
    %77 = vector.load %arg2[%c640, %c0_64] : memref<960x64xbf16, #tpu.memory_space<vmem>>, vector<64x64xbf16>
    %78 = arith.subf %31, %76 : vector<64x128xf32>
    %79 = arith.truncf %78 : vector<64x128xf32> to vector<64x128xbf16>
    %cst_65 = arith.constant dense<0.000000e+00> : vector<64x128xf32>
    %80 = tpu.matmul %77, %79, %cst_65 {dimension_numbers = #tpu.dot_dimension_numbers<[1], [0], [0], [1], [0, 0, 1, 1], [], []>} : vector<64x64xbf16>, vector<64x128xbf16>, vector<64x128xf32> -> vector<64x128xf32>
    %c640_66 = arith.constant 640 : index
    %c0_67 = arith.constant 0 : index
    %81 = vector.load %arg3[%c640_66, %c0_67] : memref<960x1xf32, #tpu.memory_space<vmem>>, vector<64x1xf32>
    %82 = vector.broadcast %81 : vector<64x1xf32> to vector<64x128xf32>
    %83 = arith.addf %80, %82 : vector<64x128xf32>
    %cst_68 = arith.constant 0.000000e+00 : f32
    %84 = vector.broadcast %cst_68 : f32 to vector<64x128xf32>
    %85 = arith.maximumf %83, %84 : vector<64x128xf32>
    %86 = arith.addf %31, %85 : vector<64x128xf32>
    %c0_69 = arith.constant 0 : index
    %c0_70 = arith.constant 0 : index
    %c0_71 = arith.constant 0 : index
    %c0_72 = arith.constant 0 : index
    %87 = vector.load %arg1[%c0_69, %c0_70, %c0_71, %c0_72] : memref<1x3x64x128xf32, #tpu.memory_space<vmem>>, vector<1x1x64x128xf32>
    %88 = vector.shape_cast %87 : vector<1x1x64x128xf32> to vector<64x128xf32>
    %c128_73 = arith.constant 128 : index
    %c0_74 = arith.constant 0 : index
    %89 = vector.load %arg5[%c128_73, %c0_74] : memref<640x128xbf16, #tpu.memory_space<vmem>>, vector<64x128xbf16>
    %cst_75 = arith.constant 0.000000e+00 : f32
    %90 = vector.broadcast %cst_75 : f32 to vector<64x128xf32>
    %c0_76 = arith.constant 0 : index
    %c0_77 = arith.constant 0 : index
    %91 = vector.load %arg6[%c0_76, %c0_77] : memref<64x128xf32, #tpu.memory_space<vmem>>, vector<64x128xf32>
    tpu.vector_store %arg6[%c0_76, %c0_77], %90 {strides = array<i32>} : memref<64x128xf32, #tpu.memory_space<vmem>>, vector<64x128xf32>,
    %cst_78 = arith.constant 0.000000e+00 : f32
    %92 = vector.broadcast %cst_78 : f32 to vector<1x128xf32>
    %c0_79 = arith.constant 0 : index
    %c0_80 = arith.constant 0 : index
    %93 = vector.load %arg7[%c0_79, %c0_80] : memref<1x128xf32, #tpu.memory_space<vmem>>, vector<1x128xf32>
    tpu.vector_store %arg7[%c0_79, %c0_80], %92 {strides = array<i32>} : memref<1x128xf32, #tpu.memory_space<vmem>>, vector<1x128xf32>,
    %c0_81 = arith.constant 0 : index
    %c0_82 = arith.constant 0 : index
    %c0_83 = arith.constant 0 : index
    %c0_84 = arith.constant 0 : index
    %94 = vector.load %arg1[%c0_81, %c0_82, %c0_83, %c0_84] : memref<1x3x64x128xf32, #tpu.memory_space<vmem>>, vector<1x1x64x128xf32>
    %95 = vector.shape_cast %94 : vector<1x1x64x128xf32> to vector<64x128xf32>
    %96 = arith.truncf %95 : vector<64x128xf32> to vector<64x128xbf16>
    %cst_85 = arith.constant dense<0.000000e+00> : vector<128x128xf32>
    %97 = tpu.matmul %96, %89, %cst_85 {dimension_numbers = #tpu.dot_dimension_numbers<[0], [0], [1], [1], [0, 1, 1, 1], [], []>} : vector<64x128xbf16>, vector<64x128xbf16>, vector<128x128xf32> -> vector<128x128xf32>
    %cst_86 = arith.constant dense<0xFF800000> : vector<128xf32>
    %98 = vector.multi_reduction <maximumf>, %97, %cst_86 [1] : vector<128x128xf32> to vector<128xf32>
    %99 = vector.shape_cast %98 : vector<128xf32> to vector<128x1xf32>
    %100 = vector.broadcast %99 : vector<128x1xf32> to vector<128x128xf32>
    %101 = arith.subf %97, %100 : vector<128x128xf32>
    %102 = math.exp %101 : vector<128x128xf32>
    %cst_87 = arith.constant dense<0.000000e+00> : vector<128xf32>
    %103 = vector.multi_reduction <add>, %102, %cst_87 [1] : vector<128x128xf32> to vector<128xf32>
    %104 = vector.shape_cast %103 : vector<128xf32> to vector<128x1xf32>
    %105 = tpu.reciprocal %104 {approx = true} : vector<128x1xf32> -> vector<128x1xf32>
    %106 = arith.mulf %104, %105 : vector<128x1xf32>
    %cst_88 = arith.constant 2.000000e+00 : f32
    %107 = vector.broadcast %cst_88 : f32 to vector<128x1xf32>
    %108 = arith.subf %107, %106 : vector<128x1xf32>
    %109 = arith.mulf %105, %108 : vector<128x1xf32>
    %110 = vector.broadcast %109 : vector<128x1xf32> to vector<128x128xf32>
    %111 = arith.mulf %102, %110 : vector<128x128xf32>
    %c256 = arith.constant 256 : index
    %c0_89 = arith.constant 0 : index
    %112 = vector.load %arg5[%c256, %c0_89] : memref<640x128xbf16, #tpu.memory_space<vmem>>, vector<64x128xbf16>
    %c0_90 = arith.constant 0 : index
    %c0_91 = arith.constant 0 : index
    %113 = vector.load %arg6[%c0_90, %c0_91] : memref<64x128xf32, #tpu.memory_space<vmem>>, vector<64x128xf32>
    %114 = arith.truncf %111 : vector<128x128xf32> to vector<128x128xbf16>
    %cst_92 = arith.constant dense<0.000000e+00> : vector<64x128xf32>
    %115 = tpu.matmul %112, %114, %cst_92 {dimension_numbers = #tpu.dot_dimension_numbers<[1], [0], [0], [1], [0, 0, 1, 1], [], []>} : vector<64x128xbf16>, vector<128x128xbf16>, vector<64x128xf32> -> vector<64x128xf32>
    %116 = arith.addf %113, %115 : vector<64x128xf32>
    %c0_93 = arith.constant 0 : index
    %c0_94 = arith.constant 0 : index
    %117 = vector.load %arg6[%c0_93, %c0_94] : memref<64x128xf32, #tpu.memory_space<vmem>>, vector<64x128xf32>
    tpu.vector_store %arg6[%c0_93, %c0_94], %116 {strides = array<i32>} : memref<64x128xf32, #tpu.memory_space<vmem>>, vector<64x128xf32>,
    %c0_95 = arith.constant 0 : index
    %c0_96 = arith.constant 0 : index
    %118 = vector.load %arg7[%c0_95, %c0_96] : memref<1x128xf32, #tpu.memory_space<vmem>>, vector<1x128xf32>
    %cst_97 = arith.constant dense<0.000000e+00> : vector<128xf32>
    %119 = vector.multi_reduction <add>, %111, %cst_97 [0] : vector<128x128xf32> to vector<128xf32>
    %120 = vector.shape_cast %119 : vector<128xf32> to vector<1x128xf32>
    %121 = arith.addf %118, %120 : vector<1x128xf32>
    %c0_98 = arith.constant 0 : index
    %c0_99 = arith.constant 0 : index
    %122 = vector.load %arg7[%c0_98, %c0_99] : memref<1x128xf32, #tpu.memory_space<vmem>>, vector<1x128xf32>
    tpu.vector_store %arg7[%c0_98, %c0_99], %121 {strides = array<i32>} : memref<1x128xf32, #tpu.memory_space<vmem>>, vector<1x128xf32>,
    %c0_100 = arith.constant 0 : index
    %c0_101 = arith.constant 0 : index
    %123 = vector.load %arg6[%c0_100, %c0_101] : memref<64x128xf32, #tpu.memory_space<vmem>>, vector<64x128xf32>
    %c0_102 = arith.constant 0 : index
    %c0_103 = arith.constant 0 : index
    %124 = vector.load %arg7[%c0_102, %c0_103] : memref<1x128xf32, #tpu.memory_space<vmem>>, vector<1x128xf32>
    %cst_104 = arith.constant 1.000000e-07 : f32
    %125 = vector.broadcast %cst_104 : f32 to vector<1x128xf32>
    %126 = arith.addf %125, %124 : vector<1x128xf32>
    %127 = tpu.reciprocal %126 {approx = true} : vector<1x128xf32> -> vector<1x128xf32>
    %128 = arith.mulf %126, %127 : vector<1x128xf32>
    %cst_105 = arith.constant 2.000000e+00 : f32
    %129 = vector.broadcast %cst_105 : f32 to vector<1x128xf32>
    %130 = arith.subf %129, %128 : vector<1x128xf32>
    %131 = arith.mulf %127, %130 : vector<1x128xf32>
    %132 = vector.broadcast %131 : vector<1x128xf32> to vector<64x128xf32>
    %133 = arith.mulf %123, %132 : vector<64x128xf32>
    %c704 = arith.constant 704 : index
    %c0_106 = arith.constant 0 : index
    %134 = vector.load %arg2[%c704, %c0_106] : memref<960x64xbf16, #tpu.memory_space<vmem>>, vector<64x64xbf16>
    %135 = arith.subf %88, %133 : vector<64x128xf32>
    %136 = arith.truncf %135 : vector<64x128xf32> to vector<64x128xbf16>
    %cst_107 = arith.constant dense<0.000000e+00> : vector<64x128xf32>
    %137 = tpu.matmul %134, %136, %cst_107 {dimension_numbers = #tpu.dot_dimension_numbers<[1], [0], [0], [1], [0, 0, 1, 1], [], []>} : vector<64x64xbf16>, vector<64x128xbf16>, vector<64x128xf32> -> vector<64x128xf32>
    %c704_108 = arith.constant 704 : index
    %c0_109 = arith.constant 0 : index
    %138 = vector.load %arg3[%c704_108, %c0_109] : memref<960x1xf32, #tpu.memory_space<vmem>>, vector<64x1xf32>
    %139 = vector.broadcast %138 : vector<64x1xf32> to vector<64x128xf32>
    %140 = arith.addf %137, %139 : vector<64x128xf32>
    %cst_110 = arith.constant 0.000000e+00 : f32
    %141 = vector.broadcast %cst_110 : f32 to vector<64x128xf32>
    %142 = arith.maximumf %140, %141 : vector<64x128xf32>
    %143 = arith.addf %88, %142 : vector<64x128xf32>
    %c0_111 = arith.constant 0 : index
    %c2_112 = arith.constant 2 : index
    %c0_113 = arith.constant 0 : index
    %c0_114 = arith.constant 0 : index
    %144 = vector.load %arg1[%c0_111, %c2_112, %c0_113, %c0_114] : memref<1x3x64x128xf32, #tpu.memory_space<vmem>>, vector<1x1x64x128xf32>
    %145 = vector.shape_cast %144 : vector<1x1x64x128xf32> to vector<64x128xf32>
    %c384_115 = arith.constant 384 : index
    %c0_116 = arith.constant 0 : index
    %146 = vector.load %arg5[%c384_115, %c0_116] : memref<640x128xbf16, #tpu.memory_space<vmem>>, vector<64x128xbf16>
    %cst_117 = arith.constant 0.000000e+00 : f32
    %147 = vector.broadcast %cst_117 : f32 to vector<64x128xf32>
    %c0_118 = arith.constant 0 : index
    %c0_119 = arith.constant 0 : index
    %148 = vector.load %arg6[%c0_118, %c0_119] : memref<64x128xf32, #tpu.memory_space<vmem>>, vector<64x128xf32>
    tpu.vector_store %arg6[%c0_118, %c0_119], %147 {strides = array<i32>} : memref<64x128xf32, #tpu.memory_space<vmem>>, vector<64x128xf32>,
    %cst_120 = arith.constant 0.000000e+00 : f32
    %149 = vector.broadcast %cst_120 : f32 to vector<1x128xf32>
    %c0_121 = arith.constant 0 : index
    %c0_122 = arith.constant 0 : index
    %150 = vector.load %arg7[%c0_121, %c0_122] : memref<1x128xf32, #tpu.memory_space<vmem>>, vector<1x128xf32>
    tpu.vector_store %arg7[%c0_121, %c0_122], %149 {strides = array<i32>} : memref<1x128xf32, #tpu.memory_space<vmem>>, vector<1x128xf32>,
    %c0_123 = arith.constant 0 : index
    %c2_124 = arith.constant 2 : index
    %c0_125 = arith.constant 0 : index
    %c0_126 = arith.constant 0 : index
    %151 = vector.load %arg1[%c0_123, %c2_124, %c0_125, %c0_126] : memref<1x3x64x128xf32, #tpu.memory_space<vmem>>, vector<1x1x64x128xf32>
    %152 = vector.shape_cast %151 : vector<1x1x64x128xf32> to vector<64x128xf32>
    %153 = arith.truncf %152 : vector<64x128xf32> to vector<64x128xbf16>
    %cst_127 = arith.constant dense<0.000000e+00> : vector<128x128xf32>
    %154 = tpu.matmul %153, %146, %cst_127 {dimension_numbers = #tpu.dot_dimension_numbers<[0], [0], [1], [1], [0, 1, 1, 1], [], []>} : vector<64x128xbf16>, vector<64x128xbf16>, vector<128x128xf32> -> vector<128x128xf32>
    %cst_128 = arith.constant dense<0xFF800000> : vector<128xf32>
    %155 = vector.multi_reduction <maximumf>, %154, %cst_128 [1] : vector<128x128xf32> to vector<128xf32>
    %156 = vector.shape_cast %155 : vector<128xf32> to vector<128x1xf32>
    %157 = vector.broadcast %156 : vector<128x1xf32> to vector<128x128xf32>
    %158 = arith.subf %154, %157 : vector<128x128xf32>
    %159 = math.exp %158 : vector<128x128xf32>
    %cst_129 = arith.constant dense<0.000000e+00> : vector<128xf32>
    %160 = vector.multi_reduction <add>, %159, %cst_129 [1] : vector<128x128xf32> to vector<128xf32>
    %161 = vector.shape_cast %160 : vector<128xf32> to vector<128x1xf32>
    %162 = tpu.reciprocal %161 {approx = true} : vector<128x1xf32> -> vector<128x1xf32>
    %163 = arith.mulf %161, %162 : vector<128x1xf32>
    %cst_130 = arith.constant 2.000000e+00 : f32
    %164 = vector.broadcast %cst_130 : f32 to vector<128x1xf32>
    %165 = arith.subf %164, %163 : vector<128x1xf32>
    %166 = arith.mulf %162, %165 : vector<128x1xf32>
    %167 = vector.broadcast %166 : vector<128x1xf32> to vector<128x128xf32>
    %168 = arith.mulf %159, %167 : vector<128x128xf32>
    %c512 = arith.constant 512 : index
    %c0_131 = arith.constant 0 : index
    %169 = vector.load %arg5[%c512, %c0_131] : memref<640x128xbf16, #tpu.memory_space<vmem>>, vector<64x128xbf16>
    %c0_132 = arith.constant 0 : index
    %c0_133 = arith.constant 0 : index
    %170 = vector.load %arg6[%c0_132, %c0_133] : memref<64x128xf32, #tpu.memory_space<vmem>>, vector<64x128xf32>
    %171 = arith.truncf %168 : vector<128x128xf32> to vector<128x128xbf16>
    %cst_134 = arith.constant dense<0.000000e+00> : vector<64x128xf32>
    %172 = tpu.matmul %169, %171, %cst_134 {dimension_numbers = #tpu.dot_dimension_numbers<[1], [0], [0], [1], [0, 0, 1, 1], [], []>} : vector<64x128xbf16>, vector<128x128xbf16>, vector<64x128xf32> -> vector<64x128xf32>
    %173 = arith.addf %170, %172 : vector<64x128xf32>
    %c0_135 = arith.constant 0 : index
    %c0_136 = arith.constant 0 : index
    %174 = vector.load %arg6[%c0_135, %c0_136] : memref<64x128xf32, #tpu.memory_space<vmem>>, vector<64x128xf32>
    tpu.vector_store %arg6[%c0_135, %c0_136], %173 {strides = array<i32>} : memref<64x128xf32, #tpu.memory_space<vmem>>, vector<64x128xf32>,
    %c0_137 = arith.constant 0 : index
    %c0_138 = arith.constant 0 : index
    %175 = vector.load %arg7[%c0_137, %c0_138] : memref<1x128xf32, #tpu.memory_space<vmem>>, vector<1x128xf32>
    %cst_139 = arith.constant dense<0.000000e+00> : vector<128xf32>
    %176 = vector.multi_reduction <add>, %168, %cst_139 [0] : vector<128x128xf32> to vector<128xf32>
    %177 = vector.shape_cast %176 : vector<128xf32> to vector<1x128xf32>
    %178 = arith.addf %175, %177 : vector<1x128xf32>
    %c0_140 = arith.constant 0 : index
    %c0_141 = arith.constant 0 : index
    %179 = vector.load %arg7[%c0_140, %c0_141] : memref<1x128xf32, #tpu.memory_space<vmem>>, vector<1x128xf32>
    tpu.vector_store %arg7[%c0_140, %c0_141], %178 {strides = array<i32>} : memref<1x128xf32, #tpu.memory_space<vmem>>, vector<1x128xf32>,
    %c0_142 = arith.constant 0 : index
    %c0_143 = arith.constant 0 : index
    %180 = vector.load %arg6[%c0_142, %c0_143] : memref<64x128xf32, #tpu.memory_space<vmem>>, vector<64x128xf32>
    %c0_144 = arith.constant 0 : index
    %c0_145 = arith.constant 0 : index
    %181 = vector.load %arg7[%c0_144, %c0_145] : memref<1x128xf32, #tpu.memory_space<vmem>>, vector<1x128xf32>
    %cst_146 = arith.constant 1.000000e-07 : f32
    %182 = vector.broadcast %cst_146 : f32 to vector<1x128xf32>
    %183 = arith.addf %182, %181 : vector<1x128xf32>
    %184 = tpu.reciprocal %183 {approx = true} : vector<1x128xf32> -> vector<1x128xf32>
    %185 = arith.mulf %183, %184 : vector<1x128xf32>
    %cst_147 = arith.constant 2.000000e+00 : f32
    %186 = vector.broadcast %cst_147 : f32 to vector<1x128xf32>
    %187 = arith.subf %186, %185 : vector<1x128xf32>
    %188 = arith.mulf %184, %187 : vector<1x128xf32>
    %189 = vector.broadcast %188 : vector<1x128xf32> to vector<64x128xf32>
    %190 = arith.mulf %180, %189 : vector<64x128xf32>
    %c768 = arith.constant 768 : index
    %c0_148 = arith.constant 0 : index
    %191 = vector.load %arg2[%c768, %c0_148] : memref<960x64xbf16, #tpu.memory_space<vmem>>, vector<64x64xbf16>
    %192 = arith.subf %145, %190 : vector<64x128xf32>
    %193 = arith.truncf %192 : vector<64x128xf32> to vector<64x128xbf16>
    %cst_149 = arith.constant dense<0.000000e+00> : vector<64x128xf32>
    %194 = tpu.matmul %191, %193, %cst_149 {dimension_numbers = #tpu.dot_dimension_numbers<[1], [0], [0], [1], [0, 0, 1, 1], [], []>} : vector<64x64xbf16>, vector<64x128xbf16>, vector<64x128xf32> -> vector<64x128xf32>
    %c768_150 = arith.constant 768 : index
    %c0_151 = arith.constant 0 : index
    %195 = vector.load %arg3[%c768_150, %c0_151] : memref<960x1xf32, #tpu.memory_space<vmem>>, vector<64x1xf32>
    %196 = vector.broadcast %195 : vector<64x1xf32> to vector<64x128xf32>
    %197 = arith.addf %194, %196 : vector<64x128xf32>
    %cst_152 = arith.constant 0.000000e+00 : f32
    %198 = vector.broadcast %cst_152 : f32 to vector<64x128xf32>
    %199 = arith.maximumf %197, %198 : vector<64x128xf32>
    %200 = arith.addf %145, %199 : vector<64x128xf32>
    %c0_153 = arith.constant 0 : index
    %c0_154 = arith.constant 0 : index
    %c0_155 = arith.constant 0 : index
    %c0_156 = arith.constant 0 : index
    %201 = vector.load %arg1[%c0_153, %c0_154, %c0_155, %c0_156] : memref<1x3x64x128xf32, #tpu.memory_space<vmem>>, vector<1x1x64x128xf32>
    %202 = vector.shape_cast %201 : vector<1x1x64x128xf32> to vector<64x128xf32>
    %c192 = arith.constant 192 : index
    %c0_157 = arith.constant 0 : index
    %203 = vector.load %arg5[%c192, %c0_157] : memref<640x128xbf16, #tpu.memory_space<vmem>>, vector<64x128xbf16>
    %cst_158 = arith.constant 0.000000e+00 : f32
    %204 = vector.broadcast %cst_158 : f32 to vector<64x128xf32>
    %c0_159 = arith.constant 0 : index
    %c0_160 = arith.constant 0 : index
    %205 = vector.load %arg6[%c0_159, %c0_160] : memref<64x128xf32, #tpu.memory_space<vmem>>, vector<64x128xf32>
    tpu.vector_store %arg6[%c0_159, %c0_160], %204 {strides = array<i32>} : memref<64x128xf32, #tpu.memory_space<vmem>>, vector<64x128xf32>,
    %cst_161 = arith.constant 0.000000e+00 : f32
    %206 = vector.broadcast %cst_161 : f32 to vector<1x128xf32>
    %c0_162 = arith.constant 0 : index
    %c0_163 = arith.constant 0 : index
    %207 = vector.load %arg7[%c0_162, %c0_163] : memref<1x128xf32, #tpu.memory_space<vmem>>, vector<1x128xf32>
    tpu.vector_store %arg7[%c0_162, %c0_163], %206 {strides = array<i32>} : memref<1x128xf32, #tpu.memory_space<vmem>>, vector<1x128xf32>,
    %c0_164 = arith.constant 0 : index
    %c2_165 = arith.constant 2 : index
    %c0_166 = arith.constant 0 : index
    %c0_167 = arith.constant 0 : index
    %208 = vector.load %arg1[%c0_164, %c2_165, %c0_166, %c0_167] : memref<1x3x64x128xf32, #tpu.memory_space<vmem>>, vector<1x1x64x128xf32>
    %209 = vector.shape_cast %208 : vector<1x1x64x128xf32> to vector<64x128xf32>
    %210 = arith.truncf %209 : vector<64x128xf32> to vector<64x128xbf16>
    %cst_168 = arith.constant dense<0.000000e+00> : vector<128x128xf32>
    %211 = tpu.matmul %210, %203, %cst_168 {dimension_numbers = #tpu.dot_dimension_numbers<[0], [0], [1], [1], [0, 1, 1, 1], [], []>} : vector<64x128xbf16>, vector<64x128xbf16>, vector<128x128xf32> -> vector<128x128xf32>
    %cst_169 = arith.constant dense<0xFF800000> : vector<128xf32>
    %212 = vector.multi_reduction <maximumf>, %211, %cst_169 [1] : vector<128x128xf32> to vector<128xf32>
    %213 = vector.shape_cast %212 : vector<128xf32> to vector<128x1xf32>
    %214 = vector.broadcast %213 : vector<128x1xf32> to vector<128x128xf32>
    %215 = arith.subf %211, %214 : vector<128x128xf32>
    %216 = math.exp %215 : vector<128x128xf32>
    %cst_170 = arith.constant dense<0.000000e+00> : vector<128xf32>
    %217 = vector.multi_reduction <add>, %216, %cst_170 [1] : vector<128x128xf32> to vector<128xf32>
    %218 = vector.shape_cast %217 : vector<128xf32> to vector<128x1xf32>
    %219 = tpu.reciprocal %218 {approx = true} : vector<128x1xf32> -> vector<128x1xf32>
    %220 = arith.mulf %218, %219 : vector<128x1xf32>
    %cst_171 = arith.constant 2.000000e+00 : f32
    %221 = vector.broadcast %cst_171 : f32 to vector<128x1xf32>
    %222 = arith.subf %221, %220 : vector<128x1xf32>
    %223 = arith.mulf %219, %222 : vector<128x1xf32>
    %224 = vector.broadcast %223 : vector<128x1xf32> to vector<128x128xf32>
    %225 = arith.mulf %216, %224 : vector<128x128xf32>
    %c320 = arith.constant 320 : index
    %c0_172 = arith.constant 0 : index
    %226 = vector.load %arg5[%c320, %c0_172] : memref<640x128xbf16, #tpu.memory_space<vmem>>, vector<64x128xbf16>
    %c0_173 = arith.constant 0 : index
    %c0_174 = arith.constant 0 : index
    %227 = vector.load %arg6[%c0_173, %c0_174] : memref<64x128xf32, #tpu.memory_space<vmem>>, vector<64x128xf32>
    %228 = arith.truncf %225 : vector<128x128xf32> to vector<128x128xbf16>
    %cst_175 = arith.constant dense<0.000000e+00> : vector<64x128xf32>
    %229 = tpu.matmul %226, %228, %cst_175 {dimension_numbers = #tpu.dot_dimension_numbers<[1], [0], [0], [1], [0, 0, 1, 1], [], []>} : vector<64x128xbf16>, vector<128x128xbf16>, vector<64x128xf32> -> vector<64x128xf32>
    %230 = arith.addf %227, %229 : vector<64x128xf32>
    %c0_176 = arith.constant 0 : index
    %c0_177 = arith.constant 0 : index
    %231 = vector.load %arg6[%c0_176, %c0_177] : memref<64x128xf32, #tpu.memory_space<vmem>>, vector<64x128xf32>
    tpu.vector_store %arg6[%c0_176, %c0_177], %230 {strides = array<i32>} : memref<64x128xf32, #tpu.memory_space<vmem>>, vector<64x128xf32>,
    %c0_178 = arith.constant 0 : index
    %c0_179 = arith.constant 0 : index
    %232 = vector.load %arg7[%c0_178, %c0_179] : memref<1x128xf32, #tpu.memory_space<vmem>>, vector<1x128xf32>
    %cst_180 = arith.constant dense<0.000000e+00> : vector<128xf32>
    %233 = vector.multi_reduction <add>, %225, %cst_180 [0] : vector<128x128xf32> to vector<128xf32>
    %234 = vector.shape_cast %233 : vector<128xf32> to vector<1x128xf32>
    %235 = arith.addf %232, %234 : vector<1x128xf32>
    %c0_181 = arith.constant 0 : index
    %c0_182 = arith.constant 0 : index
    %236 = vector.load %arg7[%c0_181, %c0_182] : memref<1x128xf32, #tpu.memory_space<vmem>>, vector<1x128xf32>
    tpu.vector_store %arg7[%c0_181, %c0_182], %235 {strides = array<i32>} : memref<1x128xf32, #tpu.memory_space<vmem>>, vector<1x128xf32>,
    %c0_183 = arith.constant 0 : index
    %c0_184 = arith.constant 0 : index
    %237 = vector.load %arg6[%c0_183, %c0_184] : memref<64x128xf32, #tpu.memory_space<vmem>>, vector<64x128xf32>
    %c0_185 = arith.constant 0 : index
    %c0_186 = arith.constant 0 : index
    %238 = vector.load %arg7[%c0_185, %c0_186] : memref<1x128xf32, #tpu.memory_space<vmem>>, vector<1x128xf32>
    %cst_187 = arith.constant 1.000000e-07 : f32
    %239 = vector.broadcast %cst_187 : f32 to vector<1x128xf32>
    %240 = arith.addf %239, %238 : vector<1x128xf32>
    %241 = tpu.reciprocal %240 {approx = true} : vector<1x128xf32> -> vector<1x128xf32>
    %242 = arith.mulf %240, %241 : vector<1x128xf32>
    %cst_188 = arith.constant 2.000000e+00 : f32
    %243 = vector.broadcast %cst_188 : f32 to vector<1x128xf32>
    %244 = arith.subf %243, %242 : vector<1x128xf32>
    %245 = arith.mulf %241, %244 : vector<1x128xf32>
    %246 = vector.broadcast %245 : vector<1x128xf32> to vector<64x128xf32>
    %247 = arith.mulf %237, %246 : vector<64x128xf32>
    %c832 = arith.constant 832 : index
    %c0_189 = arith.constant 0 : index
    %248 = vector.load %arg2[%c832, %c0_189] : memref<960x64xbf16, #tpu.memory_space<vmem>>, vector<64x64xbf16>
    %249 = arith.subf %202, %247 : vector<64x128xf32>
    %250 = arith.truncf %249 : vector<64x128xf32> to vector<64x128xbf16>
    %cst_190 = arith.constant dense<0.000000e+00> : vector<64x128xf32>
    %251 = tpu.matmul %248, %250, %cst_190 {dimension_numbers = #tpu.dot_dimension_numbers<[1], [0], [0], [1], [0, 0, 1, 1], [], []>} : vector<64x64xbf16>, vector<64x128xbf16>, vector<64x128xf32> -> vector<64x128xf32>
    %c832_191 = arith.constant 832 : index
    %c0_192 = arith.constant 0 : index
    %252 = vector.load %arg3[%c832_191, %c0_192] : memref<960x1xf32, #tpu.memory_space<vmem>>, vector<64x1xf32>
    %253 = vector.broadcast %252 : vector<64x1xf32> to vector<64x128xf32>
    %254 = arith.addf %251, %253 : vector<64x128xf32>
    %cst_193 = arith.constant 0.000000e+00 : f32
    %255 = vector.broadcast %cst_193 : f32 to vector<64x128xf32>
    %256 = arith.maximumf %254, %255 : vector<64x128xf32>
    %257 = arith.addf %202, %256 : vector<64x128xf32>
    %c0_194 = arith.constant 0 : index
    %c2_195 = arith.constant 2 : index
    %c0_196 = arith.constant 0 : index
    %c0_197 = arith.constant 0 : index
    %258 = vector.load %arg1[%c0_194, %c2_195, %c0_196, %c0_197] : memref<1x3x64x128xf32, #tpu.memory_space<vmem>>, vector<1x1x64x128xf32>
    %259 = vector.shape_cast %258 : vector<1x1x64x128xf32> to vector<64x128xf32>
    %c448 = arith.constant 448 : index
    %c0_198 = arith.constant 0 : index
    %260 = vector.load %arg5[%c448, %c0_198] : memref<640x128xbf16, #tpu.memory_space<vmem>>, vector<64x128xbf16>
    %cst_199 = arith.constant 0.000000e+00 : f32
    %261 = vector.broadcast %cst_199 : f32 to vector<64x128xf32>
    %c0_200 = arith.constant 0 : index
    %c0_201 = arith.constant 0 : index
    %262 = vector.load %arg6[%c0_200, %c0_201] : memref<64x128xf32, #tpu.memory_space<vmem>>, vector<64x128xf32>
    tpu.vector_store %arg6[%c0_200, %c0_201], %261 {strides = array<i32>} : memref<64x128xf32, #tpu.memory_space<vmem>>, vector<64x128xf32>,
    %cst_202 = arith.constant 0.000000e+00 : f32
    %263 = vector.broadcast %cst_202 : f32 to vector<1x128xf32>
    %c0_203 = arith.constant 0 : index
    %c0_204 = arith.constant 0 : index
    %264 = vector.load %arg7[%c0_203, %c0_204] : memref<1x128xf32, #tpu.memory_space<vmem>>, vector<1x128xf32>
    tpu.vector_store %arg7[%c0_203, %c0_204], %263 {strides = array<i32>} : memref<1x128xf32, #tpu.memory_space<vmem>>, vector<1x128xf32>,
    %c0_205 = arith.constant 0 : index
    %c0_206 = arith.constant 0 : index
    %c0_207 = arith.constant 0 : index
    %c0_208 = arith.constant 0 : index
    %265 = vector.load %arg1[%c0_205, %c0_206, %c0_207, %c0_208] : memref<1x3x64x128xf32, #tpu.memory_space<vmem>>, vector<1x1x64x128xf32>
    %266 = vector.shape_cast %265 : vector<1x1x64x128xf32> to vector<64x128xf32>
    %267 = arith.truncf %266 : vector<64x128xf32> to vector<64x128xbf16>
    %cst_209 = arith.constant dense<0.000000e+00> : vector<128x128xf32>
    %268 = tpu.matmul %267, %260, %cst_209 {dimension_numbers = #tpu.dot_dimension_numbers<[0], [0], [1], [1], [0, 1, 1, 1], [], []>} : vector<64x128xbf16>, vector<64x128xbf16>, vector<128x128xf32> -> vector<128x128xf32>
    %cst_210 = arith.constant dense<0xFF800000> : vector<128xf32>
    %269 = vector.multi_reduction <maximumf>, %268, %cst_210 [1] : vector<128x128xf32> to vector<128xf32>
    %270 = vector.shape_cast %269 : vector<128xf32> to vector<128x1xf32>
    %271 = vector.broadcast %270 : vector<128x1xf32> to vector<128x128xf32>
    %272 = arith.subf %268, %271 : vector<128x128xf32>
    %273 = math.exp %272 : vector<128x128xf32>
    %cst_211 = arith.constant dense<0.000000e+00> : vector<128xf32>
    %274 = vector.multi_reduction <add>, %273, %cst_211 [1] : vector<128x128xf32> to vector<128xf32>
    %275 = vector.shape_cast %274 : vector<128xf32> to vector<128x1xf32>
    %276 = tpu.reciprocal %275 {approx = true} : vector<128x1xf32> -> vector<128x1xf32>
    %277 = arith.mulf %275, %276 : vector<128x1xf32>
    %cst_212 = arith.constant 2.000000e+00 : f32
    %278 = vector.broadcast %cst_212 : f32 to vector<128x1xf32>
    %279 = arith.subf %278, %277 : vector<128x1xf32>
    %280 = arith.mulf %276, %279 : vector<128x1xf32>
    %281 = vector.broadcast %280 : vector<128x1xf32> to vector<128x128xf32>
    %282 = arith.mulf %273, %281 : vector<128x128xf32>
    %c576 = arith.constant 576 : index
    %c0_213 = arith.constant 0 : index
    %283 = vector.load %arg5[%c576, %c0_213] : memref<640x128xbf16, #tpu.memory_space<vmem>>, vector<64x128xbf16>
    %c0_214 = arith.constant 0 : index
    %c0_215 = arith.constant 0 : index
    %284 = vector.load %arg6[%c0_214, %c0_215] : memref<64x128xf32, #tpu.memory_space<vmem>>, vector<64x128xf32>
    %285 = arith.truncf %282 : vector<128x128xf32> to vector<128x128xbf16>
    %cst_216 = arith.constant dense<0.000000e+00> : vector<64x128xf32>
    %286 = tpu.matmul %283, %285, %cst_216 {dimension_numbers = #tpu.dot_dimension_numbers<[1], [0], [0], [1], [0, 0, 1, 1], [], []>} : vector<64x128xbf16>, vector<128x128xbf16>, vector<64x128xf32> -> vector<64x128xf32>
    %287 = arith.addf %284, %286 : vector<64x128xf32>
    %c0_217 = arith.constant 0 : index
    %c0_218 = arith.constant 0 : index
    %288 = vector.load %arg6[%c0_217, %c0_218] : memref<64x128xf32, #tpu.memory_space<vmem>>, vector<64x128xf32>
    tpu.vector_store %arg6[%c0_217, %c0_218], %287 {strides = array<i32>} : memref<64x128xf32, #tpu.memory_space<vmem>>, vector<64x128xf32>,
    %c0_219 = arith.constant 0 : index
    %c0_220 = arith.constant 0 : index
    %289 = vector.load %arg7[%c0_219, %c0_220] : memref<1x128xf32, #tpu.memory_space<vmem>>, vector<1x128xf32>
    %cst_221 = arith.constant dense<0.000000e+00> : vector<128xf32>
    %290 = vector.multi_reduction <add>, %282, %cst_221 [0] : vector<128x128xf32> to vector<128xf32>
    %291 = vector.shape_cast %290 : vector<128xf32> to vector<1x128xf32>
    %292 = arith.addf %289, %291 : vector<1x128xf32>
    %c0_222 = arith.constant 0 : index
    %c0_223 = arith.constant 0 : index
    %293 = vector.load %arg7[%c0_222, %c0_223] : memref<1x128xf32, #tpu.memory_space<vmem>>, vector<1x128xf32>
    tpu.vector_store %arg7[%c0_222, %c0_223], %292 {strides = array<i32>} : memref<1x128xf32, #tpu.memory_space<vmem>>, vector<1x128xf32>,
    %c0_224 = arith.constant 0 : index
    %c0_225 = arith.constant 0 : index
    %294 = vector.load %arg6[%c0_224, %c0_225] : memref<64x128xf32, #tpu.memory_space<vmem>>, vector<64x128xf32>
    %c0_226 = arith.constant 0 : index
    %c0_227 = arith.constant 0 : index
    %295 = vector.load %arg7[%c0_226, %c0_227] : memref<1x128xf32, #tpu.memory_space<vmem>>, vector<1x128xf32>
    %cst_228 = arith.constant 1.000000e-07 : f32
    %296 = vector.broadcast %cst_228 : f32 to vector<1x128xf32>
    %297 = arith.addf %296, %295 : vector<1x128xf32>
    %298 = tpu.reciprocal %297 {approx = true} : vector<1x128xf32> -> vector<1x128xf32>
    %299 = arith.mulf %297, %298 : vector<1x128xf32>
    %cst_229 = arith.constant 2.000000e+00 : f32
    %300 = vector.broadcast %cst_229 : f32 to vector<1x128xf32>
    %301 = arith.subf %300, %299 : vector<1x128xf32>
    %302 = arith.mulf %298, %301 : vector<1x128xf32>
    %303 = vector.broadcast %302 : vector<1x128xf32> to vector<64x128xf32>
    %304 = arith.mulf %294, %303 : vector<64x128xf32>
    %c896 = arith.constant 896 : index
    %c0_230 = arith.constant 0 : index
    %305 = vector.load %arg2[%c896, %c0_230] : memref<960x64xbf16, #tpu.memory_space<vmem>>, vector<64x64xbf16>
    %306 = arith.subf %259, %304 : vector<64x128xf32>
    %307 = arith.truncf %306 : vector<64x128xf32> to vector<64x128xbf16>
    %cst_231 = arith.constant dense<0.000000e+00> : vector<64x128xf32>
    %308 = tpu.matmul %305, %307, %cst_231 {dimension_numbers = #tpu.dot_dimension_numbers<[1], [0], [0], [1], [0, 0, 1, 1], [], []>} : vector<64x64xbf16>, vector<64x128xbf16>, vector<64x128xf32> -> vector<64x128xf32>
    %c896_232 = arith.constant 896 : index
    %c0_233 = arith.constant 0 : index
    %309 = vector.load %arg3[%c896_232, %c0_233] : memref<960x1xf32, #tpu.memory_space<vmem>>, vector<64x1xf32>
    %310 = vector.broadcast %309 : vector<64x1xf32> to vector<64x128xf32>
    %311 = arith.addf %308, %310 : vector<64x128xf32>
    %cst_234 = arith.constant 0.000000e+00 : f32
    %312 = vector.broadcast %cst_234 : f32 to vector<64x128xf32>
    %313 = arith.maximumf %311, %312 : vector<64x128xf32>
    %314 = arith.addf %259, %313 : vector<64x128xf32>
    %cst_235 = arith.constant 5.000000e-01 : f32
    %315 = vector.broadcast %cst_235 : f32 to vector<64x128xf32>
    %316 = arith.mulf %315, %86 : vector<64x128xf32>
    %317 = math.tanh %316 : vector<64x128xf32>
    %cst_236 = arith.constant 1.000000e+00 : f32
    %318 = vector.broadcast %cst_236 : f32 to vector<64x128xf32>
    %319 = arith.addf %318, %317 : vector<64x128xf32>
    %cst_237 = arith.constant 5.000000e-01 : f32
    %320 = vector.broadcast %cst_237 : f32 to vector<64x128xf32>
    %321 = arith.mulf %320, %319 : vector<64x128xf32>
    %cst_238 = arith.constant 5.000000e-01 : f32
    %322 = vector.broadcast %cst_238 : f32 to vector<64x128xf32>
    %323 = arith.mulf %322, %257 : vector<64x128xf32>
    %324 = math.tanh %323 : vector<64x128xf32>
    %cst_239 = arith.constant 1.000000e+00 : f32
    %325 = vector.broadcast %cst_239 : f32 to vector<64x128xf32>
    %326 = arith.addf %325, %324 : vector<64x128xf32>
    %cst_240 = arith.constant 5.000000e-01 : f32
    %327 = vector.broadcast %cst_240 : f32 to vector<64x128xf32>
    %328 = arith.mulf %327, %326 : vector<64x128xf32>
    %329 = arith.mulf %143, %328 : vector<64x128xf32>
    %330 = math.tanh %329 : vector<64x128xf32>
    %cst_241 = arith.constant 5.000000e-01 : f32
    %331 = vector.broadcast %cst_241 : f32 to vector<64x128xf32>
    %332 = arith.mulf %331, %314 : vector<64x128xf32>
    %333 = math.tanh %332 : vector<64x128xf32>
    %cst_242 = arith.constant 1.000000e+00 : f32
    %334 = vector.broadcast %cst_242 : f32 to vector<64x128xf32>
    %335 = arith.addf %334, %333 : vector<64x128xf32>
    %cst_243 = arith.constant 5.000000e-01 : f32
    %336 = vector.broadcast %cst_243 : f32 to vector<64x128xf32>
    %337 = arith.mulf %336, %335 : vector<64x128xf32>
    %338 = arith.mulf %200, %337 : vector<64x128xf32>
    %339 = math.tanh %338 : vector<64x128xf32>
    %340 = arith.addf %330, %339 : vector<64x128xf32>
    %341 = arith.mulf %340, %321 : vector<64x128xf32>
    %cst_244 = arith.constant 5.000000e-01 : f32
    %342 = vector.broadcast %cst_244 : f32 to vector<64x128xf32>
    %343 = arith.mulf %342, %341 : vector<64x128xf32>
    %344 = math.tanh %343 : vector<64x128xf32>
    %cst_245 = arith.constant 1.000000e+00 : f32
    %345 = vector.broadcast %cst_245 : f32 to vector<64x128xf32>
    %346 = arith.addf %345, %344 : vector<64x128xf32>
    %cst_246 = arith.constant 5.000000e-01 : f32
    %347 = vector.broadcast %cst_246 : f32 to vector<64x128xf32>
    %348 = arith.mulf %347, %346 : vector<64x128xf32>
    %c0_247 = arith.constant 0 : index
    %c1_248 = arith.constant 1 : index
    %c0_249 = arith.constant 0 : index
    %c0_250 = arith.constant 0 : index
    %349 = vector.load %arg1[%c0_247, %c1_248, %c0_249, %c0_250] : memref<1x3x64x128xf32, #tpu.memory_space<vmem>>, vector<1x1x64x128xf32>
    %350 = vector.shape_cast %349 : vector<1x1x64x128xf32> to vector<64x128xf32>
    %351 = math.tanh %86 : vector<64x128xf32>
    %352 = arith.mulf %348, %351 : vector<64x128xf32>
    %353 = arith.addf %350, %352 : vector<64x128xf32>
    %c0_251 = arith.constant 0 : index
    %c0_252 = arith.constant 0 : index
    %c0_253 = arith.constant 0 : index
    %354 = vector.load %arg4[%c0_251, %c0_252, %c0_253] : memref<1x64x128xf32, #tpu.memory_space<vmem>>, vector<1x64x128xf32>
    %355 = vector.shape_cast %354 : vector<1x64x128xf32> to vector<64x128xf32>
    %356 = vector.shape_cast %353 : vector<64x128xf32> to vector<1x64x128xf32>
    tpu.vector_store %arg4[%c0_251, %c0_252, %c0_253], %356 {strides = array<i32>} : memref<1x64x128xf32, #tpu.memory_space<vmem>>, vector<1x64x128xf32>,
    return
  }
  func.func @transform_0(%arg0: i32) -> (i32, i32, i32, i32) {
    %c0_i32 = arith.constant 0 : i32
    %c0_i32_0 = arith.constant 0 : i32
    %c0_i32_1 = arith.constant 0 : i32
    %c0_i32_2 = arith.constant 0 : i32
    return %arg0, %c0_i32, %c0_i32_0, %c0_i32_1 : i32, i32, i32, i32
  }
  func.func @transform_1(%arg0: i32) -> (i32, i32) {
    %c0_i32 = arith.constant 0 : i32
    %c0_i32_0 = arith.constant 0 : i32
    %c0_i32_1 = arith.constant 0 : i32
    return %c0_i32, %c0_i32_0 : i32, i32
  }
  func.func @transform_2(%arg0: i32) -> (i32, i32) {
    %c0_i32 = arith.constant 0 : i32
    %c0_i32_0 = arith.constant 0 : i32
    %c0_i32_1 = arith.constant 0 : i32
    return %c0_i32, %c0_i32_0 : i32, i32
  }
  func.func @transform_3(%arg0: i32) -> (i32, i32, i32) {
    %c0_i32 = arith.constant 0 : i32
    %c0_i32_0 = arith.constant 0 : i32
    %c0_i32_1 = arith.constant 0 : i32
    return %arg0, %c0_i32, %c0_i32_0 : i32, i32, i32
  }
}

</mosaic_0001>

<llo_original>
// kernel: _sta_jit.1
$region0: #{_sta_jit.1}
  #allocation0 [shape = 'u32[]', space=smem, size = 0x4, offset = 0x4, fixed_abs, tag = 'smem constant byte address 0x4 - core index']
  #allocation1 [shape = 'u32[144,128]{1,0:T(1,128)}', space=vmem, size = 0x12000, scoped, tag = 'internal scratch']
  #allocation2 [shape = 'bf16[640,128]{1,0:T(8,128)(2,1)}', space=vmem, size = 0x28000, scoped, tag = 'scratch operand']
  #allocation3 [shape = 'f32[64,128]{1,0:T(8,128)}', space=vmem, size = 0x8000, scoped, tag = 'scratch operand']
  #allocation4 [shape = 'f32[1,128]{1,0:T(1,128)}', space=vmem, size = 0x200, scoped, tag = 'scratch operand']
  %s0 = inlined_call_operand.vmem [shape: f32[2,3,64,128], index: 0, kind: input, shape index: {}]
  %s1 = inlined_call_operand.vmem [shape: bf16[960,64], index: 1, kind: input, shape index: {}]
  %s2 = inlined_call_operand.vmem [shape: f32[960,1], index: 2, kind: input, shape index: {}]
  %s3 = inlined_call_operand.hbm [shape: f32[2,64,128], index: 3, kind: output, shape index: {}]
  %s4 = sld [smem:[#allocation0]]
  $region45: #{_sta_jit.1} parent=0
    _
  %s6 = ssub.s32 1, %s4
  %s7 = scalar_select 0, %s6, %s4
  $region1: #{_sta_jit.1} parent=0
    #allocation5 [shape = 'u8[65536]{0}', space=vmem, size = 0x10000, scoped, tag = 'output window, operand 0']
    #allocation6 [shape = 's32[2]{0}', space=sflag, size = 0x8, scoped, tag = 'scoped memory for _sta_jit.1']
    %8 = vsyncpa [#allocation6], 0
    %s9 = scalar_lea.sflag [#allocation6], 1
    %10 = vsyncpa %s9, 0
    loop: start=0, step=1, limit=4
    $region2: #{_sta_jit.1} parent=1 // loop_pre_header
      _
    $region3: #{_sta_jit.1} parent=1 // loop_header
      %s12 = sphi 0, %s16
      %p13 = scmp.ge.s32.totalorder %s12, 4
      %s22 = sphi 0, %s24
      %s25 = sphi 0, %s22
      %s26 = sphi 0, %s25
      %s42 = sphi 0, %s26
      %s46 = sphi 0, %s46
      %s48 = sphi 0, %s46
      %s49 = sphi 0, %s48
      %s63 = sphi 0, %s49
      %s67 = sphi 0, %s67
      %s69 = sphi 0, %s67
      %s70 = sphi 0, %s69
      %s84 = sphi 0, %s70
      %s90 = sphi 0, %s92
      %s93 = sphi 0, %s90
      %s94 = sphi 0, %s93
      %s110 = sphi 0, %s94
    $region4: #{_sta_jit.1} parent=1 // loop_header_branch
      %15 = sbr.rel (%p13) target = $region8
    $region5: #{_sta_jit.1} parent=1 // loop_body
      %s17 = ssub.s32 %s12, 1
      %s18 = ssub.s32 %s12, 2
      %s19 = sadd.s32 %s12, 1
      %s20 = ssub.s32 %s12, %s19
      %p21 = scmp.eq.s32.totalorder %s20, 0
      %s23 = sadd.s32 %s22, 1
      %s24 = scalar_select %p21, %s22, %s23
      %p27 = pneg %p21
      %p28 = scmp.eq.s32.totalorder %s12, 1
      %p29 = por %p27, %p28
      %p30 = scmp.ne.s32.totalorder %s22, %s25
      %p31 = scmp.eq.s32.totalorder %s12, 0
      %p32 = por %p30, %p31
      %p33 = scmp.ne.s32.totalorder %s22, %s25
      %p34 = scmp.eq.s32.totalorder %s17, 1
      %p35 = por %p33, %p34
      %p36 = scmp.ne.s32.totalorder %s25, %s26
      %p37 = scmp.eq.s32.totalorder %s17, 0
      %p38 = por %p36, %p37
      %p39 = scmp.ne.s32.totalorder %s25, %s26
      %p40 = scmp.eq.s32.totalorder %s18, 1
      %p41 = por %p39, %p40
      %p43 = scmp.ne.s32.totalorder %s26, %s42
      %p44 = scmp.eq.s32.totalorder %s18, 0
      %p45 = por %p43, %p44
      %s47 = sadd.s32 %s46, 1
      %p50 = scmp.eq.s32.totalorder %s12, 1
      %p51 = scmp.ne.s32.totalorder %s46, %s48
      %p52 = scmp.eq.s32.totalorder %s12, 0
      %p53 = por %p51, %p52
      %p54 = scmp.ne.s32.totalorder %s46, %s48
      %p55 = scmp.eq.s32.totalorder %s17, 1
      %p56 = por %p54, %p55
      %p57 = scmp.ne.s32.totalorder %s48, %s49
      %p58 = scmp.eq.s32.totalorder %s17, 0
      %p59 = por %p57, %p58
      %p60 = scmp.ne.s32.totalorder %s48, %s49
      %p61 = scmp.eq.s32.totalorder %s18, 1
      %p62 = por %p60, %p61
      %p64 = scmp.ne.s32.totalorder %s49, %s63
      %p65 = scmp.eq.s32.totalorder %s18, 0
      %p66 = por %p64, %p65
      %s68 = sadd.s32 %s67, 1
      %p71 = scmp.eq.s32.totalorder %s12, 1
      %p72 = scmp.ne.s32.totalorder %s67, %s69
      %p73 = scmp.eq.s32.totalorder %s12, 0
      %p74 = por %p72, %p73
      %p75 = scmp.ne.s32.totalorder %s67, %s69
      %p76 = scmp.eq.s32.totalorder %s17, 1
      %p77 = por %p75, %p76
      %p78 = scmp.ne.s32.totalorder %s69, %s70
      %p79 = scmp.eq.s32.totalorder %s17, 0
      %p80 = por %p78, %p79
      %p81 = scmp.ne.s32.totalorder %s69, %s70
      %p82 = scmp.eq.s32.totalorder %s18, 1
      %p83 = por %p81, %p82
      %p85 = scmp.ne.s32.totalorder %s70, %s84
      %p86 = scmp.eq.s32.totalorder %s18, 0
      %p87 = por %p85, %p86
      %s88 = ssub.s32 %s12, %s19
      %p89 = scmp.eq.s32.totalorder %s88, 0
      %s91 = sadd.s32 %s90, 1
      %s92 = scalar_select %p89, %s90, %s91
      %p95 = pneg %p89
      %p96 = scmp.eq.s32.totalorder %s12, 1
      %p97 = por %p95, %p96
      %p98 = scmp.ne.s32.totalorder %s90, %s93
      %p99 = scmp.eq.s32.totalorder %s12, 0
      %p100 = por %p98, %p99
      %p101 = scmp.ne.s32.totalorder %s90, %s93
      %p102 = scmp.eq.s32.totalorder %s17, 1
      %p103 = por %p101, %p102
      %p104 = scmp.ne.s32.totalorder %s93, %s94
      %p105 = scmp.eq.s32.totalorder %s17, 0
      %p106 = por %p104, %p105
      %p107 = scmp.ne.s32.totalorder %s93, %s94
      %p108 = scmp.eq.s32.totalorder %s18, 1
      %p109 = por %p107, %p108
      %p111 = scmp.ne.s32.totalorder %s94, %s110
      %p112 = scmp.eq.s32.totalorder %s18, 0
      %p113 = por %p111, %p112
      %p114 = scmp.le.s32.totalorder 1, %s12
      %p115 = scmp.lt.s32.totalorder %s12, 3
      %p116 = pnand %p114, %p115
      %p117 = pneg %p116
      // Predicated region
      $region9: #{_sta_jit.1} parent=5 // pred_check
        _
      $region10: #{_sta_jit.1} parent=5 // pred_check_branch
        %119 = sbr.rel (%p116) target = $region12
      $region11: #{_sta_jit.1} parent=5 // pred_region
        %s120 = ssub.s32 %s12, 1
        // Predicated region
        $region13: #{_sta_jit.1} parent=11 // pred_check
          %p121 = pneg %p59
        $region14: #{_sta_jit.1} parent=11 // pred_check_branch
          %123 = sbr.rel (%p121) target = $region16
        $region15: #{_sta_jit.1} parent=11 // pred_region
          _
        $region16: #{_sta_jit.1} parent=11 // pred_fallthru
          _
        // Predicated region
        $region17: #{_sta_jit.1} parent=11 // pred_check
          %p124 = pneg %p80
        $region18: #{_sta_jit.1} parent=11 // pred_check_branch
          %126 = sbr.rel (%p124) target = $region20
        $region19: #{_sta_jit.1} parent=11 // pred_region
          _
        $region20: #{_sta_jit.1} parent=11 // pred_fallthru
          _
      $region12: #{_sta_jit.1} parent=5 // pred_fallthru
        _
      %p127 = scmp.lt.s32.totalorder %s12, 2
      // Predicated region
      $region21: #{_sta_jit.1} parent=5 // pred_check
        %p128 = pneg %p127
      $region22: #{_sta_jit.1} parent=5 // pred_check_branch
        %130 = sbr.rel (%p128) target = $region24
      $region23: #{_sta_jit.1} parent=5 // pred_region
        // Predicated region
        $region25: #{_sta_jit.1} parent=23 // pred_check
          %p131 = pneg %p32
        $region26: #{_sta_jit.1} parent=23 // pred_check_branch
          %133 = sbr.rel (%p131) target = $region28
        $region27: #{_sta_jit.1} parent=23 // pred_region
          %p134 = scmp.lt.s32.totalorder %s12, 1
          %s135 = scalar_select %p134, %s12, 1
          %s136 = smul.addr %s135, 24
          %s137 = smul.addr %s136, 8
          %s138 = scalar_lea.vmem %s0, %s137
        $region28: #{_sta_jit.1} parent=23 // pred_fallthru
          _
      $region24: #{_sta_jit.1} parent=5 // pred_fallthru
        _
      %p139 = scmp.le.s32.totalorder 1, %s12
      %p140 = scmp.lt.s32.totalorder %s12, 3
      %p141 = pnand %p139, %p140
      %p142 = pneg %p141
      // Predicated region
      $region29: #{_sta_jit.1} parent=5 // pred_check
        _
      $region30: #{_sta_jit.1} parent=5 // pred_check_branch
        %144 = sbr.rel (%p141) target = $region32
      $region31: #{_sta_jit.1} parent=5 // pred_region
        %s145 = ssub.s32 %s12, 1
        %p146 = scmp.lt.s32.totalorder %s17, 1
        %s147 = scalar_select %p146, %s17, 1
        %s148 = smul.addr %s147, 24
        %s149 = smul.addr %s148, 8
        %s150 = scalar_lea.vmem %s0, %s149
        %p151 = pneg %p38
        %p152 = pneg %p35
        %p153 = pneg %p59
        %p154 = pneg %p56
        %p155 = pneg %p80
        %p156 = pneg %p77
        %p157 = pneg %p106
        %p158 = pneg %p103
        %s159 = sand.u32 %s93, 1
        %s160 = scalar_lea.sflag [#allocation6], %s159
        %s161 = sand.u32 %s93, 1
        %s162 = smul.addr %s161, 64
        %s163 = scalar_lea.vmem [#allocation5], %s162
        %p164 = scmp.lt.s32.totalorder %s17, 1
        %s165 = scalar_select %p164, %s17, 1
        %s166 = smul.addr %s165, 24
        %s167 = smul.addr %s166, 8
        %s168 = scalar_lea.vmem %s0, %s167
        %v170 = vld [vmem:[%s1] sm:$0xf]
        %v171 = vld [vmem:[%s1 + $0x4] sm:$0xf]
        %v172 = vld [vmem:[%s1 + $0x8] sm:$0xf]
        %v173 = vld [vmem:[%s1 + $0xc] sm:$0xf]
        %v174 = vld [vmem:[%s1 + $0x10] sm:$0xf]
        %v175 = vld [vmem:[%s1 + $0x14] sm:$0xf]
        %v176 = vld [vmem:[%s1 + $0x18] sm:$0xf]
        %v177 = vld [vmem:[%s1 + $0x1c] sm:$0xf]
        %v178 = vld [vmem:[%s1 + $0x20] sm:$0xf]
        %v179 = vld [vmem:[%s1 + $0x24] sm:$0xf]
        %v180 = vld [vmem:[%s1 + $0x28] sm:$0xf]
        %v181 = vld [vmem:[%s1 + $0x2c] sm:$0xf]
        %v182 = vld [vmem:[%s1 + $0x30] sm:$0xf]
        %v183 = vld [vmem:[%s1 + $0x34] sm:$0xf]
        %v184 = vld [vmem:[%s1 + $0x38] sm:$0xf]
        %v185 = vld [vmem:[%s1 + $0x3c] sm:$0xf]
        %s186 = scalar_lea.vmem %s168, 64
        %v187 = vld [vmem:[%s186] sm:$0xff]
        %v188 = vld [vmem:[%s186 + $0x8] sm:$0xff]
        %v189 = vld [vmem:[%s186 + $0x10] sm:$0xff]
        %v190 = vld [vmem:[%s186 + $0x18] sm:$0xff]
        %v191 = vld [vmem:[%s186 + $0x20] sm:$0xff]
        %v192 = vld [vmem:[%s186 + $0x28] sm:$0xff]
        %v193 = vld [vmem:[%s186 + $0x30] sm:$0xff]
        %v194 = vld [vmem:[%s186 + $0x38] sm:$0xff]
        %v195 = vpack.c.bf16 %v188, %v187
        %v196 = vpack.c.bf16 %v190, %v189
        %v197 = vpack.c.bf16 %v192, %v191
        %v198 = vpack.c.bf16 %v194, %v193
        %v199 = vld [vmem:[%s2] sm:$0xff]
        %v200 = vld [vmem:[%s2 + $0x8] sm:$0xff]
        %v201 = vld [vmem:[%s2 + $0x10] sm:$0xff]
        %v202 = vld [vmem:[%s2 + $0x18] sm:$0xff]
        %v203 = vld [vmem:[%s2 + $0x20] sm:$0xff]
        %v204 = vld [vmem:[%s2 + $0x28] sm:$0xff]
        %v205 = vld [vmem:[%s2 + $0x30] sm:$0xff]
        %v206 = vld [vmem:[%s2 + $0x38] sm:$0xff]
        %v207 = vld [vmem:[%s2 + $0x40] sm:$0xff]
        %v208 = vld [vmem:[%s2 + $0x48] sm:$0xff]
        %v209 = vld [vmem:[%s2 + $0x50] sm:$0xff]
        %v210 = vld [vmem:[%s2 + $0x58] sm:$0xff]
        %v211 = vld [vmem:[%s2 + $0x60] sm:$0xff]
        %v212 = vld [vmem:[%s2 + $0x68] sm:$0xff]
        %v213 = vld [vmem:[%s2 + $0x70] sm:$0xff]
        %v214 = vld [vmem:[%s2 + $0x78] sm:$0xff]
        %216 = vset.pattern.permute.xlu0 0
        %217 = vperm.xlu0 %216, %v199
        %v218 = vpop.permute.xlu0 %217
        %221 = vset.pattern.permute.xlu0 0
        %222 = vperm.xlu0 %221, %v200
        %v223 = vpop.permute.xlu0 %222
        %226 = vset.pattern.permute.xlu0 0
        %227 = vperm.xlu0 %226, %v201
        %v228 = vpop.permute.xlu0 %227
        %231 = vset.pattern.permute.xlu0 0
        %232 = vperm.xlu0 %231, %v202
        %v233 = vpop.permute.xlu0 %232
        %236 = vset.pattern.permute.xlu0 0
        %237 = vperm.xlu0 %236, %v203
        %v238 = vpop.permute.xlu0 %237
        %241 = vset.pattern.permute.xlu0 0
        %242 = vperm.xlu0 %241, %v204
        %v243 = vpop.permute.xlu0 %242
        %246 = vset.pattern.permute.xlu0 0
        %247 = vperm.xlu0 %246, %v205
        %v248 = vpop.permute.xlu0 %247
        %251 = vset.pattern.permute.xlu0 0
        %252 = vperm.xlu0 %251, %v206
        %v253 = vpop.permute.xlu0 %252
        %256 = vset.pattern.permute.xlu0 0
        %257 = vperm.xlu0 %256, %v207
        %v258 = vpop.permute.xlu0 %257
        %261 = vset.pattern.permute.xlu0 0
        %262 = vperm.xlu0 %261, %v208
        %v263 = vpop.permute.xlu0 %262
        %266 = vset.pattern.permute.xlu0 0
        %267 = vperm.xlu0 %266, %v209
        %v268 = vpop.permute.xlu0 %267
        %271 = vset.pattern.permute.xlu0 0
        %272 = vperm.xlu0 %271, %v210
        %v273 = vpop.permute.xlu0 %272
        %276 = vset.pattern.permute.xlu0 0
        %277 = vperm.xlu0 %276, %v211
        %v278 = vpop.permute.xlu0 %277
        %281 = vset.pattern.permute.xlu0 0
        %282 = vperm.xlu0 %281, %v212
        %v283 = vpop.permute.xlu0 %282
        %286 = vset.pattern.permute.xlu0 0
        %287 = vperm.xlu0 %286, %v213
        %v288 = vpop.permute.xlu0 %287
        %291 = vset.pattern.permute.xlu0 0
        %292 = vperm.xlu0 %291, %v214
        %v293 = vpop.permute.xlu0 %292
        %v311 = vunpack.c.l.b16 %v170
        %v312 = vunpack.c.l.b16 %v171
        %v313 = vunpack.c.l.b16 %v172
        %v314 = vunpack.c.l.b16 %v173
        %v315 = vunpack.c.l.b16 %v174
        %v316 = vunpack.c.l.b16 %v175
        %v317 = vunpack.c.l.b16 %v176
        %v318 = vunpack.c.l.b16 %v177
        %v319 = vunpack.c.l.b16 %v178
        %v320 = vunpack.c.l.b16 %v179
        %v321 = vunpack.c.l.b16 %v180
        %v322 = vunpack.c.l.b16 %v181
        %v323 = vunpack.c.l.b16 %v182
        %v324 = vunpack.c.l.b16 %v183
        %v325 = vunpack.c.l.b16 %v184
        %v326 = vunpack.c.l.b16 %v185
        %v327 = vpack.c.b16 %v312, %v311
        %v328 = vpack.c.b16 %v314, %v313
        %v329 = vpack.c.b16 %v316, %v315
        %v330 = vpack.c.b16 %v318, %v317
        %v331 = vpack.c.b16 %v320, %v319
        %v332 = vpack.c.b16 %v322, %v321
        %v333 = vpack.c.b16 %v324, %v323
        %v334 = vpack.c.b16 %v326, %v325
        %vm335 = vcmask 523264
        %v337 = vsel %vm335, %v327, 0
        %v340 = vsel %vm335, %v328, 0
        %v343 = vsel %vm335, %v329, 0
        %v346 = vsel %vm335, %v330, 0
        %v349 = vsel %vm335, %v331, 0
        %v352 = vsel %vm335, %v332, 0
        %v355 = vsel %vm335, %v333, 0
        %v358 = vsel %vm335, %v334, 0
        %360 = vmatprep.subr.bf16.mxu0 0
        %361 = vmatpush1.bf16.msra.mxu0 0
        %362 = vmatprep.subr.bf16.mxu0 0
        %363 = vmatpush1.bf16.msra.mxu0 0
        %364 = vmatprep.subr.bf16.mxu0 0
        %365 = vmatpush1.bf16.msra.mxu0 0
        %366 = vmatprep.subr.bf16.mxu0 0
        %367 = vmatpush1.bf16.msra.mxu0 0
        %368 = vmatprep.subr.bf16.mxu0 0
        %369 = vmatpush1.bf16.msra.mxu0 %v198
        %370 = vmatprep.subr.bf16.mxu0 0
        %371 = vmatpush1.bf16.msra.mxu0 %v197
        %372 = vmatprep.subr.bf16.mxu0 0
        %373 = vmatpush1.bf16.msra.mxu0 %v196
        %374 = vmatprep.subr.bf16.mxu0 0
        %375 = vmatpush1.bf16.msra.mxu0 %v195
        %376 = vmatprep.subr.bf16.mxu0 0
        %377 = vmatpush2.bf16.msra.mxu0 0
        %378 = vmatprep.subr.bf16.mxu0 0
        %379 = vmatpush2.bf16.msra.mxu0 0
        %380 = vmatprep.subr.bf16.mxu0 0
        %381 = vmatpush2.bf16.msra.mxu0 0
        %382 = vmatprep.subr.bf16.mxu0 0
        %383 = vmatpush2.bf16.msra.mxu0 0
        %384 = vmatprep.subr.bf16.mxu0 0
        %385 = vmatpush2.bf16.msra.mxu0 0
        %386 = vmatprep.subr.bf16.mxu0 0
        %387 = vmatpush2.bf16.msra.mxu0 0
        %388 = vmatprep.subr.bf16.mxu0 0
        %389 = vmatpush2.bf16.msra.mxu0 0
        %390 = vmatprep.subr.bf16.mxu0 0
        %391 = vmatpush2.bf16.msra.mxu0 0
        %392 = vmatprep.mubr.bf16.mxu0 0
        %393 = vmatmul.mubr.bf16.gmra.mxu0 %v337
        %v394 = vpop.f32.mrf.mxu0
        %v395 = vadd.f32 %v218, %v394
        %v396 = vpop.f32.mrf.mxu0
        %v397 = vpop.f32.mrf.mxu0
        %v398 = vadd.f32 %v223, %v397
        %v399 = vpop.f32.mrf.mxu0
        %400 = vmatprep.mubr.bf16.mxu0 0
        %401 = vmatmul.mubr.bf16.gmra.mxu0 %v340
        %v402 = vpop.f32.mrf.mxu0
        %v403 = vadd.f32 %v228, %v402
        %v404 = vpop.f32.mrf.mxu0
        %v405 = vpop.f32.mrf.mxu0
        %v406 = vadd.f32 %v233, %v405
        %v407 = vpop.f32.mrf.mxu0
        %408 = vmatprep.mubr.bf16.mxu0 0
        %409 = vmatmul.mubr.bf16.gmra.mxu0 %v343
        %v410 = vpop.f32.mrf.mxu0
        %v411 = vadd.f32 %v238, %v410
        %v412 = vpop.f32.mrf.mxu0
        %v413 = vpop.f32.mrf.mxu0
        %v414 = vadd.f32 %v243, %v413
        %v415 = vpop.f32.mrf.mxu0
        %416 = vmatprep.mubr.bf16.mxu0 0
        %417 = vmatmul.mubr.bf16.gmra.mxu0 %v346
        %v418 = vpop.f32.mrf.mxu0
        %v419 = vadd.f32 %v248, %v418
        %v420 = vpop.f32.mrf.mxu0
        %v421 = vpop.f32.mrf.mxu0
        %v422 = vadd.f32 %v253, %v421
        %v423 = vpop.f32.mrf.mxu0
        %424 = vmatprep.mubr.bf16.mxu0 0
        %425 = vmatmul.mubr.bf16.gmra.mxu0 %v349
        %v426 = vpop.f32.mrf.mxu0
        %v427 = vadd.f32 %v258, %v426
        %v428 = vpop.f32.mrf.mxu0
        %v429 = vpop.f32.mrf.mxu0
        %v430 = vadd.f32 %v263, %v429
        %v431 = vpop.f32.mrf.mxu0
        %432 = vmatprep.mubr.bf16.mxu0 0
        %433 = vmatmul.mubr.bf16.gmra.mxu0 %v352
        %v434 = vpop.f32.mrf.mxu0
        %v435 = vadd.f32 %v268, %v434
        %v436 = vpop.f32.mrf.mxu0
        %v437 = vpop.f32.mrf.mxu0
        %v438 = vadd.f32 %v273, %v437
        %v439 = vpop.f32.mrf.mxu0
        %440 = vmatprep.mubr.bf16.mxu0 0
        %441 = vmatmul.mubr.bf16.gmra.mxu0 %v355
        %v442 = vpop.f32.mrf.mxu0
        %v443 = vadd.f32 %v278, %v442
        %v444 = vpop.f32.mrf.mxu0
        %v445 = vpop.f32.mrf.mxu0
        %v446 = vadd.f32 %v283, %v445
        %v447 = vpop.f32.mrf.mxu0
        %448 = vmatprep.mubr.bf16.mxu0 0
        %449 = vmatmul.mubr.bf16.gmra.mxu0 %v358
        %v450 = vpop.f32.mrf.mxu0
        %v451 = vadd.f32 %v288, %v450
        %v452 = vpop.f32.mrf.mxu0
        %v453 = vpop.f32.mrf.mxu0
        %v454 = vadd.f32 %v293, %v453
        %v455 = vpop.f32.mrf.mxu0
        %456 = vdwg.mxu0
        %v457 = vpack.c.bf16 %v398, %v395
        %v458 = vpack.c.bf16 %v406, %v403
        %v459 = vpack.c.bf16 %v414, %v411
        %v460 = vpack.c.bf16 %v422, %v419
        %v461 = vpack.c.bf16 %v430, %v427
        %v462 = vpack.c.bf16 %v438, %v435
        %v463 = vpack.c.bf16 %v446, %v443
        %v464 = vpack.c.bf16 %v454, %v451
        %v473 = vunpack.c.l.b16 %v457
        %v474 = vunpack.c.h.b16 %v457
        %v475 = vunpack.c.l.b16 %v458
        %v476 = vunpack.c.h.b16 %v458
        %v477 = vunpack.c.l.b16 %v459
        %v478 = vunpack.c.h.b16 %v459
        %v479 = vunpack.c.l.b16 %v460
        %v480 = vunpack.c.h.b16 %v460
        %v481 = vunpack.c.l.b16 %v461
        %v482 = vunpack.c.h.b16 %v461
        %v483 = vunpack.c.l.b16 %v462
        %v484 = vunpack.c.h.b16 %v462
        %v485 = vunpack.c.l.b16 %v463
        %v486 = vunpack.c.h.b16 %v463
        %v487 = vunpack.c.l.b16 %v464
        %v488 = vunpack.c.h.b16 %v464
        %v489 = vpack.c.b16 %v473, %v473
        %v490 = vpack.c.b16 %v474, %v474
        %v491 = vpack.c.b16 %v475, %v475
        %v492 = vpack.c.b16 %v476, %v476
        %v493 = vpack.c.b16 %v477, %v477
        %v494 = vpack.c.b16 %v478, %v478
        %v495 = vpack.c.b16 %v479, %v479
        %v496 = vpack.c.b16 %v480, %v480
        %v497 = vpack.c.b16 %v481, %v481
        %v498 = vpack.c.b16 %v482, %v482
        %v499 = vpack.c.b16 %v483, %v483
        %v500 = vpack.c.b16 %v484, %v484
        %v501 = vpack.c.b16 %v485, %v485
        %v502 = vpack.c.b16 %v486, %v486
        %v503 = vpack.c.b16 %v487, %v487
        %v504 = vpack.c.b16 %v488, %v488
        %521 = vst [vmem:[#allocation2] sm:$0xf] %v489
        %522 = vst [vmem:[#allocation2 + $0x4] sm:$0xf] %v490
        %523 = vst [vmem:[#allocation2 + $0x8] sm:$0xf] %v491
        %524 = vst [vmem:[#allocation2 + $0xc] sm:$0xf] %v492
        %525 = vst [vmem:[#allocation2 + $0x10] sm:$0xf] %v493
        %526 = vst [vmem:[#allocation2 + $0x14] sm:$0xf] %v494
        %527 = vst [vmem:[#allocation2 + $0x18] sm:$0xf] %v495
        %528 = vst [vmem:[#allocation2 + $0x1c] sm:$0xf] %v496
        %529 = vst [vmem:[#allocation2 + $0x20] sm:$0xf] %v497
        %530 = vst [vmem:[#allocation2 + $0x24] sm:$0xf] %v498
        %531 = vst [vmem:[#allocation2 + $0x28] sm:$0xf] %v499
        %532 = vst [vmem:[#allocation2 + $0x2c] sm:$0xf] %v500
        %533 = vst [vmem:[#allocation2 + $0x30] sm:$0xf] %v501
        %534 = vst [vmem:[#allocation2 + $0x34] sm:$0xf] %v502
        %535 = vst [vmem:[#allocation2 + $0x38] sm:$0xf] %v503
        %536 = vst [vmem:[#allocation2 + $0x3c] sm:$0xf] %v504
        %v537 = vld [vmem:[%s1 + $0x40] sm:$0xf]
        %v538 = vld [vmem:[%s1 + $0x44] sm:$0xf]
        %v539 = vld [vmem:[%s1 + $0x48] sm:$0xf]
        %v540 = vld [vmem:[%s1 + $0x4c] sm:$0xf]
        %v541 = vld [vmem:[%s1 + $0x50] sm:$0xf]
        %v542 = vld [vmem:[%s1 + $0x54] sm:$0xf]
        %v543 = vld [vmem:[%s1 + $0x58] sm:$0xf]
        %v544 = vld [vmem:[%s1 + $0x5c] sm:$0xf]
        %v545 = vld [vmem:[%s1 + $0x60] sm:$0xf]
        %v546 = vld [vmem:[%s1 + $0x64] sm:$0xf]
        %v547 = vld [vmem:[%s1 + $0x68] sm:$0xf]
        %v548 = vld [vmem:[%s1 + $0x6c] sm:$0xf]
        %v549 = vld [vmem:[%s1 + $0x70] sm:$0xf]
        %v550 = vld [vmem:[%s1 + $0x74] sm:$0xf]
        %v551 = vld [vmem:[%s1 + $0x78] sm:$0xf]
        %v552 = vld [vmem:[%s1 + $0x7c] sm:$0xf]
        %v553 = vld [vmem:[%s1 + $0x80] sm:$0xf]
        %v554 = vld [vmem:[%s1 + $0x84] sm:$0xf]
        %v555 = vld [vmem:[%s1 + $0x88] sm:$0xf]
        %v556 = vld [vmem:[%s1 + $0x8c] sm:$0xf]
        %v557 = vld [vmem:[%s1 + $0x90] sm:$0xf]
        %v558 = vld [vmem:[%s1 + $0x94] sm:$0xf]
        %v559 = vld [vmem:[%s1 + $0x98] sm:$0xf]
        %v560 = vld [vmem:[%s1 + $0x9c] sm:$0xf]
        %v561 = vld [vmem:[%s1 + $0xa0] sm:$0xf]
        %v562 = vld [vmem:[%s1 + $0xa4] sm:$0xf]
        %v563 = vld [vmem:[%s1 + $0xa8] sm:$0xf]
        %v564 = vld [vmem:[%s1 + $0xac] sm:$0xf]
        %v565 = vld [vmem:[%s1 + $0xb0] sm:$0xf]
        %v566 = vld [vmem:[%s1 + $0xb4] sm:$0xf]
        %v567 = vld [vmem:[%s1 + $0xb8] sm:$0xf]
        %v568 = vld [vmem:[%s1 + $0xbc] sm:$0xf]
        %v569 = vld [vmem:[%s168] sm:$0xff]
        %v570 = vld [vmem:[%s168 + $0x8] sm:$0xff]
        %v571 = vld [vmem:[%s168 + $0x10] sm:$0xff]
        %v572 = vld [vmem:[%s168 + $0x18] sm:$0xff]
        %v573 = vld [vmem:[%s168 + $0x20] sm:$0xff]
        %v574 = vld [vmem:[%s168 + $0x28] sm:$0xff]
        %v575 = vld [vmem:[%s168 + $0x30] sm:$0xff]
        %v576 = vld [vmem:[%s168 + $0x38] sm:$0xff]
        %v577 = vpack.c.bf16 %v570, %v569
        %v578 = vpack.c.bf16 %v572, %v571
        %v579 = vpack.c.bf16 %v574, %v573
        %v580 = vpack.c.bf16 %v576, %v575
        %v581 = vld [vmem:[%s2 + $0x80] sm:$0xff]
        %v582 = vld [vmem:[%s2 + $0x88] sm:$0xff]
        %v583 = vld [vmem:[%s2 + $0x90] sm:$0xff]
        %v584 = vld [vmem:[%s2 + $0x98] sm:$0xff]
        %v585 = vld [vmem:[%s2 + $0xa0] sm:$0xff]
        %v586 = vld [vmem:[%s2 + $0xa8] sm:$0xff]
        %v587 = vld [vmem:[%s2 + $0xb0] sm:$0xff]
        %v588 = vld [vmem:[%s2 + $0xb8] sm:$0xff]
        %v589 = vld [vmem:[%s2 + $0xc0] sm:$0xff]
        %v590 = vld [vmem:[%s2 + $0xc8] sm:$0xff]
        %v591 = vld [vmem:[%s2 + $0xd0] sm:$0xff]
        %v592 = vld [vmem:[%s2 + $0xd8] sm:$0xff]
        %v593 = vld [vmem:[%s2 + $0xe0] sm:$0xff]
        %v594 = vld [vmem:[%s2 + $0xe8] sm:$0xff]
        %v595 = vld [vmem:[%s2 + $0xf0] sm:$0xff]
        %v596 = vld [vmem:[%s2 + $0xf8] sm:$0xff]
        %v597 = vld [vmem:[%s2 + $0x100] sm:$0xff]
        %v598 = vld [vmem:[%s2 + $0x108] sm:$0xff]
        %v599 = vld [vmem:[%s2 + $0x110] sm:$0xff]
        %v600 = vld [vmem:[%s2 + $0x118] sm:$0xff]
        %v601 = vld [vmem:[%s2 + $0x120] sm:$0xff]
        %v602 = vld [vmem:[%s2 + $0x128] sm:$0xff]
        %v603 = vld [vmem:[%s2 + $0x130] sm:$0xff]
        %v604 = vld [vmem:[%s2 + $0x138] sm:$0xff]
        %v605 = vld [vmem:[%s2 + $0x140] sm:$0xff]
        %v606 = vld [vmem:[%s2 + $0x148] sm:$0xff]
        %v607 = vld [vmem:[%s2 + $0x150] sm:$0xff]
        %v608 = vld [vmem:[%s2 + $0x158] sm:$0xff]
        %v609 = vld [vmem:[%s2 + $0x160] sm:$0xff]
        %v610 = vld [vmem:[%s2 + $0x168] sm:$0xff]
        %v611 = vld [vmem:[%s2 + $0x170] sm:$0xff]
        %v612 = vld [vmem:[%s2 + $0x178] sm:$0xff]
        %614 = vset.pattern.permute.xlu0 0
        %615 = vperm.xlu0 %614, %v581
        %v616 = vpop.permute.xlu0 %615
        %619 = vset.pattern.permute.xlu0 0
        %620 = vperm.xlu0 %619, %v582
        %v621 = vpop.permute.xlu0 %620
        %624 = vset.pattern.permute.xlu0 0
        %625 = vperm.xlu0 %624, %v583
        %v626 = vpop.permute.xlu0 %625
        %629 = vset.pattern.permute.xlu0 0
        %630 = vperm.xlu0 %629, %v584
        %v631 = vpop.permute.xlu0 %630
        %634 = vset.pattern.permute.xlu0 0
        %635 = vperm.xlu0 %634, %v585
        %v636 = vpop.permute.xlu0 %635
        %639 = vset.pattern.permute.xlu0 0
        %640 = vperm.xlu0 %639, %v586
        %v641 = vpop.permute.xlu0 %640
        %644 = vset.pattern.permute.xlu0 0
        %645 = vperm.xlu0 %644, %v587
        %v646 = vpop.permute.xlu0 %645
        %649 = vset.pattern.permute.xlu0 0
        %650 = vperm.xlu0 %649, %v588
        %v651 = vpop.permute.xlu0 %650
        %654 = vset.pattern.permute.xlu0 0
        %655 = vperm.xlu0 %654, %v589
        %v656 = vpop.permute.xlu0 %655
        %659 = vset.pattern.permute.xlu0 0
        %660 = vperm.xlu0 %659, %v590
        %v661 = vpop.permute.xlu0 %660
        %664 = vset.pattern.permute.xlu0 0
        %665 = vperm.xlu0 %664, %v591
        %v666 = vpop.permute.xlu0 %665
        %669 = vset.pattern.permute.xlu0 0
        %670 = vperm.xlu0 %669, %v592
        %v671 = vpop.permute.xlu0 %670
        %674 = vset.pattern.permute.xlu0 0
        %675 = vperm.xlu0 %674, %v593
        %v676 = vpop.permute.xlu0 %675
        %679 = vset.pattern.permute.xlu0 0
        %680 = vperm.xlu0 %679, %v594
        %v681 = vpop.permute.xlu0 %680
        %684 = vset.pattern.permute.xlu0 0
        %685 = vperm.xlu0 %684, %v595
        %v686 = vpop.permute.xlu0 %685
        %689 = vset.pattern.permute.xlu0 0
        %690 = vperm.xlu0 %689, %v596
        %v691 = vpop.permute.xlu0 %690
        %694 = vset.pattern.permute.xlu0 0
        %695 = vperm.xlu0 %694, %v597
        %v696 = vpop.permute.xlu0 %695
        %699 = vset.pattern.permute.xlu0 0
        %700 = vperm.xlu0 %699, %v598
        %v701 = vpop.permute.xlu0 %700
        %704 = vset.pattern.permute.xlu0 0
        %705 = vperm.xlu0 %704, %v599
        %v706 = vpop.permute.xlu0 %705
        %709 = vset.pattern.permute.xlu0 0
        %710 = vperm.xlu0 %709, %v600
        %v711 = vpop.permute.xlu0 %710
        %714 = vset.pattern.permute.xlu0 0
        %715 = vperm.xlu0 %714, %v601
        %v716 = vpop.permute.xlu0 %715
        %719 = vset.pattern.permute.xlu0 0
        %720 = vperm.xlu0 %719, %v602
        %v721 = vpop.permute.xlu0 %720
        %724 = vset.pattern.permute.xlu0 0
        %725 = vperm.xlu0 %724, %v603
        %v726 = vpop.permute.xlu0 %725
        %729 = vset.pattern.permute.xlu0 0
        %730 = vperm.xlu0 %729, %v604
        %v731 = vpop.permute.xlu0 %730
        %734 = vset.pattern.permute.xlu0 0
        %735 = vperm.xlu0 %734, %v605
        %v736 = vpop.permute.xlu0 %735
        %739 = vset.pattern.permute.xlu0 0
        %740 = vperm.xlu0 %739, %v606
        %v741 = vpop.permute.xlu0 %740
        %744 = vset.pattern.permute.xlu0 0
        %745 = vperm.xlu0 %744, %v607
        %v746 = vpop.permute.xlu0 %745
        %749 = vset.pattern.permute.xlu0 0
        %750 = vperm.xlu0 %749, %v608
        %v751 = vpop.permute.xlu0 %750
        %754 = vset.pattern.permute.xlu0 0
        %755 = vperm.xlu0 %754, %v609
        %v756 = vpop.permute.xlu0 %755
        %759 = vset.pattern.permute.xlu0 0
        %760 = vperm.xlu0 %759, %v610
        %v761 = vpop.permute.xlu0 %760
        %764 = vset.pattern.permute.xlu0 0
        %765 = vperm.xlu0 %764, %v611
        %v766 = vpop.permute.xlu0 %765
        %769 = vset.pattern.permute.xlu0 0
        %770 = vperm.xlu0 %769, %v612
        %v771 = vpop.permute.xlu0 %770
        %v805 = vunpack.c.l.b16 %v537
        %v806 = vunpack.c.l.b16 %v538
        %v807 = vunpack.c.l.b16 %v539
        %v808 = vunpack.c.l.b16 %v540
        %v809 = vunpack.c.l.b16 %v541
        %v810 = vunpack.c.l.b16 %v542
        %v811 = vunpack.c.l.b16 %v543
        %v812 = vunpack.c.l.b16 %v544
        %v813 = vunpack.c.l.b16 %v545
        %v814 = vunpack.c.l.b16 %v546
        %v815 = vunpack.c.l.b16 %v547
        %v816 = vunpack.c.l.b16 %v548
        %v817 = vunpack.c.l.b16 %v549
        %v818 = vunpack.c.l.b16 %v550
        %v819 = vunpack.c.l.b16 %v551
        %v820 = vunpack.c.l.b16 %v552
        %v821 = vunpack.c.l.b16 %v553
        %v822 = vunpack.c.l.b16 %v554
        %v823 = vunpack.c.l.b16 %v555
        %v824 = vunpack.c.l.b16 %v556
        %v825 = vunpack.c.l.b16 %v557
        %v826 = vunpack.c.l.b16 %v558
        %v827 = vunpack.c.l.b16 %v559
        %v828 = vunpack.c.l.b16 %v560
        %v829 = vunpack.c.l.b16 %v561
        %v830 = vunpack.c.l.b16 %v562
        %v831 = vunpack.c.l.b16 %v563
        %v832 = vunpack.c.l.b16 %v564
        %v833 = vunpack.c.l.b16 %v565
        %v834 = vunpack.c.l.b16 %v566
        %v835 = vunpack.c.l.b16 %v567
        %v836 = vunpack.c.l.b16 %v568
        %v837 = vpack.c.b16 %v806, %v805
        %v838 = vpack.c.b16 %v808, %v807
        %v839 = vpack.c.b16 %v810, %v809
        %v840 = vpack.c.b16 %v812, %v811
        %v841 = vpack.c.b16 %v814, %v813
        %v842 = vpack.c.b16 %v816, %v815
        %v843 = vpack.c.b16 %v818, %v817
        %v844 = vpack.c.b16 %v820, %v819
        %v845 = vpack.c.b16 %v822, %v821
        %v846 = vpack.c.b16 %v824, %v823
        %v847 = vpack.c.b16 %v826, %v825
        %v848 = vpack.c.b16 %v828, %v827
        %v849 = vpack.c.b16 %v830, %v829
        %v850 = vpack.c.b16 %v832, %v831
        %v851 = vpack.c.b16 %v834, %v833
        %v852 = vpack.c.b16 %v836, %v835
        %v854 = vsel %vm335, %v837, 0
        %v857 = vsel %vm335, %v838, 0
        %v860 = vsel %vm335, %v839, 0
        %v863 = vsel %vm335, %v840, 0
        %v866 = vsel %vm335, %v841, 0
        %v869 = vsel %vm335, %v842, 0
        %v872 = vsel %vm335, %v843, 0
        %v875 = vsel %vm335, %v844, 0
        %v878 = vsel %vm335, %v845, 0
        %v881 = vsel %vm335, %v846, 0
        %v884 = vsel %vm335, %v847, 0
        %v887 = vsel %vm335, %v848, 0
        %v890 = vsel %vm335, %v849, 0
        %v893 = vsel %vm335, %v850, 0
        %v896 = vsel %vm335, %v851, 0
        %v899 = vsel %vm335, %v852, 0
        %901 = vmatprep.subr.bf16.mxu0 0
        %902 = vmatpush1.bf16.msra.mxu0 0
        %903 = vmatprep.subr.bf16.mxu0 0
        %904 = vmatpush1.bf16.msra.mxu0 0
        %905 = vmatprep.subr.bf16.mxu0 0
        %906 = vmatpush1.bf16.msra.mxu0 0
        %907 = vmatprep.subr.bf16.mxu0 0
        %908 = vmatpush1.bf16.msra.mxu0 0
        %909 = vmatprep.subr.bf16.mxu0 0
        %910 = vmatpush1.bf16.msra.mxu0 %v580
        %911 = vmatprep.subr.bf16.mxu0 0
        %912 = vmatpush1.bf16.msra.mxu0 %v579
        %913 = vmatprep.subr.bf16.mxu0 0
        %914 = vmatpush1.bf16.msra.mxu0 %v578
        %915 = vmatprep.subr.bf16.mxu0 0
        %916 = vmatpush1.bf16.msra.mxu0 %v577
        %917 = vmatprep.subr.bf16.mxu0 0
        %918 = vmatpush2.bf16.msra.mxu0 0
        %919 = vmatprep.subr.bf16.mxu0 0
        %920 = vmatpush2.bf16.msra.mxu0 0
        %921 = vmatprep.subr.bf16.mxu0 0
        %922 = vmatpush2.bf16.msra.mxu0 0
        %923 = vmatprep.subr.bf16.mxu0 0
        %924 = vmatpush2.bf16.msra.mxu0 0
        %925 = vmatprep.subr.bf16.mxu0 0
        %926 = vmatpush2.bf16.msra.mxu0 0
        %927 = vmatprep.subr.bf16.mxu0 0
        %928 = vmatpush2.bf16.msra.mxu0 0
        %929 = vmatprep.subr.bf16.mxu0 0
        %930 = vmatpush2.bf16.msra.mxu0 0
        %931 = vmatprep.subr.bf16.mxu0 0
        %932 = vmatpush2.bf16.msra.mxu0 0
        %933 = vmatprep.mubr.bf16.mxu0 0
        %934 = vmatmul.mubr.bf16.gmra.mxu0 %v854
        %v935 = vpop.f32.mrf.mxu0
        %v936 = vadd.f32 %v616, %v935
        %v937 = vpop.f32.mrf.mxu0
        %v938 = vpop.f32.mrf.mxu0
        %v939 = vadd.f32 %v621, %v938
        %v940 = vpop.f32.mrf.mxu0
        %941 = vmatprep.mubr.bf16.mxu0 0
        %942 = vmatmul.mubr.bf16.gmra.mxu0 %v857
        %v943 = vpop.f32.mrf.mxu0
        %v944 = vadd.f32 %v626, %v943
        %v945 = vpop.f32.mrf.mxu0
        %v946 = vpop.f32.mrf.mxu0
        %v947 = vadd.f32 %v631, %v946
        %v948 = vpop.f32.mrf.mxu0
        %949 = vmatprep.mubr.bf16.mxu0 0
        %950 = vmatmul.mubr.bf16.gmra.mxu0 %v860
        %v951 = vpop.f32.mrf.mxu0
        %v952 = vadd.f32 %v636, %v951
        %v953 = vpop.f32.mrf.mxu0
        %v954 = vpop.f32.mrf.mxu0
        %v955 = vadd.f32 %v641, %v954
        %v956 = vpop.f32.mrf.mxu0
        %957 = vmatprep.mubr.bf16.mxu0 0
        %958 = vmatmul.mubr.bf16.gmra.mxu0 %v863
        %v959 = vpop.f32.mrf.mxu0
        %v960 = vadd.f32 %v646, %v959
        %v961 = vpop.f32.mrf.mxu0
        %v962 = vpop.f32.mrf.mxu0
        %v963 = vadd.f32 %v651, %v962
        %v964 = vpop.f32.mrf.mxu0
        %965 = vmatprep.mubr.bf16.mxu0 0
        %966 = vmatmul.mubr.bf16.gmra.mxu0 %v866
        %v967 = vpop.f32.mrf.mxu0
        %v968 = vadd.f32 %v656, %v967
        %v969 = vpop.f32.mrf.mxu0
        %v970 = vpop.f32.mrf.mxu0
        %v971 = vadd.f32 %v661, %v970
        %v972 = vpop.f32.mrf.mxu0
        %973 = vmatprep.mubr.bf16.mxu0 0
        %974 = vmatmul.mubr.bf16.gmra.mxu0 %v869
        %v975 = vpop.f32.mrf.mxu0
        %v976 = vadd.f32 %v666, %v975
        %v977 = vpop.f32.mrf.mxu0
        %v978 = vpop.f32.mrf.mxu0
        %v979 = vadd.f32 %v671, %v978
        %v980 = vpop.f32.mrf.mxu0
        %981 = vmatprep.mubr.bf16.mxu0 0
        %982 = vmatmul.mubr.bf16.gmra.mxu0 %v872
        %v983 = vpop.f32.mrf.mxu0
        %v984 = vadd.f32 %v676, %v983
        %v985 = vpop.f32.mrf.mxu0
        %v986 = vpop.f32.mrf.mxu0
        %v987 = vadd.f32 %v681, %v986
        %v988 = vpop.f32.mrf.mxu0
        %989 = vmatprep.mubr.bf16.mxu0 0
        %990 = vmatmul.mubr.bf16.gmra.mxu0 %v875
        %v991 = vpop.f32.mrf.mxu0
        %v992 = vadd.f32 %v686, %v991
        %v993 = vpop.f32.mrf.mxu0
        %v994 = vpop.f32.mrf.mxu0
        %v995 = vadd.f32 %v691, %v994
        %v996 = vpop.f32.mrf.mxu0
        %997 = vmatprep.mubr.bf16.mxu0 0
        %998 = vmatmul.mubr.bf16.gmra.mxu0 %v878
        %v999 = vpop.f32.mrf.mxu0
        %v1000 = vadd.f32 %v696, %v999
        %v1001 = vpop.f32.mrf.mxu0
        %v1002 = vpop.f32.mrf.mxu0
        %v1003 = vadd.f32 %v701, %v1002
        %v1004 = vpop.f32.mrf.mxu0
        %1005 = vmatprep.mubr.bf16.mxu0 0
        %1006 = vmatmul.mubr.bf16.gmra.mxu0 %v881
        %v1007 = vpop.f32.mrf.mxu0
        %v1008 = vadd.f32 %v706, %v1007
        %v1009 = vpop.f32.mrf.mxu0
        %v1010 = vpop.f32.mrf.mxu0
        %v1011 = vadd.f32 %v711, %v1010
        %v1012 = vpop.f32.mrf.mxu0
        %1013 = vmatprep.mubr.bf16.mxu0 0
        %1014 = vmatmul.mubr.bf16.gmra.mxu0 %v884
        %v1015 = vpop.f32.mrf.mxu0
        %v1016 = vadd.f32 %v716, %v1015
        %v1017 = vpop.f32.mrf.mxu0
        %v1018 = vpop.f32.mrf.mxu0
        %v1019 = vadd.f32 %v721, %v1018
        %v1020 = vpop.f32.mrf.mxu0
        %1021 = vmatprep.mubr.bf16.mxu0 0
        %1022 = vmatmul.mubr.bf16.gmra.mxu0 %v887
        %v1023 = vpop.f32.mrf.mxu0
        %v1024 = vadd.f32 %v726, %v1023
        %v1025 = vpop.f32.mrf.mxu0
        %v1026 = vpop.f32.mrf.mxu0
        %v1027 = vadd.f32 %v731, %v1026
        %v1028 = vpop.f32.mrf.mxu0
        %1029 = vmatprep.mubr.bf16.mxu0 0
        %1030 = vmatmul.mubr.bf16.gmra.mxu0 %v890
        %v1031 = vpop.f32.mrf.mxu0
        %v1032 = vadd.f32 %v736, %v1031
        %v1033 = vpop.f32.mrf.mxu0
        %v1034 = vpop.f32.mrf.mxu0
        %v1035 = vadd.f32 %v741, %v1034
        %v1036 = vpop.f32.mrf.mxu0
        %1037 = vmatprep.mubr.bf16.mxu0 0
        %1038 = vmatmul.mubr.bf16.gmra.mxu0 %v893
        %v1039 = vpop.f32.mrf.mxu0
        %v1040 = vadd.f32 %v746, %v1039
        %v1041 = vpop.f32.mrf.mxu0
        %v1042 = vpop.f32.mrf.mxu0
        %v1043 = vadd.f32 %v751, %v1042
        %v1044 = vpop.f32.mrf.mxu0
        %1045 = vmatprep.mubr.bf16.mxu0 0
        %1046 = vmatmul.mubr.bf16.gmra.mxu0 %v896
        %v1047 = vpop.f32.mrf.mxu0
        %v1048 = vadd.f32 %v756, %v1047
        %v1049 = vpop.f32.mrf.mxu0
        %v1050 = vpop.f32.mrf.mxu0
        %v1051 = vadd.f32 %v761, %v1050
        %v1052 = vpop.f32.mrf.mxu0
        %1053 = vmatprep.mubr.bf16.mxu0 0
        %1054 = vmatmul.mubr.bf16.gmra.mxu0 %v899
        %v1055 = vpop.f32.mrf.mxu0
        %v1056 = vadd.f32 %v766, %v1055
        %v1057 = vpop.f32.mrf.mxu0
        %v1058 = vpop.f32.mrf.mxu0
        %v1059 = vadd.f32 %v771, %v1058
        %v1060 = vpop.f32.mrf.mxu0
        %1061 = vdwg.mxu0
        %v1062 = vpack.c.bf16 %v939, %v936
        %v1063 = vpack.c.bf16 %v947, %v944
        %v1064 = vpack.c.bf16 %v955, %v952
        %v1065 = vpack.c.bf16 %v963, %v960
        %v1066 = vpack.c.bf16 %v971, %v968
        %v1067 = vpack.c.bf16 %v979, %v976
        %v1068 = vpack.c.bf16 %v987, %v984
        %v1069 = vpack.c.bf16 %v995, %v992
        %v1070 = vpack.c.bf16 %v1003, %v1000
        %v1071 = vpack.c.bf16 %v1011, %v1008
        %v1072 = vpack.c.bf16 %v1019, %v1016
        %v1073 = vpack.c.bf16 %v1027, %v1024
        %v1074 = vpack.c.bf16 %v1035, %v1032
        %v1075 = vpack.c.bf16 %v1043, %v1040
        %v1076 = vpack.c.bf16 %v1051, %v1048
        %v1077 = vpack.c.bf16 %v1059, %v1056
        %v1094 = vunpack.c.l.b16 %v1062
        %v1095 = vunpack.c.h.b16 %v1062
        %v1096 = vunpack.c.l.b16 %v1063
        %v1097 = vunpack.c.h.b16 %v1063
        %v1098 = vunpack.c.l.b16 %v1064
        %v1099 = vunpack.c.h.b16 %v1064
        %v1100 = vunpack.c.l.b16 %v1065
        %v1101 = vunpack.c.h.b16 %v1065
        %v1102 = vunpack.c.l.b16 %v1066
        %v1103 = vunpack.c.h.b16 %v1066
        %v1104 = vunpack.c.l.b16 %v1067
        %v1105 = vunpack.c.h.b16 %v1067
        %v1106 = vunpack.c.l.b16 %v1068
        %v1107 = vunpack.c.h.b16 %v1068
        %v1108 = vunpack.c.l.b16 %v1069
        %v1109 = vunpack.c.h.b16 %v1069
        %v1110 = vunpack.c.l.b16 %v1070
        %v1111 = vunpack.c.h.b16 %v1070
        %v1112 = vunpack.c.l.b16 %v1071
        %v1113 = vunpack.c.h.b16 %v1071
        %v1114 = vunpack.c.l.b16 %v1072
        %v1115 = vunpack.c.h.b16 %v1072
        %v1116 = vunpack.c.l.b16 %v1073
        %v1117 = vunpack.c.h.b16 %v1073
        %v1118 = vunpack.c.l.b16 %v1074
        %v1119 = vunpack.c.h.b16 %v1074
        %v1120 = vunpack.c.l.b16 %v1075
        %v1121 = vunpack.c.h.b16 %v1075
        %v1122 = vunpack.c.l.b16 %v1076
        %v1123 = vunpack.c.h.b16 %v1076
        %v1124 = vunpack.c.l.b16 %v1077
        %v1125 = vunpack.c.h.b16 %v1077
        %v1126 = vpack.c.b16 %v1094, %v1094
        %v1127 = vpack.c.b16 %v1095, %v1095
        %v1128 = vpack.c.b16 %v1096, %v1096
        %v1129 = vpack.c.b16 %v1097, %v1097
        %v1130 = vpack.c.b16 %v1098, %v1098
        %v1131 = vpack.c.b16 %v1099, %v1099
        %v1132 = vpack.c.b16 %v1100, %v1100
        %v1133 = vpack.c.b16 %v1101, %v1101
        %v1134 = vpack.c.b16 %v1102, %v1102
        %v1135 = vpack.c.b16 %v1103, %v1103
        %v1136 = vpack.c.b16 %v1104, %v1104
        %v1137 = vpack.c.b16 %v1105, %v1105
        %v1138 = vpack.c.b16 %v1106, %v1106
        %v1139 = vpack.c.b16 %v1107, %v1107
        %v1140 = vpack.c.b16 %v1108, %v1108
        %v1141 = vpack.c.b16 %v1109, %v1109
        %v1142 = vpack.c.b16 %v1110, %v1110
        %v1143 = vpack.c.b16 %v1111, %v1111
        %v1144 = vpack.c.b16 %v1112, %v1112
        %v1145 = vpack.c.b16 %v1113, %v1113
        %v1146 = vpack.c.b16 %v1114, %v1114
        %v1147 = vpack.c.b16 %v1115, %v1115
        %v1148 = vpack.c.b16 %v1116, %v1116
        %v1149 = vpack.c.b16 %v1117, %v1117
        %v1150 = vpack.c.b16 %v1118, %v1118
        %v1151 = vpack.c.b16 %v1119, %v1119
        %v1152 = vpack.c.b16 %v1120, %v1120
        %v1153 = vpack.c.b16 %v1121, %v1121
        %v1154 = vpack.c.b16 %v1122, %v1122
        %v1155 = vpack.c.b16 %v1123, %v1123
        %v1156 = vpack.c.b16 %v1124, %v1124
        %v1157 = vpack.c.b16 %v1125, %v1125
        %1190 = vst [vmem:[#allocation2 + $0x40] sm:$0xf] %v1126
        %1191 = vst [vmem:[#allocation2 + $0x44] sm:$0xf] %v1127
        %1192 = vst [vmem:[#allocation2 + $0x48] sm:$0xf] %v1128
        %1193 = vst [vmem:[#allocation2 + $0x4c] sm:$0xf] %v1129
        %1194 = vst [vmem:[#allocation2 + $0x50] sm:$0xf] %v1130
        %1195 = vst [vmem:[#allocation2 + $0x54] sm:$0xf] %v1131
        %1196 = vst [vmem:[#allocation2 + $0x58] sm:$0xf] %v1132
        %1197 = vst [vmem:[#allocation2 + $0x5c] sm:$0xf] %v1133
        %1198 = vst [vmem:[#allocation2 + $0x60] sm:$0xf] %v1134
        %1199 = vst [vmem:[#allocation2 + $0x64] sm:$0xf] %v1135
        %1200 = vst [vmem:[#allocation2 + $0x68] sm:$0xf] %v1136
        %1201 = vst [vmem:[#allocation2 + $0x6c] sm:$0xf] %v1137
        %1202 = vst [vmem:[#allocation2 + $0x70] sm:$0xf] %v1138
        %1203 = vst [vmem:[#allocation2 + $0x74] sm:$0xf] %v1139
        %1204 = vst [vmem:[#allocation2 + $0x78] sm:$0xf] %v1140
        %1205 = vst [vmem:[#allocation2 + $0x7c] sm:$0xf] %v1141
        %1206 = vst [vmem:[#allocation2 + $0x80] sm:$0xf] %v1142
        %1207 = vst [vmem:[#allocation2 + $0x84] sm:$0xf] %v1143
        %1208 = vst [vmem:[#allocation2 + $0x88] sm:$0xf] %v1144
        %1209 = vst [vmem:[#allocation2 + $0x8c] sm:$0xf] %v1145
        %1210 = vst [vmem:[#allocation2 + $0x90] sm:$0xf] %v1146
        %1211 = vst [vmem:[#allocation2 + $0x94] sm:$0xf] %v1147
        %1212 = vst [vmem:[#allocation2 + $0x98] sm:$0xf] %v1148
        %1213 = vst [vmem:[#allocation2 + $0x9c] sm:$0xf] %v1149
        %1214 = vst [vmem:[#allocation2 + $0xa0] sm:$0xf] %v1150
        %1215 = vst [vmem:[#allocation2 + $0xa4] sm:$0xf] %v1151
        %1216 = vst [vmem:[#allocation2 + $0xa8] sm:$0xf] %v1152
        %1217 = vst [vmem:[#allocation2 + $0xac] sm:$0xf] %v1153
        %1218 = vst [vmem:[#allocation2 + $0xb0] sm:$0xf] %v1154
        %1219 = vst [vmem:[#allocation2 + $0xb4] sm:$0xf] %v1155
        %1220 = vst [vmem:[#allocation2 + $0xb8] sm:$0xf] %v1156
        %1221 = vst [vmem:[#allocation2 + $0xbc] sm:$0xf] %v1157
        %v1222 = vld [vmem:[%s1 + $0xc0] sm:$0xf]
        %v1223 = vld [vmem:[%s1 + $0xc4] sm:$0xf]
        %v1224 = vld [vmem:[%s1 + $0xc8] sm:$0xf]
        %v1225 = vld [vmem:[%s1 + $0xcc] sm:$0xf]
        %v1226 = vld [vmem:[%s1 + $0xd0] sm:$0xf]
        %v1227 = vld [vmem:[%s1 + $0xd4] sm:$0xf]
        %v1228 = vld [vmem:[%s1 + $0xd8] sm:$0xf]
        %v1229 = vld [vmem:[%s1 + $0xdc] sm:$0xf]
        %v1230 = vld [vmem:[%s1 + $0xe0] sm:$0xf]
        %v1231 = vld [vmem:[%s1 + $0xe4] sm:$0xf]
        %v1232 = vld [vmem:[%s1 + $0xe8] sm:$0xf]
        %v1233 = vld [vmem:[%s1 + $0xec] sm:$0xf]
        %v1234 = vld [vmem:[%s1 + $0xf0] sm:$0xf]
        %v1235 = vld [vmem:[%s1 + $0xf4] sm:$0xf]
        %v1236 = vld [vmem:[%s1 + $0xf8] sm:$0xf]
        %v1237 = vld [vmem:[%s1 + $0xfc] sm:$0xf]
        %v1238 = vld [vmem:[%s1 + $0x100] sm:$0xf]
        %v1239 = vld [vmem:[%s1 + $0x104] sm:$0xf]
        %v1240 = vld [vmem:[%s1 + $0x108] sm:$0xf]
        %v1241 = vld [vmem:[%s1 + $0x10c] sm:$0xf]
        %v1242 = vld [vmem:[%s1 + $0x110] sm:$0xf]
        %v1243 = vld [vmem:[%s1 + $0x114] sm:$0xf]
        %v1244 = vld [vmem:[%s1 + $0x118] sm:$0xf]
        %v1245 = vld [vmem:[%s1 + $0x11c] sm:$0xf]
        %v1246 = vld [vmem:[%s1 + $0x120] sm:$0xf]
        %v1247 = vld [vmem:[%s1 + $0x124] sm:$0xf]
        %v1248 = vld [vmem:[%s1 + $0x128] sm:$0xf]
        %v1249 = vld [vmem:[%s1 + $0x12c] sm:$0xf]
        %v1250 = vld [vmem:[%s1 + $0x130] sm:$0xf]
        %v1251 = vld [vmem:[%s1 + $0x134] sm:$0xf]
        %v1252 = vld [vmem:[%s1 + $0x138] sm:$0xf]
        %v1253 = vld [vmem:[%s1 + $0x13c] sm:$0xf]
        %s1254 = scalar_lea.vmem %s168, 128
        %v1255 = vld [vmem:[%s1254] sm:$0xff]
        %v1256 = vld [vmem:[%s1254 + $0x8] sm:$0xff]
        %v1257 = vld [vmem:[%s1254 + $0x10] sm:$0xff]
        %v1258 = vld [vmem:[%s1254 + $0x18] sm:$0xff]
        %v1259 = vld [vmem:[%s1254 + $0x20] sm:$0xff]
        %v1260 = vld [vmem:[%s1254 + $0x28] sm:$0xff]
        %v1261 = vld [vmem:[%s1254 + $0x30] sm:$0xff]
        %v1262 = vld [vmem:[%s1254 + $0x38] sm:$0xff]
        %v1263 = vpack.c.bf16 %v1256, %v1255
        %v1264 = vpack.c.bf16 %v1258, %v1257
        %v1265 = vpack.c.bf16 %v1260, %v1259
        %v1266 = vpack.c.bf16 %v1262, %v1261
        %v1267 = vld [vmem:[%s2 + $0x180] sm:$0xff]
        %v1268 = vld [vmem:[%s2 + $0x188] sm:$0xff]
        %v1269 = vld [vmem:[%s2 + $0x190] sm:$0xff]
        %v1270 = vld [vmem:[%s2 + $0x198] sm:$0xff]
        %v1271 = vld [vmem:[%s2 + $0x1a0] sm:$0xff]
        %v1272 = vld [vmem:[%s2 + $0x1a8] sm:$0xff]
        %v1273 = vld [vmem:[%s2 + $0x1b0] sm:$0xff]
        %v1274 = vld [vmem:[%s2 + $0x1b8] sm:$0xff]
        %v1275 = vld [vmem:[%s2 + $0x1c0] sm:$0xff]
        %v1276 = vld [vmem:[%s2 + $0x1c8] sm:$0xff]
        %v1277 = vld [vmem:[%s2 + $0x1d0] sm:$0xff]
        %v1278 = vld [vmem:[%s2 + $0x1d8] sm:$0xff]
        %v1279 = vld [vmem:[%s2 + $0x1e0] sm:$0xff]
        %v1280 = vld [vmem:[%s2 + $0x1e8] sm:$0xff]
        %v1281 = vld [vmem:[%s2 + $0x1f0] sm:$0xff]
        %v1282 = vld [vmem:[%s2 + $0x1f8] sm:$0xff]
        %v1283 = vld [vmem:[%s2 + $0x200] sm:$0xff]
        %v1284 = vld [vmem:[%s2 + $0x208] sm:$0xff]
        %v1285 = vld [vmem:[%s2 + $0x210] sm:$0xff]
        %v1286 = vld [vmem:[%s2 + $0x218] sm:$0xff]
        %v1287 = vld [vmem:[%s2 + $0x220] sm:$0xff]
        %v1288 = vld [vmem:[%s2 + $0x228] sm:$0xff]
        %v1289 = vld [vmem:[%s2 + $0x230] sm:$0xff]
        %v1290 = vld [vmem:[%s2 + $0x238] sm:$0xff]
        %v1291 = vld [vmem:[%s2 + $0x240] sm:$0xff]
        %v1292 = vld [vmem:[%s2 + $0x248] sm:$0xff]
        %v1293 = vld [vmem:[%s2 + $0x250] sm:$0xff]
        %v1294 = vld [vmem:[%s2 + $0x258] sm:$0xff]
        %v1295 = vld [vmem:[%s2 + $0x260] sm:$0xff]
        %v1296 = vld [vmem:[%s2 + $0x268] sm:$0xff]
        %v1297 = vld [vmem:[%s2 + $0x270] sm:$0xff]
        %v1298 = vld [vmem:[%s2 + $0x278] sm:$0xff]
        %1300 = vset.pattern.permute.xlu0 0
        %1301 = vperm.xlu0 %1300, %v1267
        %v1302 = vpop.permute.xlu0 %1301
        %1305 = vset.pattern.permute.xlu0 0
        %1306 = vperm.xlu0 %1305, %v1268
        %v1307 = vpop.permute.xlu0 %1306
        %1310 = vset.pattern.permute.xlu0 0
        %1311 = vperm.xlu0 %1310, %v1269
        %v1312 = vpop.permute.xlu0 %1311
        %1315 = vset.pattern.permute.xlu0 0
        %1316 = vperm.xlu0 %1315, %v1270
        %v1317 = vpop.permute.xlu0 %1316
        %1320 = vset.pattern.permute.xlu0 0
        %1321 = vperm.xlu0 %1320, %v1271
        %v1322 = vpop.permute.xlu0 %1321
        %1325 = vset.pattern.permute.xlu0 0
        %1326 = vperm.xlu0 %1325, %v1272
        %v1327 = vpop.permute.xlu0 %1326
        %1330 = vset.pattern.permute.xlu0 0
        %1331 = vperm.xlu0 %1330, %v1273
        %v1332 = vpop.permute.xlu0 %1331
        %1335 = vset.pattern.permute.xlu0 0
        %1336 = vperm.xlu0 %1335, %v1274
        %v1337 = vpop.permute.xlu0 %1336
        %1340 = vset.pattern.permute.xlu0 0
        %1341 = vperm.xlu0 %1340, %v1275
        %v1342 = vpop.permute.xlu0 %1341
        %1345 = vset.pattern.permute.xlu0 0
        %1346 = vperm.xlu0 %1345, %v1276
        %v1347 = vpop.permute.xlu0 %1346
        %1350 = vset.pattern.permute.xlu0 0
        %1351 = vperm.xlu0 %1350, %v1277
        %v1352 = vpop.permute.xlu0 %1351
        %1355 = vset.pattern.permute.xlu0 0
        %1356 = vperm.xlu0 %1355, %v1278
        %v1357 = vpop.permute.xlu0 %1356
        %1360 = vset.pattern.permute.xlu0 0
        %1361 = vperm.xlu0 %1360, %v1279
        %v1362 = vpop.permute.xlu0 %1361
        %1365 = vset.pattern.permute.xlu0 0
        %1366 = vperm.xlu0 %1365, %v1280
        %v1367 = vpop.permute.xlu0 %1366
        %1370 = vset.pattern.permute.xlu0 0
        %1371 = vperm.xlu0 %1370, %v1281
        %v1372 = vpop.permute.xlu0 %1371
        %1375 = vset.pattern.permute.xlu0 0
        %1376 = vperm.xlu0 %1375, %v1282
        %v1377 = vpop.permute.xlu0 %1376
        %1380 = vset.pattern.permute.xlu0 0
        %1381 = vperm.xlu0 %1380, %v1283
        %v1382 = vpop.permute.xlu0 %1381
        %1385 = vset.pattern.permute.xlu0 0
        %1386 = vperm.xlu0 %1385, %v1284
        %v1387 = vpop.permute.xlu0 %1386
        %1390 = vset.pattern.permute.xlu0 0
        %1391 = vperm.xlu0 %1390, %v1285
        %v1392 = vpop.permute.xlu0 %1391
        %1395 = vset.pattern.permute.xlu0 0
        %1396 = vperm.xlu0 %1395, %v1286
        %v1397 = vpop.permute.xlu0 %1396
        %1400 = vset.pattern.permute.xlu0 0
        %1401 = vperm.xlu0 %1400, %v1287
        %v1402 = vpop.permute.xlu0 %1401
        %1405 = vset.pattern.permute.xlu0 0
        %1406 = vperm.xlu0 %1405, %v1288
        %v1407 = vpop.permute.xlu0 %1406
        %1410 = vset.pattern.permute.xlu0 0
        %1411 = vperm.xlu0 %1410, %v1289
        %v1412 = vpop.permute.xlu0 %1411
        %1415 = vset.pattern.permute.xlu0 0
        %1416 = vperm.xlu0 %1415, %v1290
        %v1417 = vpop.permute.xlu0 %1416
        %1420 = vset.pattern.permute.xlu0 0
        %1421 = vperm.xlu0 %1420, %v1291
        %v1422 = vpop.permute.xlu0 %1421
        %1425 = vset.pattern.permute.xlu0 0
        %1426 = vperm.xlu0 %1425, %v1292
        %v1427 = vpop.permute.xlu0 %1426
        %1430 = vset.pattern.permute.xlu0 0
        %1431 = vperm.xlu0 %1430, %v1293
        %v1432 = vpop.permute.xlu0 %1431
        %1435 = vset.pattern.permute.xlu0 0
        %1436 = vperm.xlu0 %1435, %v1294
        %v1437 = vpop.permute.xlu0 %1436
        %1440 = vset.pattern.permute.xlu0 0
        %1441 = vperm.xlu0 %1440, %v1295
        %v1442 = vpop.permute.xlu0 %1441
        %1445 = vset.pattern.permute.xlu0 0
        %1446 = vperm.xlu0 %1445, %v1296
        %v1447 = vpop.permute.xlu0 %1446
        %1450 = vset.pattern.permute.xlu0 0
        %1451 = vperm.xlu0 %1450, %v1297
        %v1452 = vpop.permute.xlu0 %1451
        %1455 = vset.pattern.permute.xlu0 0
        %1456 = vperm.xlu0 %1455, %v1298
        %v1457 = vpop.permute.xlu0 %1456
        %v1491 = vunpack.c.l.b16 %v1222
        %v1492 = vunpack.c.l.b16 %v1223
        %v1493 = vunpack.c.l.b16 %v1224
        %v1494 = vunpack.c.l.b16 %v1225
        %v1495 = vunpack.c.l.b16 %v1226
        %v1496 = vunpack.c.l.b16 %v1227
        %v1497 = vunpack.c.l.b16 %v1228
        %v1498 = vunpack.c.l.b16 %v1229
        %v1499 = vunpack.c.l.b16 %v1230
        %v1500 = vunpack.c.l.b16 %v1231
        %v1501 = vunpack.c.l.b16 %v1232
        %v1502 = vunpack.c.l.b16 %v1233
        %v1503 = vunpack.c.l.b16 %v1234
        %v1504 = vunpack.c.l.b16 %v1235
        %v1505 = vunpack.c.l.b16 %v1236
        %v1506 = vunpack.c.l.b16 %v1237
        %v1507 = vunpack.c.l.b16 %v1238
        %v1508 = vunpack.c.l.b16 %v1239
        %v1509 = vunpack.c.l.b16 %v1240
        %v1510 = vunpack.c.l.b16 %v1241
        %v1511 = vunpack.c.l.b16 %v1242
        %v1512 = vunpack.c.l.b16 %v1243
        %v1513 = vunpack.c.l.b16 %v1244
        %v1514 = vunpack.c.l.b16 %v1245
        %v1515 = vunpack.c.l.b16 %v1246
        %v1516 = vunpack.c.l.b16 %v1247
        %v1517 = vunpack.c.l.b16 %v1248
        %v1518 = vunpack.c.l.b16 %v1249
        %v1519 = vunpack.c.l.b16 %v1250
        %v1520 = vunpack.c.l.b16 %v1251
        %v1521 = vunpack.c.l.b16 %v1252
        %v1522 = vunpack.c.l.b16 %v1253
        %v1523 = vpack.c.b16 %v1492, %v1491
        %v1524 = vpack.c.b16 %v1494, %v1493
        %v1525 = vpack.c.b16 %v1496, %v1495
        %v1526 = vpack.c.b16 %v1498, %v1497
        %v1527 = vpack.c.b16 %v1500, %v1499
        %v1528 = vpack.c.b16 %v1502, %v1501
        %v1529 = vpack.c.b16 %v1504, %v1503
        %v1530 = vpack.c.b16 %v1506, %v1505
        %v1531 = vpack.c.b16 %v1508, %v1507
        %v1532 = vpack.c.b16 %v1510, %v1509
        %v1533 = vpack.c.b16 %v1512, %v1511
        %v1534 = vpack.c.b16 %v1514, %v1513
        %v1535 = vpack.c.b16 %v1516, %v1515
        %v1536 = vpack.c.b16 %v1518, %v1517
        %v1537 = vpack.c.b16 %v1520, %v1519
        %v1538 = vpack.c.b16 %v1522, %v1521
        %v1540 = vsel %vm335, %v1523, 0
        %v1543 = vsel %vm335, %v1524, 0
        %v1546 = vsel %vm335, %v1525, 0
        %v1549 = vsel %vm335, %v1526, 0
        %v1552 = vsel %vm335, %v1527, 0
        %v1555 = vsel %vm335, %v1528, 0
        %v1558 = vsel %vm335, %v1529, 0
        %v1561 = vsel %vm335, %v1530, 0
        %v1564 = vsel %vm335, %v1531, 0
        %v1567 = vsel %vm335, %v1532, 0
        %v1570 = vsel %vm335, %v1533, 0
        %v1573 = vsel %vm335, %v1534, 0
        %v1576 = vsel %vm335, %v1535, 0
        %v1579 = vsel %vm335, %v1536, 0
        %v1582 = vsel %vm335, %v1537, 0
        %v1585 = vsel %vm335, %v1538, 0
        %1587 = vmatprep.subr.bf16.mxu0 0
        %1588 = vmatpush1.bf16.msra.mxu0 0
        %1589 = vmatprep.subr.bf16.mxu0 0
        %1590 = vmatpush1.bf16.msra.mxu0 0
        %1591 = vmatprep.subr.bf16.mxu0 0
        %1592 = vmatpush1.bf16.msra.mxu0 0
        %1593 = vmatprep.subr.bf16.mxu0 0
        %1594 = vmatpush1.bf16.msra.mxu0 0
        %1595 = vmatprep.subr.bf16.mxu0 0
        %1596 = vmatpush1.bf16.msra.mxu0 %v1266
        %1597 = vmatprep.subr.bf16.mxu0 0
        %1598 = vmatpush1.bf16.msra.mxu0 %v1265
        %1599 = vmatprep.subr.bf16.mxu0 0
        %1600 = vmatpush1.bf16.msra.mxu0 %v1264
        %1601 = vmatprep.subr.bf16.mxu0 0
        %1602 = vmatpush1.bf16.msra.mxu0 %v1263
        %1603 = vmatprep.subr.bf16.mxu0 0
        %1604 = vmatpush2.bf16.msra.mxu0 0
        %1605 = vmatprep.subr.bf16.mxu0 0
        %1606 = vmatpush2.bf16.msra.mxu0 0
        %1607 = vmatprep.subr.bf16.mxu0 0
        %1608 = vmatpush2.bf16.msra.mxu0 0
        %1609 = vmatprep.subr.bf16.mxu0 0
        %1610 = vmatpush2.bf16.msra.mxu0 0
        %1611 = vmatprep.subr.bf16.mxu0 0
        %1612 = vmatpush2.bf16.msra.mxu0 0
        %1613 = vmatprep.subr.bf16.mxu0 0
        %1614 = vmatpush2.bf16.msra.mxu0 0
        %1615 = vmatprep.subr.bf16.mxu0 0
        %1616 = vmatpush2.bf16.msra.mxu0 0
        %1617 = vmatprep.subr.bf16.mxu0 0
        %1618 = vmatpush2.bf16.msra.mxu0 0
        %1619 = vmatprep.mubr.bf16.mxu0 0
        %1620 = vmatmul.mubr.bf16.gmra.mxu0 %v1540
        %v1621 = vpop.f32.mrf.mxu0
        %v1622 = vadd.f32 %v1302, %v1621
        %v1623 = vpop.f32.mrf.mxu0
        %v1624 = vpop.f32.mrf.mxu0
        %v1625 = vadd.f32 %v1307, %v1624
        %v1626 = vpop.f32.mrf.mxu0
        %1627 = vmatprep.mubr.bf16.mxu0 0
        %1628 = vmatmul.mubr.bf16.gmra.mxu0 %v1543
        %v1629 = vpop.f32.mrf.mxu0
        %v1630 = vadd.f32 %v1312, %v1629
        %v1631 = vpop.f32.mrf.mxu0
        %v1632 = vpop.f32.mrf.mxu0
        %v1633 = vadd.f32 %v1317, %v1632
        %v1634 = vpop.f32.mrf.mxu0
        %1635 = vmatprep.mubr.bf16.mxu0 0
        %1636 = vmatmul.mubr.bf16.gmra.mxu0 %v1546
        %v1637 = vpop.f32.mrf.mxu0
        %v1638 = vadd.f32 %v1322, %v1637
        %v1639 = vpop.f32.mrf.mxu0
        %v1640 = vpop.f32.mrf.mxu0
        %v1641 = vadd.f32 %v1327, %v1640
        %v1642 = vpop.f32.mrf.mxu0
        %1643 = vmatprep.mubr.bf16.mxu0 0
        %1644 = vmatmul.mubr.bf16.gmra.mxu0 %v1549
        %v1645 = vpop.f32.mrf.mxu0
        %v1646 = vadd.f32 %v1332, %v1645
        %v1647 = vpop.f32.mrf.mxu0
        %v1648 = vpop.f32.mrf.mxu0
        %v1649 = vadd.f32 %v1337, %v1648
        %v1650 = vpop.f32.mrf.mxu0
        %1651 = vmatprep.mubr.bf16.mxu0 0
        %1652 = vmatmul.mubr.bf16.gmra.mxu0 %v1552
        %v1653 = vpop.f32.mrf.mxu0
        %v1654 = vadd.f32 %v1342, %v1653
        %v1655 = vpop.f32.mrf.mxu0
        %v1656 = vpop.f32.mrf.mxu0
        %v1657 = vadd.f32 %v1347, %v1656
        %v1658 = vpop.f32.mrf.mxu0
        %1659 = vmatprep.mubr.bf16.mxu0 0
        %1660 = vmatmul.mubr.bf16.gmra.mxu0 %v1555
        %v1661 = vpop.f32.mrf.mxu0
        %v1662 = vadd.f32 %v1352, %v1661
        %v1663 = vpop.f32.mrf.mxu0
        %v1664 = vpop.f32.mrf.mxu0
        %v1665 = vadd.f32 %v1357, %v1664
        %v1666 = vpop.f32.mrf.mxu0
        %1667 = vmatprep.mubr.bf16.mxu0 0
        %1668 = vmatmul.mubr.bf16.gmra.mxu0 %v1558
        %v1669 = vpop.f32.mrf.mxu0
        %v1670 = vadd.f32 %v1362, %v1669
        %v1671 = vpop.f32.mrf.mxu0
        %v1672 = vpop.f32.mrf.mxu0
        %v1673 = vadd.f32 %v1367, %v1672
        %v1674 = vpop.f32.mrf.mxu0
        %1675 = vmatprep.mubr.bf16.mxu0 0
        %1676 = vmatmul.mubr.bf16.gmra.mxu0 %v1561
        %v1677 = vpop.f32.mrf.mxu0
        %v1678 = vadd.f32 %v1372, %v1677
        %v1679 = vpop.f32.mrf.mxu0
        %v1680 = vpop.f32.mrf.mxu0
        %v1681 = vadd.f32 %v1377, %v1680
        %v1682 = vpop.f32.mrf.mxu0
        %1683 = vmatprep.mubr.bf16.mxu0 0
        %1684 = vmatmul.mubr.bf16.gmra.mxu0 %v1564
        %v1685 = vpop.f32.mrf.mxu0
        %v1686 = vadd.f32 %v1382, %v1685
        %v1687 = vpop.f32.mrf.mxu0
        %v1688 = vpop.f32.mrf.mxu0
        %v1689 = vadd.f32 %v1387, %v1688
        %v1690 = vpop.f32.mrf.mxu0
        %1691 = vmatprep.mubr.bf16.mxu0 0
        %1692 = vmatmul.mubr.bf16.gmra.mxu0 %v1567
        %v1693 = vpop.f32.mrf.mxu0
        %v1694 = vadd.f32 %v1392, %v1693
        %v1695 = vpop.f32.mrf.mxu0
        %v1696 = vpop.f32.mrf.mxu0
        %v1697 = vadd.f32 %v1397, %v1696
        %v1698 = vpop.f32.mrf.mxu0
        %1699 = vmatprep.mubr.bf16.mxu0 0
        %1700 = vmatmul.mubr.bf16.gmra.mxu0 %v1570
        %v1701 = vpop.f32.mrf.mxu0
        %v1702 = vadd.f32 %v1402, %v1701
        %v1703 = vpop.f32.mrf.mxu0
        %v1704 = vpop.f32.mrf.mxu0
        %v1705 = vadd.f32 %v1407, %v1704
        %v1706 = vpop.f32.mrf.mxu0
        %1707 = vmatprep.mubr.bf16.mxu0 0
        %1708 = vmatmul.mubr.bf16.gmra.mxu0 %v1573
        %v1709 = vpop.f32.mrf.mxu0
        %v1710 = vadd.f32 %v1412, %v1709
        %v1711 = vpop.f32.mrf.mxu0
        %v1712 = vpop.f32.mrf.mxu0
        %v1713 = vadd.f32 %v1417, %v1712
        %v1714 = vpop.f32.mrf.mxu0
        %1715 = vmatprep.mubr.bf16.mxu0 0
        %1716 = vmatmul.mubr.bf16.gmra.mxu0 %v1576
        %v1717 = vpop.f32.mrf.mxu0
        %v1718 = vadd.f32 %v1422, %v1717
        %v1719 = vpop.f32.mrf.mxu0
        %v1720 = vpop.f32.mrf.mxu0
        %v1721 = vadd.f32 %v1427, %v1720
        %v1722 = vpop.f32.mrf.mxu0
        %1723 = vmatprep.mubr.bf16.mxu0 0
        %1724 = vmatmul.mubr.bf16.gmra.mxu0 %v1579
        %v1725 = vpop.f32.mrf.mxu0
        %v1726 = vadd.f32 %v1432, %v1725
        %v1727 = vpop.f32.mrf.mxu0
        %v1728 = vpop.f32.mrf.mxu0
        %v1729 = vadd.f32 %v1437, %v1728
        %v1730 = vpop.f32.mrf.mxu0
        %1731 = vmatprep.mubr.bf16.mxu0 0
        %1732 = vmatmul.mubr.bf16.gmra.mxu0 %v1582
        %v1733 = vpop.f32.mrf.mxu0
        %v1734 = vadd.f32 %v1442, %v1733
        %v1735 = vpop.f32.mrf.mxu0
        %v1736 = vpop.f32.mrf.mxu0
        %v1737 = vadd.f32 %v1447, %v1736
        %v1738 = vpop.f32.mrf.mxu0
        %1739 = vmatprep.mubr.bf16.mxu0 0
        %1740 = vmatmul.mubr.bf16.gmra.mxu0 %v1585
        %v1741 = vpop.f32.mrf.mxu0
        %v1742 = vadd.f32 %v1452, %v1741
        %v1743 = vpop.f32.mrf.mxu0
        %v1744 = vpop.f32.mrf.mxu0
        %v1745 = vadd.f32 %v1457, %v1744
        %v1746 = vpop.f32.mrf.mxu0
        %1747 = vdwg.mxu0
        %v1748 = vpack.c.bf16 %v1625, %v1622
        %v1749 = vpack.c.bf16 %v1633, %v1630
        %v1750 = vpack.c.bf16 %v1641, %v1638
        %v1751 = vpack.c.bf16 %v1649, %v1646
        %v1752 = vpack.c.bf16 %v1657, %v1654
        %v1753 = vpack.c.bf16 %v1665, %v1662
        %v1754 = vpack.c.bf16 %v1673, %v1670
        %v1755 = vpack.c.bf16 %v1681, %v1678
        %v1756 = vpack.c.bf16 %v1689, %v1686
        %v1757 = vpack.c.bf16 %v1697, %v1694
        %v1758 = vpack.c.bf16 %v1705, %v1702
        %v1759 = vpack.c.bf16 %v1713, %v1710
        %v1760 = vpack.c.bf16 %v1721, %v1718
        %v1761 = vpack.c.bf16 %v1729, %v1726
        %v1762 = vpack.c.bf16 %v1737, %v1734
        %v1763 = vpack.c.bf16 %v1745, %v1742
        %v1780 = vunpack.c.l.b16 %v1748
        %v1781 = vunpack.c.h.b16 %v1748
        %v1782 = vunpack.c.l.b16 %v1749
        %v1783 = vunpack.c.h.b16 %v1749
        %v1784 = vunpack.c.l.b16 %v1750
        %v1785 = vunpack.c.h.b16 %v1750
        %v1786 = vunpack.c.l.b16 %v1751
        %v1787 = vunpack.c.h.b16 %v1751
        %v1788 = vunpack.c.l.b16 %v1752
        %v1789 = vunpack.c.h.b16 %v1752
        %v1790 = vunpack.c.l.b16 %v1753
        %v1791 = vunpack.c.h.b16 %v1753
        %v1792 = vunpack.c.l.b16 %v1754
        %v1793 = vunpack.c.h.b16 %v1754
        %v1794 = vunpack.c.l.b16 %v1755
        %v1795 = vunpack.c.h.b16 %v1755
        %v1796 = vunpack.c.l.b16 %v1756
        %v1797 = vunpack.c.h.b16 %v1756
        %v1798 = vunpack.c.l.b16 %v1757
        %v1799 = vunpack.c.h.b16 %v1757
        %v1800 = vunpack.c.l.b16 %v1758
        %v1801 = vunpack.c.h.b16 %v1758
        %v1802 = vunpack.c.l.b16 %v1759
        %v1803 = vunpack.c.h.b16 %v1759
        %v1804 = vunpack.c.l.b16 %v1760
        %v1805 = vunpack.c.h.b16 %v1760
        %v1806 = vunpack.c.l.b16 %v1761
        %v1807 = vunpack.c.h.b16 %v1761
        %v1808 = vunpack.c.l.b16 %v1762
        %v1809 = vunpack.c.h.b16 %v1762
        %v1810 = vunpack.c.l.b16 %v1763
        %v1811 = vunpack.c.h.b16 %v1763
        %v1812 = vpack.c.b16 %v1780, %v1780
        %v1813 = vpack.c.b16 %v1781, %v1781
        %v1814 = vpack.c.b16 %v1782, %v1782
        %v1815 = vpack.c.b16 %v1783, %v1783
        %v1816 = vpack.c.b16 %v1784, %v1784
        %v1817 = vpack.c.b16 %v1785, %v1785
        %v1818 = vpack.c.b16 %v1786, %v1786
        %v1819 = vpack.c.b16 %v1787, %v1787
        %v1820 = vpack.c.b16 %v1788, %v1788
        %v1821 = vpack.c.b16 %v1789, %v1789
        %v1822 = vpack.c.b16 %v1790, %v1790
        %v1823 = vpack.c.b16 %v1791, %v1791
        %v1824 = vpack.c.b16 %v1792, %v1792
        %v1825 = vpack.c.b16 %v1793, %v1793
        %v1826 = vpack.c.b16 %v1794, %v1794
        %v1827 = vpack.c.b16 %v1795, %v1795
        %v1828 = vpack.c.b16 %v1796, %v1796
        %v1829 = vpack.c.b16 %v1797, %v1797
        %v1830 = vpack.c.b16 %v1798, %v1798
        %v1831 = vpack.c.b16 %v1799, %v1799
        %v1832 = vpack.c.b16 %v1800, %v1800
        %v1833 = vpack.c.b16 %v1801, %v1801
        %v1834 = vpack.c.b16 %v1802, %v1802
        %v1835 = vpack.c.b16 %v1803, %v1803
        %v1836 = vpack.c.b16 %v1804, %v1804
        %v1837 = vpack.c.b16 %v1805, %v1805
        %v1838 = vpack.c.b16 %v1806, %v1806
        %v1839 = vpack.c.b16 %v1807, %v1807
        %v1840 = vpack.c.b16 %v1808, %v1808
        %v1841 = vpack.c.b16 %v1809, %v1809
        %v1842 = vpack.c.b16 %v1810, %v1810
        %v1843 = vpack.c.b16 %v1811, %v1811
        %1876 = vst [vmem:[#allocation2 + $0xc0] sm:$0xf] %v1812
        %1877 = vst [vmem:[#allocation2 + $0xc4] sm:$0xf] %v1813
        %1878 = vst [vmem:[#allocation2 + $0xc8] sm:$0xf] %v1814
        %1879 = vst [vmem:[#allocation2 + $0xcc] sm:$0xf] %v1815
        %1880 = vst [vmem:[#allocation2 + $0xd0] sm:$0xf] %v1816
        %1881 = vst [vmem:[#allocation2 + $0xd4] sm:$0xf] %v1817
        %1882 = vst [vmem:[#allocation2 + $0xd8] sm:$0xf] %v1818
        %1883 = vst [vmem:[#allocation2 + $0xdc] sm:$0xf] %v1819
        %1884 = vst [vmem:[#allocation2 + $0xe0] sm:$0xf] %v1820
        %1885 = vst [vmem:[#allocation2 + $0xe4] sm:$0xf] %v1821
        %1886 = vst [vmem:[#allocation2 + $0xe8] sm:$0xf] %v1822
        %1887 = vst [vmem:[#allocation2 + $0xec] sm:$0xf] %v1823
        %1888 = vst [vmem:[#allocation2 + $0xf0] sm:$0xf] %v1824
        %1889 = vst [vmem:[#allocation2 + $0xf4] sm:$0xf] %v1825
        %1890 = vst [vmem:[#allocation2 + $0xf8] sm:$0xf] %v1826
        %1891 = vst [vmem:[#allocation2 + $0xfc] sm:$0xf] %v1827
        %1892 = vst [vmem:[#allocation2 + $0x100] sm:$0xf] %v1828
        %1893 = vst [vmem:[#allocation2 + $0x104] sm:$0xf] %v1829
        %1894 = vst [vmem:[#allocation2 + $0x108] sm:$0xf] %v1830
        %1895 = vst [vmem:[#allocation2 + $0x10c] sm:$0xf] %v1831
        %1896 = vst [vmem:[#allocation2 + $0x110] sm:$0xf] %v1832
        %1897 = vst [vmem:[#allocation2 + $0x114] sm:$0xf] %v1833
        %1898 = vst [vmem:[#allocation2 + $0x118] sm:$0xf] %v1834
        %1899 = vst [vmem:[#allocation2 + $0x11c] sm:$0xf] %v1835
        %1900 = vst [vmem:[#allocation2 + $0x120] sm:$0xf] %v1836
        %1901 = vst [vmem:[#allocation2 + $0x124] sm:$0xf] %v1837
        %1902 = vst [vmem:[#allocation2 + $0x128] sm:$0xf] %v1838
        %1903 = vst [vmem:[#allocation2 + $0x12c] sm:$0xf] %v1839
        %1904 = vst [vmem:[#allocation2 + $0x130] sm:$0xf] %v1840
        %1905 = vst [vmem:[#allocation2 + $0x134] sm:$0xf] %v1841
        %1906 = vst [vmem:[#allocation2 + $0x138] sm:$0xf] %v1842
        %1907 = vst [vmem:[#allocation2 + $0x13c] sm:$0xf] %v1843
        %v1908 = vld [vmem:[%s186] sm:$0xff]
        %v1909 = vld [vmem:[%s186 + $0x8] sm:$0xff]
        %v1910 = vld [vmem:[%s186 + $0x10] sm:$0xff]
        %v1911 = vld [vmem:[%s186 + $0x18] sm:$0xff]
        %v1912 = vld [vmem:[%s186 + $0x20] sm:$0xff]
        %v1913 = vld [vmem:[%s186 + $0x28] sm:$0xff]
        %v1914 = vld [vmem:[%s186 + $0x30] sm:$0xff]
        %v1915 = vld [vmem:[%s186 + $0x38] sm:$0xff]
        %v1916 = vld [vmem:[#allocation2] sm:$0xf]
        %v1917 = vld [vmem:[#allocation2 + $0x4] sm:$0xf]
        %v1918 = vld [vmem:[#allocation2 + $0x8] sm:$0xf]
        %v1919 = vld [vmem:[#allocation2 + $0xc] sm:$0xf]
        %v1920 = vld [vmem:[#allocation2 + $0x10] sm:$0xf]
        %v1921 = vld [vmem:[#allocation2 + $0x14] sm:$0xf]
        %v1922 = vld [vmem:[#allocation2 + $0x18] sm:$0xf]
        %v1923 = vld [vmem:[#allocation2 + $0x1c] sm:$0xf]
        %1924 = vst [vmem:[#allocation3] sm:$0xff] 0.0
        %1925 = vst [vmem:[#allocation3 + $0x8] sm:$0xff] 0.0
        %1926 = vst [vmem:[#allocation3 + $0x10] sm:$0xff] 0.0
        %1927 = vst [vmem:[#allocation3 + $0x18] sm:$0xff] 0.0
        %1928 = vst [vmem:[#allocation3 + $0x20] sm:$0xff] 0.0
        %1929 = vst [vmem:[#allocation3 + $0x28] sm:$0xff] 0.0
        %1930 = vst [vmem:[#allocation3 + $0x30] sm:$0xff] 0.0
        %1931 = vst [vmem:[#allocation3 + $0x38] sm:$0xff] 0.0
        %1932 = vst [vmem:[#allocation4] sm:$0x1] 0.0
        %v1933 = vld [vmem:[%s186] sm:$0xff]
        %v1934 = vld [vmem:[%s186 + $0x8] sm:$0xff]
        %v1935 = vld [vmem:[%s186 + $0x10] sm:$0xff]
        %v1936 = vld [vmem:[%s186 + $0x18] sm:$0xff]
        %v1937 = vld [vmem:[%s186 + $0x20] sm:$0xff]
        %v1938 = vld [vmem:[%s186 + $0x28] sm:$0xff]
        %v1939 = vld [vmem:[%s186 + $0x30] sm:$0xff]
        %v1940 = vld [vmem:[%s186 + $0x38] sm:$0xff]
        %v1941 = vpack.c.bf16 %v1934, %v1933
        %v1942 = vpack.c.bf16 %v1936, %v1935
        %v1943 = vpack.c.bf16 %v1938, %v1937
        %v1944 = vpack.c.bf16 %v1940, %v1939
        %1945 = vxpose.xlu0.c.b16.start [1/8] %v1941, 128
        %1946 = vxpose.xlu0.c.b16.cont [2/8] %v1942, 128
        %1947 = vxpose.xlu0.c.b16.cont [3/8] %v1943, 128
        %1948 = vxpose.xlu0.c.b16.cont [4/8] %v1944, 128
        %1949 = vxpose.xlu0.c.b16.cont [5/8] 0, 128
        %1950 = vxpose.xlu0.c.b16.cont [6/8] 0, 128
        %1951 = vxpose.xlu0.c.b16.cont [7/8] 0, 128
        %1952 = vxpose.xlu0.c.b16.end [8/8] 0, 128
        %v1953 = vpop.trf.xlu0
        %v1954 = vpop.trf.xlu0
        %v1955 = vpop.trf.xlu0
        %v1956 = vpop.trf.xlu0
        %v1957 = vpop.trf.xlu0
        %v1958 = vpop.trf.xlu0
        %v1959 = vpop.trf.xlu0
        %v1960 = vpop.trf.xlu0
        %v1969 = vunpack.c.l.b16 %v1916
        %v1970 = vunpack.c.l.b16 %v1917
        %v1971 = vunpack.c.l.b16 %v1918
        %v1972 = vunpack.c.l.b16 %v1919
        %v1973 = vunpack.c.l.b16 %v1920
        %v1974 = vunpack.c.l.b16 %v1921
        %v1975 = vunpack.c.l.b16 %v1922
        %v1976 = vunpack.c.l.b16 %v1923
        %v1977 = vpack.c.b16 %v1970, %v1969
        %v1978 = vpack.c.b16 %v1972, %v1971
        %v1979 = vpack.c.b16 %v1974, %v1973
        %v1980 = vpack.c.b16 %v1976, %v1975
        %v1986 = vsel %vm335, %v1953, 0
        %v1989 = vsel %vm335, %v1954, 0
        %v1992 = vsel %vm335, %v1955, 0
        %v1995 = vsel %vm335, %v1956, 0
        %v1998 = vsel %vm335, %v1957, 0
        %v2001 = vsel %vm335, %v1958, 0
        %v2004 = vsel %vm335, %v1959, 0
        %v2007 = vsel %vm335, %v1960, 0
        %2009 = vmatprep.subr.bf16.mxu0 0
        %2010 = vmatpush1.bf16.msra.mxu0 0
        %2011 = vmatprep.subr.bf16.mxu0 0
        %2012 = vmatpush1.bf16.msra.mxu0 0
        %2013 = vmatprep.subr.bf16.mxu0 0
        %2014 = vmatpush1.bf16.msra.mxu0 0
        %2015 = vmatprep.subr.bf16.mxu0 0
        %2016 = vmatpush1.bf16.msra.mxu0 0
        %2017 = vmatprep.subr.bf16.mxu0 0
        %2018 = vmatpush1.bf16.msra.mxu0 %v1980
        %2019 = vmatprep.subr.bf16.mxu0 0
        %2020 = vmatpush1.bf16.msra.mxu0 %v1979
        %2021 = vmatprep.subr.bf16.mxu0 0
        %2022 = vmatpush1.bf16.msra.mxu0 %v1978
        %2023 = vmatprep.subr.bf16.mxu0 0
        %2024 = vmatpush1.bf16.msra.mxu0 %v1977
        %2025 = vmatprep.subr.bf16.mxu0 0
        %2026 = vmatpush2.bf16.msra.mxu0 0
        %2027 = vmatprep.subr.bf16.mxu0 0
        %2028 = vmatpush2.bf16.msra.mxu0 0
        %2029 = vmatprep.subr.bf16.mxu0 0
        %2030 = vmatpush2.bf16.msra.mxu0 0
        %2031 = vmatprep.subr.bf16.mxu0 0
        %2032 = vmatpush2.bf16.msra.mxu0 0
        %2033 = vmatprep.subr.bf16.mxu0 0
        %2034 = vmatpush2.bf16.msra.mxu0 0
        %2035 = vmatprep.subr.bf16.mxu0 0
        %2036 = vmatpush2.bf16.msra.mxu0 0
        %2037 = vmatprep.subr.bf16.mxu0 0
        %2038 = vmatpush2.bf16.msra.mxu0 0
        %2039 = vmatprep.subr.bf16.mxu0 0
        %2040 = vmatpush2.bf16.msra.mxu0 0
        %2041 = vmatprep.mubr.bf16.mxu0 0
        %2042 = vmatmul.mubr.bf16.gmra.mxu0 %v1986
        %v2043 = vpop.f32.mrf.mxu0
        %v2044 = vadd.f32 0.0, %v2043
        %v2045 = vpop.f32.mrf.mxu0
        %v2046 = vpop.f32.mrf.mxu0
        %v2047 = vadd.f32 0.0, %v2046
        %v2048 = vpop.f32.mrf.mxu0
        %2049 = vmatprep.mubr.bf16.mxu0 0
        %2050 = vmatmul.mubr.bf16.gmra.mxu0 %v1989
        %v2051 = vpop.f32.mrf.mxu0
        %v2052 = vadd.f32 0.0, %v2051
        %v2053 = vpop.f32.mrf.mxu0
        %v2054 = vpop.f32.mrf.mxu0
        %v2055 = vadd.f32 0.0, %v2054
        %v2056 = vpop.f32.mrf.mxu0
        %2057 = vmatprep.mubr.bf16.mxu0 0
        %2058 = vmatmul.mubr.bf16.gmra.mxu0 %v1992
        %v2059 = vpop.f32.mrf.mxu0
        %v2060 = vadd.f32 0.0, %v2059
        %v2061 = vpop.f32.mrf.mxu0
        %v2062 = vpop.f32.mrf.mxu0
        %v2063 = vadd.f32 0.0, %v2062
        %v2064 = vpop.f32.mrf.mxu0
        %2065 = vmatprep.mubr.bf16.mxu0 0
        %2066 = vmatmul.mubr.bf16.gmra.mxu0 %v1995
        %v2067 = vpop.f32.mrf.mxu0
        %v2068 = vadd.f32 0.0, %v2067
        %v2069 = vpop.f32.mrf.mxu0
        %v2070 = vpop.f32.mrf.mxu0
        %v2071 = vadd.f32 0.0, %v2070
        %v2072 = vpop.f32.mrf.mxu0
        %2073 = vmatprep.mubr.bf16.mxu0 0
        %2074 = vmatmul.mubr.bf16.gmra.mxu0 %v1998
        %v2075 = vpop.f32.mrf.mxu0
        %v2076 = vadd.f32 0.0, %v2075
        %v2077 = vpop.f32.mrf.mxu0
        %v2078 = vpop.f32.mrf.mxu0
        %v2079 = vadd.f32 0.0, %v2078
        %v2080 = vpop.f32.mrf.mxu0
        %2081 = vmatprep.mubr.bf16.mxu0 0
        %2082 = vmatmul.mubr.bf16.gmra.mxu0 %v2001
        %v2083 = vpop.f32.mrf.mxu0
        %v2084 = vadd.f32 0.0, %v2083
        %v2085 = vpop.f32.mrf.mxu0
        %v2086 = vpop.f32.mrf.mxu0
        %v2087 = vadd.f32 0.0, %v2086
        %v2088 = vpop.f32.mrf.mxu0
        %2089 = vmatprep.mubr.bf16.mxu0 0
        %2090 = vmatmul.mubr.bf16.gmra.mxu0 %v2004
        %v2091 = vpop.f32.mrf.mxu0
        %v2092 = vadd.f32 0.0, %v2091
        %v2093 = vpop.f32.mrf.mxu0
        %v2094 = vpop.f32.mrf.mxu0
        %v2095 = vadd.f32 0.0, %v2094
        %v2096 = vpop.f32.mrf.mxu0
        %2097 = vmatprep.mubr.bf16.mxu0 0
        %2098 = vmatmul.mubr.bf16.gmra.mxu0 %v2007
        %v2099 = vpop.f32.mrf.mxu0
        %v2100 = vadd.f32 0.0, %v2099
        %v2101 = vpop.f32.mrf.mxu0
        %v2102 = vpop.f32.mrf.mxu0
        %v2103 = vadd.f32 0.0, %v2102
        %v2104 = vpop.f32.mrf.mxu0
        %2105 = vdwg.mxu0
        %2106 = vmax.xlane.f32.xlu0 %v2044
        %v2107 = vpop.xlane.xlu0 %2106
        %2108 = vmax.xlane.f32.xlu0 %v2047
        %v2109 = vpop.xlane.xlu0 %2108
        %2110 = vmax.xlane.f32.xlu0 %v2052
        %v2111 = vpop.xlane.xlu0 %2110
        %2112 = vmax.xlane.f32.xlu0 %v2055
        %v2113 = vpop.xlane.xlu0 %2112
        %2114 = vmax.xlane.f32.xlu0 %v2060
        %v2115 = vpop.xlane.xlu0 %2114
        %2116 = vmax.xlane.f32.xlu0 %v2063
        %v2117 = vpop.xlane.xlu0 %2116
        %2118 = vmax.xlane.f32.xlu0 %v2068
        %v2119 = vpop.xlane.xlu0 %2118
        %2120 = vmax.xlane.f32.xlu0 %v2071
        %v2121 = vpop.xlane.xlu0 %2120
        %2122 = vmax.xlane.f32.xlu0 %v2076
        %v2123 = vpop.xlane.xlu0 %2122
        %2124 = vmax.xlane.f32.xlu0 %v2079
        %v2125 = vpop.xlane.xlu0 %2124
        %2126 = vmax.xlane.f32.xlu0 %v2084
        %v2127 = vpop.xlane.xlu0 %2126
        %2128 = vmax.xlane.f32.xlu0 %v2087
        %v2129 = vpop.xlane.xlu0 %2128
        %2130 = vmax.xlane.f32.xlu0 %v2092
        %v2131 = vpop.xlane.xlu0 %2130
        %2132 = vmax.xlane.f32.xlu0 %v2095
        %v2133 = vpop.xlane.xlu0 %2132
        %2134 = vmax.xlane.f32.xlu0 %v2100
        %v2135 = vpop.xlane.xlu0 %2134
        %2136 = vmax.xlane.f32.xlu0 %v2103
        %v2137 = vpop.xlane.xlu0 %2136
        %v2138 = vsub.f32 %v2044, %v2107
        %v2139 = vsub.f32 %v2047, %v2109
        %v2140 = vsub.f32 %v2052, %v2111
        %v2141 = vsub.f32 %v2055, %v2113
        %v2142 = vsub.f32 %v2060, %v2115
        %v2143 = vsub.f32 %v2063, %v2117
        %v2144 = vsub.f32 %v2068, %v2119
        %v2145 = vsub.f32 %v2071, %v2121
        %v2146 = vsub.f32 %v2076, %v2123
        %v2147 = vsub.f32 %v2079, %v2125
        %v2148 = vsub.f32 %v2084, %v2127
        %v2149 = vsub.f32 %v2087, %v2129
        %v2150 = vsub.f32 %v2092, %v2131
        %v2151 = vsub.f32 %v2095, %v2133
        %v2152 = vsub.f32 %v2100, %v2135
        %v2153 = vsub.f32 %v2103, %v2137
        %v2154 = vmul.f32 %v2138, 1.442695
        %v2155 = vpow.pop %v2154
        %v2156 = vmul.f32 %v2139, 1.442695
        %v2157 = vpow.pop %v2156
        %v2158 = vmul.f32 %v2140, 1.442695
        %v2159 = vpow.pop %v2158
        %v2160 = vmul.f32 %v2141, 1.442695
        %v2161 = vpow.pop %v2160
        %v2162 = vmul.f32 %v2142, 1.442695
        %v2163 = vpow.pop %v2162
        %v2164 = vmul.f32 %v2143, 1.442695
        %v2165 = vpow.pop %v2164
        %v2166 = vmul.f32 %v2144, 1.442695
        %v2167 = vpow.pop %v2166
        %v2168 = vmul.f32 %v2145, 1.442695
        %v2169 = vpow.pop %v2168
        %v2170 = vmul.f32 %v2146, 1.442695
        %v2171 = vpow.pop %v2170
        %v2172 = vmul.f32 %v2147, 1.442695
        %v2173 = vpow.pop %v2172
        %v2174 = vmul.f32 %v2148, 1.442695
        %v2175 = vpow.pop %v2174
        %v2176 = vmul.f32 %v2149, 1.442695
        %v2177 = vpow.pop %v2176
        %v2178 = vmul.f32 %v2150, 1.442695
        %v2179 = vpow.pop %v2178
        %v2180 = vmul.f32 %v2151, 1.442695
        %v2181 = vpow.pop %v2180
        %v2182 = vmul.f32 %v2152, 1.442695
        %v2183 = vpow.pop %v2182
        %v2184 = vmul.f32 %v2153, 1.442695
        %v2185 = vpow.pop %v2184
        %2186 = vadd.xlane.f32.xlu0 %v2155
        %v2187 = vpop.xlane.xlu0 %2186
        %2188 = vadd.xlane.f32.xlu0 %v2157
        %v2189 = vpop.xlane.xlu0 %2188
        %2190 = vadd.xlane.f32.xlu0 %v2159
        %v2191 = vpop.xlane.xlu0 %2190
        %2192 = vadd.xlane.f32.xlu0 %v2161
        %v2193 = vpop.xlane.xlu0 %2192
        %2194 = vadd.xlane.f32.xlu0 %v2163
        %v2195 = vpop.xlane.xlu0 %2194
        %2196 = vadd.xlane.f32.xlu0 %v2165
        %v2197 = vpop.xlane.xlu0 %2196
        %2198 = vadd.xlane.f32.xlu0 %v2167
        %v2199 = vpop.xlane.xlu0 %2198
        %2200 = vadd.xlane.f32.xlu0 %v2169
        %v2201 = vpop.xlane.xlu0 %2200
        %2202 = vadd.xlane.f32.xlu0 %v2171
        %v2203 = vpop.xlane.xlu0 %2202
        %2204 = vadd.xlane.f32.xlu0 %v2173
        %v2205 = vpop.xlane.xlu0 %2204
        %2206 = vadd.xlane.f32.xlu0 %v2175
        %v2207 = vpop.xlane.xlu0 %2206
        %2208 = vadd.xlane.f32.xlu0 %v2177
        %v2209 = vpop.xlane.xlu0 %2208
        %2210 = vadd.xlane.f32.xlu0 %v2179
        %v2211 = vpop.xlane.xlu0 %2210
        %2212 = vadd.xlane.f32.xlu0 %v2181
        %v2213 = vpop.xlane.xlu0 %2212
        %2214 = vadd.xlane.f32.xlu0 %v2183
        %v2215 = vpop.xlane.xlu0 %2214
        %2216 = vadd.xlane.f32.xlu0 %v2185
        %v2217 = vpop.xlane.xlu0 %2216
        %v2218 = vrcp.pop %v2187
        %v2219 = vrcp.pop %v2189
        %v2220 = vrcp.pop %v2191
        %v2221 = vrcp.pop %v2193
        %v2222 = vrcp.pop %v2195
        %v2223 = vrcp.pop %v2197
        %v2224 = vrcp.pop %v2199
        %v2225 = vrcp.pop %v2201
        %v2226 = vrcp.pop %v2203
        %v2227 = vrcp.pop %v2205
        %v2228 = vrcp.pop %v2207
        %v2229 = vrcp.pop %v2209
        %v2230 = vrcp.pop %v2211
        %v2231 = vrcp.pop %v2213
        %v2232 = vrcp.pop %v2215
        %v2233 = vrcp.pop %v2217
        %v2234 = vmul.f32 %v2187, %v2218
        %v2235 = vmul.f32 %v2189, %v2219
        %v2236 = vmul.f32 %v2191, %v2220
        %v2237 = vmul.f32 %v2193, %v2221
        %v2238 = vmul.f32 %v2195, %v2222
        %v2239 = vmul.f32 %v2197, %v2223
        %v2240 = vmul.f32 %v2199, %v2224
        %v2241 = vmul.f32 %v2201, %v2225
        %v2242 = vmul.f32 %v2203, %v2226
        %v2243 = vmul.f32 %v2205, %v2227
        %v2244 = vmul.f32 %v2207, %v2228
        %v2245 = vmul.f32 %v2209, %v2229
        %v2246 = vmul.f32 %v2211, %v2230
        %v2247 = vmul.f32 %v2213, %v2231
        %v2248 = vmul.f32 %v2215, %v2232
        %v2249 = vmul.f32 %v2217, %v2233
        %v2250 = vsub.f32 2.0, %v2234
        %v2251 = vsub.f32 2.0, %v2235
        %v2252 = vsub.f32 2.0, %v2236
        %v2253 = vsub.f32 2.0, %v2237
        %v2254 = vsub.f32 2.0, %v2238
        %v2255 = vsub.f32 2.0, %v2239
        %v2256 = vsub.f32 2.0, %v2240
        %v2257 = vsub.f32 2.0, %v2241
        %v2258 = vsub.f32 2.0, %v2242
        %v2259 = vsub.f32 2.0, %v2243
        %v2260 = vsub.f32 2.0, %v2244
        %v2261 = vsub.f32 2.0, %v2245
        %v2262 = vsub.f32 2.0, %v2246
        %v2263 = vsub.f32 2.0, %v2247
        %v2264 = vsub.f32 2.0, %v2248
        %v2265 = vsub.f32 2.0, %v2249
        %v2266 = vmul.f32 %v2218, %v2250
        %v2267 = vmul.f32 %v2219, %v2251
        %v2268 = vmul.f32 %v2220, %v2252
        %v2269 = vmul.f32 %v2221, %v2253
        %v2270 = vmul.f32 %v2222, %v2254
        %v2271 = vmul.f32 %v2223, %v2255
        %v2272 = vmul.f32 %v2224, %v2256
        %v2273 = vmul.f32 %v2225, %v2257
        %v2274 = vmul.f32 %v2226, %v2258
        %v2275 = vmul.f32 %v2227, %v2259
        %v2276 = vmul.f32 %v2228, %v2260
        %v2277 = vmul.f32 %v2229, %v2261
        %v2278 = vmul.f32 %v2230, %v2262
        %v2279 = vmul.f32 %v2231, %v2263
        %v2280 = vmul.f32 %v2232, %v2264
        %v2281 = vmul.f32 %v2233, %v2265
        %v2282 = vmul.f32 %v2155, %v2266
        %v2283 = vmul.f32 %v2157, %v2267
        %v2284 = vmul.f32 %v2159, %v2268
        %v2285 = vmul.f32 %v2161, %v2269
        %v2286 = vmul.f32 %v2163, %v2270
        %v2287 = vmul.f32 %v2165, %v2271
        %v2288 = vmul.f32 %v2167, %v2272
        %v2289 = vmul.f32 %v2169, %v2273
        %v2290 = vmul.f32 %v2171, %v2274
        %v2291 = vmul.f32 %v2173, %v2275
        %v2292 = vmul.f32 %v2175, %v2276
        %v2293 = vmul.f32 %v2177, %v2277
        %v2294 = vmul.f32 %v2179, %v2278
        %v2295 = vmul.f32 %v2181, %v2279
        %v2296 = vmul.f32 %v2183, %v2280
        %v2297 = vmul.f32 %v2185, %v2281
        %v2298 = vld [vmem:[#allocation2 + $0x20] sm:$0xf]
        %v2299 = vld [vmem:[#allocation2 + $0x24] sm:$0xf]
        %v2300 = vld [vmem:[#allocation2 + $0x28] sm:$0xf]
        %v2301 = vld [vmem:[#allocation2 + $0x2c] sm:$0xf]
        %v2302 = vld [vmem:[#allocation2 + $0x30] sm:$0xf]
        %v2303 = vld [vmem:[#allocation2 + $0x34] sm:$0xf]
        %v2304 = vld [vmem:[#allocation2 + $0x38] sm:$0xf]
        %v2305 = vld [vmem:[#allocation2 + $0x3c] sm:$0xf]
        %v2306 = vld [vmem:[#allocation3] sm:$0xff]
        %v2307 = vld [vmem:[#allocation3 + $0x8] sm:$0xff]
        %v2308 = vld [vmem:[#allocation3 + $0x10] sm:$0xff]
        %v2309 = vld [vmem:[#allocation3 + $0x18] sm:$0xff]
        %v2310 = vld [vmem:[#allocation3 + $0x20] sm:$0xff]
        %v2311 = vld [vmem:[#allocation3 + $0x28] sm:$0xff]
        %v2312 = vld [vmem:[#allocation3 + $0x30] sm:$0xff]
        %v2313 = vld [vmem:[#allocation3 + $0x38] sm:$0xff]
        %v2314 = vpack.c.bf16 %v2283, %v2282
        %v2315 = vpack.c.bf16 %v2285, %v2284
        %v2316 = vpack.c.bf16 %v2287, %v2286
        %v2317 = vpack.c.bf16 %v2289, %v2288
        %v2318 = vpack.c.bf16 %v2291, %v2290
        %v2319 = vpack.c.bf16 %v2293, %v2292
        %v2320 = vpack.c.bf16 %v2295, %v2294
        %v2321 = vpack.c.bf16 %v2297, %v2296
        %v2330 = vunpack.c.l.b16 %v2298
        %v2331 = vunpack.c.l.b16 %v2299
        %v2332 = vunpack.c.l.b16 %v2300
        %v2333 = vunpack.c.l.b16 %v2301
        %v2334 = vunpack.c.l.b16 %v2302
        %v2335 = vunpack.c.l.b16 %v2303
        %v2336 = vunpack.c.l.b16 %v2304
        %v2337 = vunpack.c.l.b16 %v2305
        %v2338 = vpack.c.b16 %v2331, %v2330
        %v2339 = vpack.c.b16 %v2333, %v2332
        %v2340 = vpack.c.b16 %v2335, %v2334
        %v2341 = vpack.c.b16 %v2337, %v2336
        %2346 = vmatprep.subr.bf16.mxu0 0
        %2347 = vmatpush1.bf16.msra.mxu0 %v2321
        %2348 = vmatprep.subr.bf16.mxu0 0
        %2349 = vmatpush1.bf16.msra.mxu0 %v2320
        %2350 = vmatprep.subr.bf16.mxu0 0
        %2351 = vmatpush1.bf16.msra.mxu0 %v2319
        %2352 = vmatprep.subr.bf16.mxu0 0
        %2353 = vmatpush1.bf16.msra.mxu0 %v2318
        %2354 = vmatprep.subr.bf16.mxu0 0
        %2355 = vmatpush1.bf16.msra.mxu0 %v2317
        %2356 = vmatprep.subr.bf16.mxu0 0
        %2357 = vmatpush1.bf16.msra.mxu0 %v2316
        %2358 = vmatprep.subr.bf16.mxu0 0
        %2359 = vmatpush1.bf16.msra.mxu0 %v2315
        %2360 = vmatprep.subr.bf16.mxu0 0
        %2361 = vmatpush1.bf16.msra.mxu0 %v2314
        %2362 = vmatprep.subr.bf16.mxu0 0
        %2363 = vmatpush2.bf16.msra.mxu0 0
        %2364 = vmatprep.subr.bf16.mxu0 0
        %2365 = vmatpush2.bf16.msra.mxu0 0
        %2366 = vmatprep.subr.bf16.mxu0 0
        %2367 = vmatpush2.bf16.msra.mxu0 0
        %2368 = vmatprep.subr.bf16.mxu0 0
        %2369 = vmatpush2.bf16.msra.mxu0 0
        %2370 = vmatprep.subr.bf16.mxu0 0
        %2371 = vmatpush2.bf16.msra.mxu0 0
        %2372 = vmatprep.subr.bf16.mxu0 0
        %2373 = vmatpush2.bf16.msra.mxu0 0
        %2374 = vmatprep.subr.bf16.mxu0 0
        %2375 = vmatpush2.bf16.msra.mxu0 0
        %2376 = vmatprep.subr.bf16.mxu0 0
        %2377 = vmatpush2.bf16.msra.mxu0 0
        %2378 = vmatprep.mubr.bf16.mxu0 0
        %2379 = vmatmul.mubr.bf16.gmra.mxu0 %v2338
        %v2380 = vpop.f32.mrf.mxu0
        %v2381 = vadd.f32 0.0, %v2380
        %v2382 = vpop.f32.mrf.mxu0
        %v2383 = vpop.f32.mrf.mxu0
        %v2384 = vadd.f32 0.0, %v2383
        %v2385 = vpop.f32.mrf.mxu0
        %2386 = vmatprep.mubr.bf16.mxu0 0
        %2387 = vmatmul.mubr.bf16.gmra.mxu0 %v2339
        %v2388 = vpop.f32.mrf.mxu0
        %v2389 = vadd.f32 0.0, %v2388
        %v2390 = vpop.f32.mrf.mxu0
        %v2391 = vpop.f32.mrf.mxu0
        %v2392 = vadd.f32 0.0, %v2391
        %v2393 = vpop.f32.mrf.mxu0
        %2394 = vmatprep.mubr.bf16.mxu0 0
        %2395 = vmatmul.mubr.bf16.gmra.mxu0 %v2340
        %v2396 = vpop.f32.mrf.mxu0
        %v2397 = vadd.f32 0.0, %v2396
        %v2398 = vpop.f32.mrf.mxu0
        %v2399 = vpop.f32.mrf.mxu0
        %v2400 = vadd.f32 0.0, %v2399
        %v2401 = vpop.f32.mrf.mxu0
        %2402 = vmatprep.mubr.bf16.mxu0 0
        %2403 = vmatmul.mubr.bf16.gmra.mxu0 %v2341
        %v2404 = vpop.f32.mrf.mxu0
        %v2405 = vadd.f32 0.0, %v2404
        %v2406 = vpop.f32.mrf.mxu0
        %v2407 = vpop.f32.mrf.mxu0
        %v2408 = vadd.f32 0.0, %v2407
        %v2409 = vpop.f32.mrf.mxu0
        %2410 = vdwg.mxu0
        %v2411 = vadd.f32 %v2306, %v2381
        %v2412 = vadd.f32 %v2307, %v2384
        %v2413 = vadd.f32 %v2308, %v2389
        %v2414 = vadd.f32 %v2309, %v2392
        %v2415 = vadd.f32 %v2310, %v2397
        %v2416 = vadd.f32 %v2311, %v2400
        %v2417 = vadd.f32 %v2312, %v2405
        %v2418 = vadd.f32 %v2313, %v2408
        %2419 = vst [vmem:[#allocation3] sm:$0xff] %v2411
        %2420 = vst [vmem:[#allocation3 + $0x8] sm:$0xff] %v2412
        %2421 = vst [vmem:[#allocation3 + $0x10] sm:$0xff] %v2413
        %2422 = vst [vmem:[#allocation3 + $0x18] sm:$0xff] %v2414
        %2423 = vst [vmem:[#allocation3 + $0x20] sm:$0xff] %v2415
        %2424 = vst [vmem:[#allocation3 + $0x28] sm:$0xff] %v2416
        %2425 = vst [vmem:[#allocation3 + $0x30] sm:$0xff] %v2417
        %2426 = vst [vmem:[#allocation3 + $0x38] sm:$0xff] %v2418
        %v2427 = vld [vmem:[#allocation4] sm:$0x1]
        %v2428 = vadd.f32 %v2282, %v2283
        %v2429 = vadd.f32 %v2428, %v2284
        %v2430 = vadd.f32 %v2429, %v2285
        %v2431 = vadd.f32 %v2430, %v2286
        %v2432 = vadd.f32 %v2431, %v2287
        %v2433 = vadd.f32 %v2432, %v2288
        %v2434 = vadd.f32 %v2433, %v2289
        %v2435 = vadd.f32 %v2434, %v2290
        %v2436 = vadd.f32 %v2435, %v2291
        %v2437 = vadd.f32 %v2436, %v2292
        %v2438 = vadd.f32 %v2437, %v2293
        %v2439 = vadd.f32 %v2438, %v2294
        %v2440 = vadd.f32 %v2439, %v2295
        %v2441 = vadd.f32 %v2440, %v2296
        %v2442 = vadd.f32 %v2441, %v2297
        %v2443 = vrot.slane %v2442, 4
        %v2444 = vadd.f32 %v2442, %v2443
        %v2445 = vrot.slane %v2444, 2
        %v2446 = vadd.f32 %v2444, %v2445
        %v2447 = vrot.slane %v2446, 1
        %v2448 = vadd.f32 %v2446, %v2447
        %v2449 = vadd.f32 %v2427, %v2448
        %2450 = vst [vmem:[#allocation4] sm:$0x1] %v2449
        %v2451 = vld [vmem:[#allocation3] sm:$0xff]
        %v2452 = vld [vmem:[#allocation3 + $0x8] sm:$0xff]
        %v2453 = vld [vmem:[#allocation3 + $0x10] sm:$0xff]
        %v2454 = vld [vmem:[#allocation3 + $0x18] sm:$0xff]
        %v2455 = vld [vmem:[#allocation3 + $0x20] sm:$0xff]
        %v2456 = vld [vmem:[#allocation3 + $0x28] sm:$0xff]
        %v2457 = vld [vmem:[#allocation3 + $0x30] sm:$0xff]
        %v2458 = vld [vmem:[#allocation3 + $0x38] sm:$0xff]
        %v2459 = vld [vmem:[#allocation4] sm:$0x1]
        %v2460 = vadd.f32 %v2459, 1e-07
        %v2461 = vrcp.pop %v2460
        %v2462 = vmul.f32 %v2460, %v2461
        %v2463 = vsub.f32 2.0, %v2462
        %v2464 = vmul.f32 %v2461, %v2463
        %v2466 = vlaneseq
        %v2467 = vshrl.u32 %v2466, 7
        %v2468 = vsub.s32 0, %v2467
        %v2469 = vrot.slane %v2464, %v2468
        %v2471 = vmul.f32 %v2451, %v2469
        %v2472 = vmul.f32 %v2452, %v2469
        %v2473 = vmul.f32 %v2453, %v2469
        %v2474 = vmul.f32 %v2454, %v2469
        %v2475 = vmul.f32 %v2455, %v2469
        %v2476 = vmul.f32 %v2456, %v2469
        %v2477 = vmul.f32 %v2457, %v2469
        %v2478 = vmul.f32 %v2458, %v2469
        %v2479 = vld [vmem:[%s1 + $0x140] sm:$0xf]
        %v2480 = vld [vmem:[%s1 + $0x144] sm:$0xf]
        %v2481 = vld [vmem:[%s1 + $0x148] sm:$0xf]
        %v2482 = vld [vmem:[%s1 + $0x14c] sm:$0xf]
        %v2483 = vld [vmem:[%s1 + $0x150] sm:$0xf]
        %v2484 = vld [vmem:[%s1 + $0x154] sm:$0xf]
        %v2485 = vld [vmem:[%s1 + $0x158] sm:$0xf]
        %v2486 = vld [vmem:[%s1 + $0x15c] sm:$0xf]
        %v2487 = vsub.f32 %v1908, %v2471
        %v2488 = vsub.f32 %v1909, %v2472
        %v2489 = vsub.f32 %v1910, %v2473
        %v2490 = vsub.f32 %v1911, %v2474
        %v2491 = vsub.f32 %v1912, %v2475
        %v2492 = vsub.f32 %v1913, %v2476
        %v2493 = vsub.f32 %v1914, %v2477
        %v2494 = vsub.f32 %v1915, %v2478
        %v2495 = vpack.c.bf16 %v2488, %v2487
        %v2496 = vpack.c.bf16 %v2490, %v2489
        %v2497 = vpack.c.bf16 %v2492, %v2491
        %v2498 = vpack.c.bf16 %v2494, %v2493
        %v2499 = vld [vmem:[%s2 + $0x280] sm:$0xff]
        %v2500 = vld [vmem:[%s2 + $0x288] sm:$0xff]
        %v2501 = vld [vmem:[%s2 + $0x290] sm:$0xff]
        %v2502 = vld [vmem:[%s2 + $0x298] sm:$0xff]
        %v2503 = vld [vmem:[%s2 + $0x2a0] sm:$0xff]
        %v2504 = vld [vmem:[%s2 + $0x2a8] sm:$0xff]
        %v2505 = vld [vmem:[%s2 + $0x2b0] sm:$0xff]
        %v2506 = vld [vmem:[%s2 + $0x2b8] sm:$0xff]
        %2508 = vset.pattern.permute.xlu0 0
        %2509 = vperm.xlu0 %2508, %v2499
        %v2510 = vpop.permute.xlu0 %2509
        %2513 = vset.pattern.permute.xlu0 0
        %2514 = vperm.xlu0 %2513, %v2500
        %v2515 = vpop.permute.xlu0 %2514
        %2518 = vset.pattern.permute.xlu0 0
        %2519 = vperm.xlu0 %2518, %v2501
        %v2520 = vpop.permute.xlu0 %2519
        %2523 = vset.pattern.permute.xlu0 0
        %2524 = vperm.xlu0 %2523, %v2502
        %v2525 = vpop.permute.xlu0 %2524
        %2528 = vset.pattern.permute.xlu0 0
        %2529 = vperm.xlu0 %2528, %v2503
        %v2530 = vpop.permute.xlu0 %2529
        %2533 = vset.pattern.permute.xlu0 0
        %2534 = vperm.xlu0 %2533, %v2504
        %v2535 = vpop.permute.xlu0 %2534
        %2538 = vset.pattern.permute.xlu0 0
        %2539 = vperm.xlu0 %2538, %v2505
        %v2540 = vpop.permute.xlu0 %2539
        %2543 = vset.pattern.permute.xlu0 0
        %2544 = vperm.xlu0 %2543, %v2506
        %v2545 = vpop.permute.xlu0 %2544
        %v2555 = vunpack.c.l.b16 %v2479
        %v2556 = vunpack.c.l.b16 %v2480
        %v2557 = vunpack.c.l.b16 %v2481
        %v2558 = vunpack.c.l.b16 %v2482
        %v2559 = vunpack.c.l.b16 %v2483
        %v2560 = vunpack.c.l.b16 %v2484
        %v2561 = vunpack.c.l.b16 %v2485
        %v2562 = vunpack.c.l.b16 %v2486
        %v2563 = vpack.c.b16 %v2556, %v2555
        %v2564 = vpack.c.b16 %v2558, %v2557
        %v2565 = vpack.c.b16 %v2560, %v2559
        %v2566 = vpack.c.b16 %v2562, %v2561
        %v2568 = vsel %vm335, %v2563, 0
        %v2571 = vsel %vm335, %v2564, 0
        %v2574 = vsel %vm335, %v2565, 0
        %v2577 = vsel %vm335, %v2566, 0
        %2579 = vmatprep.subr.bf16.mxu0 0
        %2580 = vmatpush1.bf16.msra.mxu0 0
        %2581 = vmatprep.subr.bf16.mxu0 0
        %2582 = vmatpush1.bf16.msra.mxu0 0
        %2583 = vmatprep.subr.bf16.mxu0 0
        %2584 = vmatpush1.bf16.msra.mxu0 0
        %2585 = vmatprep.subr.bf16.mxu0 0
        %2586 = vmatpush1.bf16.msra.mxu0 0
        %2587 = vmatprep.subr.bf16.mxu0 0
        %2588 = vmatpush1.bf16.msra.mxu0 %v2498
        %2589 = vmatprep.subr.bf16.mxu0 0
        %2590 = vmatpush1.bf16.msra.mxu0 %v2497
        %2591 = vmatprep.subr.bf16.mxu0 0
        %2592 = vmatpush1.bf16.msra.mxu0 %v2496
        %2593 = vmatprep.subr.bf16.mxu0 0
        %2594 = vmatpush1.bf16.msra.mxu0 %v2495
        %2595 = vmatprep.subr.bf16.mxu0 0
        %2596 = vmatpush2.bf16.msra.mxu0 0
        %2597 = vmatprep.subr.bf16.mxu0 0
        %2598 = vmatpush2.bf16.msra.mxu0 0
        %2599 = vmatprep.subr.bf16.mxu0 0
        %2600 = vmatpush2.bf16.msra.mxu0 0
        %2601 = vmatprep.subr.bf16.mxu0 0
        %2602 = vmatpush2.bf16.msra.mxu0 0
        %2603 = vmatprep.subr.bf16.mxu0 0
        %2604 = vmatpush2.bf16.msra.mxu0 0
        %2605 = vmatprep.subr.bf16.mxu0 0
        %2606 = vmatpush2.bf16.msra.mxu0 0
        %2607 = vmatprep.subr.bf16.mxu0 0
        %2608 = vmatpush2.bf16.msra.mxu0 0
        %2609 = vmatprep.subr.bf16.mxu0 0
        %2610 = vmatpush2.bf16.msra.mxu0 0
        %2611 = vmatprep.mubr.bf16.mxu0 0
        %2612 = vmatmul.mubr.bf16.gmra.mxu0 %v2568
        %v2613 = vpop.f32.mrf.mxu0
        %v2614 = vadd.f32 %v2510, %v2613
        %v2615 = vpop.f32.mrf.mxu0
        %v2616 = vpop.f32.mrf.mxu0
        %v2617 = vadd.f32 %v2515, %v2616
        %v2618 = vpop.f32.mrf.mxu0
        %2619 = vmatprep.mubr.bf16.mxu0 0
        %2620 = vmatmul.mubr.bf16.gmra.mxu0 %v2571
        %v2621 = vpop.f32.mrf.mxu0
        %v2622 = vadd.f32 %v2520, %v2621
        %v2623 = vpop.f32.mrf.mxu0
        %v2624 = vpop.f32.mrf.mxu0
        %v2625 = vadd.f32 %v2525, %v2624
        %v2626 = vpop.f32.mrf.mxu0
        %2627 = vmatprep.mubr.bf16.mxu0 0
        %2628 = vmatmul.mubr.bf16.gmra.mxu0 %v2574
        %v2629 = vpop.f32.mrf.mxu0
        %v2630 = vadd.f32 %v2530, %v2629
        %v2631 = vpop.f32.mrf.mxu0
        %v2632 = vpop.f32.mrf.mxu0
        %v2633 = vadd.f32 %v2535, %v2632
        %v2634 = vpop.f32.mrf.mxu0
        %2635 = vmatprep.mubr.bf16.mxu0 0
        %2636 = vmatmul.mubr.bf16.gmra.mxu0 %v2577
        %v2637 = vpop.f32.mrf.mxu0
        %v2638 = vadd.f32 %v2540, %v2637
        %v2639 = vpop.f32.mrf.mxu0
        %v2640 = vpop.f32.mrf.mxu0
        %v2641 = vadd.f32 %v2545, %v2640
        %v2642 = vpop.f32.mrf.mxu0
        %2643 = vdwg.mxu0
        %v2644 = vmax.f32 %v2614, 0.0
        %v2645 = vmax.f32 %v2617, 0.0
        %v2646 = vmax.f32 %v2622, 0.0
        %v2647 = vmax.f32 %v2625, 0.0
        %v2648 = vmax.f32 %v2630, 0.0
        %v2649 = vmax.f32 %v2633, 0.0
        %v2650 = vmax.f32 %v2638, 0.0
        %v2651 = vmax.f32 %v2641, 0.0
        %v2652 = vadd.f32 %v1908, %v2644
        %v2653 = vadd.f32 %v1909, %v2645
        %v2654 = vadd.f32 %v1910, %v2646
        %v2655 = vadd.f32 %v1911, %v2647
        %v2656 = vadd.f32 %v1912, %v2648
        %v2657 = vadd.f32 %v1913, %v2649
        %v2658 = vadd.f32 %v1914, %v2650
        %v2659 = vadd.f32 %v1915, %v2651
        %v2660 = vld [vmem:[%s168] sm:$0xff]
        %v2661 = vld [vmem:[%s168 + $0x8] sm:$0xff]
        %v2662 = vld [vmem:[%s168 + $0x10] sm:$0xff]
        %v2663 = vld [vmem:[%s168 + $0x18] sm:$0xff]
        %v2664 = vld [vmem:[%s168 + $0x20] sm:$0xff]
        %v2665 = vld [vmem:[%s168 + $0x28] sm:$0xff]
        %v2666 = vld [vmem:[%s168 + $0x30] sm:$0xff]
        %v2667 = vld [vmem:[%s168 + $0x38] sm:$0xff]
        %v2668 = vld [vmem:[#allocation2 + $0x40] sm:$0xf]
        %v2669 = vld [vmem:[#allocation2 + $0x44] sm:$0xf]
        %v2670 = vld [vmem:[#allocation2 + $0x48] sm:$0xf]
        %v2671 = vld [vmem:[#allocation2 + $0x4c] sm:$0xf]
        %v2672 = vld [vmem:[#allocation2 + $0x50] sm:$0xf]
        %v2673 = vld [vmem:[#allocation2 + $0x54] sm:$0xf]
        %v2674 = vld [vmem:[#allocation2 + $0x58] sm:$0xf]
        %v2675 = vld [vmem:[#allocation2 + $0x5c] sm:$0xf]
        %2676 = vst [vmem:[#allocation3] sm:$0xff] 0.0
        %2677 = vst [vmem:[#allocation3 + $0x8] sm:$0xff] 0.0
        %2678 = vst [vmem:[#allocation3 + $0x10] sm:$0xff] 0.0
        %2679 = vst [vmem:[#allocation3 + $0x18] sm:$0xff] 0.0
        %2680 = vst [vmem:[#allocation3 + $0x20] sm:$0xff] 0.0
        %2681 = vst [vmem:[#allocation3 + $0x28] sm:$0xff] 0.0
        %2682 = vst [vmem:[#allocation3 + $0x30] sm:$0xff] 0.0
        %2683 = vst [vmem:[#allocation3 + $0x38] sm:$0xff] 0.0
        %2684 = vst [vmem:[#allocation4] sm:$0x1] 0.0
        %v2685 = vld [vmem:[%s168] sm:$0xff]
        %v2686 = vld [vmem:[%s168 + $0x8] sm:$0xff]
        %v2687 = vld [vmem:[%s168 + $0x10] sm:$0xff]
        %v2688 = vld [vmem:[%s168 + $0x18] sm:$0xff]
        %v2689 = vld [vmem:[%s168 + $0x20] sm:$0xff]
        %v2690 = vld [vmem:[%s168 + $0x28] sm:$0xff]
        %v2691 = vld [vmem:[%s168 + $0x30] sm:$0xff]
        %v2692 = vld [vmem:[%s168 + $0x38] sm:$0xff]
        %v2693 = vpack.c.bf16 %v2686, %v2685
        %v2694 = vpack.c.bf16 %v2688, %v2687
        %v2695 = vpack.c.bf16 %v2690, %v2689
        %v2696 = vpack.c.bf16 %v2692, %v2691
        %2697 = vxpose.xlu0.c.b16.start [1/8] %v2693, 128
        %2698 = vxpose.xlu0.c.b16.cont [2/8] %v2694, 128
        %2699 = vxpose.xlu0.c.b16.cont [3/8] %v2695, 128
        %2700 = vxpose.xlu0.c.b16.cont [4/8] %v2696, 128
        %2701 = vxpose.xlu0.c.b16.cont [5/8] 0, 128
        %2702 = vxpose.xlu0.c.b16.cont [6/8] 0, 128
        %2703 = vxpose.xlu0.c.b16.cont [7/8] 0, 128
        %2704 = vxpose.xlu0.c.b16.end [8/8] 0, 128
        %v2705 = vpop.trf.xlu0
        %v2706 = vpop.trf.xlu0
        %v2707 = vpop.trf.xlu0
        %v2708 = vpop.trf.xlu0
        %v2709 = vpop.trf.xlu0
        %v2710 = vpop.trf.xlu0
        %v2711 = vpop.trf.xlu0
        %v2712 = vpop.trf.xlu0
        %v2721 = vunpack.c.l.b16 %v2668
        %v2722 = vunpack.c.l.b16 %v2669
        %v2723 = vunpack.c.l.b16 %v2670
        %v2724 = vunpack.c.l.b16 %v2671
        %v2725 = vunpack.c.l.b16 %v2672
        %v2726 = vunpack.c.l.b16 %v2673
        %v2727 = vunpack.c.l.b16 %v2674
        %v2728 = vunpack.c.l.b16 %v2675
        %v2729 = vpack.c.b16 %v2722, %v2721
        %v2730 = vpack.c.b16 %v2724, %v2723
        %v2731 = vpack.c.b16 %v2726, %v2725
        %v2732 = vpack.c.b16 %v2728, %v2727
        %v2738 = vsel %vm335, %v2705, 0
        %v2741 = vsel %vm335, %v2706, 0
        %v2744 = vsel %vm335, %v2707, 0
        %v2747 = vsel %vm335, %v2708, 0
        %v2750 = vsel %vm335, %v2709, 0
        %v2753 = vsel %vm335, %v2710, 0
        %v2756 = vsel %vm335, %v2711, 0
        %v2759 = vsel %vm335, %v2712, 0
        %2761 = vmatprep.subr.bf16.mxu0 0
        %2762 = vmatpush1.bf16.msra.mxu0 0
        %2763 = vmatprep.subr.bf16.mxu0 0
        %2764 = vmatpush1.bf16.msra.mxu0 0
        %2765 = vmatprep.subr.bf16.mxu0 0
        %2766 = vmatpush1.bf16.msra.mxu0 0
        %2767 = vmatprep.subr.bf16.mxu0 0
        %2768 = vmatpush1.bf16.msra.mxu0 0
        %2769 = vmatprep.subr.bf16.mxu0 0
        %2770 = vmatpush1.bf16.msra.mxu0 %v2732
        %2771 = vmatprep.subr.bf16.mxu0 0
        %2772 = vmatpush1.bf16.msra.mxu0 %v2731
        %2773 = vmatprep.subr.bf16.mxu0 0
        %2774 = vmatpush1.bf16.msra.mxu0 %v2730
        %2775 = vmatprep.subr.bf16.mxu0 0
        %2776 = vmatpush1.bf16.msra.mxu0 %v2729
        %2777 = vmatprep.subr.bf16.mxu0 0
        %2778 = vmatpush2.bf16.msra.mxu0 0
        %2779 = vmatprep.subr.bf16.mxu0 0
        %2780 = vmatpush2.bf16.msra.mxu0 0
        %2781 = vmatprep.subr.bf16.mxu0 0
        %2782 = vmatpush2.bf16.msra.mxu0 0
        %2783 = vmatprep.subr.bf16.mxu0 0
        %2784 = vmatpush2.bf16.msra.mxu0 0
        %2785 = vmatprep.subr.bf16.mxu0 0
        %2786 = vmatpush2.bf16.msra.mxu0 0
        %2787 = vmatprep.subr.bf16.mxu0 0
        %2788 = vmatpush2.bf16.msra.mxu0 0
        %2789 = vmatprep.subr.bf16.mxu0 0
        %2790 = vmatpush2.bf16.msra.mxu0 0
        %2791 = vmatprep.subr.bf16.mxu0 0
        %2792 = vmatpush2.bf16.msra.mxu0 0
        %2793 = vmatprep.mubr.bf16.mxu0 0
        %2794 = vmatmul.mubr.bf16.gmra.mxu0 %v2738
        %v2795 = vpop.f32.mrf.mxu0
        %v2796 = vadd.f32 0.0, %v2795
        %v2797 = vpop.f32.mrf.mxu0
        %v2798 = vpop.f32.mrf.mxu0
        %v2799 = vadd.f32 0.0, %v2798
        %v2800 = vpop.f32.mrf.mxu0
        %2801 = vmatprep.mubr.bf16.mxu0 0
        %2802 = vmatmul.mubr.bf16.gmra.mxu0 %v2741
        %v2803 = vpop.f32.mrf.mxu0
        %v2804 = vadd.f32 0.0, %v2803
        %v2805 = vpop.f32.mrf.mxu0
        %v2806 = vpop.f32.mrf.mxu0
        %v2807 = vadd.f32 0.0, %v2806
        %v2808 = vpop.f32.mrf.mxu0
        %2809 = vmatprep.mubr.bf16.mxu0 0
        %2810 = vmatmul.mubr.bf16.gmra.mxu0 %v2744
        %v2811 = vpop.f32.mrf.mxu0
        %v2812 = vadd.f32 0.0, %v2811
        %v2813 = vpop.f32.mrf.mxu0
        %v2814 = vpop.f32.mrf.mxu0
        %v2815 = vadd.f32 0.0, %v2814
        %v2816 = vpop.f32.mrf.mxu0
        %2817 = vmatprep.mubr.bf16.mxu0 0
        %2818 = vmatmul.mubr.bf16.gmra.mxu0 %v2747
        %v2819 = vpop.f32.mrf.mxu0
        %v2820 = vadd.f32 0.0, %v2819
        %v2821 = vpop.f32.mrf.mxu0
        %v2822 = vpop.f32.mrf.mxu0
        %v2823 = vadd.f32 0.0, %v2822
        %v2824 = vpop.f32.mrf.mxu0
        %2825 = vmatprep.mubr.bf16.mxu0 0
        %2826 = vmatmul.mubr.bf16.gmra.mxu0 %v2750
        %v2827 = vpop.f32.mrf.mxu0
        %v2828 = vadd.f32 0.0, %v2827
        %v2829 = vpop.f32.mrf.mxu0
        %v2830 = vpop.f32.mrf.mxu0
        %v2831 = vadd.f32 0.0, %v2830
        %v2832 = vpop.f32.mrf.mxu0
        %2833 = vmatprep.mubr.bf16.mxu0 0
        %2834 = vmatmul.mubr.bf16.gmra.mxu0 %v2753
        %v2835 = vpop.f32.mrf.mxu0
        %v2836 = vadd.f32 0.0, %v2835
        %v2837 = vpop.f32.mrf.mxu0
        %v2838 = vpop.f32.mrf.mxu0
        %v2839 = vadd.f32 0.0, %v2838
        %v2840 = vpop.f32.mrf.mxu0
        %2841 = vmatprep.mubr.bf16.mxu0 0
        %2842 = vmatmul.mubr.bf16.gmra.mxu0 %v2756
        %v2843 = vpop.f32.mrf.mxu0
        %v2844 = vadd.f32 0.0, %v2843
        %v2845 = vpop.f32.mrf.mxu0
        %v2846 = vpop.f32.mrf.mxu0
        %v2847 = vadd.f32 0.0, %v2846
        %v2848 = vpop.f32.mrf.mxu0
        %2849 = vmatprep.mubr.bf16.mxu0 0
        %2850 = vmatmul.mubr.bf16.gmra.mxu0 %v2759
        %v2851 = vpop.f32.mrf.mxu0
        %v2852 = vadd.f32 0.0, %v2851
        %v2853 = vpop.f32.mrf.mxu0
        %v2854 = vpop.f32.mrf.mxu0
        %v2855 = vadd.f32 0.0, %v2854
        %v2856 = vpop.f32.mrf.mxu0
        %2857 = vdwg.mxu0
        %2858 = vmax.xlane.f32.xlu0 %v2796
        %v2859 = vpop.xlane.xlu0 %2858
        %2860 = vmax.xlane.f32.xlu0 %v2799
        %v2861 = vpop.xlane.xlu0 %2860
        %2862 = vmax.xlane.f32.xlu0 %v2804
        %v2863 = vpop.xlane.xlu0 %2862
        %2864 = vmax.xlane.f32.xlu0 %v2807
        %v2865 = vpop.xlane.xlu0 %2864
        %2866 = vmax.xlane.f32.xlu0 %v2812
        %v2867 = vpop.xlane.xlu0 %2866
        %2868 = vmax.xlane.f32.xlu0 %v2815
        %v2869 = vpop.xlane.xlu0 %2868
        %2870 = vmax.xlane.f32.xlu0 %v2820
        %v2871 = vpop.xlane.xlu0 %2870
        %2872 = vmax.xlane.f32.xlu0 %v2823
        %v2873 = vpop.xlane.xlu0 %2872
        %2874 = vmax.xlane.f32.xlu0 %v2828
        %v2875 = vpop.xlane.xlu0 %2874
        %2876 = vmax.xlane.f32.xlu0 %v2831
        %v2877 = vpop.xlane.xlu0 %2876
        %2878 = vmax.xlane.f32.xlu0 %v2836
        %v2879 = vpop.xlane.xlu0 %2878
        %2880 = vmax.xlane.f32.xlu0 %v2839
        %v2881 = vpop.xlane.xlu0 %2880
        %2882 = vmax.xlane.f32.xlu0 %v2844
        %v2883 = vpop.xlane.xlu0 %2882
        %2884 = vmax.xlane.f32.xlu0 %v2847
        %v2885 = vpop.xlane.xlu0 %2884
        %2886 = vmax.xlane.f32.xlu0 %v2852
        %v2887 = vpop.xlane.xlu0 %2886
        %2888 = vmax.xlane.f32.xlu0 %v2855
        %v2889 = vpop.xlane.xlu0 %2888
        %v2890 = vsub.f32 %v2796, %v2859
        %v2891 = vsub.f32 %v2799, %v2861
        %v2892 = vsub.f32 %v2804, %v2863
        %v2893 = vsub.f32 %v2807, %v2865
        %v2894 = vsub.f32 %v2812, %v2867
        %v2895 = vsub.f32 %v2815, %v2869
        %v2896 = vsub.f32 %v2820, %v2871
        %v2897 = vsub.f32 %v2823, %v2873
        %v2898 = vsub.f32 %v2828, %v2875
        %v2899 = vsub.f32 %v2831, %v2877
        %v2900 = vsub.f32 %v2836, %v2879
        %v2901 = vsub.f32 %v2839, %v2881
        %v2902 = vsub.f32 %v2844, %v2883
        %v2903 = vsub.f32 %v2847, %v2885
        %v2904 = vsub.f32 %v2852, %v2887
        %v2905 = vsub.f32 %v2855, %v2889
        %v2906 = vmul.f32 %v2890, 1.442695
        %v2907 = vpow.pop %v2906
        %v2908 = vmul.f32 %v2891, 1.442695
        %v2909 = vpow.pop %v2908
        %v2910 = vmul.f32 %v2892, 1.442695
        %v2911 = vpow.pop %v2910
        %v2912 = vmul.f32 %v2893, 1.442695
        %v2913 = vpow.pop %v2912
        %v2914 = vmul.f32 %v2894, 1.442695
        %v2915 = vpow.pop %v2914
        %v2916 = vmul.f32 %v2895, 1.442695
        %v2917 = vpow.pop %v2916
        %v2918 = vmul.f32 %v2896, 1.442695
        %v2919 = vpow.pop %v2918
        %v2920 = vmul.f32 %v2897, 1.442695
        %v2921 = vpow.pop %v2920
        %v2922 = vmul.f32 %v2898, 1.442695
        %v2923 = vpow.pop %v2922
        %v2924 = vmul.f32 %v2899, 1.442695
        %v2925 = vpow.pop %v2924
        %v2926 = vmul.f32 %v2900, 1.442695
        %v2927 = vpow.pop %v2926
        %v2928 = vmul.f32 %v2901, 1.442695
        %v2929 = vpow.pop %v2928
        %v2930 = vmul.f32 %v2902, 1.442695
        %v2931 = vpow.pop %v2930
        %v2932 = vmul.f32 %v2903, 1.442695
        %v2933 = vpow.pop %v2932
        %v2934 = vmul.f32 %v2904, 1.442695
        %v2935 = vpow.pop %v2934
        %v2936 = vmul.f32 %v2905, 1.442695
        %v2937 = vpow.pop %v2936
        %2938 = vadd.xlane.f32.xlu0 %v2907
        %v2939 = vpop.xlane.xlu0 %2938
        %2940 = vadd.xlane.f32.xlu0 %v2909
        %v2941 = vpop.xlane.xlu0 %2940
        %2942 = vadd.xlane.f32.xlu0 %v2911
        %v2943 = vpop.xlane.xlu0 %2942
        %2944 = vadd.xlane.f32.xlu0 %v2913
        %v2945 = vpop.xlane.xlu0 %2944
        %2946 = vadd.xlane.f32.xlu0 %v2915
        %v2947 = vpop.xlane.xlu0 %2946
        %2948 = vadd.xlane.f32.xlu0 %v2917
        %v2949 = vpop.xlane.xlu0 %2948
        %2950 = vadd.xlane.f32.xlu0 %v2919
        %v2951 = vpop.xlane.xlu0 %2950
        %2952 = vadd.xlane.f32.xlu0 %v2921
        %v2953 = vpop.xlane.xlu0 %2952
        %2954 = vadd.xlane.f32.xlu0 %v2923
        %v2955 = vpop.xlane.xlu0 %2954
        %2956 = vadd.xlane.f32.xlu0 %v2925
        %v2957 = vpop.xlane.xlu0 %2956
        %2958 = vadd.xlane.f32.xlu0 %v2927
        %v2959 = vpop.xlane.xlu0 %2958
        %2960 = vadd.xlane.f32.xlu0 %v2929
        %v2961 = vpop.xlane.xlu0 %2960
        %2962 = vadd.xlane.f32.xlu0 %v2931
        %v2963 = vpop.xlane.xlu0 %2962
        %2964 = vadd.xlane.f32.xlu0 %v2933
        %v2965 = vpop.xlane.xlu0 %2964
        %2966 = vadd.xlane.f32.xlu0 %v2935
        %v2967 = vpop.xlane.xlu0 %2966
        %2968 = vadd.xlane.f32.xlu0 %v2937
        %v2969 = vpop.xlane.xlu0 %2968
        %v2970 = vrcp.pop %v2939
        %v2971 = vrcp.pop %v2941
        %v2972 = vrcp.pop %v2943
        %v2973 = vrcp.pop %v2945
        %v2974 = vrcp.pop %v2947
        %v2975 = vrcp.pop %v2949
        %v2976 = vrcp.pop %v2951
        %v2977 = vrcp.pop %v2953
        %v2978 = vrcp.pop %v2955
        %v2979 = vrcp.pop %v2957
        %v2980 = vrcp.pop %v2959
        %v2981 = vrcp.pop %v2961
        %v2982 = vrcp.pop %v2963
        %v2983 = vrcp.pop %v2965
        %v2984 = vrcp.pop %v2967
        %v2985 = vrcp.pop %v2969
        %v2986 = vmul.f32 %v2939, %v2970
        %v2987 = vmul.f32 %v2941, %v2971
        %v2988 = vmul.f32 %v2943, %v2972
        %v2989 = vmul.f32 %v2945, %v2973
        %v2990 = vmul.f32 %v2947, %v2974
        %v2991 = vmul.f32 %v2949, %v2975
        %v2992 = vmul.f32 %v2951, %v2976
        %v2993 = vmul.f32 %v2953, %v2977
        %v2994 = vmul.f32 %v2955, %v2978
        %v2995 = vmul.f32 %v2957, %v2979
        %v2996 = vmul.f32 %v2959, %v2980
        %v2997 = vmul.f32 %v2961, %v2981
        %v2998 = vmul.f32 %v2963, %v2982
        %v2999 = vmul.f32 %v2965, %v2983
        %v3000 = vmul.f32 %v2967, %v2984
        %v3001 = vmul.f32 %v2969, %v2985
        %v3002 = vsub.f32 2.0, %v2986
        %v3003 = vsub.f32 2.0, %v2987
        %v3004 = vsub.f32 2.0, %v2988
        %v3005 = vsub.f32 2.0, %v2989
        %v3006 = vsub.f32 2.0, %v2990
        %v3007 = vsub.f32 2.0, %v2991
        %v3008 = vsub.f32 2.0, %v2992
        %v3009 = vsub.f32 2.0, %v2993
        %v3010 = vsub.f32 2.0, %v2994
        %v3011 = vsub.f32 2.0, %v2995
        %v3012 = vsub.f32 2.0, %v2996
        %v3013 = vsub.f32 2.0, %v2997
        %v3014 = vsub.f32 2.0, %v2998
        %v3015 = vsub.f32 2.0, %v2999
        %v3016 = vsub.f32 2.0, %v3000
        %v3017 = vsub.f32 2.0, %v3001
        %v3018 = vmul.f32 %v2970, %v3002
        %v3019 = vmul.f32 %v2971, %v3003
        %v3020 = vmul.f32 %v2972, %v3004
        %v3021 = vmul.f32 %v2973, %v3005
        %v3022 = vmul.f32 %v2974, %v3006
        %v3023 = vmul.f32 %v2975, %v3007
        %v3024 = vmul.f32 %v2976, %v3008
        %v3025 = vmul.f32 %v2977, %v3009
        %v3026 = vmul.f32 %v2978, %v3010
        %v3027 = vmul.f32 %v2979, %v3011
        %v3028 = vmul.f32 %v2980, %v3012
        %v3029 = vmul.f32 %v2981, %v3013
        %v3030 = vmul.f32 %v2982, %v3014
        %v3031 = vmul.f32 %v2983, %v3015
        %v3032 = vmul.f32 %v2984, %v3016
        %v3033 = vmul.f32 %v2985, %v3017
        %v3034 = vmul.f32 %v2907, %v3018
        %v3035 = vmul.f32 %v2909, %v3019
        %v3036 = vmul.f32 %v2911, %v3020
        %v3037 = vmul.f32 %v2913, %v3021
        %v3038 = vmul.f32 %v2915, %v3022
        %v3039 = vmul.f32 %v2917, %v3023
        %v3040 = vmul.f32 %v2919, %v3024
        %v3041 = vmul.f32 %v2921, %v3025
        %v3042 = vmul.f32 %v2923, %v3026
        %v3043 = vmul.f32 %v2925, %v3027
        %v3044 = vmul.f32 %v2927, %v3028
        %v3045 = vmul.f32 %v2929, %v3029
        %v3046 = vmul.f32 %v2931, %v3030
        %v3047 = vmul.f32 %v2933, %v3031
        %v3048 = vmul.f32 %v2935, %v3032
        %v3049 = vmul.f32 %v2937, %v3033
        %v3050 = vld [vmem:[#allocation2 + $0x80] sm:$0xf]
        %v3051 = vld [vmem:[#allocation2 + $0x84] sm:$0xf]
        %v3052 = vld [vmem:[#allocation2 + $0x88] sm:$0xf]
        %v3053 = vld [vmem:[#allocation2 + $0x8c] sm:$0xf]
        %v3054 = vld [vmem:[#allocation2 + $0x90] sm:$0xf]
        %v3055 = vld [vmem:[#allocation2 + $0x94] sm:$0xf]
        %v3056 = vld [vmem:[#allocation2 + $0x98] sm:$0xf]
        %v3057 = vld [vmem:[#allocation2 + $0x9c] sm:$0xf]
        %v3058 = vld [vmem:[#allocation3] sm:$0xff]
        %v3059 = vld [vmem:[#allocation3 + $0x8] sm:$0xff]
        %v3060 = vld [vmem:[#allocation3 + $0x10] sm:$0xff]
        %v3061 = vld [vmem:[#allocation3 + $0x18] sm:$0xff]
        %v3062 = vld [vmem:[#allocation3 + $0x20] sm:$0xff]
        %v3063 = vld [vmem:[#allocation3 + $0x28] sm:$0xff]
        %v3064 = vld [vmem:[#allocation3 + $0x30] sm:$0xff]
        %v3065 = vld [vmem:[#allocation3 + $0x38] sm:$0xff]
        %v3066 = vpack.c.bf16 %v3035, %v3034
        %v3067 = vpack.c.bf16 %v3037, %v3036
        %v3068 = vpack.c.bf16 %v3039, %v3038
        %v3069 = vpack.c.bf16 %v3041, %v3040
        %v3070 = vpack.c.bf16 %v3043, %v3042
        %v3071 = vpack.c.bf16 %v3045, %v3044
        %v3072 = vpack.c.bf16 %v3047, %v3046
        %v3073 = vpack.c.bf16 %v3049, %v3048
        %v3082 = vunpack.c.l.b16 %v3050
        %v3083 = vunpack.c.l.b16 %v3051
        %v3084 = vunpack.c.l.b16 %v3052
        %v3085 = vunpack.c.l.b16 %v3053
        %v3086 = vunpack.c.l.b16 %v3054
        %v3087 = vunpack.c.l.b16 %v3055
        %v3088 = vunpack.c.l.b16 %v3056
        %v3089 = vunpack.c.l.b16 %v3057
        %v3090 = vpack.c.b16 %v3083, %v3082
        %v3091 = vpack.c.b16 %v3085, %v3084
        %v3092 = vpack.c.b16 %v3087, %v3086
        %v3093 = vpack.c.b16 %v3089, %v3088
        %3098 = vmatprep.subr.bf16.mxu0 0
        %3099 = vmatpush1.bf16.msra.mxu0 %v3073
        %3100 = vmatprep.subr.bf16.mxu0 0
        %3101 = vmatpush1.bf16.msra.mxu0 %v3072
        %3102 = vmatprep.subr.bf16.mxu0 0
        %3103 = vmatpush1.bf16.msra.mxu0 %v3071
        %3104 = vmatprep.subr.bf16.mxu0 0
        %3105 = vmatpush1.bf16.msra.mxu0 %v3070
        %3106 = vmatprep.subr.bf16.mxu0 0
        %3107 = vmatpush1.bf16.msra.mxu0 %v3069
        %3108 = vmatprep.subr.bf16.mxu0 0
        %3109 = vmatpush1.bf16.msra.mxu0 %v3068
        %3110 = vmatprep.subr.bf16.mxu0 0
        %3111 = vmatpush1.bf16.msra.mxu0 %v3067
        %3112 = vmatprep.subr.bf16.mxu0 0
        %3113 = vmatpush1.bf16.msra.mxu0 %v3066
        %3114 = vmatprep.subr.bf16.mxu0 0
        %3115 = vmatpush2.bf16.msra.mxu0 0
        %3116 = vmatprep.subr.bf16.mxu0 0
        %3117 = vmatpush2.bf16.msra.mxu0 0
        %3118 = vmatprep.subr.bf16.mxu0 0
        %3119 = vmatpush2.bf16.msra.mxu0 0
        %3120 = vmatprep.subr.bf16.mxu0 0
        %3121 = vmatpush2.bf16.msra.mxu0 0
        %3122 = vmatprep.subr.bf16.mxu0 0
        %3123 = vmatpush2.bf16.msra.mxu0 0
        %3124 = vmatprep.subr.bf16.mxu0 0
        %3125 = vmatpush2.bf16.msra.mxu0 0
        %3126 = vmatprep.subr.bf16.mxu0 0
        %3127 = vmatpush2.bf16.msra.mxu0 0
        %3128 = vmatprep.subr.bf16.mxu0 0
        %3129 = vmatpush2.bf16.msra.mxu0 0
        %3130 = vmatprep.mubr.bf16.mxu0 0
        %3131 = vmatmul.mubr.bf16.gmra.mxu0 %v3090
        %v3132 = vpop.f32.mrf.mxu0
        %v3133 = vadd.f32 0.0, %v3132
        %v3134 = vpop.f32.mrf.mxu0
        %v3135 = vpop.f32.mrf.mxu0
        %v3136 = vadd.f32 0.0, %v3135
        %v3137 = vpop.f32.mrf.mxu0
        %3138 = vmatprep.mubr.bf16.mxu0 0
        %3139 = vmatmul.mubr.bf16.gmra.mxu0 %v3091
        %v3140 = vpop.f32.mrf.mxu0
        %v3141 = vadd.f32 0.0, %v3140
        %v3142 = vpop.f32.mrf.mxu0
        %v3143 = vpop.f32.mrf.mxu0
        %v3144 = vadd.f32 0.0, %v3143
        %v3145 = vpop.f32.mrf.mxu0
        %3146 = vmatprep.mubr.bf16.mxu0 0
        %3147 = vmatmul.mubr.bf16.gmra.mxu0 %v3092
        %v3148 = vpop.f32.mrf.mxu0
        %v3149 = vadd.f32 0.0, %v3148
        %v3150 = vpop.f32.mrf.mxu0
        %v3151 = vpop.f32.mrf.mxu0
        %v3152 = vadd.f32 0.0, %v3151
        %v3153 = vpop.f32.mrf.mxu0
        %3154 = vmatprep.mubr.bf16.mxu0 0
        %3155 = vmatmul.mubr.bf16.gmra.mxu0 %v3093
        %v3156 = vpop.f32.mrf.mxu0
        %v3157 = vadd.f32 0.0, %v3156
        %v3158 = vpop.f32.mrf.mxu0
        %v3159 = vpop.f32.mrf.mxu0
        %v3160 = vadd.f32 0.0, %v3159
        %v3161 = vpop.f32.mrf.mxu0
        %3162 = vdwg.mxu0
        %v3163 = vadd.f32 %v3058, %v3133
        %v3164 = vadd.f32 %v3059, %v3136
        %v3165 = vadd.f32 %v3060, %v3141
        %v3166 = vadd.f32 %v3061, %v3144
        %v3167 = vadd.f32 %v3062, %v3149
        %v3168 = vadd.f32 %v3063, %v3152
        %v3169 = vadd.f32 %v3064, %v3157
        %v3170 = vadd.f32 %v3065, %v3160
        %3171 = vst [vmem:[#allocation3] sm:$0xff] %v3163
        %3172 = vst [vmem:[#allocation3 + $0x8] sm:$0xff] %v3164
        %3173 = vst [vmem:[#allocation3 + $0x10] sm:$0xff] %v3165
        %3174 = vst [vmem:[#allocation3 + $0x18] sm:$0xff] %v3166
        %3175 = vst [vmem:[#allocation3 + $0x20] sm:$0xff] %v3167
        %3176 = vst [vmem:[#allocation3 + $0x28] sm:$0xff] %v3168
        %3177 = vst [vmem:[#allocation3 + $0x30] sm:$0xff] %v3169
        %3178 = vst [vmem:[#allocation3 + $0x38] sm:$0xff] %v3170
        %v3179 = vld [vmem:[#allocation4] sm:$0x1]
        %v3180 = vadd.f32 %v3034, %v3035
        %v3181 = vadd.f32 %v3180, %v3036
        %v3182 = vadd.f32 %v3181, %v3037
        %v3183 = vadd.f32 %v3182, %v3038
        %v3184 = vadd.f32 %v3183, %v3039
        %v3185 = vadd.f32 %v3184, %v3040
        %v3186 = vadd.f32 %v3185, %v3041
        %v3187 = vadd.f32 %v3186, %v3042
        %v3188 = vadd.f32 %v3187, %v3043
        %v3189 = vadd.f32 %v3188, %v3044
        %v3190 = vadd.f32 %v3189, %v3045
        %v3191 = vadd.f32 %v3190, %v3046
        %v3192 = vadd.f32 %v3191, %v3047
        %v3193 = vadd.f32 %v3192, %v3048
        %v3194 = vadd.f32 %v3193, %v3049
        %v3195 = vrot.slane %v3194, 4
        %v3196 = vadd.f32 %v3194, %v3195
        %v3197 = vrot.slane %v3196, 2
        %v3198 = vadd.f32 %v3196, %v3197
        %v3199 = vrot.slane %v3198, 1
        %v3200 = vadd.f32 %v3198, %v3199
        %v3201 = vadd.f32 %v3179, %v3200
        %3202 = vst [vmem:[#allocation4] sm:$0x1] %v3201
        %v3203 = vld [vmem:[#allocation3] sm:$0xff]
        %v3204 = vld [vmem:[#allocation3 + $0x8] sm:$0xff]
        %v3205 = vld [vmem:[#allocation3 + $0x10] sm:$0xff]
        %v3206 = vld [vmem:[#allocation3 + $0x18] sm:$0xff]
        %v3207 = vld [vmem:[#allocation3 + $0x20] sm:$0xff]
        %v3208 = vld [vmem:[#allocation3 + $0x28] sm:$0xff]
        %v3209 = vld [vmem:[#allocation3 + $0x30] sm:$0xff]
        %v3210 = vld [vmem:[#allocation3 + $0x38] sm:$0xff]
        %v3211 = vld [vmem:[#allocation4] sm:$0x1]
        %v3212 = vadd.f32 %v3211, 1e-07
        %v3213 = vrcp.pop %v3212
        %v3214 = vmul.f32 %v3212, %v3213
        %v3215 = vsub.f32 2.0, %v3214
        %v3216 = vmul.f32 %v3213, %v3215
        %v3218 = vlaneseq
        %v3219 = vshrl.u32 %v3218, 7
        %v3220 = vsub.s32 0, %v3219
        %v3221 = vrot.slane %v3216, %v3220
        %v3223 = vmul.f32 %v3203, %v3221
        %v3224 = vmul.f32 %v3204, %v3221
        %v3225 = vmul.f32 %v3205, %v3221
        %v3226 = vmul.f32 %v3206, %v3221
        %v3227 = vmul.f32 %v3207, %v3221
        %v3228 = vmul.f32 %v3208, %v3221
        %v3229 = vmul.f32 %v3209, %v3221
        %v3230 = vmul.f32 %v3210, %v3221
        %v3231 = vld [vmem:[%s1 + $0x160] sm:$0xf]
        %v3232 = vld [vmem:[%s1 + $0x164] sm:$0xf]
        %v3233 = vld [vmem:[%s1 + $0x168] sm:$0xf]
        %v3234 = vld [vmem:[%s1 + $0x16c] sm:$0xf]
        %v3235 = vld [vmem:[%s1 + $0x170] sm:$0xf]
        %v3236 = vld [vmem:[%s1 + $0x174] sm:$0xf]
        %v3237 = vld [vmem:[%s1 + $0x178] sm:$0xf]
        %v3238 = vld [vmem:[%s1 + $0x17c] sm:$0xf]
        %v3239 = vsub.f32 %v2660, %v3223
        %v3240 = vsub.f32 %v2661, %v3224
        %v3241 = vsub.f32 %v2662, %v3225
        %v3242 = vsub.f32 %v2663, %v3226
        %v3243 = vsub.f32 %v2664, %v3227
        %v3244 = vsub.f32 %v2665, %v3228
        %v3245 = vsub.f32 %v2666, %v3229
        %v3246 = vsub.f32 %v2667, %v3230
        %v3247 = vpack.c.bf16 %v3240, %v3239
        %v3248 = vpack.c.bf16 %v3242, %v3241
        %v3249 = vpack.c.bf16 %v3244, %v3243
        %v3250 = vpack.c.bf16 %v3246, %v3245
        %v3251 = vld [vmem:[%s2 + $0x2c0] sm:$0xff]
        %v3252 = vld [vmem:[%s2 + $0x2c8] sm:$0xff]
        %v3253 = vld [vmem:[%s2 + $0x2d0] sm:$0xff]
        %v3254 = vld [vmem:[%s2 + $0x2d8] sm:$0xff]
        %v3255 = vld [vmem:[%s2 + $0x2e0] sm:$0xff]
        %v3256 = vld [vmem:[%s2 + $0x2e8] sm:$0xff]
        %v3257 = vld [vmem:[%s2 + $0x2f0] sm:$0xff]
        %v3258 = vld [vmem:[%s2 + $0x2f8] sm:$0xff]
        %3260 = vset.pattern.permute.xlu0 0
        %3261 = vperm.xlu0 %3260, %v3251
        %v3262 = vpop.permute.xlu0 %3261
        %3265 = vset.pattern.permute.xlu0 0
        %3266 = vperm.xlu0 %3265, %v3252
        %v3267 = vpop.permute.xlu0 %3266
        %3270 = vset.pattern.permute.xlu0 0
        %3271 = vperm.xlu0 %3270, %v3253
        %v3272 = vpop.permute.xlu0 %3271
        %3275 = vset.pattern.permute.xlu0 0
        %3276 = vperm.xlu0 %3275, %v3254
        %v3277 = vpop.permute.xlu0 %3276
        %3280 = vset.pattern.permute.xlu0 0
        %3281 = vperm.xlu0 %3280, %v3255
        %v3282 = vpop.permute.xlu0 %3281
        %3285 = vset.pattern.permute.xlu0 0
        %3286 = vperm.xlu0 %3285, %v3256
        %v3287 = vpop.permute.xlu0 %3286
        %3290 = vset.pattern.permute.xlu0 0
        %3291 = vperm.xlu0 %3290, %v3257
        %v3292 = vpop.permute.xlu0 %3291
        %3295 = vset.pattern.permute.xlu0 0
        %3296 = vperm.xlu0 %3295, %v3258
        %v3297 = vpop.permute.xlu0 %3296
        %v3307 = vunpack.c.l.b16 %v3231
        %v3308 = vunpack.c.l.b16 %v3232
        %v3309 = vunpack.c.l.b16 %v3233
        %v3310 = vunpack.c.l.b16 %v3234
        %v3311 = vunpack.c.l.b16 %v3235
        %v3312 = vunpack.c.l.b16 %v3236
        %v3313 = vunpack.c.l.b16 %v3237
        %v3314 = vunpack.c.l.b16 %v3238
        %v3315 = vpack.c.b16 %v3308, %v3307
        %v3316 = vpack.c.b16 %v3310, %v3309
        %v3317 = vpack.c.b16 %v3312, %v3311
        %v3318 = vpack.c.b16 %v3314, %v3313
        %v3320 = vsel %vm335, %v3315, 0
        %v3323 = vsel %vm335, %v3316, 0
        %v3326 = vsel %vm335, %v3317, 0
        %v3329 = vsel %vm335, %v3318, 0
        %3331 = vmatprep.subr.bf16.mxu0 0
        %3332 = vmatpush1.bf16.msra.mxu0 0
        %3333 = vmatprep.subr.bf16.mxu0 0
        %3334 = vmatpush1.bf16.msra.mxu0 0
        %3335 = vmatprep.subr.bf16.mxu0 0
        %3336 = vmatpush1.bf16.msra.mxu0 0
        %3337 = vmatprep.subr.bf16.mxu0 0
        %3338 = vmatpush1.bf16.msra.mxu0 0
        %3339 = vmatprep.subr.bf16.mxu0 0
        %3340 = vmatpush1.bf16.msra.mxu0 %v3250
        %3341 = vmatprep.subr.bf16.mxu0 0
        %3342 = vmatpush1.bf16.msra.mxu0 %v3249
        %3343 = vmatprep.subr.bf16.mxu0 0
        %3344 = vmatpush1.bf16.msra.mxu0 %v3248
        %3345 = vmatprep.subr.bf16.mxu0 0
        %3346 = vmatpush1.bf16.msra.mxu0 %v3247
        %3347 = vmatprep.subr.bf16.mxu0 0
        %3348 = vmatpush2.bf16.msra.mxu0 0
        %3349 = vmatprep.subr.bf16.mxu0 0
        %3350 = vmatpush2.bf16.msra.mxu0 0
        %3351 = vmatprep.subr.bf16.mxu0 0
        %3352 = vmatpush2.bf16.msra.mxu0 0
        %3353 = vmatprep.subr.bf16.mxu0 0
        %3354 = vmatpush2.bf16.msra.mxu0 0
        %3355 = vmatprep.subr.bf16.mxu0 0
        %3356 = vmatpush2.bf16.msra.mxu0 0
        %3357 = vmatprep.subr.bf16.mxu0 0
        %3358 = vmatpush2.bf16.msra.mxu0 0
        %3359 = vmatprep.subr.bf16.mxu0 0
        %3360 = vmatpush2.bf16.msra.mxu0 0
        %3361 = vmatprep.subr.bf16.mxu0 0
        %3362 = vmatpush2.bf16.msra.mxu0 0
        %3363 = vmatprep.mubr.bf16.mxu0 0
        %3364 = vmatmul.mubr.bf16.gmra.mxu0 %v3320
        %v3365 = vpop.f32.mrf.mxu0
        %v3366 = vadd.f32 %v3262, %v3365
        %v3367 = vpop.f32.mrf.mxu0
        %v3368 = vpop.f32.mrf.mxu0
        %v3369 = vadd.f32 %v3267, %v3368
        %v3370 = vpop.f32.mrf.mxu0
        %3371 = vmatprep.mubr.bf16.mxu0 0
        %3372 = vmatmul.mubr.bf16.gmra.mxu0 %v3323
        %v3373 = vpop.f32.mrf.mxu0
        %v3374 = vadd.f32 %v3272, %v3373
        %v3375 = vpop.f32.mrf.mxu0
        %v3376 = vpop.f32.mrf.mxu0
        %v3377 = vadd.f32 %v3277, %v3376
        %v3378 = vpop.f32.mrf.mxu0
        %3379 = vmatprep.mubr.bf16.mxu0 0
        %3380 = vmatmul.mubr.bf16.gmra.mxu0 %v3326
        %v3381 = vpop.f32.mrf.mxu0
        %v3382 = vadd.f32 %v3282, %v3381
        %v3383 = vpop.f32.mrf.mxu0
        %v3384 = vpop.f32.mrf.mxu0
        %v3385 = vadd.f32 %v3287, %v3384
        %v3386 = vpop.f32.mrf.mxu0
        %3387 = vmatprep.mubr.bf16.mxu0 0
        %3388 = vmatmul.mubr.bf16.gmra.mxu0 %v3329
        %v3389 = vpop.f32.mrf.mxu0
        %v3390 = vadd.f32 %v3292, %v3389
        %v3391 = vpop.f32.mrf.mxu0
        %v3392 = vpop.f32.mrf.mxu0
        %v3393 = vadd.f32 %v3297, %v3392
        %v3394 = vpop.f32.mrf.mxu0
        %3395 = vdwg.mxu0
        %v3396 = vmax.f32 %v3366, 0.0
        %v3397 = vmax.f32 %v3369, 0.0
        %v3398 = vmax.f32 %v3374, 0.0
        %v3399 = vmax.f32 %v3377, 0.0
        %v3400 = vmax.f32 %v3382, 0.0
        %v3401 = vmax.f32 %v3385, 0.0
        %v3402 = vmax.f32 %v3390, 0.0
        %v3403 = vmax.f32 %v3393, 0.0
        %v3404 = vadd.f32 %v2660, %v3396
        %v3405 = vadd.f32 %v2661, %v3397
        %v3406 = vadd.f32 %v2662, %v3398
        %v3407 = vadd.f32 %v2663, %v3399
        %v3408 = vadd.f32 %v2664, %v3400
        %v3409 = vadd.f32 %v2665, %v3401
        %v3410 = vadd.f32 %v2666, %v3402
        %v3411 = vadd.f32 %v2667, %v3403
        %v3412 = vld [vmem:[%s1254] sm:$0xff]
        %v3413 = vld [vmem:[%s1254 + $0x8] sm:$0xff]
        %v3414 = vld [vmem:[%s1254 + $0x10] sm:$0xff]
        %v3415 = vld [vmem:[%s1254 + $0x18] sm:$0xff]
        %v3416 = vld [vmem:[%s1254 + $0x20] sm:$0xff]
        %v3417 = vld [vmem:[%s1254 + $0x28] sm:$0xff]
        %v3418 = vld [vmem:[%s1254 + $0x30] sm:$0xff]
        %v3419 = vld [vmem:[%s1254 + $0x38] sm:$0xff]
        %v3420 = vld [vmem:[#allocation2 + $0xc0] sm:$0xf]
        %v3421 = vld [vmem:[#allocation2 + $0xc4] sm:$0xf]
        %v3422 = vld [vmem:[#allocation2 + $0xc8] sm:$0xf]
        %v3423 = vld [vmem:[#allocation2 + $0xcc] sm:$0xf]
        %v3424 = vld [vmem:[#allocation2 + $0xd0] sm:$0xf]
        %v3425 = vld [vmem:[#allocation2 + $0xd4] sm:$0xf]
        %v3426 = vld [vmem:[#allocation2 + $0xd8] sm:$0xf]
        %v3427 = vld [vmem:[#allocation2 + $0xdc] sm:$0xf]
        %3428 = vst [vmem:[#allocation3] sm:$0xff] 0.0
        %3429 = vst [vmem:[#allocation3 + $0x8] sm:$0xff] 0.0
        %3430 = vst [vmem:[#allocation3 + $0x10] sm:$0xff] 0.0
        %3431 = vst [vmem:[#allocation3 + $0x18] sm:$0xff] 0.0
        %3432 = vst [vmem:[#allocation3 + $0x20] sm:$0xff] 0.0
        %3433 = vst [vmem:[#allocation3 + $0x28] sm:$0xff] 0.0
        %3434 = vst [vmem:[#allocation3 + $0x30] sm:$0xff] 0.0
        %3435 = vst [vmem:[#allocation3 + $0x38] sm:$0xff] 0.0
        %3436 = vst [vmem:[#allocation4] sm:$0x1] 0.0
        %v3437 = vld [vmem:[%s1254] sm:$0xff]
        %v3438 = vld [vmem:[%s1254 + $0x8] sm:$0xff]
        %v3439 = vld [vmem:[%s1254 + $0x10] sm:$0xff]
        %v3440 = vld [vmem:[%s1254 + $0x18] sm:$0xff]
        %v3441 = vld [vmem:[%s1254 + $0x20] sm:$0xff]
        %v3442 = vld [vmem:[%s1254 + $0x28] sm:$0xff]
        %v3443 = vld [vmem:[%s1254 + $0x30] sm:$0xff]
        %v3444 = vld [vmem:[%s1254 + $0x38] sm:$0xff]
        %v3445 = vpack.c.bf16 %v3438, %v3437
        %v3446 = vpack.c.bf16 %v3440, %v3439
        %v3447 = vpack.c.bf16 %v3442, %v3441
        %v3448 = vpack.c.bf16 %v3444, %v3443
        %3449 = vxpose.xlu0.c.b16.start [1/8] %v3445, 128
        %3450 = vxpose.xlu0.c.b16.cont [2/8] %v3446, 128
        %3451 = vxpose.xlu0.c.b16.cont [3/8] %v3447, 128
        %3452 = vxpose.xlu0.c.b16.cont [4/8] %v3448, 128
        %3453 = vxpose.xlu0.c.b16.cont [5/8] 0, 128
        %3454 = vxpose.xlu0.c.b16.cont [6/8] 0, 128
        %3455 = vxpose.xlu0.c.b16.cont [7/8] 0, 128
        %3456 = vxpose.xlu0.c.b16.end [8/8] 0, 128
        %v3457 = vpop.trf.xlu0
        %v3458 = vpop.trf.xlu0
        %v3459 = vpop.trf.xlu0
        %v3460 = vpop.trf.xlu0
        %v3461 = vpop.trf.xlu0
        %v3462 = vpop.trf.xlu0
        %v3463 = vpop.trf.xlu0
        %v3464 = vpop.trf.xlu0
        %v3473 = vunpack.c.l.b16 %v3420
        %v3474 = vunpack.c.l.b16 %v3421
        %v3475 = vunpack.c.l.b16 %v3422
        %v3476 = vunpack.c.l.b16 %v3423
        %v3477 = vunpack.c.l.b16 %v3424
        %v3478 = vunpack.c.l.b16 %v3425
        %v3479 = vunpack.c.l.b16 %v3426
        %v3480 = vunpack.c.l.b16 %v3427
        %v3481 = vpack.c.b16 %v3474, %v3473
        %v3482 = vpack.c.b16 %v3476, %v3475
        %v3483 = vpack.c.b16 %v3478, %v3477
        %v3484 = vpack.c.b16 %v3480, %v3479
        %v3490 = vsel %vm335, %v3457, 0
        %v3493 = vsel %vm335, %v3458, 0
        %v3496 = vsel %vm335, %v3459, 0
        %v3499 = vsel %vm335, %v3460, 0
        %v3502 = vsel %vm335, %v3461, 0
        %v3505 = vsel %vm335, %v3462, 0
        %v3508 = vsel %vm335, %v3463, 0
        %v3511 = vsel %vm335, %v3464, 0
        %3513 = vmatprep.subr.bf16.mxu0 0
        %3514 = vmatpush1.bf16.msra.mxu0 0
        %3515 = vmatprep.subr.bf16.mxu0 0
        %3516 = vmatpush1.bf16.msra.mxu0 0
        %3517 = vmatprep.subr.bf16.mxu0 0
        %3518 = vmatpush1.bf16.msra.mxu0 0
        %3519 = vmatprep.subr.bf16.mxu0 0
        %3520 = vmatpush1.bf16.msra.mxu0 0
        %3521 = vmatprep.subr.bf16.mxu0 0
        %3522 = vmatpush1.bf16.msra.mxu0 %v3484
        %3523 = vmatprep.subr.bf16.mxu0 0
        %3524 = vmatpush1.bf16.msra.mxu0 %v3483
        %3525 = vmatprep.subr.bf16.mxu0 0
        %3526 = vmatpush1.bf16.msra.mxu0 %v3482
        %3527 = vmatprep.subr.bf16.mxu0 0
        %3528 = vmatpush1.bf16.msra.mxu0 %v3481
        %3529 = vmatprep.subr.bf16.mxu0 0
        %3530 = vmatpush2.bf16.msra.mxu0 0
        %3531 = vmatprep.subr.bf16.mxu0 0
        %3532 = vmatpush2.bf16.msra.mxu0 0
        %3533 = vmatprep.subr.bf16.mxu0 0
        %3534 = vmatpush2.bf16.msra.mxu0 0
        %3535 = vmatprep.subr.bf16.mxu0 0
        %3536 = vmatpush2.bf16.msra.mxu0 0
        %3537 = vmatprep.subr.bf16.mxu0 0
        %3538 = vmatpush2.bf16.msra.mxu0 0
        %3539 = vmatprep.subr.bf16.mxu0 0
        %3540 = vmatpush2.bf16.msra.mxu0 0
        %3541 = vmatprep.subr.bf16.mxu0 0
        %3542 = vmatpush2.bf16.msra.mxu0 0
        %3543 = vmatprep.subr.bf16.mxu0 0
        %3544 = vmatpush2.bf16.msra.mxu0 0
        %3545 = vmatprep.mubr.bf16.mxu0 0
        %3546 = vmatmul.mubr.bf16.gmra.mxu0 %v3490
        %v3547 = vpop.f32.mrf.mxu0
        %v3548 = vadd.f32 0.0, %v3547
        %v3549 = vpop.f32.mrf.mxu0
        %v3550 = vpop.f32.mrf.mxu0
        %v3551 = vadd.f32 0.0, %v3550
        %v3552 = vpop.f32.mrf.mxu0
        %3553 = vmatprep.mubr.bf16.mxu0 0
        %3554 = vmatmul.mubr.bf16.gmra.mxu0 %v3493
        %v3555 = vpop.f32.mrf.mxu0
        %v3556 = vadd.f32 0.0, %v3555
        %v3557 = vpop.f32.mrf.mxu0
        %v3558 = vpop.f32.mrf.mxu0
        %v3559 = vadd.f32 0.0, %v3558
        %v3560 = vpop.f32.mrf.mxu0
        %3561 = vmatprep.mubr.bf16.mxu0 0
        %3562 = vmatmul.mubr.bf16.gmra.mxu0 %v3496
        %v3563 = vpop.f32.mrf.mxu0
        %v3564 = vadd.f32 0.0, %v3563
        %v3565 = vpop.f32.mrf.mxu0
        %v3566 = vpop.f32.mrf.mxu0
        %v3567 = vadd.f32 0.0, %v3566
        %v3568 = vpop.f32.mrf.mxu0
        %3569 = vmatprep.mubr.bf16.mxu0 0
        %3570 = vmatmul.mubr.bf16.gmra.mxu0 %v3499
        %v3571 = vpop.f32.mrf.mxu0
        %v3572 = vadd.f32 0.0, %v3571
        %v3573 = vpop.f32.mrf.mxu0
        %v3574 = vpop.f32.mrf.mxu0
        %v3575 = vadd.f32 0.0, %v3574
        %v3576 = vpop.f32.mrf.mxu0
        %3577 = vmatprep.mubr.bf16.mxu0 0
        %3578 = vmatmul.mubr.bf16.gmra.mxu0 %v3502
        %v3579 = vpop.f32.mrf.mxu0
        %v3580 = vadd.f32 0.0, %v3579
        %v3581 = vpop.f32.mrf.mxu0
        %v3582 = vpop.f32.mrf.mxu0
        %v3583 = vadd.f32 0.0, %v3582
        %v3584 = vpop.f32.mrf.mxu0
        %3585 = vmatprep.mubr.bf16.mxu0 0
        %3586 = vmatmul.mubr.bf16.gmra.mxu0 %v3505
        %v3587 = vpop.f32.mrf.mxu0
        %v3588 = vadd.f32 0.0, %v3587
        %v3589 = vpop.f32.mrf.mxu0
        %v3590 = vpop.f32.mrf.mxu0
        %v3591 = vadd.f32 0.0, %v3590
        %v3592 = vpop.f32.mrf.mxu0
        %3593 = vmatprep.mubr.bf16.mxu0 0
        %3594 = vmatmul.mubr.bf16.gmra.mxu0 %v3508
        %v3595 = vpop.f32.mrf.mxu0
        %v3596 = vadd.f32 0.0, %v3595
        %v3597 = vpop.f32.mrf.mxu0
        %v3598 = vpop.f32.mrf.mxu0
        %v3599 = vadd.f32 0.0, %v3598
        %v3600 = vpop.f32.mrf.mxu0
        %3601 = vmatprep.mubr.bf16.mxu0 0
        %3602 = vmatmul.mubr.bf16.gmra.mxu0 %v3511
        %v3603 = vpop.f32.mrf.mxu0
        %v3604 = vadd.f32 0.0, %v3603
        %v3605 = vpop.f32.mrf.mxu0
        %v3606 = vpop.f32.mrf.mxu0
        %v3607 = vadd.f32 0.0, %v3606
        %v3608 = vpop.f32.mrf.mxu0
        %3609 = vdwg.mxu0
        %3610 = vmax.xlane.f32.xlu0 %v3548
        %v3611 = vpop.xlane.xlu0 %3610
        %3612 = vmax.xlane.f32.xlu0 %v3551
        %v3613 = vpop.xlane.xlu0 %3612
        %3614 = vmax.xlane.f32.xlu0 %v3556
        %v3615 = vpop.xlane.xlu0 %3614
        %3616 = vmax.xlane.f32.xlu0 %v3559
        %v3617 = vpop.xlane.xlu0 %3616
        %3618 = vmax.xlane.f32.xlu0 %v3564
        %v3619 = vpop.xlane.xlu0 %3618
        %3620 = vmax.xlane.f32.xlu0 %v3567
        %v3621 = vpop.xlane.xlu0 %3620
        %3622 = vmax.xlane.f32.xlu0 %v3572
        %v3623 = vpop.xlane.xlu0 %3622
        %3624 = vmax.xlane.f32.xlu0 %v3575
        %v3625 = vpop.xlane.xlu0 %3624
        %3626 = vmax.xlane.f32.xlu0 %v3580
        %v3627 = vpop.xlane.xlu0 %3626
        %3628 = vmax.xlane.f32.xlu0 %v3583
        %v3629 = vpop.xlane.xlu0 %3628
        %3630 = vmax.xlane.f32.xlu0 %v3588
        %v3631 = vpop.xlane.xlu0 %3630
        %3632 = vmax.xlane.f32.xlu0 %v3591
        %v3633 = vpop.xlane.xlu0 %3632
        %3634 = vmax.xlane.f32.xlu0 %v3596
        %v3635 = vpop.xlane.xlu0 %3634
        %3636 = vmax.xlane.f32.xlu0 %v3599
        %v3637 = vpop.xlane.xlu0 %3636
        %3638 = vmax.xlane.f32.xlu0 %v3604
        %v3639 = vpop.xlane.xlu0 %3638
        %3640 = vmax.xlane.f32.xlu0 %v3607
        %v3641 = vpop.xlane.xlu0 %3640
        %v3642 = vsub.f32 %v3548, %v3611
        %v3643 = vsub.f32 %v3551, %v3613
        %v3644 = vsub.f32 %v3556, %v3615
        %v3645 = vsub.f32 %v3559, %v3617
        %v3646 = vsub.f32 %v3564, %v3619
        %v3647 = vsub.f32 %v3567, %v3621
        %v3648 = vsub.f32 %v3572, %v3623
        %v3649 = vsub.f32 %v3575, %v3625
        %v3650 = vsub.f32 %v3580, %v3627
        %v3651 = vsub.f32 %v3583, %v3629
        %v3652 = vsub.f32 %v3588, %v3631
        %v3653 = vsub.f32 %v3591, %v3633
        %v3654 = vsub.f32 %v3596, %v3635
        %v3655 = vsub.f32 %v3599, %v3637
        %v3656 = vsub.f32 %v3604, %v3639
        %v3657 = vsub.f32 %v3607, %v3641
        %v3658 = vmul.f32 %v3642, 1.442695
        %v3659 = vpow.pop %v3658
        %v3660 = vmul.f32 %v3643, 1.442695
        %v3661 = vpow.pop %v3660
        %v3662 = vmul.f32 %v3644, 1.442695
        %v3663 = vpow.pop %v3662
        %v3664 = vmul.f32 %v3645, 1.442695
        %v3665 = vpow.pop %v3664
        %v3666 = vmul.f32 %v3646, 1.442695
        %v3667 = vpow.pop %v3666
        %v3668 = vmul.f32 %v3647, 1.442695
        %v3669 = vpow.pop %v3668
        %v3670 = vmul.f32 %v3648, 1.442695
        %v3671 = vpow.pop %v3670
        %v3672 = vmul.f32 %v3649, 1.442695
        %v3673 = vpow.pop %v3672
        %v3674 = vmul.f32 %v3650, 1.442695
        %v3675 = vpow.pop %v3674
        %v3676 = vmul.f32 %v3651, 1.442695
        %v3677 = vpow.pop %v3676
        %v3678 = vmul.f32 %v3652, 1.442695
        %v3679 = vpow.pop %v3678
        %v3680 = vmul.f32 %v3653, 1.442695
        %v3681 = vpow.pop %v3680
        %v3682 = vmul.f32 %v3654, 1.442695
        %v3683 = vpow.pop %v3682
        %v3684 = vmul.f32 %v3655, 1.442695
        %v3685 = vpow.pop %v3684
        %v3686 = vmul.f32 %v3656, 1.442695
        %v3687 = vpow.pop %v3686
        %v3688 = vmul.f32 %v3657, 1.442695
        %v3689 = vpow.pop %v3688
        %3690 = vadd.xlane.f32.xlu0 %v3659
        %v3691 = vpop.xlane.xlu0 %3690
        %3692 = vadd.xlane.f32.xlu0 %v3661
        %v3693 = vpop.xlane.xlu0 %3692
        %3694 = vadd.xlane.f32.xlu0 %v3663
        %v3695 = vpop.xlane.xlu0 %3694
        %3696 = vadd.xlane.f32.xlu0 %v3665
        %v3697 = vpop.xlane.xlu0 %3696
        %3698 = vadd.xlane.f32.xlu0 %v3667
        %v3699 = vpop.xlane.xlu0 %3698
        %3700 = vadd.xlane.f32.xlu0 %v3669
        %v3701 = vpop.xlane.xlu0 %3700
        %3702 = vadd.xlane.f32.xlu0 %v3671
        %v3703 = vpop.xlane.xlu0 %3702
        %3704 = vadd.xlane.f32.xlu0 %v3673
        %v3705 = vpop.xlane.xlu0 %3704
        %3706 = vadd.xlane.f32.xlu0 %v3675
        %v3707 = vpop.xlane.xlu0 %3706
        %3708 = vadd.xlane.f32.xlu0 %v3677
        %v3709 = vpop.xlane.xlu0 %3708
        %3710 = vadd.xlane.f32.xlu0 %v3679
        %v3711 = vpop.xlane.xlu0 %3710
        %3712 = vadd.xlane.f32.xlu0 %v3681
        %v3713 = vpop.xlane.xlu0 %3712
        %3714 = vadd.xlane.f32.xlu0 %v3683
        %v3715 = vpop.xlane.xlu0 %3714
        %3716 = vadd.xlane.f32.xlu0 %v3685
        %v3717 = vpop.xlane.xlu0 %3716
        %3718 = vadd.xlane.f32.xlu0 %v3687
        %v3719 = vpop.xlane.xlu0 %3718
        %3720 = vadd.xlane.f32.xlu0 %v3689
        %v3721 = vpop.xlane.xlu0 %3720
        %v3722 = vrcp.pop %v3691
        %v3723 = vrcp.pop %v3693
        %v3724 = vrcp.pop %v3695
        %v3725 = vrcp.pop %v3697
        %v3726 = vrcp.pop %v3699
        %v3727 = vrcp.pop %v3701
        %v3728 = vrcp.pop %v3703
        %v3729 = vrcp.pop %v3705
        %v3730 = vrcp.pop %v3707
        %v3731 = vrcp.pop %v3709
        %v3732 = vrcp.pop %v3711
        %v3733 = vrcp.pop %v3713
        %v3734 = vrcp.pop %v3715
        %v3735 = vrcp.pop %v3717
        %v3736 = vrcp.pop %v3719
        %v3737 = vrcp.pop %v3721
        %v3738 = vmul.f32 %v3691, %v3722
        %v3739 = vmul.f32 %v3693, %v3723
        %v3740 = vmul.f32 %v3695, %v3724
        %v3741 = vmul.f32 %v3697, %v3725
        %v3742 = vmul.f32 %v3699, %v3726
        %v3743 = vmul.f32 %v3701, %v3727
        %v3744 = vmul.f32 %v3703, %v3728
        %v3745 = vmul.f32 %v3705, %v3729
        %v3746 = vmul.f32 %v3707, %v3730
        %v3747 = vmul.f32 %v3709, %v3731
        %v3748 = vmul.f32 %v3711, %v3732
        %v3749 = vmul.f32 %v3713, %v3733
        %v3750 = vmul.f32 %v3715, %v3734
        %v3751 = vmul.f32 %v3717, %v3735
        %v3752 = vmul.f32 %v3719, %v3736
        %v3753 = vmul.f32 %v3721, %v3737
        %v3754 = vsub.f32 2.0, %v3738
        %v3755 = vsub.f32 2.0, %v3739
        %v3756 = vsub.f32 2.0, %v3740
        %v3757 = vsub.f32 2.0, %v3741
        %v3758 = vsub.f32 2.0, %v3742
        %v3759 = vsub.f32 2.0, %v3743
        %v3760 = vsub.f32 2.0, %v3744
        %v3761 = vsub.f32 2.0, %v3745
        %v3762 = vsub.f32 2.0, %v3746
        %v3763 = vsub.f32 2.0, %v3747
        %v3764 = vsub.f32 2.0, %v3748
        %v3765 = vsub.f32 2.0, %v3749
        %v3766 = vsub.f32 2.0, %v3750
        %v3767 = vsub.f32 2.0, %v3751
        %v3768 = vsub.f32 2.0, %v3752
        %v3769 = vsub.f32 2.0, %v3753
        %v3770 = vmul.f32 %v3722, %v3754
        %v3771 = vmul.f32 %v3723, %v3755
        %v3772 = vmul.f32 %v3724, %v3756
        %v3773 = vmul.f32 %v3725, %v3757
        %v3774 = vmul.f32 %v3726, %v3758
        %v3775 = vmul.f32 %v3727, %v3759
        %v3776 = vmul.f32 %v3728, %v3760
        %v3777 = vmul.f32 %v3729, %v3761
        %v3778 = vmul.f32 %v3730, %v3762
        %v3779 = vmul.f32 %v3731, %v3763
        %v3780 = vmul.f32 %v3732, %v3764
        %v3781 = vmul.f32 %v3733, %v3765
        %v3782 = vmul.f32 %v3734, %v3766
        %v3783 = vmul.f32 %v3735, %v3767
        %v3784 = vmul.f32 %v3736, %v3768
        %v3785 = vmul.f32 %v3737, %v3769
        %v3786 = vmul.f32 %v3659, %v3770
        %v3787 = vmul.f32 %v3661, %v3771
        %v3788 = vmul.f32 %v3663, %v3772
        %v3789 = vmul.f32 %v3665, %v3773
        %v3790 = vmul.f32 %v3667, %v3774
        %v3791 = vmul.f32 %v3669, %v3775
        %v3792 = vmul.f32 %v3671, %v3776
        %v3793 = vmul.f32 %v3673, %v3777
        %v3794 = vmul.f32 %v3675, %v3778
        %v3795 = vmul.f32 %v3677, %v3779
        %v3796 = vmul.f32 %v3679, %v3780
        %v3797 = vmul.f32 %v3681, %v3781
        %v3798 = vmul.f32 %v3683, %v3782
        %v3799 = vmul.f32 %v3685, %v3783
        %v3800 = vmul.f32 %v3687, %v3784
        %v3801 = vmul.f32 %v3689, %v3785
        %v3802 = vld [vmem:[#allocation2 + $0x100] sm:$0xf]
        %v3803 = vld [vmem:[#allocation2 + $0x104] sm:$0xf]
        %v3804 = vld [vmem:[#allocation2 + $0x108] sm:$0xf]
        %v3805 = vld [vmem:[#allocation2 + $0x10c] sm:$0xf]
        %v3806 = vld [vmem:[#allocation2 + $0x110] sm:$0xf]
        %v3807 = vld [vmem:[#allocation2 + $0x114] sm:$0xf]
        %v3808 = vld [vmem:[#allocation2 + $0x118] sm:$0xf]
        %v3809 = vld [vmem:[#allocation2 + $0x11c] sm:$0xf]
        %v3810 = vld [vmem:[#allocation3] sm:$0xff]
        %v3811 = vld [vmem:[#allocation3 + $0x8] sm:$0xff]
        %v3812 = vld [vmem:[#allocation3 + $0x10] sm:$0xff]
        %v3813 = vld [vmem:[#allocation3 + $0x18] sm:$0xff]
        %v3814 = vld [vmem:[#allocation3 + $0x20] sm:$0xff]
        %v3815 = vld [vmem:[#allocation3 + $0x28] sm:$0xff]
        %v3816 = vld [vmem:[#allocation3 + $0x30] sm:$0xff]
        %v3817 = vld [vmem:[#allocation3 + $0x38] sm:$0xff]
        %v3818 = vpack.c.bf16 %v3787, %v3786
        %v3819 = vpack.c.bf16 %v3789, %v3788
        %v3820 = vpack.c.bf16 %v3791, %v3790
        %v3821 = vpack.c.bf16 %v3793, %v3792
        %v3822 = vpack.c.bf16 %v3795, %v3794
        %v3823 = vpack.c.bf16 %v3797, %v3796
        %v3824 = vpack.c.bf16 %v3799, %v3798
        %v3825 = vpack.c.bf16 %v3801, %v3800
        %v3834 = vunpack.c.l.b16 %v3802
        %v3835 = vunpack.c.l.b16 %v3803
        %v3836 = vunpack.c.l.b16 %v3804
        %v3837 = vunpack.c.l.b16 %v3805
        %v3838 = vunpack.c.l.b16 %v3806
        %v3839 = vunpack.c.l.b16 %v3807
        %v3840 = vunpack.c.l.b16 %v3808
        %v3841 = vunpack.c.l.b16 %v3809
        %v3842 = vpack.c.b16 %v3835, %v3834
        %v3843 = vpack.c.b16 %v3837, %v3836
        %v3844 = vpack.c.b16 %v3839, %v3838
        %v3845 = vpack.c.b16 %v3841, %v3840
        %3850 = vmatprep.subr.bf16.mxu0 0
        %3851 = vmatpush1.bf16.msra.mxu0 %v3825
        %3852 = vmatprep.subr.bf16.mxu0 0
        %3853 = vmatpush1.bf16.msra.mxu0 %v3824
        %3854 = vmatprep.subr.bf16.mxu0 0
        %3855 = vmatpush1.bf16.msra.mxu0 %v3823
        %3856 = vmatprep.subr.bf16.mxu0 0
        %3857 = vmatpush1.bf16.msra.mxu0 %v3822
        %3858 = vmatprep.subr.bf16.mxu0 0
        %3859 = vmatpush1.bf16.msra.mxu0 %v3821
        %3860 = vmatprep.subr.bf16.mxu0 0
        %3861 = vmatpush1.bf16.msra.mxu0 %v3820
        %3862 = vmatprep.subr.bf16.mxu0 0
        %3863 = vmatpush1.bf16.msra.mxu0 %v3819
        %3864 = vmatprep.subr.bf16.mxu0 0
        %3865 = vmatpush1.bf16.msra.mxu0 %v3818
        %3866 = vmatprep.subr.bf16.mxu0 0
        %3867 = vmatpush2.bf16.msra.mxu0 0
        %3868 = vmatprep.subr.bf16.mxu0 0
        %3869 = vmatpush2.bf16.msra.mxu0 0
        %3870 = vmatprep.subr.bf16.mxu0 0
        %3871 = vmatpush2.bf16.msra.mxu0 0
        %3872 = vmatprep.subr.bf16.mxu0 0
        %3873 = vmatpush2.bf16.msra.mxu0 0
        %3874 = vmatprep.subr.bf16.mxu0 0
        %3875 = vmatpush2.bf16.msra.mxu0 0
        %3876 = vmatprep.subr.bf16.mxu0 0
        %3877 = vmatpush2.bf16.msra.mxu0 0
        %3878 = vmatprep.subr.bf16.mxu0 0
        %3879 = vmatpush2.bf16.msra.mxu0 0
        %3880 = vmatprep.subr.bf16.mxu0 0
        %3881 = vmatpush2.bf16.msra.mxu0 0
        %3882 = vmatprep.mubr.bf16.mxu0 0
        %3883 = vmatmul.mubr.bf16.gmra.mxu0 %v3842
        %v3884 = vpop.f32.mrf.mxu0
        %v3885 = vadd.f32 0.0, %v3884
        %v3886 = vpop.f32.mrf.mxu0
        %v3887 = vpop.f32.mrf.mxu0
        %v3888 = vadd.f32 0.0, %v3887
        %v3889 = vpop.f32.mrf.mxu0
        %3890 = vmatprep.mubr.bf16.mxu0 0
        %3891 = vmatmul.mubr.bf16.gmra.mxu0 %v3843
        %v3892 = vpop.f32.mrf.mxu0
        %v3893 = vadd.f32 0.0, %v3892
        %v3894 = vpop.f32.mrf.mxu0
        %v3895 = vpop.f32.mrf.mxu0
        %v3896 = vadd.f32 0.0, %v3895
        %v3897 = vpop.f32.mrf.mxu0
        %3898 = vmatprep.mubr.bf16.mxu0 0
        %3899 = vmatmul.mubr.bf16.gmra.mxu0 %v3844
        %v3900 = vpop.f32.mrf.mxu0
        %v3901 = vadd.f32 0.0, %v3900
        %v3902 = vpop.f32.mrf.mxu0
        %v3903 = vpop.f32.mrf.mxu0
        %v3904 = vadd.f32 0.0, %v3903
        %v3905 = vpop.f32.mrf.mxu0
        %3906 = vmatprep.mubr.bf16.mxu0 0
        %3907 = vmatmul.mubr.bf16.gmra.mxu0 %v3845
        %v3908 = vpop.f32.mrf.mxu0
        %v3909 = vadd.f32 0.0, %v3908
        %v3910 = vpop.f32.mrf.mxu0
        %v3911 = vpop.f32.mrf.mxu0
        %v3912 = vadd.f32 0.0, %v3911
        %v3913 = vpop.f32.mrf.mxu0
        %3914 = vdwg.mxu0
        %v3915 = vadd.f32 %v3810, %v3885
        %v3916 = vadd.f32 %v3811, %v3888
        %v3917 = vadd.f32 %v3812, %v3893
        %v3918 = vadd.f32 %v3813, %v3896
        %v3919 = vadd.f32 %v3814, %v3901
        %v3920 = vadd.f32 %v3815, %v3904
        %v3921 = vadd.f32 %v3816, %v3909
        %v3922 = vadd.f32 %v3817, %v3912
        %3923 = vst [vmem:[#allocation3] sm:$0xff] %v3915
        %3924 = vst [vmem:[#allocation3 + $0x8] sm:$0xff] %v3916
        %3925 = vst [vmem:[#allocation3 + $0x10] sm:$0xff] %v3917
        %3926 = vst [vmem:[#allocation3 + $0x18] sm:$0xff] %v3918
        %3927 = vst [vmem:[#allocation3 + $0x20] sm:$0xff] %v3919
        %3928 = vst [vmem:[#allocation3 + $0x28] sm:$0xff] %v3920
        %3929 = vst [vmem:[#allocation3 + $0x30] sm:$0xff] %v3921
        %3930 = vst [vmem:[#allocation3 + $0x38] sm:$0xff] %v3922
        %v3931 = vld [vmem:[#allocation4] sm:$0x1]
        %v3932 = vadd.f32 %v3786, %v3787
        %v3933 = vadd.f32 %v3932, %v3788
        %v3934 = vadd.f32 %v3933, %v3789
        %v3935 = vadd.f32 %v3934, %v3790
        %v3936 = vadd.f32 %v3935, %v3791
        %v3937 = vadd.f32 %v3936, %v3792
        %v3938 = vadd.f32 %v3937, %v3793
        %v3939 = vadd.f32 %v3938, %v3794
        %v3940 = vadd.f32 %v3939, %v3795
        %v3941 = vadd.f32 %v3940, %v3796
        %v3942 = vadd.f32 %v3941, %v3797
        %v3943 = vadd.f32 %v3942, %v3798
        %v3944 = vadd.f32 %v3943, %v3799
        %v3945 = vadd.f32 %v3944, %v3800
        %v3946 = vadd.f32 %v3945, %v3801
        %v3947 = vrot.slane %v3946, 4
        %v3948 = vadd.f32 %v3946, %v3947
        %v3949 = vrot.slane %v3948, 2
        %v3950 = vadd.f32 %v3948, %v3949
        %v3951 = vrot.slane %v3950, 1
        %v3952 = vadd.f32 %v3950, %v3951
        %v3953 = vadd.f32 %v3931, %v3952
        %3954 = vst [vmem:[#allocation4] sm:$0x1] %v3953
        %v3955 = vld [vmem:[#allocation3] sm:$0xff]
        %v3956 = vld [vmem:[#allocation3 + $0x8] sm:$0xff]
        %v3957 = vld [vmem:[#allocation3 + $0x10] sm:$0xff]
        %v3958 = vld [vmem:[#allocation3 + $0x18] sm:$0xff]
        %v3959 = vld [vmem:[#allocation3 + $0x20] sm:$0xff]
        %v3960 = vld [vmem:[#allocation3 + $0x28] sm:$0xff]
        %v3961 = vld [vmem:[#allocation3 + $0x30] sm:$0xff]
        %v3962 = vld [vmem:[#allocation3 + $0x38] sm:$0xff]
        %v3963 = vld [vmem:[#allocation4] sm:$0x1]
        %v3964 = vadd.f32 %v3963, 1e-07
        %v3965 = vrcp.pop %v3964
        %v3966 = vmul.f32 %v3964, %v3965
        %v3967 = vsub.f32 2.0, %v3966
        %v3968 = vmul.f32 %v3965, %v3967
        %v3970 = vlaneseq
        %v3971 = vshrl.u32 %v3970, 7
        %v3972 = vsub.s32 0, %v3971
        %v3973 = vrot.slane %v3968, %v3972
        %v3975 = vmul.f32 %v3955, %v3973
        %v3976 = vmul.f32 %v3956, %v3973
        %v3977 = vmul.f32 %v3957, %v3973
        %v3978 = vmul.f32 %v3958, %v3973
        %v3979 = vmul.f32 %v3959, %v3973
        %v3980 = vmul.f32 %v3960, %v3973
        %v3981 = vmul.f32 %v3961, %v3973
        %v3982 = vmul.f32 %v3962, %v3973
        %v3983 = vld [vmem:[%s1 + $0x180] sm:$0xf]
        %v3984 = vld [vmem:[%s1 + $0x184] sm:$0xf]
        %v3985 = vld [vmem:[%s1 + $0x188] sm:$0xf]
        %v3986 = vld [vmem:[%s1 + $0x18c] sm:$0xf]
        %v3987 = vld [vmem:[%s1 + $0x190] sm:$0xf]
        %v3988 = vld [vmem:[%s1 + $0x194] sm:$0xf]
        %v3989 = vld [vmem:[%s1 + $0x198] sm:$0xf]
        %v3990 = vld [vmem:[%s1 + $0x19c] sm:$0xf]
        %v3991 = vsub.f32 %v3412, %v3975
        %v3992 = vsub.f32 %v3413, %v3976
        %v3993 = vsub.f32 %v3414, %v3977
        %v3994 = vsub.f32 %v3415, %v3978
        %v3995 = vsub.f32 %v3416, %v3979
        %v3996 = vsub.f32 %v3417, %v3980
        %v3997 = vsub.f32 %v3418, %v3981
        %v3998 = vsub.f32 %v3419, %v3982
        %v3999 = vpack.c.bf16 %v3992, %v3991
        %v4000 = vpack.c.bf16 %v3994, %v3993
        %v4001 = vpack.c.bf16 %v3996, %v3995
        %v4002 = vpack.c.bf16 %v3998, %v3997
        %v4003 = vld [vmem:[%s2 + $0x300] sm:$0xff]
        %v4004 = vld [vmem:[%s2 + $0x308] sm:$0xff]
        %v4005 = vld [vmem:[%s2 + $0x310] sm:$0xff]
        %v4006 = vld [vmem:[%s2 + $0x318] sm:$0xff]
        %v4007 = vld [vmem:[%s2 + $0x320] sm:$0xff]
        %v4008 = vld [vmem:[%s2 + $0x328] sm:$0xff]
        %v4009 = vld [vmem:[%s2 + $0x330] sm:$0xff]
        %v4010 = vld [vmem:[%s2 + $0x338] sm:$0xff]
        %4012 = vset.pattern.permute.xlu0 0
        %4013 = vperm.xlu0 %4012, %v4003
        %v4014 = vpop.permute.xlu0 %4013
        %4017 = vset.pattern.permute.xlu0 0
        %4018 = vperm.xlu0 %4017, %v4004
        %v4019 = vpop.permute.xlu0 %4018
        %4022 = vset.pattern.permute.xlu0 0
        %4023 = vperm.xlu0 %4022, %v4005
        %v4024 = vpop.permute.xlu0 %4023
        %4027 = vset.pattern.permute.xlu0 0
        %4028 = vperm.xlu0 %4027, %v4006
        %v4029 = vpop.permute.xlu0 %4028
        %4032 = vset.pattern.permute.xlu0 0
        %4033 = vperm.xlu0 %4032, %v4007
        %v4034 = vpop.permute.xlu0 %4033
        %4037 = vset.pattern.permute.xlu0 0
        %4038 = vperm.xlu0 %4037, %v4008
        %v4039 = vpop.permute.xlu0 %4038
        %4042 = vset.pattern.permute.xlu0 0
        %4043 = vperm.xlu0 %4042, %v4009
        %v4044 = vpop.permute.xlu0 %4043
        %4047 = vset.pattern.permute.xlu0 0
        %4048 = vperm.xlu0 %4047, %v4010
        %v4049 = vpop.permute.xlu0 %4048
        %v4059 = vunpack.c.l.b16 %v3983
        %v4060 = vunpack.c.l.b16 %v3984
        %v4061 = vunpack.c.l.b16 %v3985
        %v4062 = vunpack.c.l.b16 %v3986
        %v4063 = vunpack.c.l.b16 %v3987
        %v4064 = vunpack.c.l.b16 %v3988
        %v4065 = vunpack.c.l.b16 %v3989
        %v4066 = vunpack.c.l.b16 %v3990
        %v4067 = vpack.c.b16 %v4060, %v4059
        %v4068 = vpack.c.b16 %v4062, %v4061
        %v4069 = vpack.c.b16 %v4064, %v4063
        %v4070 = vpack.c.b16 %v4066, %v4065
        %v4072 = vsel %vm335, %v4067, 0
        %v4075 = vsel %vm335, %v4068, 0
        %v4078 = vsel %vm335, %v4069, 0
        %v4081 = vsel %vm335, %v4070, 0
        %4083 = vmatprep.subr.bf16.mxu0 0
        %4084 = vmatpush1.bf16.msra.mxu0 0
        %4085 = vmatprep.subr.bf16.mxu0 0
        %4086 = vmatpush1.bf16.msra.mxu0 0
        %4087 = vmatprep.subr.bf16.mxu0 0
        %4088 = vmatpush1.bf16.msra.mxu0 0
        %4089 = vmatprep.subr.bf16.mxu0 0
        %4090 = vmatpush1.bf16.msra.mxu0 0
        %4091 = vmatprep.subr.bf16.mxu0 0
        %4092 = vmatpush1.bf16.msra.mxu0 %v4002
        %4093 = vmatprep.subr.bf16.mxu0 0
        %4094 = vmatpush1.bf16.msra.mxu0 %v4001
        %4095 = vmatprep.subr.bf16.mxu0 0
        %4096 = vmatpush1.bf16.msra.mxu0 %v4000
        %4097 = vmatprep.subr.bf16.mxu0 0
        %4098 = vmatpush1.bf16.msra.mxu0 %v3999
        %4099 = vmatprep.subr.bf16.mxu0 0
        %4100 = vmatpush2.bf16.msra.mxu0 0
        %4101 = vmatprep.subr.bf16.mxu0 0
        %4102 = vmatpush2.bf16.msra.mxu0 0
        %4103 = vmatprep.subr.bf16.mxu0 0
        %4104 = vmatpush2.bf16.msra.mxu0 0
        %4105 = vmatprep.subr.bf16.mxu0 0
        %4106 = vmatpush2.bf16.msra.mxu0 0
        %4107 = vmatprep.subr.bf16.mxu0 0
        %4108 = vmatpush2.bf16.msra.mxu0 0
        %4109 = vmatprep.subr.bf16.mxu0 0
        %4110 = vmatpush2.bf16.msra.mxu0 0
        %4111 = vmatprep.subr.bf16.mxu0 0
        %4112 = vmatpush2.bf16.msra.mxu0 0
        %4113 = vmatprep.subr.bf16.mxu0 0
        %4114 = vmatpush2.bf16.msra.mxu0 0
        %4115 = vmatprep.mubr.bf16.mxu0 0
        %4116 = vmatmul.mubr.bf16.gmra.mxu0 %v4072
        %v4117 = vpop.f32.mrf.mxu0
        %v4118 = vadd.f32 %v4014, %v4117
        %v4119 = vpop.f32.mrf.mxu0
        %v4120 = vpop.f32.mrf.mxu0
        %v4121 = vadd.f32 %v4019, %v4120
        %v4122 = vpop.f32.mrf.mxu0
        %4123 = vmatprep.mubr.bf16.mxu0 0
        %4124 = vmatmul.mubr.bf16.gmra.mxu0 %v4075
        %v4125 = vpop.f32.mrf.mxu0
        %v4126 = vadd.f32 %v4024, %v4125
        %v4127 = vpop.f32.mrf.mxu0
        %v4128 = vpop.f32.mrf.mxu0
        %v4129 = vadd.f32 %v4029, %v4128
        %v4130 = vpop.f32.mrf.mxu0
        %4131 = vmatprep.mubr.bf16.mxu0 0
        %4132 = vmatmul.mubr.bf16.gmra.mxu0 %v4078
        %v4133 = vpop.f32.mrf.mxu0
        %v4134 = vadd.f32 %v4034, %v4133
        %v4135 = vpop.f32.mrf.mxu0
        %v4136 = vpop.f32.mrf.mxu0
        %v4137 = vadd.f32 %v4039, %v4136
        %v4138 = vpop.f32.mrf.mxu0
        %4139 = vmatprep.mubr.bf16.mxu0 0
        %4140 = vmatmul.mubr.bf16.gmra.mxu0 %v4081
        %v4141 = vpop.f32.mrf.mxu0
        %v4142 = vadd.f32 %v4044, %v4141
        %v4143 = vpop.f32.mrf.mxu0
        %v4144 = vpop.f32.mrf.mxu0
        %v4145 = vadd.f32 %v4049, %v4144
        %v4146 = vpop.f32.mrf.mxu0
        %4147 = vdwg.mxu0
        %v4148 = vmax.f32 %v4118, 0.0
        %v4149 = vmax.f32 %v4121, 0.0
        %v4150 = vmax.f32 %v4126, 0.0
        %v4151 = vmax.f32 %v4129, 0.0
        %v4152 = vmax.f32 %v4134, 0.0
        %v4153 = vmax.f32 %v4137, 0.0
        %v4154 = vmax.f32 %v4142, 0.0
        %v4155 = vmax.f32 %v4145, 0.0
        %v4156 = vadd.f32 %v3412, %v4148
        %v4157 = vadd.f32 %v3413, %v4149
        %v4158 = vadd.f32 %v3414, %v4150
        %v4159 = vadd.f32 %v3415, %v4151
        %v4160 = vadd.f32 %v3416, %v4152
        %v4161 = vadd.f32 %v3417, %v4153
        %v4162 = vadd.f32 %v3418, %v4154
        %v4163 = vadd.f32 %v3419, %v4155
        %v4164 = vld [vmem:[%s168] sm:$0xff]
        %v4165 = vld [vmem:[%s168 + $0x8] sm:$0xff]
        %v4166 = vld [vmem:[%s168 + $0x10] sm:$0xff]
        %v4167 = vld [vmem:[%s168 + $0x18] sm:$0xff]
        %v4168 = vld [vmem:[%s168 + $0x20] sm:$0xff]
        %v4169 = vld [vmem:[%s168 + $0x28] sm:$0xff]
        %v4170 = vld [vmem:[%s168 + $0x30] sm:$0xff]
        %v4171 = vld [vmem:[%s168 + $0x38] sm:$0xff]
        %v4172 = vld [vmem:[#allocation2 + $0x60] sm:$0xf]
        %v4173 = vld [vmem:[#allocation2 + $0x64] sm:$0xf]
        %v4174 = vld [vmem:[#allocation2 + $0x68] sm:$0xf]
        %v4175 = vld [vmem:[#allocation2 + $0x6c] sm:$0xf]
        %v4176 = vld [vmem:[#allocation2 + $0x70] sm:$0xf]
        %v4177 = vld [vmem:[#allocation2 + $0x74] sm:$0xf]
        %v4178 = vld [vmem:[#allocation2 + $0x78] sm:$0xf]
        %v4179 = vld [vmem:[#allocation2 + $0x7c] sm:$0xf]
        %4180 = vst [vmem:[#allocation3] sm:$0xff] 0.0
        %4181 = vst [vmem:[#allocation3 + $0x8] sm:$0xff] 0.0
        %4182 = vst [vmem:[#allocation3 + $0x10] sm:$0xff] 0.0
        %4183 = vst [vmem:[#allocation3 + $0x18] sm:$0xff] 0.0
        %4184 = vst [vmem:[#allocation3 + $0x20] sm:$0xff] 0.0
        %4185 = vst [vmem:[#allocation3 + $0x28] sm:$0xff] 0.0
        %4186 = vst [vmem:[#allocation3 + $0x30] sm:$0xff] 0.0
        %4187 = vst [vmem:[#allocation3 + $0x38] sm:$0xff] 0.0
        %4188 = vst [vmem:[#allocation4] sm:$0x1] 0.0
        %v4189 = vld [vmem:[%s1254] sm:$0xff]
        %v4190 = vld [vmem:[%s1254 + $0x8] sm:$0xff]
        %v4191 = vld [vmem:[%s1254 + $0x10] sm:$0xff]
        %v4192 = vld [vmem:[%s1254 + $0x18] sm:$0xff]
        %v4193 = vld [vmem:[%s1254 + $0x20] sm:$0xff]
        %v4194 = vld [vmem:[%s1254 + $0x28] sm:$0xff]
        %v4195 = vld [vmem:[%s1254 + $0x30] sm:$0xff]
        %v4196 = vld [vmem:[%s1254 + $0x38] sm:$0xff]
        %v4197 = vpack.c.bf16 %v4190, %v4189
        %v4198 = vpack.c.bf16 %v4192, %v4191
        %v4199 = vpack.c.bf16 %v4194, %v4193
        %v4200 = vpack.c.bf16 %v4196, %v4195
        %4201 = vxpose.xlu0.c.b16.start [1/8] %v4197, 128
        %4202 = vxpose.xlu0.c.b16.cont [2/8] %v4198, 128
        %4203 = vxpose.xlu0.c.b16.cont [3/8] %v4199, 128
        %4204 = vxpose.xlu0.c.b16.cont [4/8] %v4200, 128
        %4205 = vxpose.xlu0.c.b16.cont [5/8] 0, 128
        %4206 = vxpose.xlu0.c.b16.cont [6/8] 0, 128
        %4207 = vxpose.xlu0.c.b16.cont [7/8] 0, 128
        %4208 = vxpose.xlu0.c.b16.end [8/8] 0, 128
        %v4209 = vpop.trf.xlu0
        %v4210 = vpop.trf.xlu0
        %v4211 = vpop.trf.xlu0
        %v4212 = vpop.trf.xlu0
        %v4213 = vpop.trf.xlu0
        %v4214 = vpop.trf.xlu0
        %v4215 = vpop.trf.xlu0
        %v4216 = vpop.trf.xlu0
        %v4225 = vunpack.c.l.b16 %v4172
        %v4226 = vunpack.c.l.b16 %v4173
        %v4227 = vunpack.c.l.b16 %v4174
        %v4228 = vunpack.c.l.b16 %v4175
        %v4229 = vunpack.c.l.b16 %v4176
        %v4230 = vunpack.c.l.b16 %v4177
        %v4231 = vunpack.c.l.b16 %v4178
        %v4232 = vunpack.c.l.b16 %v4179
        %v4233 = vpack.c.b16 %v4226, %v4225
        %v4234 = vpack.c.b16 %v4228, %v4227
        %v4235 = vpack.c.b16 %v4230, %v4229
        %v4236 = vpack.c.b16 %v4232, %v4231
        %v4242 = vsel %vm335, %v4209, 0
        %v4245 = vsel %vm335, %v4210, 0
        %v4248 = vsel %vm335, %v4211, 0
        %v4251 = vsel %vm335, %v4212, 0
        %v4254 = vsel %vm335, %v4213, 0
        %v4257 = vsel %vm335, %v4214, 0
        %v4260 = vsel %vm335, %v4215, 0
        %v4263 = vsel %vm335, %v4216, 0
        %4265 = vmatprep.subr.bf16.mxu0 0
        %4266 = vmatpush1.bf16.msra.mxu0 0
        %4267 = vmatprep.subr.bf16.mxu0 0
        %4268 = vmatpush1.bf16.msra.mxu0 0
        %4269 = vmatprep.subr.bf16.mxu0 0
        %4270 = vmatpush1.bf16.msra.mxu0 0
        %4271 = vmatprep.subr.bf16.mxu0 0
        %4272 = vmatpush1.bf16.msra.mxu0 0
        %4273 = vmatprep.subr.bf16.mxu0 0
        %4274 = vmatpush1.bf16.msra.mxu0 %v4236
        %4275 = vmatprep.subr.bf16.mxu0 0
        %4276 = vmatpush1.bf16.msra.mxu0 %v4235
        %4277 = vmatprep.subr.bf16.mxu0 0
        %4278 = vmatpush1.bf16.msra.mxu0 %v4234
        %4279 = vmatprep.subr.bf16.mxu0 0
        %4280 = vmatpush1.bf16.msra.mxu0 %v4233
        %4281 = vmatprep.subr.bf16.mxu0 0
        %4282 = vmatpush2.bf16.msra.mxu0 0
        %4283 = vmatprep.subr.bf16.mxu0 0
        %4284 = vmatpush2.bf16.msra.mxu0 0
        %4285 = vmatprep.subr.bf16.mxu0 0
        %4286 = vmatpush2.bf16.msra.mxu0 0
        %4287 = vmatprep.subr.bf16.mxu0 0
        %4288 = vmatpush2.bf16.msra.mxu0 0
        %4289 = vmatprep.subr.bf16.mxu0 0
        %4290 = vmatpush2.bf16.msra.mxu0 0
        %4291 = vmatprep.subr.bf16.mxu0 0
        %4292 = vmatpush2.bf16.msra.mxu0 0
        %4293 = vmatprep.subr.bf16.mxu0 0
        %4294 = vmatpush2.bf16.msra.mxu0 0
        %4295 = vmatprep.subr.bf16.mxu0 0
        %4296 = vmatpush2.bf16.msra.mxu0 0
        %4297 = vmatprep.mubr.bf16.mxu0 0
        %4298 = vmatmul.mubr.bf16.gmra.mxu0 %v4242
        %v4299 = vpop.f32.mrf.mxu0
        %v4300 = vadd.f32 0.0, %v4299
        %v4301 = vpop.f32.mrf.mxu0
        %v4302 = vpop.f32.mrf.mxu0
        %v4303 = vadd.f32 0.0, %v4302
        %v4304 = vpop.f32.mrf.mxu0
        %4305 = vmatprep.mubr.bf16.mxu0 0
        %4306 = vmatmul.mubr.bf16.gmra.mxu0 %v4245
        %v4307 = vpop.f32.mrf.mxu0
        %v4308 = vadd.f32 0.0, %v4307
        %v4309 = vpop.f32.mrf.mxu0
        %v4310 = vpop.f32.mrf.mxu0
        %v4311 = vadd.f32 0.0, %v4310
        %v4312 = vpop.f32.mrf.mxu0
        %4313 = vmatprep.mubr.bf16.mxu0 0
        %4314 = vmatmul.mubr.bf16.gmra.mxu0 %v4248
        %v4315 = vpop.f32.mrf.mxu0
        %v4316 = vadd.f32 0.0, %v4315
        %v4317 = vpop.f32.mrf.mxu0
        %v4318 = vpop.f32.mrf.mxu0
        %v4319 = vadd.f32 0.0, %v4318
        %v4320 = vpop.f32.mrf.mxu0
        %4321 = vmatprep.mubr.bf16.mxu0 0
        %4322 = vmatmul.mubr.bf16.gmra.mxu0 %v4251
        %v4323 = vpop.f32.mrf.mxu0
        %v4324 = vadd.f32 0.0, %v4323
        %v4325 = vpop.f32.mrf.mxu0
        %v4326 = vpop.f32.mrf.mxu0
        %v4327 = vadd.f32 0.0, %v4326
        %v4328 = vpop.f32.mrf.mxu0
        %4329 = vmatprep.mubr.bf16.mxu0 0
        %4330 = vmatmul.mubr.bf16.gmra.mxu0 %v4254
        %v4331 = vpop.f32.mrf.mxu0
        %v4332 = vadd.f32 0.0, %v4331
        %v4333 = vpop.f32.mrf.mxu0
        %v4334 = vpop.f32.mrf.mxu0
        %v4335 = vadd.f32 0.0, %v4334
        %v4336 = vpop.f32.mrf.mxu0
        %4337 = vmatprep.mubr.bf16.mxu0 0
        %4338 = vmatmul.mubr.bf16.gmra.mxu0 %v4257
        %v4339 = vpop.f32.mrf.mxu0
        %v4340 = vadd.f32 0.0, %v4339
        %v4341 = vpop.f32.mrf.mxu0
        %v4342 = vpop.f32.mrf.mxu0
        %v4343 = vadd.f32 0.0, %v4342
        %v4344 = vpop.f32.mrf.mxu0
        %4345 = vmatprep.mubr.bf16.mxu0 0
        %4346 = vmatmul.mubr.bf16.gmra.mxu0 %v4260
        %v4347 = vpop.f32.mrf.mxu0
        %v4348 = vadd.f32 0.0, %v4347
        %v4349 = vpop.f32.mrf.mxu0
        %v4350 = vpop.f32.mrf.mxu0
        %v4351 = vadd.f32 0.0, %v4350
        %v4352 = vpop.f32.mrf.mxu0
        %4353 = vmatprep.mubr.bf16.mxu0 0
        %4354 = vmatmul.mubr.bf16.gmra.mxu0 %v4263
        %v4355 = vpop.f32.mrf.mxu0
        %v4356 = vadd.f32 0.0, %v4355
        %v4357 = vpop.f32.mrf.mxu0
        %v4358 = vpop.f32.mrf.mxu0
        %v4359 = vadd.f32 0.0, %v4358
        %v4360 = vpop.f32.mrf.mxu0
        %4361 = vdwg.mxu0
        %4362 = vmax.xlane.f32.xlu0 %v4300
        %v4363 = vpop.xlane.xlu0 %4362
        %4364 = vmax.xlane.f32.xlu0 %v4303
        %v4365 = vpop.xlane.xlu0 %4364
        %4366 = vmax.xlane.f32.xlu0 %v4308
        %v4367 = vpop.xlane.xlu0 %4366
        %4368 = vmax.xlane.f32.xlu0 %v4311
        %v4369 = vpop.xlane.xlu0 %4368
        %4370 = vmax.xlane.f32.xlu0 %v4316
        %v4371 = vpop.xlane.xlu0 %4370
        %4372 = vmax.xlane.f32.xlu0 %v4319
        %v4373 = vpop.xlane.xlu0 %4372
        %4374 = vmax.xlane.f32.xlu0 %v4324
        %v4375 = vpop.xlane.xlu0 %4374
        %4376 = vmax.xlane.f32.xlu0 %v4327
        %v4377 = vpop.xlane.xlu0 %4376
        %4378 = vmax.xlane.f32.xlu0 %v4332
        %v4379 = vpop.xlane.xlu0 %4378
        %4380 = vmax.xlane.f32.xlu0 %v4335
        %v4381 = vpop.xlane.xlu0 %4380
        %4382 = vmax.xlane.f32.xlu0 %v4340
        %v4383 = vpop.xlane.xlu0 %4382
        %4384 = vmax.xlane.f32.xlu0 %v4343
        %v4385 = vpop.xlane.xlu0 %4384
        %4386 = vmax.xlane.f32.xlu0 %v4348
        %v4387 = vpop.xlane.xlu0 %4386
        %4388 = vmax.xlane.f32.xlu0 %v4351
        %v4389 = vpop.xlane.xlu0 %4388
        %4390 = vmax.xlane.f32.xlu0 %v4356
        %v4391 = vpop.xlane.xlu0 %4390
        %4392 = vmax.xlane.f32.xlu0 %v4359
        %v4393 = vpop.xlane.xlu0 %4392
        %v4394 = vsub.f32 %v4300, %v4363
        %v4395 = vsub.f32 %v4303, %v4365
        %v4396 = vsub.f32 %v4308, %v4367
        %v4397 = vsub.f32 %v4311, %v4369
        %v4398 = vsub.f32 %v4316, %v4371
        %v4399 = vsub.f32 %v4319, %v4373
        %v4400 = vsub.f32 %v4324, %v4375
        %v4401 = vsub.f32 %v4327, %v4377
        %v4402 = vsub.f32 %v4332, %v4379
        %v4403 = vsub.f32 %v4335, %v4381
        %v4404 = vsub.f32 %v4340, %v4383
        %v4405 = vsub.f32 %v4343, %v4385
        %v4406 = vsub.f32 %v4348, %v4387
        %v4407 = vsub.f32 %v4351, %v4389
        %v4408 = vsub.f32 %v4356, %v4391
        %v4409 = vsub.f32 %v4359, %v4393
        %v4410 = vmul.f32 %v4394, 1.442695
        %v4411 = vpow.pop %v4410
        %v4412 = vmul.f32 %v4395, 1.442695
        %v4413 = vpow.pop %v4412
        %v4414 = vmul.f32 %v4396, 1.442695
        %v4415 = vpow.pop %v4414
        %v4416 = vmul.f32 %v4397, 1.442695
        %v4417 = vpow.pop %v4416
        %v4418 = vmul.f32 %v4398, 1.442695
        %v4419 = vpow.pop %v4418
        %v4420 = vmul.f32 %v4399, 1.442695
        %v4421 = vpow.pop %v4420
        %v4422 = vmul.f32 %v4400, 1.442695
        %v4423 = vpow.pop %v4422
        %v4424 = vmul.f32 %v4401, 1.442695
        %v4425 = vpow.pop %v4424
        %v4426 = vmul.f32 %v4402, 1.442695
        %v4427 = vpow.pop %v4426
        %v4428 = vmul.f32 %v4403, 1.442695
        %v4429 = vpow.pop %v4428
        %v4430 = vmul.f32 %v4404, 1.442695
        %v4431 = vpow.pop %v4430
        %v4432 = vmul.f32 %v4405, 1.442695
        %v4433 = vpow.pop %v4432
        %v4434 = vmul.f32 %v4406, 1.442695
        %v4435 = vpow.pop %v4434
        %v4436 = vmul.f32 %v4407, 1.442695
        %v4437 = vpow.pop %v4436
        %v4438 = vmul.f32 %v4408, 1.442695
        %v4439 = vpow.pop %v4438
        %v4440 = vmul.f32 %v4409, 1.442695
        %v4441 = vpow.pop %v4440
        %4442 = vadd.xlane.f32.xlu0 %v4411
        %v4443 = vpop.xlane.xlu0 %4442
        %4444 = vadd.xlane.f32.xlu0 %v4413
        %v4445 = vpop.xlane.xlu0 %4444
        %4446 = vadd.xlane.f32.xlu0 %v4415
        %v4447 = vpop.xlane.xlu0 %4446
        %4448 = vadd.xlane.f32.xlu0 %v4417
        %v4449 = vpop.xlane.xlu0 %4448
        %4450 = vadd.xlane.f32.xlu0 %v4419
        %v4451 = vpop.xlane.xlu0 %4450
        %4452 = vadd.xlane.f32.xlu0 %v4421
        %v4453 = vpop.xlane.xlu0 %4452
        %4454 = vadd.xlane.f32.xlu0 %v4423
        %v4455 = vpop.xlane.xlu0 %4454
        %4456 = vadd.xlane.f32.xlu0 %v4425
        %v4457 = vpop.xlane.xlu0 %4456
        %4458 = vadd.xlane.f32.xlu0 %v4427
        %v4459 = vpop.xlane.xlu0 %4458
        %4460 = vadd.xlane.f32.xlu0 %v4429
        %v4461 = vpop.xlane.xlu0 %4460
        %4462 = vadd.xlane.f32.xlu0 %v4431
        %v4463 = vpop.xlane.xlu0 %4462
        %4464 = vadd.xlane.f32.xlu0 %v4433
        %v4465 = vpop.xlane.xlu0 %4464
        %4466 = vadd.xlane.f32.xlu0 %v4435
        %v4467 = vpop.xlane.xlu0 %4466
        %4468 = vadd.xlane.f32.xlu0 %v4437
        %v4469 = vpop.xlane.xlu0 %4468
        %4470 = vadd.xlane.f32.xlu0 %v4439
        %v4471 = vpop.xlane.xlu0 %4470
        %4472 = vadd.xlane.f32.xlu0 %v4441
        %v4473 = vpop.xlane.xlu0 %4472
        %v4474 = vrcp.pop %v4443
        %v4475 = vrcp.pop %v4445
        %v4476 = vrcp.pop %v4447
        %v4477 = vrcp.pop %v4449
        %v4478 = vrcp.pop %v4451
        %v4479 = vrcp.pop %v4453
        %v4480 = vrcp.pop %v4455
        %v4481 = vrcp.pop %v4457
        %v4482 = vrcp.pop %v4459
        %v4483 = vrcp.pop %v4461
        %v4484 = vrcp.pop %v4463
        %v4485 = vrcp.pop %v4465
        %v4486 = vrcp.pop %v4467
        %v4487 = vrcp.pop %v4469
        %v4488 = vrcp.pop %v4471
        %v4489 = vrcp.pop %v4473
        %v4490 = vmul.f32 %v4443, %v4474
        %v4491 = vmul.f32 %v4445, %v4475
        %v4492 = vmul.f32 %v4447, %v4476
        %v4493 = vmul.f32 %v4449, %v4477
        %v4494 = vmul.f32 %v4451, %v4478
        %v4495 = vmul.f32 %v4453, %v4479
        %v4496 = vmul.f32 %v4455, %v4480
        %v4497 = vmul.f32 %v4457, %v4481
        %v4498 = vmul.f32 %v4459, %v4482
        %v4499 = vmul.f32 %v4461, %v4483
        %v4500 = vmul.f32 %v4463, %v4484
        %v4501 = vmul.f32 %v4465, %v4485
        %v4502 = vmul.f32 %v4467, %v4486
        %v4503 = vmul.f32 %v4469, %v4487
        %v4504 = vmul.f32 %v4471, %v4488
        %v4505 = vmul.f32 %v4473, %v4489
        %v4506 = vsub.f32 2.0, %v4490
        %v4507 = vsub.f32 2.0, %v4491
        %v4508 = vsub.f32 2.0, %v4492
        %v4509 = vsub.f32 2.0, %v4493
        %v4510 = vsub.f32 2.0, %v4494
        %v4511 = vsub.f32 2.0, %v4495
        %v4512 = vsub.f32 2.0, %v4496
        %v4513 = vsub.f32 2.0, %v4497
        %v4514 = vsub.f32 2.0, %v4498
        %v4515 = vsub.f32 2.0, %v4499
        %v4516 = vsub.f32 2.0, %v4500
        %v4517 = vsub.f32 2.0, %v4501
        %v4518 = vsub.f32 2.0, %v4502
        %v4519 = vsub.f32 2.0, %v4503
        %v4520 = vsub.f32 2.0, %v4504
        %v4521 = vsub.f32 2.0, %v4505
        %v4522 = vmul.f32 %v4474, %v4506
        %v4523 = vmul.f32 %v4475, %v4507
        %v4524 = vmul.f32 %v4476, %v4508
        %v4525 = vmul.f32 %v4477, %v4509
        %v4526 = vmul.f32 %v4478, %v4510
        %v4527 = vmul.f32 %v4479, %v4511
        %v4528 = vmul.f32 %v4480, %v4512
        %v4529 = vmul.f32 %v4481, %v4513
        %v4530 = vmul.f32 %v4482, %v4514
        %v4531 = vmul.f32 %v4483, %v4515
        %v4532 = vmul.f32 %v4484, %v4516
        %v4533 = vmul.f32 %v4485, %v4517
        %v4534 = vmul.f32 %v4486, %v4518
        %v4535 = vmul.f32 %v4487, %v4519
        %v4536 = vmul.f32 %v4488, %v4520
        %v4537 = vmul.f32 %v4489, %v4521
        %v4538 = vmul.f32 %v4411, %v4522
        %v4539 = vmul.f32 %v4413, %v4523
        %v4540 = vmul.f32 %v4415, %v4524
        %v4541 = vmul.f32 %v4417, %v4525
        %v4542 = vmul.f32 %v4419, %v4526
        %v4543 = vmul.f32 %v4421, %v4527
        %v4544 = vmul.f32 %v4423, %v4528
        %v4545 = vmul.f32 %v4425, %v4529
        %v4546 = vmul.f32 %v4427, %v4530
        %v4547 = vmul.f32 %v4429, %v4531
        %v4548 = vmul.f32 %v4431, %v4532
        %v4549 = vmul.f32 %v4433, %v4533
        %v4550 = vmul.f32 %v4435, %v4534
        %v4551 = vmul.f32 %v4437, %v4535
        %v4552 = vmul.f32 %v4439, %v4536
        %v4553 = vmul.f32 %v4441, %v4537
        %v4554 = vld [vmem:[#allocation2 + $0xa0] sm:$0xf]
        %v4555 = vld [vmem:[#allocation2 + $0xa4] sm:$0xf]
        %v4556 = vld [vmem:[#allocation2 + $0xa8] sm:$0xf]
        %v4557 = vld [vmem:[#allocation2 + $0xac] sm:$0xf]
        %v4558 = vld [vmem:[#allocation2 + $0xb0] sm:$0xf]
        %v4559 = vld [vmem:[#allocation2 + $0xb4] sm:$0xf]
        %v4560 = vld [vmem:[#allocation2 + $0xb8] sm:$0xf]
        %v4561 = vld [vmem:[#allocation2 + $0xbc] sm:$0xf]
        %v4562 = vld [vmem:[#allocation3] sm:$0xff]
        %v4563 = vld [vmem:[#allocation3 + $0x8] sm:$0xff]
        %v4564 = vld [vmem:[#allocation3 + $0x10] sm:$0xff]
        %v4565 = vld [vmem:[#allocation3 + $0x18] sm:$0xff]
        %v4566 = vld [vmem:[#allocation3 + $0x20] sm:$0xff]
        %v4567 = vld [vmem:[#allocation3 + $0x28] sm:$0xff]
        %v4568 = vld [vmem:[#allocation3 + $0x30] sm:$0xff]
        %v4569 = vld [vmem:[#allocation3 + $0x38] sm:$0xff]
        %v4570 = vpack.c.bf16 %v4539, %v4538
        %v4571 = vpack.c.bf16 %v4541, %v4540
        %v4572 = vpack.c.bf16 %v4543, %v4542
        %v4573 = vpack.c.bf16 %v4545, %v4544
        %v4574 = vpack.c.bf16 %v4547, %v4546
        %v4575 = vpack.c.bf16 %v4549, %v4548
        %v4576 = vpack.c.bf16 %v4551, %v4550
        %v4577 = vpack.c.bf16 %v4553, %v4552
        %v4586 = vunpack.c.l.b16 %v4554
        %v4587 = vunpack.c.l.b16 %v4555
        %v4588 = vunpack.c.l.b16 %v4556
        %v4589 = vunpack.c.l.b16 %v4557
        %v4590 = vunpack.c.l.b16 %v4558
        %v4591 = vunpack.c.l.b16 %v4559
        %v4592 = vunpack.c.l.b16 %v4560
        %v4593 = vunpack.c.l.b16 %v4561
        %v4594 = vpack.c.b16 %v4587, %v4586
        %v4595 = vpack.c.b16 %v4589, %v4588
        %v4596 = vpack.c.b16 %v4591, %v4590
        %v4597 = vpack.c.b16 %v4593, %v4592
        %4602 = vmatprep.subr.bf16.mxu0 0
        %4603 = vmatpush1.bf16.msra.mxu0 %v4577
        %4604 = vmatprep.subr.bf16.mxu0 0
        %4605 = vmatpush1.bf16.msra.mxu0 %v4576
        %4606 = vmatprep.subr.bf16.mxu0 0
        %4607 = vmatpush1.bf16.msra.mxu0 %v4575
        %4608 = vmatprep.subr.bf16.mxu0 0
        %4609 = vmatpush1.bf16.msra.mxu0 %v4574
        %4610 = vmatprep.subr.bf16.mxu0 0
        %4611 = vmatpush1.bf16.msra.mxu0 %v4573
        %4612 = vmatprep.subr.bf16.mxu0 0
        %4613 = vmatpush1.bf16.msra.mxu0 %v4572
        %4614 = vmatprep.subr.bf16.mxu0 0
        %4615 = vmatpush1.bf16.msra.mxu0 %v4571
        %4616 = vmatprep.subr.bf16.mxu0 0
        %4617 = vmatpush1.bf16.msra.mxu0 %v4570
        %4618 = vmatprep.subr.bf16.mxu0 0
        %4619 = vmatpush2.bf16.msra.mxu0 0
        %4620 = vmatprep.subr.bf16.mxu0 0
        %4621 = vmatpush2.bf16.msra.mxu0 0
        %4622 = vmatprep.subr.bf16.mxu0 0
        %4623 = vmatpush2.bf16.msra.mxu0 0
        %4624 = vmatprep.subr.bf16.mxu0 0
        %4625 = vmatpush2.bf16.msra.mxu0 0
        %4626 = vmatprep.subr.bf16.mxu0 0
        %4627 = vmatpush2.bf16.msra.mxu0 0
        %4628 = vmatprep.subr.bf16.mxu0 0
        %4629 = vmatpush2.bf16.msra.mxu0 0
        %4630 = vmatprep.subr.bf16.mxu0 0
        %4631 = vmatpush2.bf16.msra.mxu0 0
        %4632 = vmatprep.subr.bf16.mxu0 0
        %4633 = vmatpush2.bf16.msra.mxu0 0
        %4634 = vmatprep.mubr.bf16.mxu0 0
        %4635 = vmatmul.mubr.bf16.gmra.mxu0 %v4594
        %v4636 = vpop.f32.mrf.mxu0
        %v4637 = vadd.f32 0.0, %v4636
        %v4638 = vpop.f32.mrf.mxu0
        %v4639 = vpop.f32.mrf.mxu0
        %v4640 = vadd.f32 0.0, %v4639
        %v4641 = vpop.f32.mrf.mxu0
        %4642 = vmatprep.mubr.bf16.mxu0 0
        %4643 = vmatmul.mubr.bf16.gmra.mxu0 %v4595
        %v4644 = vpop.f32.mrf.mxu0
        %v4645 = vadd.f32 0.0, %v4644
        %v4646 = vpop.f32.mrf.mxu0
        %v4647 = vpop.f32.mrf.mxu0
        %v4648 = vadd.f32 0.0, %v4647
        %v4649 = vpop.f32.mrf.mxu0
        %4650 = vmatprep.mubr.bf16.mxu0 0
        %4651 = vmatmul.mubr.bf16.gmra.mxu0 %v4596
        %v4652 = vpop.f32.mrf.mxu0
        %v4653 = vadd.f32 0.0, %v4652
        %v4654 = vpop.f32.mrf.mxu0
        %v4655 = vpop.f32.mrf.mxu0
        %v4656 = vadd.f32 0.0, %v4655
        %v4657 = vpop.f32.mrf.mxu0
        %4658 = vmatprep.mubr.bf16.mxu0 0
        %4659 = vmatmul.mubr.bf16.gmra.mxu0 %v4597
        %v4660 = vpop.f32.mrf.mxu0
        %v4661 = vadd.f32 0.0, %v4660
        %v4662 = vpop.f32.mrf.mxu0
        %v4663 = vpop.f32.mrf.mxu0
        %v4664 = vadd.f32 0.0, %v4663
        %v4665 = vpop.f32.mrf.mxu0
        %4666 = vdwg.mxu0
        %v4667 = vadd.f32 %v4562, %v4637
        %v4668 = vadd.f32 %v4563, %v4640
        %v4669 = vadd.f32 %v4564, %v4645
        %v4670 = vadd.f32 %v4565, %v4648
        %v4671 = vadd.f32 %v4566, %v4653
        %v4672 = vadd.f32 %v4567, %v4656
        %v4673 = vadd.f32 %v4568, %v4661
        %v4674 = vadd.f32 %v4569, %v4664
        %4675 = vst [vmem:[#allocation3] sm:$0xff] %v4667
        %4676 = vst [vmem:[#allocation3 + $0x8] sm:$0xff] %v4668
        %4677 = vst [vmem:[#allocation3 + $0x10] sm:$0xff] %v4669
        %4678 = vst [vmem:[#allocation3 + $0x18] sm:$0xff] %v4670
        %4679 = vst [vmem:[#allocation3 + $0x20] sm:$0xff] %v4671
        %4680 = vst [vmem:[#allocation3 + $0x28] sm:$0xff] %v4672
        %4681 = vst [vmem:[#allocation3 + $0x30] sm:$0xff] %v4673
        %4682 = vst [vmem:[#allocation3 + $0x38] sm:$0xff] %v4674
        %v4683 = vld [vmem:[#allocation4] sm:$0x1]
        %v4684 = vadd.f32 %v4538, %v4539
        %v4685 = vadd.f32 %v4684, %v4540
        %v4686 = vadd.f32 %v4685, %v4541
        %v4687 = vadd.f32 %v4686, %v4542
        %v4688 = vadd.f32 %v4687, %v4543
        %v4689 = vadd.f32 %v4688, %v4544
        %v4690 = vadd.f32 %v4689, %v4545
        %v4691 = vadd.f32 %v4690, %v4546
        %v4692 = vadd.f32 %v4691, %v4547
        %v4693 = vadd.f32 %v4692, %v4548
        %v4694 = vadd.f32 %v4693, %v4549
        %v4695 = vadd.f32 %v4694, %v4550
        %v4696 = vadd.f32 %v4695, %v4551
        %v4697 = vadd.f32 %v4696, %v4552
        %v4698 = vadd.f32 %v4697, %v4553
        %v4699 = vrot.slane %v4698, 4
        %v4700 = vadd.f32 %v4698, %v4699
        %v4701 = vrot.slane %v4700, 2
        %v4702 = vadd.f32 %v4700, %v4701
        %v4703 = vrot.slane %v4702, 1
        %v4704 = vadd.f32 %v4702, %v4703
        %v4705 = vadd.f32 %v4683, %v4704
        %4706 = vst [vmem:[#allocation4] sm:$0x1] %v4705
        %v4707 = vld [vmem:[#allocation3] sm:$0xff]
        %v4708 = vld [vmem:[#allocation3 + $0x8] sm:$0xff]
        %v4709 = vld [vmem:[#allocation3 + $0x10] sm:$0xff]
        %v4710 = vld [vmem:[#allocation3 + $0x18] sm:$0xff]
        %v4711 = vld [vmem:[#allocation3 + $0x20] sm:$0xff]
        %v4712 = vld [vmem:[#allocation3 + $0x28] sm:$0xff]
        %v4713 = vld [vmem:[#allocation3 + $0x30] sm:$0xff]
        %v4714 = vld [vmem:[#allocation3 + $0x38] sm:$0xff]
        %v4715 = vld [vmem:[#allocation4] sm:$0x1]
        %v4716 = vadd.f32 %v4715, 1e-07
        %v4717 = vrcp.pop %v4716
        %v4718 = vmul.f32 %v4716, %v4717
        %v4719 = vsub.f32 2.0, %v4718
        %v4720 = vmul.f32 %v4717, %v4719
        %v4722 = vlaneseq
        %v4723 = vshrl.u32 %v4722, 7
        %v4724 = vsub.s32 0, %v4723
        %v4725 = vrot.slane %v4720, %v4724
        %v4727 = vmul.f32 %v4707, %v4725
        %v4728 = vmul.f32 %v4708, %v4725
        %v4729 = vmul.f32 %v4709, %v4725
        %v4730 = vmul.f32 %v4710, %v4725
        %v4731 = vmul.f32 %v4711, %v4725
        %v4732 = vmul.f32 %v4712, %v4725
        %v4733 = vmul.f32 %v4713, %v4725
        %v4734 = vmul.f32 %v4714, %v4725
        %v4735 = vld [vmem:[%s1 + $0x1a0] sm:$0xf]
        %v4736 = vld [vmem:[%s1 + $0x1a4] sm:$0xf]
        %v4737 = vld [vmem:[%s1 + $0x1a8] sm:$0xf]
        %v4738 = vld [vmem:[%s1 + $0x1ac] sm:$0xf]
        %v4739 = vld [vmem:[%s1 + $0x1b0] sm:$0xf]
        %v4740 = vld [vmem:[%s1 + $0x1b4] sm:$0xf]
        %v4741 = vld [vmem:[%s1 + $0x1b8] sm:$0xf]
        %v4742 = vld [vmem:[%s1 + $0x1bc] sm:$0xf]
        %v4743 = vsub.f32 %v4164, %v4727
        %v4744 = vsub.f32 %v4165, %v4728
        %v4745 = vsub.f32 %v4166, %v4729
        %v4746 = vsub.f32 %v4167, %v4730
        %v4747 = vsub.f32 %v4168, %v4731
        %v4748 = vsub.f32 %v4169, %v4732
        %v4749 = vsub.f32 %v4170, %v4733
        %v4750 = vsub.f32 %v4171, %v4734
        %v4751 = vpack.c.bf16 %v4744, %v4743
        %v4752 = vpack.c.bf16 %v4746, %v4745
        %v4753 = vpack.c.bf16 %v4748, %v4747
        %v4754 = vpack.c.bf16 %v4750, %v4749
        %v4755 = vld [vmem:[%s2 + $0x340] sm:$0xff]
        %v4756 = vld [vmem:[%s2 + $0x348] sm:$0xff]
        %v4757 = vld [vmem:[%s2 + $0x350] sm:$0xff]
        %v4758 = vld [vmem:[%s2 + $0x358] sm:$0xff]
        %v4759 = vld [vmem:[%s2 + $0x360] sm:$0xff]
        %v4760 = vld [vmem:[%s2 + $0x368] sm:$0xff]
        %v4761 = vld [vmem:[%s2 + $0x370] sm:$0xff]
        %v4762 = vld [vmem:[%s2 + $0x378] sm:$0xff]
        %4764 = vset.pattern.permute.xlu0 0
        %4765 = vperm.xlu0 %4764, %v4755
        %v4766 = vpop.permute.xlu0 %4765
        %4769 = vset.pattern.permute.xlu0 0
        %4770 = vperm.xlu0 %4769, %v4756
        %v4771 = vpop.permute.xlu0 %4770
        %4774 = vset.pattern.permute.xlu0 0
        %4775 = vperm.xlu0 %4774, %v4757
        %v4776 = vpop.permute.xlu0 %4775
        %4779 = vset.pattern.permute.xlu0 0
        %4780 = vperm.xlu0 %4779, %v4758
        %v4781 = vpop.permute.xlu0 %4780
        %4784 = vset.pattern.permute.xlu0 0
        %4785 = vperm.xlu0 %4784, %v4759
        %v4786 = vpop.permute.xlu0 %4785
        %4789 = vset.pattern.permute.xlu0 0
        %4790 = vperm.xlu0 %4789, %v4760
        %v4791 = vpop.permute.xlu0 %4790
        %4794 = vset.pattern.permute.xlu0 0
        %4795 = vperm.xlu0 %4794, %v4761
        %v4796 = vpop.permute.xlu0 %4795
        %4799 = vset.pattern.permute.xlu0 0
        %4800 = vperm.xlu0 %4799, %v4762
        %v4801 = vpop.permute.xlu0 %4800
        %v4811 = vunpack.c.l.b16 %v4735
        %v4812 = vunpack.c.l.b16 %v4736
        %v4813 = vunpack.c.l.b16 %v4737
        %v4814 = vunpack.c.l.b16 %v4738
        %v4815 = vunpack.c.l.b16 %v4739
        %v4816 = vunpack.c.l.b16 %v4740
        %v4817 = vunpack.c.l.b16 %v4741
        %v4818 = vunpack.c.l.b16 %v4742
        %v4819 = vpack.c.b16 %v4812, %v4811
        %v4820 = vpack.c.b16 %v4814, %v4813
        %v4821 = vpack.c.b16 %v4816, %v4815
        %v4822 = vpack.c.b16 %v4818, %v4817
        %v4824 = vsel %vm335, %v4819, 0
        %v4827 = vsel %vm335, %v4820, 0
        %v4830 = vsel %vm335, %v4821, 0
        %v4833 = vsel %vm335, %v4822, 0
        %4835 = vmatprep.subr.bf16.mxu0 0
        %4836 = vmatpush1.bf16.msra.mxu0 0
        %4837 = vmatprep.subr.bf16.mxu0 0
        %4838 = vmatpush1.bf16.msra.mxu0 0
        %4839 = vmatprep.subr.bf16.mxu0 0
        %4840 = vmatpush1.bf16.msra.mxu0 0
        %4841 = vmatprep.subr.bf16.mxu0 0
        %4842 = vmatpush1.bf16.msra.mxu0 0
        %4843 = vmatprep.subr.bf16.mxu0 0
        %4844 = vmatpush1.bf16.msra.mxu0 %v4754
        %4845 = vmatprep.subr.bf16.mxu0 0
        %4846 = vmatpush1.bf16.msra.mxu0 %v4753
        %4847 = vmatprep.subr.bf16.mxu0 0
        %4848 = vmatpush1.bf16.msra.mxu0 %v4752
        %4849 = vmatprep.subr.bf16.mxu0 0
        %4850 = vmatpush1.bf16.msra.mxu0 %v4751
        %4851 = vmatprep.subr.bf16.mxu0 0
        %4852 = vmatpush2.bf16.msra.mxu0 0
        %4853 = vmatprep.subr.bf16.mxu0 0
        %4854 = vmatpush2.bf16.msra.mxu0 0
        %4855 = vmatprep.subr.bf16.mxu0 0
        %4856 = vmatpush2.bf16.msra.mxu0 0
        %4857 = vmatprep.subr.bf16.mxu0 0
        %4858 = vmatpush2.bf16.msra.mxu0 0
        %4859 = vmatprep.subr.bf16.mxu0 0
        %4860 = vmatpush2.bf16.msra.mxu0 0
        %4861 = vmatprep.subr.bf16.mxu0 0
        %4862 = vmatpush2.bf16.msra.mxu0 0
        %4863 = vmatprep.subr.bf16.mxu0 0
        %4864 = vmatpush2.bf16.msra.mxu0 0
        %4865 = vmatprep.subr.bf16.mxu0 0
        %4866 = vmatpush2.bf16.msra.mxu0 0
        %4867 = vmatprep.mubr.bf16.mxu0 0
        %4868 = vmatmul.mubr.bf16.gmra.mxu0 %v4824
        %v4869 = vpop.f32.mrf.mxu0
        %v4870 = vadd.f32 %v4766, %v4869
        %v4871 = vpop.f32.mrf.mxu0
        %v4872 = vpop.f32.mrf.mxu0
        %v4873 = vadd.f32 %v4771, %v4872
        %v4874 = vpop.f32.mrf.mxu0
        %4875 = vmatprep.mubr.bf16.mxu0 0
        %4876 = vmatmul.mubr.bf16.gmra.mxu0 %v4827
        %v4877 = vpop.f32.mrf.mxu0
        %v4878 = vadd.f32 %v4776, %v4877
        %v4879 = vpop.f32.mrf.mxu0
        %v4880 = vpop.f32.mrf.mxu0
        %v4881 = vadd.f32 %v4781, %v4880
        %v4882 = vpop.f32.mrf.mxu0
        %4883 = vmatprep.mubr.bf16.mxu0 0
        %4884 = vmatmul.mubr.bf16.gmra.mxu0 %v4830
        %v4885 = vpop.f32.mrf.mxu0
        %v4886 = vadd.f32 %v4786, %v4885
        %v4887 = vpop.f32.mrf.mxu0
        %v4888 = vpop.f32.mrf.mxu0
        %v4889 = vadd.f32 %v4791, %v4888
        %v4890 = vpop.f32.mrf.mxu0
        %4891 = vmatprep.mubr.bf16.mxu0 0
        %4892 = vmatmul.mubr.bf16.gmra.mxu0 %v4833
        %v4893 = vpop.f32.mrf.mxu0
        %v4894 = vadd.f32 %v4796, %v4893
        %v4895 = vpop.f32.mrf.mxu0
        %v4896 = vpop.f32.mrf.mxu0
        %v4897 = vadd.f32 %v4801, %v4896
        %v4898 = vpop.f32.mrf.mxu0
        %4899 = vdwg.mxu0
        %v4900 = vmax.f32 %v4870, 0.0
        %v4901 = vmax.f32 %v4873, 0.0
        %v4902 = vmax.f32 %v4878, 0.0
        %v4903 = vmax.f32 %v4881, 0.0
        %v4904 = vmax.f32 %v4886, 0.0
        %v4905 = vmax.f32 %v4889, 0.0
        %v4906 = vmax.f32 %v4894, 0.0
        %v4907 = vmax.f32 %v4897, 0.0
        %v4908 = vadd.f32 %v4164, %v4900
        %v4909 = vadd.f32 %v4165, %v4901
        %v4910 = vadd.f32 %v4166, %v4902
        %v4911 = vadd.f32 %v4167, %v4903
        %v4912 = vadd.f32 %v4168, %v4904
        %v4913 = vadd.f32 %v4169, %v4905
        %v4914 = vadd.f32 %v4170, %v4906
        %v4915 = vadd.f32 %v4171, %v4907
        %v4916 = vld [vmem:[%s1254] sm:$0xff]
        %v4917 = vld [vmem:[%s1254 + $0x8] sm:$0xff]
        %v4918 = vld [vmem:[%s1254 + $0x10] sm:$0xff]
        %v4919 = vld [vmem:[%s1254 + $0x18] sm:$0xff]
        %v4920 = vld [vmem:[%s1254 + $0x20] sm:$0xff]
        %v4921 = vld [vmem:[%s1254 + $0x28] sm:$0xff]
        %v4922 = vld [vmem:[%s1254 + $0x30] sm:$0xff]
        %v4923 = vld [vmem:[%s1254 + $0x38] sm:$0xff]
        %v4924 = vld [vmem:[#allocation2 + $0xe0] sm:$0xf]
        %v4925 = vld [vmem:[#allocation2 + $0xe4] sm:$0xf]
        %v4926 = vld [vmem:[#allocation2 + $0xe8] sm:$0xf]
        %v4927 = vld [vmem:[#allocation2 + $0xec] sm:$0xf]
        %v4928 = vld [vmem:[#allocation2 + $0xf0] sm:$0xf]
        %v4929 = vld [vmem:[#allocation2 + $0xf4] sm:$0xf]
        %v4930 = vld [vmem:[#allocation2 + $0xf8] sm:$0xf]
        %v4931 = vld [vmem:[#allocation2 + $0xfc] sm:$0xf]
        %4932 = vst [vmem:[#allocation3] sm:$0xff] 0.0
        %4933 = vst [vmem:[#allocation3 + $0x8] sm:$0xff] 0.0
        %4934 = vst [vmem:[#allocation3 + $0x10] sm:$0xff] 0.0
        %4935 = vst [vmem:[#allocation3 + $0x18] sm:$0xff] 0.0
        %4936 = vst [vmem:[#allocation3 + $0x20] sm:$0xff] 0.0
        %4937 = vst [vmem:[#allocation3 + $0x28] sm:$0xff] 0.0
        %4938 = vst [vmem:[#allocation3 + $0x30] sm:$0xff] 0.0
        %4939 = vst [vmem:[#allocation3 + $0x38] sm:$0xff] 0.0
        %4940 = vst [vmem:[#allocation4] sm:$0x1] 0.0
        %v4941 = vld [vmem:[%s168] sm:$0xff]
        %v4942 = vld [vmem:[%s168 + $0x8] sm:$0xff]
        %v4943 = vld [vmem:[%s168 + $0x10] sm:$0xff]
        %v4944 = vld [vmem:[%s168 + $0x18] sm:$0xff]
        %v4945 = vld [vmem:[%s168 + $0x20] sm:$0xff]
        %v4946 = vld [vmem:[%s168 + $0x28] sm:$0xff]
        %v4947 = vld [vmem:[%s168 + $0x30] sm:$0xff]
        %v4948 = vld [vmem:[%s168 + $0x38] sm:$0xff]
        %v4949 = vpack.c.bf16 %v4942, %v4941
        %v4950 = vpack.c.bf16 %v4944, %v4943
        %v4951 = vpack.c.bf16 %v4946, %v4945
        %v4952 = vpack.c.bf16 %v4948, %v4947
        %4953 = vxpose.xlu0.c.b16.start [1/8] %v4949, 128
        %4954 = vxpose.xlu0.c.b16.cont [2/8] %v4950, 128
        %4955 = vxpose.xlu0.c.b16.cont [3/8] %v4951, 128
        %4956 = vxpose.xlu0.c.b16.cont [4/8] %v4952, 128
        %4957 = vxpose.xlu0.c.b16.cont [5/8] 0, 128
        %4958 = vxpose.xlu0.c.b16.cont [6/8] 0, 128
        %4959 = vxpose.xlu0.c.b16.cont [7/8] 0, 128
        %4960 = vxpose.xlu0.c.b16.end [8/8] 0, 128
        %v4961 = vpop.trf.xlu0
        %v4962 = vpop.trf.xlu0
        %v4963 = vpop.trf.xlu0
        %v4964 = vpop.trf.xlu0
        %v4965 = vpop.trf.xlu0
        %v4966 = vpop.trf.xlu0
        %v4967 = vpop.trf.xlu0
        %v4968 = vpop.trf.xlu0
        %v4977 = vunpack.c.l.b16 %v4924
        %v4978 = vunpack.c.l.b16 %v4925
        %v4979 = vunpack.c.l.b16 %v4926
        %v4980 = vunpack.c.l.b16 %v4927
        %v4981 = vunpack.c.l.b16 %v4928
        %v4982 = vunpack.c.l.b16 %v4929
        %v4983 = vunpack.c.l.b16 %v4930
        %v4984 = vunpack.c.l.b16 %v4931
        %v4985 = vpack.c.b16 %v4978, %v4977
        %v4986 = vpack.c.b16 %v4980, %v4979
        %v4987 = vpack.c.b16 %v4982, %v4981
        %v4988 = vpack.c.b16 %v4984, %v4983
        %v4994 = vsel %vm335, %v4961, 0
        %v4997 = vsel %vm335, %v4962, 0
        %v5000 = vsel %vm335, %v4963, 0
        %v5003 = vsel %vm335, %v4964, 0
        %v5006 = vsel %vm335, %v4965, 0
        %v5009 = vsel %vm335, %v4966, 0
        %v5012 = vsel %vm335, %v4967, 0
        %v5015 = vsel %vm335, %v4968, 0
        %5017 = vmatprep.subr.bf16.mxu0 0
        %5018 = vmatpush1.bf16.msra.mxu0 0
        %5019 = vmatprep.subr.bf16.mxu0 0
        %5020 = vmatpush1.bf16.msra.mxu0 0
        %5021 = vmatprep.subr.bf16.mxu0 0
        %5022 = vmatpush1.bf16.msra.mxu0 0
        %5023 = vmatprep.subr.bf16.mxu0 0
        %5024 = vmatpush1.bf16.msra.mxu0 0
        %5025 = vmatprep.subr.bf16.mxu0 0
        %5026 = vmatpush1.bf16.msra.mxu0 %v4988
        %5027 = vmatprep.subr.bf16.mxu0 0
        %5028 = vmatpush1.bf16.msra.mxu0 %v4987
        %5029 = vmatprep.subr.bf16.mxu0 0
        %5030 = vmatpush1.bf16.msra.mxu0 %v4986
        %5031 = vmatprep.subr.bf16.mxu0 0
        %5032 = vmatpush1.bf16.msra.mxu0 %v4985
        %5033 = vmatprep.subr.bf16.mxu0 0
        %5034 = vmatpush2.bf16.msra.mxu0 0
        %5035 = vmatprep.subr.bf16.mxu0 0
        %5036 = vmatpush2.bf16.msra.mxu0 0
        %5037 = vmatprep.subr.bf16.mxu0 0
        %5038 = vmatpush2.bf16.msra.mxu0 0
        %5039 = vmatprep.subr.bf16.mxu0 0
        %5040 = vmatpush2.bf16.msra.mxu0 0
        %5041 = vmatprep.subr.bf16.mxu0 0
        %5042 = vmatpush2.bf16.msra.mxu0 0
        %5043 = vmatprep.subr.bf16.mxu0 0
        %5044 = vmatpush2.bf16.msra.mxu0 0
        %5045 = vmatprep.subr.bf16.mxu0 0
        %5046 = vmatpush2.bf16.msra.mxu0 0
        %5047 = vmatprep.subr.bf16.mxu0 0
        %5048 = vmatpush2.bf16.msra.mxu0 0
        %5049 = vmatprep.mubr.bf16.mxu0 0
        %5050 = vmatmul.mubr.bf16.gmra.mxu0 %v4994
        %v5051 = vpop.f32.mrf.mxu0
        %v5052 = vadd.f32 0.0, %v5051
        %v5053 = vpop.f32.mrf.mxu0
        %v5054 = vpop.f32.mrf.mxu0
        %v5055 = vadd.f32 0.0, %v5054
        %v5056 = vpop.f32.mrf.mxu0
        %5057 = vmatprep.mubr.bf16.mxu0 0
        %5058 = vmatmul.mubr.bf16.gmra.mxu0 %v4997
        %v5059 = vpop.f32.mrf.mxu0
        %v5060 = vadd.f32 0.0, %v5059
        %v5061 = vpop.f32.mrf.mxu0
        %v5062 = vpop.f32.mrf.mxu0
        %v5063 = vadd.f32 0.0, %v5062
        %v5064 = vpop.f32.mrf.mxu0
        %5065 = vmatprep.mubr.bf16.mxu0 0
        %5066 = vmatmul.mubr.bf16.gmra.mxu0 %v5000
        %v5067 = vpop.f32.mrf.mxu0
        %v5068 = vadd.f32 0.0, %v5067
        %v5069 = vpop.f32.mrf.mxu0
        %v5070 = vpop.f32.mrf.mxu0
        %v5071 = vadd.f32 0.0, %v5070
        %v5072 = vpop.f32.mrf.mxu0
        %5073 = vmatprep.mubr.bf16.mxu0 0
        %5074 = vmatmul.mubr.bf16.gmra.mxu0 %v5003
        %v5075 = vpop.f32.mrf.mxu0
        %v5076 = vadd.f32 0.0, %v5075
        %v5077 = vpop.f32.mrf.mxu0
        %v5078 = vpop.f32.mrf.mxu0
        %v5079 = vadd.f32 0.0, %v5078
        %v5080 = vpop.f32.mrf.mxu0
        %5081 = vmatprep.mubr.bf16.mxu0 0
        %5082 = vmatmul.mubr.bf16.gmra.mxu0 %v5006
        %v5083 = vpop.f32.mrf.mxu0
        %v5084 = vadd.f32 0.0, %v5083
        %v5085 = vpop.f32.mrf.mxu0
        %v5086 = vpop.f32.mrf.mxu0
        %v5087 = vadd.f32 0.0, %v5086
        %v5088 = vpop.f32.mrf.mxu0
        %5089 = vmatprep.mubr.bf16.mxu0 0
        %5090 = vmatmul.mubr.bf16.gmra.mxu0 %v5009
        %v5091 = vpop.f32.mrf.mxu0
        %v5092 = vadd.f32 0.0, %v5091
        %v5093 = vpop.f32.mrf.mxu0
        %v5094 = vpop.f32.mrf.mxu0
        %v5095 = vadd.f32 0.0, %v5094
        %v5096 = vpop.f32.mrf.mxu0
        %5097 = vmatprep.mubr.bf16.mxu0 0
        %5098 = vmatmul.mubr.bf16.gmra.mxu0 %v5012
        %v5099 = vpop.f32.mrf.mxu0
        %v5100 = vadd.f32 0.0, %v5099
        %v5101 = vpop.f32.mrf.mxu0
        %v5102 = vpop.f32.mrf.mxu0
        %v5103 = vadd.f32 0.0, %v5102
        %v5104 = vpop.f32.mrf.mxu0
        %5105 = vmatprep.mubr.bf16.mxu0 0
        %5106 = vmatmul.mubr.bf16.gmra.mxu0 %v5015
        %v5107 = vpop.f32.mrf.mxu0
        %v5108 = vadd.f32 0.0, %v5107
        %v5109 = vpop.f32.mrf.mxu0
        %v5110 = vpop.f32.mrf.mxu0
        %v5111 = vadd.f32 0.0, %v5110
        %v5112 = vpop.f32.mrf.mxu0
        %5113 = vdwg.mxu0
        %5114 = vmax.xlane.f32.xlu0 %v5052
        %v5115 = vpop.xlane.xlu0 %5114
        %5116 = vmax.xlane.f32.xlu0 %v5055
        %v5117 = vpop.xlane.xlu0 %5116
        %5118 = vmax.xlane.f32.xlu0 %v5060
        %v5119 = vpop.xlane.xlu0 %5118
        %5120 = vmax.xlane.f32.xlu0 %v5063
        %v5121 = vpop.xlane.xlu0 %5120
        %5122 = vmax.xlane.f32.xlu0 %v5068
        %v5123 = vpop.xlane.xlu0 %5122
        %5124 = vmax.xlane.f32.xlu0 %v5071
        %v5125 = vpop.xlane.xlu0 %5124
        %5126 = vmax.xlane.f32.xlu0 %v5076
        %v5127 = vpop.xlane.xlu0 %5126
        %5128 = vmax.xlane.f32.xlu0 %v5079
        %v5129 = vpop.xlane.xlu0 %5128
        %5130 = vmax.xlane.f32.xlu0 %v5084
        %v5131 = vpop.xlane.xlu0 %5130
        %5132 = vmax.xlane.f32.xlu0 %v5087
        %v5133 = vpop.xlane.xlu0 %5132
        %5134 = vmax.xlane.f32.xlu0 %v5092
        %v5135 = vpop.xlane.xlu0 %5134
        %5136 = vmax.xlane.f32.xlu0 %v5095
        %v5137 = vpop.xlane.xlu0 %5136
        %5138 = vmax.xlane.f32.xlu0 %v5100
        %v5139 = vpop.xlane.xlu0 %5138
        %5140 = vmax.xlane.f32.xlu0 %v5103
        %v5141 = vpop.xlane.xlu0 %5140
        %5142 = vmax.xlane.f32.xlu0 %v5108
        %v5143 = vpop.xlane.xlu0 %5142
        %5144 = vmax.xlane.f32.xlu0 %v5111
        %v5145 = vpop.xlane.xlu0 %5144
        %v5146 = vsub.f32 %v5052, %v5115
        %v5147 = vsub.f32 %v5055, %v5117
        %v5148 = vsub.f32 %v5060, %v5119
        %v5149 = vsub.f32 %v5063, %v5121
        %v5150 = vsub.f32 %v5068, %v5123
        %v5151 = vsub.f32 %v5071, %v5125
        %v5152 = vsub.f32 %v5076, %v5127
        %v5153 = vsub.f32 %v5079, %v5129
        %v5154 = vsub.f32 %v5084, %v5131
        %v5155 = vsub.f32 %v5087, %v5133
        %v5156 = vsub.f32 %v5092, %v5135
        %v5157 = vsub.f32 %v5095, %v5137
        %v5158 = vsub.f32 %v5100, %v5139
        %v5159 = vsub.f32 %v5103, %v5141
        %v5160 = vsub.f32 %v5108, %v5143
        %v5161 = vsub.f32 %v5111, %v5145
        %v5162 = vmul.f32 %v5146, 1.442695
        %v5163 = vpow.pop %v5162
        %v5164 = vmul.f32 %v5147, 1.442695
        %v5165 = vpow.pop %v5164
        %v5166 = vmul.f32 %v5148, 1.442695
        %v5167 = vpow.pop %v5166
        %v5168 = vmul.f32 %v5149, 1.442695
        %v5169 = vpow.pop %v5168
        %v5170 = vmul.f32 %v5150, 1.442695
        %v5171 = vpow.pop %v5170
        %v5172 = vmul.f32 %v5151, 1.442695
        %v5173 = vpow.pop %v5172
        %v5174 = vmul.f32 %v5152, 1.442695
        %v5175 = vpow.pop %v5174
        %v5176 = vmul.f32 %v5153, 1.442695
        %v5177 = vpow.pop %v5176
        %v5178 = vmul.f32 %v5154, 1.442695
        %v5179 = vpow.pop %v5178
        %v5180 = vmul.f32 %v5155, 1.442695
        %v5181 = vpow.pop %v5180
        %v5182 = vmul.f32 %v5156, 1.442695
        %v5183 = vpow.pop %v5182
        %v5184 = vmul.f32 %v5157, 1.442695
        %v5185 = vpow.pop %v5184
        %v5186 = vmul.f32 %v5158, 1.442695
        %v5187 = vpow.pop %v5186
        %v5188 = vmul.f32 %v5159, 1.442695
        %v5189 = vpow.pop %v5188
        %v5190 = vmul.f32 %v5160, 1.442695
        %v5191 = vpow.pop %v5190
        %v5192 = vmul.f32 %v5161, 1.442695
        %v5193 = vpow.pop %v5192
        %5194 = vadd.xlane.f32.xlu0 %v5163
        %v5195 = vpop.xlane.xlu0 %5194
        %5196 = vadd.xlane.f32.xlu0 %v5165
        %v5197 = vpop.xlane.xlu0 %5196
        %5198 = vadd.xlane.f32.xlu0 %v5167
        %v5199 = vpop.xlane.xlu0 %5198
        %5200 = vadd.xlane.f32.xlu0 %v5169
        %v5201 = vpop.xlane.xlu0 %5200
        %5202 = vadd.xlane.f32.xlu0 %v5171
        %v5203 = vpop.xlane.xlu0 %5202
        %5204 = vadd.xlane.f32.xlu0 %v5173
        %v5205 = vpop.xlane.xlu0 %5204
        %5206 = vadd.xlane.f32.xlu0 %v5175
        %v5207 = vpop.xlane.xlu0 %5206
        %5208 = vadd.xlane.f32.xlu0 %v5177
        %v5209 = vpop.xlane.xlu0 %5208
        %5210 = vadd.xlane.f32.xlu0 %v5179
        %v5211 = vpop.xlane.xlu0 %5210
        %5212 = vadd.xlane.f32.xlu0 %v5181
        %v5213 = vpop.xlane.xlu0 %5212
        %5214 = vadd.xlane.f32.xlu0 %v5183
        %v5215 = vpop.xlane.xlu0 %5214
        %5216 = vadd.xlane.f32.xlu0 %v5185
        %v5217 = vpop.xlane.xlu0 %5216
        %5218 = vadd.xlane.f32.xlu0 %v5187
        %v5219 = vpop.xlane.xlu0 %5218
        %5220 = vadd.xlane.f32.xlu0 %v5189
        %v5221 = vpop.xlane.xlu0 %5220
        %5222 = vadd.xlane.f32.xlu0 %v5191
        %v5223 = vpop.xlane.xlu0 %5222
        %5224 = vadd.xlane.f32.xlu0 %v5193
        %v5225 = vpop.xlane.xlu0 %5224
        %v5226 = vrcp.pop %v5195
        %v5227 = vrcp.pop %v5197
        %v5228 = vrcp.pop %v5199
        %v5229 = vrcp.pop %v5201
        %v5230 = vrcp.pop %v5203
        %v5231 = vrcp.pop %v5205
        %v5232 = vrcp.pop %v5207
        %v5233 = vrcp.pop %v5209
        %v5234 = vrcp.pop %v5211
        %v5235 = vrcp.pop %v5213
        %v5236 = vrcp.pop %v5215
        %v5237 = vrcp.pop %v5217
        %v5238 = vrcp.pop %v5219
        %v5239 = vrcp.pop %v5221
        %v5240 = vrcp.pop %v5223
        %v5241 = vrcp.pop %v5225
        %v5242 = vmul.f32 %v5195, %v5226
        %v5243 = vmul.f32 %v5197, %v5227
        %v5244 = vmul.f32 %v5199, %v5228
        %v5245 = vmul.f32 %v5201, %v5229
        %v5246 = vmul.f32 %v5203, %v5230
        %v5247 = vmul.f32 %v5205, %v5231
        %v5248 = vmul.f32 %v5207, %v5232
        %v5249 = vmul.f32 %v5209, %v5233
        %v5250 = vmul.f32 %v5211, %v5234
        %v5251 = vmul.f32 %v5213, %v5235
        %v5252 = vmul.f32 %v5215, %v5236
        %v5253 = vmul.f32 %v5217, %v5237
        %v5254 = vmul.f32 %v5219, %v5238
        %v5255 = vmul.f32 %v5221, %v5239
        %v5256 = vmul.f32 %v5223, %v5240
        %v5257 = vmul.f32 %v5225, %v5241
        %v5258 = vsub.f32 2.0, %v5242
        %v5259 = vsub.f32 2.0, %v5243
        %v5260 = vsub.f32 2.0, %v5244
        %v5261 = vsub.f32 2.0, %v5245
        %v5262 = vsub.f32 2.0, %v5246
        %v5263 = vsub.f32 2.0, %v5247
        %v5264 = vsub.f32 2.0, %v5248
        %v5265 = vsub.f32 2.0, %v5249
        %v5266 = vsub.f32 2.0, %v5250
        %v5267 = vsub.f32 2.0, %v5251
        %v5268 = vsub.f32 2.0, %v5252
        %v5269 = vsub.f32 2.0, %v5253
        %v5270 = vsub.f32 2.0, %v5254
        %v5271 = vsub.f32 2.0, %v5255
        %v5272 = vsub.f32 2.0, %v5256
        %v5273 = vsub.f32 2.0, %v5257
        %v5274 = vmul.f32 %v5226, %v5258
        %v5275 = vmul.f32 %v5227, %v5259
        %v5276 = vmul.f32 %v5228, %v5260
        %v5277 = vmul.f32 %v5229, %v5261
        %v5278 = vmul.f32 %v5230, %v5262
        %v5279 = vmul.f32 %v5231, %v5263
        %v5280 = vmul.f32 %v5232, %v5264
        %v5281 = vmul.f32 %v5233, %v5265
        %v5282 = vmul.f32 %v5234, %v5266
        %v5283 = vmul.f32 %v5235, %v5267
        %v5284 = vmul.f32 %v5236, %v5268
        %v5285 = vmul.f32 %v5237, %v5269
        %v5286 = vmul.f32 %v5238, %v5270
        %v5287 = vmul.f32 %v5239, %v5271
        %v5288 = vmul.f32 %v5240, %v5272
        %v5289 = vmul.f32 %v5241, %v5273
        %v5290 = vmul.f32 %v5163, %v5274
        %v5291 = vmul.f32 %v5165, %v5275
        %v5292 = vmul.f32 %v5167, %v5276
        %v5293 = vmul.f32 %v5169, %v5277
        %v5294 = vmul.f32 %v5171, %v5278
        %v5295 = vmul.f32 %v5173, %v5279
        %v5296 = vmul.f32 %v5175, %v5280
        %v5297 = vmul.f32 %v5177, %v5281
        %v5298 = vmul.f32 %v5179, %v5282
        %v5299 = vmul.f32 %v5181, %v5283
        %v5300 = vmul.f32 %v5183, %v5284
        %v5301 = vmul.f32 %v5185, %v5285
        %v5302 = vmul.f32 %v5187, %v5286
        %v5303 = vmul.f32 %v5189, %v5287
        %v5304 = vmul.f32 %v5191, %v5288
        %v5305 = vmul.f32 %v5193, %v5289
        %v5306 = vld [vmem:[#allocation2 + $0x120] sm:$0xf]
        %v5307 = vld [vmem:[#allocation2 + $0x124] sm:$0xf]
        %v5308 = vld [vmem:[#allocation2 + $0x128] sm:$0xf]
        %v5309 = vld [vmem:[#allocation2 + $0x12c] sm:$0xf]
        %v5310 = vld [vmem:[#allocation2 + $0x130] sm:$0xf]
        %v5311 = vld [vmem:[#allocation2 + $0x134] sm:$0xf]
        %v5312 = vld [vmem:[#allocation2 + $0x138] sm:$0xf]
        %v5313 = vld [vmem:[#allocation2 + $0x13c] sm:$0xf]
        %v5314 = vld [vmem:[#allocation3] sm:$0xff]
        %v5315 = vld [vmem:[#allocation3 + $0x8] sm:$0xff]
        %v5316 = vld [vmem:[#allocation3 + $0x10] sm:$0xff]
        %v5317 = vld [vmem:[#allocation3 + $0x18] sm:$0xff]
        %v5318 = vld [vmem:[#allocation3 + $0x20] sm:$0xff]
        %v5319 = vld [vmem:[#allocation3 + $0x28] sm:$0xff]
        %v5320 = vld [vmem:[#allocation3 + $0x30] sm:$0xff]
        %v5321 = vld [vmem:[#allocation3 + $0x38] sm:$0xff]
        %v5322 = vpack.c.bf16 %v5291, %v5290
        %v5323 = vpack.c.bf16 %v5293, %v5292
        %v5324 = vpack.c.bf16 %v5295, %v5294
        %v5325 = vpack.c.bf16 %v5297, %v5296
        %v5326 = vpack.c.bf16 %v5299, %v5298
        %v5327 = vpack.c.bf16 %v5301, %v5300
        %v5328 = vpack.c.bf16 %v5303, %v5302
        %v5329 = vpack.c.bf16 %v5305, %v5304
        %v5338 = vunpack.c.l.b16 %v5306
        %v5339 = vunpack.c.l.b16 %v5307
        %v5340 = vunpack.c.l.b16 %v5308
        %v5341 = vunpack.c.l.b16 %v5309
        %v5342 = vunpack.c.l.b16 %v5310
        %v5343 = vunpack.c.l.b16 %v5311
        %v5344 = vunpack.c.l.b16 %v5312
        %v5345 = vunpack.c.l.b16 %v5313
        %v5346 = vpack.c.b16 %v5339, %v5338
        %v5347 = vpack.c.b16 %v5341, %v5340
        %v5348 = vpack.c.b16 %v5343, %v5342
        %v5349 = vpack.c.b16 %v5345, %v5344
        %5354 = vmatprep.subr.bf16.mxu0 0
        %5355 = vmatpush1.bf16.msra.mxu0 %v5329
        %5356 = vmatprep.subr.bf16.mxu0 0
        %5357 = vmatpush1.bf16.msra.mxu0 %v5328
        %5358 = vmatprep.subr.bf16.mxu0 0
        %5359 = vmatpush1.bf16.msra.mxu0 %v5327
        %5360 = vmatprep.subr.bf16.mxu0 0
        %5361 = vmatpush1.bf16.msra.mxu0 %v5326
        %5362 = vmatprep.subr.bf16.mxu0 0
        %5363 = vmatpush1.bf16.msra.mxu0 %v5325
        %5364 = vmatprep.subr.bf16.mxu0 0
        %5365 = vmatpush1.bf16.msra.mxu0 %v5324
        %5366 = vmatprep.subr.bf16.mxu0 0
        %5367 = vmatpush1.bf16.msra.mxu0 %v5323
        %5368 = vmatprep.subr.bf16.mxu0 0
        %5369 = vmatpush1.bf16.msra.mxu0 %v5322
        %5370 = vmatprep.subr.bf16.mxu0 0
        %5371 = vmatpush2.bf16.msra.mxu0 0
        %5372 = vmatprep.subr.bf16.mxu0 0
        %5373 = vmatpush2.bf16.msra.mxu0 0
        %5374 = vmatprep.subr.bf16.mxu0 0
        %5375 = vmatpush2.bf16.msra.mxu0 0
        %5376 = vmatprep.subr.bf16.mxu0 0
        %5377 = vmatpush2.bf16.msra.mxu0 0
        %5378 = vmatprep.subr.bf16.mxu0 0
        %5379 = vmatpush2.bf16.msra.mxu0 0
        %5380 = vmatprep.subr.bf16.mxu0 0
        %5381 = vmatpush2.bf16.msra.mxu0 0
        %5382 = vmatprep.subr.bf16.mxu0 0
        %5383 = vmatpush2.bf16.msra.mxu0 0
        %5384 = vmatprep.subr.bf16.mxu0 0
        %5385 = vmatpush2.bf16.msra.mxu0 0
        %5386 = vmatprep.mubr.bf16.mxu0 0
        %5387 = vmatmul.mubr.bf16.gmra.mxu0 %v5346
        %v5388 = vpop.f32.mrf.mxu0
        %v5389 = vadd.f32 0.0, %v5388
        %v5390 = vpop.f32.mrf.mxu0
        %v5391 = vpop.f32.mrf.mxu0
        %v5392 = vadd.f32 0.0, %v5391
        %v5393 = vpop.f32.mrf.mxu0
        %5394 = vmatprep.mubr.bf16.mxu0 0
        %5395 = vmatmul.mubr.bf16.gmra.mxu0 %v5347
        %v5396 = vpop.f32.mrf.mxu0
        %v5397 = vadd.f32 0.0, %v5396
        %v5398 = vpop.f32.mrf.mxu0
        %v5399 = vpop.f32.mrf.mxu0
        %v5400 = vadd.f32 0.0, %v5399
        %v5401 = vpop.f32.mrf.mxu0
        %5402 = vmatprep.mubr.bf16.mxu0 0
        %5403 = vmatmul.mubr.bf16.gmra.mxu0 %v5348
        %v5404 = vpop.f32.mrf.mxu0
        %v5405 = vadd.f32 0.0, %v5404
        %v5406 = vpop.f32.mrf.mxu0
        %v5407 = vpop.f32.mrf.mxu0
        %v5408 = vadd.f32 0.0, %v5407
        %v5409 = vpop.f32.mrf.mxu0
        %5410 = vmatprep.mubr.bf16.mxu0 0
        %5411 = vmatmul.mubr.bf16.gmra.mxu0 %v5349
        %v5412 = vpop.f32.mrf.mxu0
        %v5413 = vadd.f32 0.0, %v5412
        %v5414 = vpop.f32.mrf.mxu0
        %v5415 = vpop.f32.mrf.mxu0
        %v5416 = vadd.f32 0.0, %v5415
        %v5417 = vpop.f32.mrf.mxu0
        %5418 = vdwg.mxu0
        %v5419 = vadd.f32 %v5314, %v5389
        %v5420 = vadd.f32 %v5315, %v5392
        %v5421 = vadd.f32 %v5316, %v5397
        %v5422 = vadd.f32 %v5317, %v5400
        %v5423 = vadd.f32 %v5318, %v5405
        %v5424 = vadd.f32 %v5319, %v5408
        %v5425 = vadd.f32 %v5320, %v5413
        %v5426 = vadd.f32 %v5321, %v5416
        %5427 = vst [vmem:[#allocation3] sm:$0xff] %v5419
        %5428 = vst [vmem:[#allocation3 + $0x8] sm:$0xff] %v5420
        %5429 = vst [vmem:[#allocation3 + $0x10] sm:$0xff] %v5421
        %5430 = vst [vmem:[#allocation3 + $0x18] sm:$0xff] %v5422
        %5431 = vst [vmem:[#allocation3 + $0x20] sm:$0xff] %v5423
        %5432 = vst [vmem:[#allocation3 + $0x28] sm:$0xff] %v5424
        %5433 = vst [vmem:[#allocation3 + $0x30] sm:$0xff] %v5425
        %5434 = vst [vmem:[#allocation3 + $0x38] sm:$0xff] %v5426
        %v5435 = vld [vmem:[#allocation4] sm:$0x1]
        %v5436 = vadd.f32 %v5290, %v5291
        %v5437 = vadd.f32 %v5436, %v5292
        %v5438 = vadd.f32 %v5437, %v5293
        %v5439 = vadd.f32 %v5438, %v5294
        %v5440 = vadd.f32 %v5439, %v5295
        %v5441 = vadd.f32 %v5440, %v5296
        %v5442 = vadd.f32 %v5441, %v5297
        %v5443 = vadd.f32 %v5442, %v5298
        %v5444 = vadd.f32 %v5443, %v5299
        %v5445 = vadd.f32 %v5444, %v5300
        %v5446 = vadd.f32 %v5445, %v5301
        %v5447 = vadd.f32 %v5446, %v5302
        %v5448 = vadd.f32 %v5447, %v5303
        %v5449 = vadd.f32 %v5448, %v5304
        %v5450 = vadd.f32 %v5449, %v5305
        %v5451 = vrot.slane %v5450, 4
        %v5452 = vadd.f32 %v5450, %v5451
        %v5453 = vrot.slane %v5452, 2
        %v5454 = vadd.f32 %v5452, %v5453
        %v5455 = vrot.slane %v5454, 1
        %v5456 = vadd.f32 %v5454, %v5455
        %v5457 = vadd.f32 %v5435, %v5456
        %5458 = vst [vmem:[#allocation4] sm:$0x1] %v5457
        %v5459 = vld [vmem:[#allocation3] sm:$0xff]
        %v5460 = vld [vmem:[#allocation3 + $0x8] sm:$0xff]
        %v5461 = vld [vmem:[#allocation3 + $0x10] sm:$0xff]
        %v5462 = vld [vmem:[#allocation3 + $0x18] sm:$0xff]
        %v5463 = vld [vmem:[#allocation3 + $0x20] sm:$0xff]
        %v5464 = vld [vmem:[#allocation3 + $0x28] sm:$0xff]
        %v5465 = vld [vmem:[#allocation3 + $0x30] sm:$0xff]
        %v5466 = vld [vmem:[#allocation3 + $0x38] sm:$0xff]
        %v5467 = vld [vmem:[#allocation4] sm:$0x1]
        %v5468 = vadd.f32 %v5467, 1e-07
        %v5469 = vrcp.pop %v5468
        %v5470 = vmul.f32 %v5468, %v5469
        %v5471 = vsub.f32 2.0, %v5470
        %v5472 = vmul.f32 %v5469, %v5471
        %v5474 = vlaneseq
        %v5475 = vshrl.u32 %v5474, 7
        %v5476 = vsub.s32 0, %v5475
        %v5477 = vrot.slane %v5472, %v5476
        %v5479 = vmul.f32 %v5459, %v5477
        %v5480 = vmul.f32 %v5460, %v5477
        %v5481 = vmul.f32 %v5461, %v5477
        %v5482 = vmul.f32 %v5462, %v5477
        %v5483 = vmul.f32 %v5463, %v5477
        %v5484 = vmul.f32 %v5464, %v5477
        %v5485 = vmul.f32 %v5465, %v5477
        %v5486 = vmul.f32 %v5466, %v5477
        %v5487 = vld [vmem:[%s1 + $0x1c0] sm:$0xf]
        %v5488 = vld [vmem:[%s1 + $0x1c4] sm:$0xf]
        %v5489 = vld [vmem:[%s1 + $0x1c8] sm:$0xf]
        %v5490 = vld [vmem:[%s1 + $0x1cc] sm:$0xf]
        %v5491 = vld [vmem:[%s1 + $0x1d0] sm:$0xf]
        %v5492 = vld [vmem:[%s1 + $0x1d4] sm:$0xf]
        %v5493 = vld [vmem:[%s1 + $0x1d8] sm:$0xf]
        %v5494 = vld [vmem:[%s1 + $0x1dc] sm:$0xf]
        %v5495 = vsub.f32 %v4916, %v5479
        %v5496 = vsub.f32 %v4917, %v5480
        %v5497 = vsub.f32 %v4918, %v5481
        %v5498 = vsub.f32 %v4919, %v5482
        %v5499 = vsub.f32 %v4920, %v5483
        %v5500 = vsub.f32 %v4921, %v5484
        %v5501 = vsub.f32 %v4922, %v5485
        %v5502 = vsub.f32 %v4923, %v5486
        %v5503 = vpack.c.bf16 %v5496, %v5495
        %v5504 = vpack.c.bf16 %v5498, %v5497
        %v5505 = vpack.c.bf16 %v5500, %v5499
        %v5506 = vpack.c.bf16 %v5502, %v5501
        %v5507 = vld [vmem:[%s2 + $0x380] sm:$0xff]
        %v5508 = vld [vmem:[%s2 + $0x388] sm:$0xff]
        %v5509 = vld [vmem:[%s2 + $0x390] sm:$0xff]
        %v5510 = vld [vmem:[%s2 + $0x398] sm:$0xff]
        %v5511 = vld [vmem:[%s2 + $0x3a0] sm:$0xff]
        %v5512 = vld [vmem:[%s2 + $0x3a8] sm:$0xff]
        %v5513 = vld [vmem:[%s2 + $0x3b0] sm:$0xff]
        %v5514 = vld [vmem:[%s2 + $0x3b8] sm:$0xff]
        %5516 = vset.pattern.permute.xlu0 0
        %5517 = vperm.xlu0 %5516, %v5507
        %v5518 = vpop.permute.xlu0 %5517
        %5521 = vset.pattern.permute.xlu0 0
        %5522 = vperm.xlu0 %5521, %v5508
        %v5523 = vpop.permute.xlu0 %5522
        %5526 = vset.pattern.permute.xlu0 0
        %5527 = vperm.xlu0 %5526, %v5509
        %v5528 = vpop.permute.xlu0 %5527
        %5531 = vset.pattern.permute.xlu0 0
        %5532 = vperm.xlu0 %5531, %v5510
        %v5533 = vpop.permute.xlu0 %5532
        %5536 = vset.pattern.permute.xlu0 0
        %5537 = vperm.xlu0 %5536, %v5511
        %v5538 = vpop.permute.xlu0 %5537
        %5541 = vset.pattern.permute.xlu0 0
        %5542 = vperm.xlu0 %5541, %v5512
        %v5543 = vpop.permute.xlu0 %5542
        %5546 = vset.pattern.permute.xlu0 0
        %5547 = vperm.xlu0 %5546, %v5513
        %v5548 = vpop.permute.xlu0 %5547
        %5551 = vset.pattern.permute.xlu0 0
        %5552 = vperm.xlu0 %5551, %v5514
        %v5553 = vpop.permute.xlu0 %5552
        %v5563 = vunpack.c.l.b16 %v5487
        %v5564 = vunpack.c.l.b16 %v5488
        %v5565 = vunpack.c.l.b16 %v5489
        %v5566 = vunpack.c.l.b16 %v5490
        %v5567 = vunpack.c.l.b16 %v5491
        %v5568 = vunpack.c.l.b16 %v5492
        %v5569 = vunpack.c.l.b16 %v5493
        %v5570 = vunpack.c.l.b16 %v5494
        %v5571 = vpack.c.b16 %v5564, %v5563
        %v5572 = vpack.c.b16 %v5566, %v5565
        %v5573 = vpack.c.b16 %v5568, %v5567
        %v5574 = vpack.c.b16 %v5570, %v5569
        %v5576 = vsel %vm335, %v5571, 0
        %v5579 = vsel %vm335, %v5572, 0
        %v5582 = vsel %vm335, %v5573, 0
        %v5585 = vsel %vm335, %v5574, 0
        %5587 = vmatprep.subr.bf16.mxu0 0
        %5588 = vmatpush1.bf16.msra.mxu0 0
        %5589 = vmatprep.subr.bf16.mxu0 0
        %5590 = vmatpush1.bf16.msra.mxu0 0
        %5591 = vmatprep.subr.bf16.mxu0 0
        %5592 = vmatpush1.bf16.msra.mxu0 0
        %5593 = vmatprep.subr.bf16.mxu0 0
        %5594 = vmatpush1.bf16.msra.mxu0 0
        %5595 = vmatprep.subr.bf16.mxu0 0
        %5596 = vmatpush1.bf16.msra.mxu0 %v5506
        %5597 = vmatprep.subr.bf16.mxu0 0
        %5598 = vmatpush1.bf16.msra.mxu0 %v5505
        %5599 = vmatprep.subr.bf16.mxu0 0
        %5600 = vmatpush1.bf16.msra.mxu0 %v5504
        %5601 = vmatprep.subr.bf16.mxu0 0
        %5602 = vmatpush1.bf16.msra.mxu0 %v5503
        %5603 = vmatprep.subr.bf16.mxu0 0
        %5604 = vmatpush2.bf16.msra.mxu0 0
        %5605 = vmatprep.subr.bf16.mxu0 0
        %5606 = vmatpush2.bf16.msra.mxu0 0
        %5607 = vmatprep.subr.bf16.mxu0 0
        %5608 = vmatpush2.bf16.msra.mxu0 0
        %5609 = vmatprep.subr.bf16.mxu0 0
        %5610 = vmatpush2.bf16.msra.mxu0 0
        %5611 = vmatprep.subr.bf16.mxu0 0
        %5612 = vmatpush2.bf16.msra.mxu0 0
        %5613 = vmatprep.subr.bf16.mxu0 0
        %5614 = vmatpush2.bf16.msra.mxu0 0
        %5615 = vmatprep.subr.bf16.mxu0 0
        %5616 = vmatpush2.bf16.msra.mxu0 0
        %5617 = vmatprep.subr.bf16.mxu0 0
        %5618 = vmatpush2.bf16.msra.mxu0 0
        %5619 = vmatprep.mubr.bf16.mxu0 0
        %5620 = vmatmul.mubr.bf16.gmra.mxu0 %v5576
        %v5621 = vpop.f32.mrf.mxu0
        %v5622 = vadd.f32 %v5518, %v5621
        %v5623 = vpop.f32.mrf.mxu0
        %v5624 = vpop.f32.mrf.mxu0
        %v5625 = vadd.f32 %v5523, %v5624
        %v5626 = vpop.f32.mrf.mxu0
        %5627 = vmatprep.mubr.bf16.mxu0 0
        %5628 = vmatmul.mubr.bf16.gmra.mxu0 %v5579
        %v5629 = vpop.f32.mrf.mxu0
        %v5630 = vadd.f32 %v5528, %v5629
        %v5631 = vpop.f32.mrf.mxu0
        %v5632 = vpop.f32.mrf.mxu0
        %v5633 = vadd.f32 %v5533, %v5632
        %v5634 = vpop.f32.mrf.mxu0
        %5635 = vmatprep.mubr.bf16.mxu0 0
        %5636 = vmatmul.mubr.bf16.gmra.mxu0 %v5582
        %v5637 = vpop.f32.mrf.mxu0
        %v5638 = vadd.f32 %v5538, %v5637
        %v5639 = vpop.f32.mrf.mxu0
        %v5640 = vpop.f32.mrf.mxu0
        %v5641 = vadd.f32 %v5543, %v5640
        %v5642 = vpop.f32.mrf.mxu0
        %5643 = vmatprep.mubr.bf16.mxu0 0
        %5644 = vmatmul.mubr.bf16.gmra.mxu0 %v5585
        %v5645 = vpop.f32.mrf.mxu0
        %v5646 = vadd.f32 %v5548, %v5645
        %v5647 = vpop.f32.mrf.mxu0
        %v5648 = vpop.f32.mrf.mxu0
        %v5649 = vadd.f32 %v5553, %v5648
        %v5650 = vpop.f32.mrf.mxu0
        %5651 = vdwg.mxu0
        %v5652 = vmax.f32 %v5622, 0.0
        %v5653 = vmax.f32 %v5625, 0.0
        %v5654 = vmax.f32 %v5630, 0.0
        %v5655 = vmax.f32 %v5633, 0.0
        %v5656 = vmax.f32 %v5638, 0.0
        %v5657 = vmax.f32 %v5641, 0.0
        %v5658 = vmax.f32 %v5646, 0.0
        %v5659 = vmax.f32 %v5649, 0.0
        %v5660 = vadd.f32 %v4916, %v5652
        %v5661 = vadd.f32 %v4917, %v5653
        %v5662 = vadd.f32 %v4918, %v5654
        %v5663 = vadd.f32 %v4919, %v5655
        %v5664 = vadd.f32 %v4920, %v5656
        %v5665 = vadd.f32 %v4921, %v5657
        %v5666 = vadd.f32 %v4922, %v5658
        %v5667 = vadd.f32 %v4923, %v5659
        %v5668 = vmul.f32 %v2652, 0.5
        %v5669 = vmul.f32 %v2653, 0.5
        %v5670 = vmul.f32 %v2654, 0.5
        %v5671 = vmul.f32 %v2655, 0.5
        %v5672 = vmul.f32 %v2656, 0.5
        %v5673 = vmul.f32 %v2657, 0.5
        %v5674 = vmul.f32 %v2658, 0.5
        %v5675 = vmul.f32 %v2659, 0.5
        %v5676 = vtanh.pop %v5668
        %v5677 = vtanh.pop %v5669
        %v5678 = vtanh.pop %v5670
        %v5679 = vtanh.pop %v5671
        %v5680 = vtanh.pop %v5672
        %v5681 = vtanh.pop %v5673
        %v5682 = vtanh.pop %v5674
        %v5683 = vtanh.pop %v5675
        %v5684 = vadd.f32 %v5676, 1.0
        %v5685 = vadd.f32 %v5677, 1.0
        %v5686 = vadd.f32 %v5678, 1.0
        %v5687 = vadd.f32 %v5679, 1.0
        %v5688 = vadd.f32 %v5680, 1.0
        %v5689 = vadd.f32 %v5681, 1.0
        %v5690 = vadd.f32 %v5682, 1.0
        %v5691 = vadd.f32 %v5683, 1.0
        %v5692 = vmul.f32 %v5684, 0.5
        %v5693 = vmul.f32 %v5685, 0.5
        %v5694 = vmul.f32 %v5686, 0.5
        %v5695 = vmul.f32 %v5687, 0.5
        %v5696 = vmul.f32 %v5688, 0.5
        %v5697 = vmul.f32 %v5689, 0.5
        %v5698 = vmul.f32 %v5690, 0.5
        %v5699 = vmul.f32 %v5691, 0.5
        %v5700 = vmul.f32 %v4908, 0.5
        %v5701 = vmul.f32 %v4909, 0.5
        %v5702 = vmul.f32 %v4910, 0.5
        %v5703 = vmul.f32 %v4911, 0.5
        %v5704 = vmul.f32 %v4912, 0.5
        %v5705 = vmul.f32 %v4913, 0.5
        %v5706 = vmul.f32 %v4914, 0.5
        %v5707 = vmul.f32 %v4915, 0.5
        %v5708 = vtanh.pop %v5700
        %v5709 = vtanh.pop %v5701
        %v5710 = vtanh.pop %v5702
        %v5711 = vtanh.pop %v5703
        %v5712 = vtanh.pop %v5704
        %v5713 = vtanh.pop %v5705
        %v5714 = vtanh.pop %v5706
        %v5715 = vtanh.pop %v5707
        %v5716 = vadd.f32 %v5708, 1.0
        %v5717 = vadd.f32 %v5709, 1.0
        %v5718 = vadd.f32 %v5710, 1.0
        %v5719 = vadd.f32 %v5711, 1.0
        %v5720 = vadd.f32 %v5712, 1.0
        %v5721 = vadd.f32 %v5713, 1.0
        %v5722 = vadd.f32 %v5714, 1.0
        %v5723 = vadd.f32 %v5715, 1.0
        %v5724 = vmul.f32 %v5716, 0.5
        %v5725 = vmul.f32 %v5717, 0.5
        %v5726 = vmul.f32 %v5718, 0.5
        %v5727 = vmul.f32 %v5719, 0.5
        %v5728 = vmul.f32 %v5720, 0.5
        %v5729 = vmul.f32 %v5721, 0.5
        %v5730 = vmul.f32 %v5722, 0.5
        %v5731 = vmul.f32 %v5723, 0.5
        %v5732 = vmul.f32 %v3404, %v5724
        %v5733 = vmul.f32 %v3405, %v5725
        %v5734 = vmul.f32 %v3406, %v5726
        %v5735 = vmul.f32 %v3407, %v5727
        %v5736 = vmul.f32 %v3408, %v5728
        %v5737 = vmul.f32 %v3409, %v5729
        %v5738 = vmul.f32 %v3410, %v5730
        %v5739 = vmul.f32 %v3411, %v5731
        %v5740 = vtanh.pop %v5732
        %v5741 = vtanh.pop %v5733
        %v5742 = vtanh.pop %v5734
        %v5743 = vtanh.pop %v5735
        %v5744 = vtanh.pop %v5736
        %v5745 = vtanh.pop %v5737
        %v5746 = vtanh.pop %v5738
        %v5747 = vtanh.pop %v5739
        %v5748 = vmul.f32 %v5660, 0.5
        %v5749 = vmul.f32 %v5661, 0.5
        %v5750 = vmul.f32 %v5662, 0.5
        %v5751 = vmul.f32 %v5663, 0.5
        %v5752 = vmul.f32 %v5664, 0.5
        %v5753 = vmul.f32 %v5665, 0.5
        %v5754 = vmul.f32 %v5666, 0.5
        %v5755 = vmul.f32 %v5667, 0.5
        %v5756 = vtanh.pop %v5748
        %v5757 = vtanh.pop %v5749
        %v5758 = vtanh.pop %v5750
        %v5759 = vtanh.pop %v5751
        %v5760 = vtanh.pop %v5752
        %v5761 = vtanh.pop %v5753
        %v5762 = vtanh.pop %v5754
        %v5763 = vtanh.pop %v5755
        %v5764 = vadd.f32 %v5756, 1.0
        %v5765 = vadd.f32 %v5757, 1.0
        %v5766 = vadd.f32 %v5758, 1.0
        %v5767 = vadd.f32 %v5759, 1.0
        %v5768 = vadd.f32 %v5760, 1.0
        %v5769 = vadd.f32 %v5761, 1.0
        %v5770 = vadd.f32 %v5762, 1.0
        %v5771 = vadd.f32 %v5763, 1.0
        %v5772 = vmul.f32 %v5764, 0.5
        %v5773 = vmul.f32 %v5765, 0.5
        %v5774 = vmul.f32 %v5766, 0.5
        %v5775 = vmul.f32 %v5767, 0.5
        %v5776 = vmul.f32 %v5768, 0.5
        %v5777 = vmul.f32 %v5769, 0.5
        %v5778 = vmul.f32 %v5770, 0.5
        %v5779 = vmul.f32 %v5771, 0.5
        %v5780 = vmul.f32 %v4156, %v5772
        %v5781 = vmul.f32 %v4157, %v5773
        %v5782 = vmul.f32 %v4158, %v5774
        %v5783 = vmul.f32 %v4159, %v5775
        %v5784 = vmul.f32 %v4160, %v5776
        %v5785 = vmul.f32 %v4161, %v5777
        %v5786 = vmul.f32 %v4162, %v5778
        %v5787 = vmul.f32 %v4163, %v5779
        %v5788 = vtanh.pop %v5780
        %v5789 = vtanh.pop %v5781
        %v5790 = vtanh.pop %v5782
        %v5791 = vtanh.pop %v5783
        %v5792 = vtanh.pop %v5784
        %v5793 = vtanh.pop %v5785
        %v5794 = vtanh.pop %v5786
        %v5795 = vtanh.pop %v5787
        %v5796 = vadd.f32 %v5740, %v5788
        %v5797 = vadd.f32 %v5741, %v5789
        %v5798 = vadd.f32 %v5742, %v5790
        %v5799 = vadd.f32 %v5743, %v5791
        %v5800 = vadd.f32 %v5744, %v5792
        %v5801 = vadd.f32 %v5745, %v5793
        %v5802 = vadd.f32 %v5746, %v5794
        %v5803 = vadd.f32 %v5747, %v5795
        %v5804 = vmul.f32 %v5796, %v5692
        %v5805 = vmul.f32 %v5797, %v5693
        %v5806 = vmul.f32 %v5798, %v5694
        %v5807 = vmul.f32 %v5799, %v5695
        %v5808 = vmul.f32 %v5800, %v5696
        %v5809 = vmul.f32 %v5801, %v5697
        %v5810 = vmul.f32 %v5802, %v5698
        %v5811 = vmul.f32 %v5803, %v5699
        %v5812 = vmul.f32 %v5804, 0.5
        %v5813 = vmul.f32 %v5805, 0.5
        %v5814 = vmul.f32 %v5806, 0.5
        %v5815 = vmul.f32 %v5807, 0.5
        %v5816 = vmul.f32 %v5808, 0.5
        %v5817 = vmul.f32 %v5809, 0.5
        %v5818 = vmul.f32 %v5810, 0.5
        %v5819 = vmul.f32 %v5811, 0.5
        %v5820 = vtanh.pop %v5812
        %v5821 = vtanh.pop %v5813
        %v5822 = vtanh.pop %v5814
        %v5823 = vtanh.pop %v5815
        %v5824 = vtanh.pop %v5816
        %v5825 = vtanh.pop %v5817
        %v5826 = vtanh.pop %v5818
        %v5827 = vtanh.pop %v5819
        %v5828 = vadd.f32 %v5820, 1.0
        %v5829 = vadd.f32 %v5821, 1.0
        %v5830 = vadd.f32 %v5822, 1.0
        %v5831 = vadd.f32 %v5823, 1.0
        %v5832 = vadd.f32 %v5824, 1.0
        %v5833 = vadd.f32 %v5825, 1.0
        %v5834 = vadd.f32 %v5826, 1.0
        %v5835 = vadd.f32 %v5827, 1.0
        %v5836 = vmul.f32 %v5828, 0.5
        %v5837 = vmul.f32 %v5829, 0.5
        %v5838 = vmul.f32 %v5830, 0.5
        %v5839 = vmul.f32 %v5831, 0.5
        %v5840 = vmul.f32 %v5832, 0.5
        %v5841 = vmul.f32 %v5833, 0.5
        %v5842 = vmul.f32 %v5834, 0.5
        %v5843 = vmul.f32 %v5835, 0.5
        %v5844 = vld [vmem:[%s186] sm:$0xff]
        %v5845 = vld [vmem:[%s186 + $0x8] sm:$0xff]
        %v5846 = vld [vmem:[%s186 + $0x10] sm:$0xff]
        %v5847 = vld [vmem:[%s186 + $0x18] sm:$0xff]
        %v5848 = vld [vmem:[%s186 + $0x20] sm:$0xff]
        %v5849 = vld [vmem:[%s186 + $0x28] sm:$0xff]
        %v5850 = vld [vmem:[%s186 + $0x30] sm:$0xff]
        %v5851 = vld [vmem:[%s186 + $0x38] sm:$0xff]
        %v5852 = vtanh.pop %v2652
        %v5853 = vtanh.pop %v2653
        %v5854 = vtanh.pop %v2654
        %v5855 = vtanh.pop %v2655
        %v5856 = vtanh.pop %v2656
        %v5857 = vtanh.pop %v2657
        %v5858 = vtanh.pop %v2658
        %v5859 = vtanh.pop %v2659
        %v5860 = vmul.f32 %v5836, %v5852
        %v5861 = vmul.f32 %v5837, %v5853
        %v5862 = vmul.f32 %v5838, %v5854
        %v5863 = vmul.f32 %v5839, %v5855
        %v5864 = vmul.f32 %v5840, %v5856
        %v5865 = vmul.f32 %v5841, %v5857
        %v5866 = vmul.f32 %v5842, %v5858
        %v5867 = vmul.f32 %v5843, %v5859
        %v5868 = vadd.f32 %v5844, %v5860
        %v5869 = vadd.f32 %v5845, %v5861
        %v5870 = vadd.f32 %v5846, %v5862
        %v5871 = vadd.f32 %v5847, %v5863
        %v5872 = vadd.f32 %v5848, %v5864
        %v5873 = vadd.f32 %v5849, %v5865
        %v5874 = vadd.f32 %v5850, %v5866
        %v5875 = vadd.f32 %v5851, %v5867
        %5876 = vst [vmem:[%s163] sm:$0xff] %v5868
        %5877 = vst [vmem:[%s163 + $0x8] sm:$0xff] %v5869
        %5878 = vst [vmem:[%s163 + $0x10] sm:$0xff] %v5870
        %5879 = vst [vmem:[%s163 + $0x18] sm:$0xff] %v5871
        %5880 = vst [vmem:[%s163 + $0x20] sm:$0xff] %v5872
        %5881 = vst [vmem:[%s163 + $0x28] sm:$0xff] %v5873
        %5882 = vst [vmem:[%s163 + $0x30] sm:$0xff] %v5874
        %5883 = vst [vmem:[%s163 + $0x38] sm:$0xff] %v5875
        %s5884 = sand.u32 %s93, 1
        %s5885 = scalar_lea.sflag [#allocation6], %s5884
        %s5886 = sand.u32 %s93, 1
        %s5887 = smul.addr %s5886, 64
        %s5888 = scalar_lea.vmem [#allocation5], %s5887
        // Predicated region
        $region33: #{_sta_jit.1} parent=31 // pred_check
          %p5889 = pneg %p103
        $region34: #{_sta_jit.1} parent=31 // pred_check_branch
          %5891 = sbr.rel (%p5889) target = $region36
        $region35: #{_sta_jit.1} parent=31 // pred_region
          %s5893 = ssub.s32 1024, 1024
          %5894 = vsyncadd %s5885, %s5893
          %s5895 = smul.addr %s17, 8
          %s5896 = smul.addr %s5895, 128
          %s5897 = scalar_lea.hbm %s3, %s5896
          %s5898 = sshll.u32 %s5888, 4
          %s5899 = int_to_ptr.vmem [resolvable:$true] %s5898
          %5904 = dma.vmem_to_hbm [thread:$0]  %s5899, 1024, %s5897, %s5885, 128, 128, 8
        $region36: #{_sta_jit.1} parent=31 // pred_fallthru
          _
      $region32: #{_sta_jit.1} parent=5 // pred_fallthru
        _
      %p5905 = scmp.le.s32.totalorder 2, %s12
      // Predicated region
      $region37: #{_sta_jit.1} parent=5 // pred_check
        %p5906 = pneg %p5905
      $region38: #{_sta_jit.1} parent=5 // pred_check_branch
        %5908 = sbr.rel (%p5906) target = $region40
      $region39: #{_sta_jit.1} parent=5 // pred_region
        %s5909 = ssub.s32 %s12, 2
        // Predicated region
        $region41: #{_sta_jit.1} parent=39 // pred_check
          %p5910 = pneg %p109
        $region42: #{_sta_jit.1} parent=39 // pred_check_branch
          %5912 = sbr.rel (%p5910) target = $region44
        $region43: #{_sta_jit.1} parent=39 // pred_region
          %s5913 = sand.u32 %s94, 1
          %s5914 = scalar_lea.sflag [#allocation6], %s5913
          %s5915 = sand.u32 %s94, 1
          %s5916 = smul.addr %s5915, 64
          %s5917 = scalar_lea.vmem [#allocation5], %s5916
          %5918 = dma.done %s5914, 1024
        $region44: #{_sta_jit.1} parent=39 // pred_fallthru
          _
      $region40: #{_sta_jit.1} parent=5 // pred_fallthru
        _
    $region6: #{_sta_jit.1} parent=1 // loop_footer
      %s16 = sadd.s32 1, %s12
    $region7: #{_sta_jit.1} parent=1 // loop_footer_branch
      %11 = sbr.rel target = $region3
    $region8: #{_sta_jit.1} parent=1 // loop_exit
      _
    %5919 = vsyncpa [#allocation6], 1
    %s5920 = scalar_lea.sflag [#allocation6], 1
    %5921 = vsyncpa %s5920, 1

</llo_original>
